<compile_context>
chip_gen: v7x
topology: tpu7x:2x2x1
jax: 0.10.0
libtpu: 0.0.40
codegen_flags: <defaults>
</compile_context>

<pallas_src>
import jax
import jax.numpy as jnp
from jax.experimental import pallas as pl
from jax.experimental.pallas import tpu as pltpu


def fused_intent_kernel(ids_ref, t_ref, b1_ref, wc_ref, bc_ref, o_ref):
    # ids_ref: (N, 1) int32     token ids, N = B*S, rows ordered S-MAJOR (n = s*B + b)
    # t_ref  : (V, H) f32       fused table  T = embedding @ W1  (padding row -> 0)
    # b1_ref : (1, H) f32
    # wc_ref : (S, H, Cpad) f32 classifier weight, wc_ref[s, h, c] == Wc[c, s*H + h]
    # bc_ref : (1, Cpad) f32    classifier bias, zero-padded past n_classes
    # o_ref  : (B, Cpad) f32
    n_tok = ids_ref.shape[0]
    n_vocab = t_ref.shape[0]
    seq_len, n_hidden, _ = wc_ref.shape
    batch = o_ref.shape[0]

    # --- Embedding + Linear(E->H) in one MXU matmul against the fused table. ---
    ids = ids_ref[...]                                                # (N, 1)
    vocab_iota = jax.lax.broadcasted_iota(jnp.int32, (n_tok, n_vocab), 1)
    onehot = (ids == vocab_iota).astype(jnp.float32)                  # (N, V)
    hidden = jnp.dot(onehot, t_ref[...],
                     preferred_element_type=jnp.float32)              # (N, H)
    # nn.Dropout(0.1, inplace=True) is identity at inference time.
    hidden = jnp.maximum(hidden + b1_ref[...], 0.0)                   # (N, H)

    # --- Classifier on the MXU: batched over S, then a cheap VPU sum over S. ---
    # logits[b, c] = sum_{s,h} hidden[s, b, h] * wc[s, h, c] + bc[c]
    hidden3 = hidden.reshape(seq_len, batch, n_hidden)                # (S, B, H)
    per_s = jax.lax.dot_general(
        hidden3, wc_ref[...],
        dimension_numbers=(((2,), (1,)), ((0,), (0,))),               # batch over S
        preferred_element_type=jnp.float32)                           # (S, B, Cpad)
    logits = jnp.sum(per_s, axis=0) + bc_ref[...]                     # (B, Cpad)
    o_ref[...] = logits.astype(o_ref.dtype)


def intent_dl_forward(token_type_ids, kparams, *, n_classes):
    """Whole IntentDLModel forward as a single-grid-step pallas_call."""
    t_fused = kparams["t_fused"]              # (V, H)
    b1 = kparams["b1"]                        # (1, H)
    wc_shc = kparams["wc_shc"]                # (S, H, Cpad)
    bc_pad = kparams["bc_pad"]                # (1, Cpad)

    B, S = token_type_ids.shape
    V, H = t_fused.shape
    S_w, H_w, Cpad = wc_shc.shape
    assert (S_w, H_w) == (S, H), "classifier layout must match seq_len * hidden"
    N = B * S

    # s-major token order (n = s*B + b) so the kernel's (S, B, H) split is a
    # pure leading-dim regrouping of the (N, H) hidden activations.
    ids2d = token_type_ids.T.reshape(N, 1).astype(jnp.int32)

    logits_pad = pl.pallas_call(
        fused_intent_kernel,
        out_shape=jax.ShapeDtypeStruct((B, Cpad), jnp.float32),
        grid_spec=pltpu.PrefetchScalarGridSpec(
            num_scalar_prefetch=0,
            grid=(1,),                        # launch-bound model: one grid step
            in_specs=[
                pl.BlockSpec((N, 1), lambda i: (0, 0)),
                pl.BlockSpec((V, H), lambda i: (0, 0)),
                pl.BlockSpec((1, H), lambda i: (0, 0)),
                pl.BlockSpec((S, H, Cpad), lambda i: (0, 0, 0)),
                pl.BlockSpec((1, Cpad), lambda i: (0, 0)),
            ],
            out_specs=pl.BlockSpec((B, Cpad), lambda i: (0, 0)),
        ),
        compiler_params=pltpu.CompilerParams(
            dimension_semantics=("arbitrary",)),
    )(ids2d, t_fused, b1, wc_shc, bc_pad)
    return logits_pad[:, :n_classes]


def init_params(key, n_embeddings, n_embedding_dim, padding_idx,
                n_hidden_layer_neurons, n_classes, flat_features):
    """PyTorch-layout parameters (Linear weights stored pre-transposed as (in, out))."""
    ks = jax.random.split(key, 5)
    emb = jax.random.normal(ks[0], (n_embeddings, n_embedding_dim), jnp.float32)
    emb = emb.at[padding_idx].set(0.0)   # nn.Embedding zeroes the padding row
    w1 = 0.05 * jax.random.normal(
        ks[1], (n_embedding_dim, n_hidden_layer_neurons), jnp.float32)
    b1 = 0.05 * jax.random.normal(ks[2], (n_hidden_layer_neurons,), jnp.float32)
    wc = 0.02 * jax.random.normal(ks[3], (flat_features, n_classes), jnp.float32)
    bc = 0.02 * jax.random.normal(ks[4], (n_classes,), jnp.float32)
    # NOTE: self.linear_layer (ModuleList of Linear(512, 9216)) is never used in
    # forward(), so its parameters are intentionally not instantiated.
    return {"embedding": emb, "w1": w1, "b1": b1, "wc": wc, "bc": bc}


def prepare_kernel_params(params, seq_len, *, lane=128):
    """One-time host-side re-layout / folding (free vs. per-call cost)."""
    emb = params["embedding"]                 # (V, E)
    w1 = params["w1"]                         # (E, H)
    b1 = params["b1"]                         # (H,)
    wc = params["wc"]                         # (S*H, C)
    bc = params["bc"]                         # (C,)
    H = w1.shape[1]
    C = wc.shape[1]
    S = seq_len
    assert wc.shape[0] == S * H

    # (1) Fold Embedding @ W1 into a single (V, H) table. Exact: the in-kernel
    #     one-hot matmul selects rows, and row-wise (table @ W1) is independent
    #     of the other rows.  Padding row stays all-zero (0 @ W1 == 0).
    t_fused = jnp.matmul(emb, w1, precision=jax.lax.Precision.HIGHEST)   # (V, H)

    # (2) Classifier: wc_shc[s, h, c] == wc[s*H + h, c]  (row-major .view flatten),
    #     zero-padded along classes to a full 128-lane output.
    cpad = max(lane, ((C + lane - 1) // lane) * lane)
    wc_shc = jnp.pad(wc.reshape(S, H, C), ((0, 0), (0, 0), (0, cpad - C)))
    bc_pad = jnp.pad(bc, (0, cpad - C)).reshape(1, cpad)

    return {
        "t_fused": t_fused,
        "b1": b1.reshape(1, H),
        "wc_shc": wc_shc,
        "bc_pad": bc_pad,
    }


if __name__ == "__main__":
    # Hyper-params. The classifier is hard-coded to Linear(9216, C), so the
    # forward only works when seq_len * n_hidden_layer_neurons == 9216.
    n_embeddings = 100
    n_embedding_dim = 32
    padding_idx = 0
    n_hidden_layer = 2            # unused in forward()
    n_hidden_layer_neurons = 128
    n_classes = 8
    batch = 2
    seq_len = 72                  # 72 * 128 == 9216

    key = jax.random.PRNGKey(0)
    pkey, dkey = jax.random.split(key)
    params = init_params(pkey, n_embeddings, n_embedding_dim, padding_idx,
                         n_hidden_layer_neurons, n_classes,
                         flat_features=seq_len * n_hidden_layer_neurons)
    kparams = prepare_kernel_params(params, seq_len)

    token_type_ids = jax.random.randint(
        dkey, (batch, seq_len), 0, n_embeddings, dtype=jnp.int32)

    fwd = jax.jit(intent_dl_forward, static_argnames=("n_classes",))
    logits = jax.block_until_ready(fwd(token_type_ids, kparams,
                                       n_classes=n_classes))
    assert logits.shape == (batch, n_classes)

    # Pure-JAX reference of the same forward semantics (PyTorch-layout params).
    hp = jax.lax.Precision.HIGHEST
    emb_ref = jnp.take(params["embedding"], token_type_ids, axis=0)
    h_ref = jnp.maximum(
        jnp.matmul(emb_ref, params["w1"], precision=hp) + params["b1"], 0.0)
    ref = jnp.matmul(h_ref.reshape(batch, -1), params["wc"], precision=hp) + params["bc"]
    err = float(jnp.max(jnp.abs(logits - ref)))
    assert jnp.allclose(logits, ref, atol=1e-3, rtol=1e-3), err

    print("KERNEL_OK")
</pallas_src>

<mosaic_0001>
module attributes {stable_mosaic.version = 11 : i64} {
  func.func @fused_intent_kernel(%arg0: i32, %arg1: memref<144x1xi32, #tpu.memory_space<vmem>>, %arg2: memref<100x128xf32, #tpu.memory_space<vmem>>, %arg3: memref<1x128xf32, #tpu.memory_space<vmem>>, %arg4: memref<72x128x128xf32, #tpu.memory_space<vmem>>, %arg5: memref<1x128xf32, #tpu.memory_space<vmem>>, %arg6: memref<2x128xf32, #tpu.memory_space<vmem>>) attributes {dimension_semantics = [#tpu.dimension_semantics<arbitrary>], iteration_bounds = array<i64: 1>, scalar_prefetch = 0 : i64, scratch_operands = 0 : i64, tpu.core_type = #tpu.core_type<tc>, window_params = [{pipeline_mode = #tpu.pipeline_mode<synchronous>, transform_indices = @transform_0, window_bounds = array<i64: 144, 1>}, {pipeline_mode = #tpu.pipeline_mode<synchronous>, transform_indices = @transform_1, window_bounds = array<i64: 100, 128>}, {pipeline_mode = #tpu.pipeline_mode<synchronous>, transform_indices = @transform_2, window_bounds = array<i64: 1, 128>}, {pipeline_mode = #tpu.pipeline_mode<synchronous>, transform_indices = @transform_3, window_bounds = array<i64: 72, 128, 128>}, {pipeline_mode = #tpu.pipeline_mode<synchronous>, transform_indices = @transform_4, window_bounds = array<i64: 1, 128>}, {pipeline_mode = #tpu.pipeline_mode<synchronous>, transform_indices = @transform_5, window_bounds = array<i64: 2, 128>}]} {
    %c0 = arith.constant 0 : index
    %c0_0 = arith.constant 0 : index
    %0 = vector.load %arg1[%c0, %c0_0] : memref<144x1xi32, #tpu.memory_space<vmem>>, vector<144x1xi32>
    %1 = tpu.iota {dimensions = array<i32: 1>} : vector<144x100xi32>
    %2 = vector.broadcast %0 : vector<144x1xi32> to vector<144x100xi32>
    %3 = arith.cmpi eq, %2, %1 : vector<144x100xi32>
    %4 = arith.extui %3 : vector<144x100xi1> to vector<144x100xi32>
    %5 = arith.sitofp %4 : vector<144x100xi32> to vector<144x100xf32>
    %c0_1 = arith.constant 0 : index
    %c0_2 = arith.constant 0 : index
    %6 = vector.load %arg2[%c0_1, %c0_2] : memref<100x128xf32, #tpu.memory_space<vmem>>, vector<100x128xf32>
    %cst = arith.constant dense<0.000000e+00> : vector<144x128xf32>
    %7 = tpu.matmul %5, %6, %cst {dimension_numbers = #tpu.dot_dimension_numbers<[1], [0], [0], [1], [0, 0, 1, 1], [], []>} : vector<144x100xf32>, vector<100x128xf32>, vector<144x128xf32> -> vector<144x128xf32>
    %c0_3 = arith.constant 0 : index
    %c0_4 = arith.constant 0 : index
    %8 = vector.load %arg3[%c0_3, %c0_4] : memref<1x128xf32, #tpu.memory_space<vmem>>, vector<1x128xf32>
    %9 = vector.broadcast %8 : vector<1x128xf32> to vector<144x128xf32>
    %10 = arith.addf %7, %9 : vector<144x128xf32>
    %cst_5 = arith.constant 0.000000e+00 : f32
    %11 = vector.broadcast %cst_5 : f32 to vector<144x128xf32>
    %12 = arith.maximumf %10, %11 : vector<144x128xf32>
    %13 = vector.shape_cast %12 : vector<144x128xf32> to vector<72x2x128xf32>
    %c0_6 = arith.constant 0 : index
    %c0_7 = arith.constant 0 : index
    %c0_8 = arith.constant 0 : index
    %14 = vector.load %arg4[%c0_6, %c0_7, %c0_8] : memref<72x128x128xf32, #tpu.memory_space<vmem>>, vector<72x128x128xf32>
    %cst_9 = arith.constant dense<0.000000e+00> : vector<72x2x128xf32>
    %15 = tpu.matmul %13, %14, %cst_9 {dimension_numbers = #tpu.dot_dimension_numbers<[2], [1], [1], [2], [0, 0, 0, 1, 1, 2], [0], [0]>} : vector<72x2x128xf32>, vector<72x128x128xf32>, vector<72x2x128xf32> -> vector<72x2x128xf32>
    %cst_10 = arith.constant dense<0.000000e+00> : vector<2x128xf32>
    %16 = vector.multi_reduction <add>, %15, %cst_10 [0] : vector<72x2x128xf32> to vector<2x128xf32>
    %c0_11 = arith.constant 0 : index
    %c0_12 = arith.constant 0 : index
    %17 = vector.load %arg5[%c0_11, %c0_12] : memref<1x128xf32, #tpu.memory_space<vmem>>, vector<1x128xf32>
    %18 = vector.broadcast %17 : vector<1x128xf32> to vector<2x128xf32>
    %19 = arith.addf %16, %18 : vector<2x128xf32>
    %c0_13 = arith.constant 0 : index
    %c0_14 = arith.constant 0 : index
    %20 = vector.load %arg6[%c0_13, %c0_14] : memref<2x128xf32, #tpu.memory_space<vmem>>, vector<2x128xf32>
    tpu.vector_store %arg6[%c0_13, %c0_14], %19 {strides = array<i32>} : memref<2x128xf32, #tpu.memory_space<vmem>>, vector<2x128xf32>,
    return
  }
  func.func @transform_0(%arg0: i32) -> (i32, i32) {
    %c0_i32 = arith.constant 0 : i32
    %c0_i32_0 = arith.constant 0 : i32
    %c0_i32_1 = arith.constant 0 : i32
    return %c0_i32, %c0_i32_0 : i32, i32
  }
  func.func @transform_1(%arg0: i32) -> (i32, i32) {
    %c0_i32 = arith.constant 0 : i32
    %c0_i32_0 = arith.constant 0 : i32
    %c0_i32_1 = arith.constant 0 : i32
    return %c0_i32, %c0_i32_0 : i32, i32
  }
  func.func @transform_2(%arg0: i32) -> (i32, i32) {
    %c0_i32 = arith.constant 0 : i32
    %c0_i32_0 = arith.constant 0 : i32
    %c0_i32_1 = arith.constant 0 : i32
    return %c0_i32, %c0_i32_0 : i32, i32
  }
  func.func @transform_3(%arg0: i32) -> (i32, i32, i32) {
    %c0_i32 = arith.constant 0 : i32
    %c0_i32_0 = arith.constant 0 : i32
    %c0_i32_1 = arith.constant 0 : i32
    %c0_i32_2 = arith.constant 0 : i32
    return %c0_i32, %c0_i32_0, %c0_i32_1 : i32, i32, i32
  }
  func.func @transform_4(%arg0: i32) -> (i32, i32) {
    %c0_i32 = arith.constant 0 : i32
    %c0_i32_0 = arith.constant 0 : i32
    %c0_i32_1 = arith.constant 0 : i32
    return %c0_i32, %c0_i32_0 : i32, i32
  }
  func.func @transform_5(%arg0: i32) -> (i32, i32) {
    %c0_i32 = arith.constant 0 : i32
    %c0_i32_0 = arith.constant 0 : i32
    %c0_i32_1 = arith.constant 0 : i32
    return %c0_i32, %c0_i32_0 : i32, i32
  }
}

</mosaic_0001>

<llo_original>
// kernel: intent_dl_forward.1
$region0: #{intent_dl_forward.1}
  #allocation0 [shape = 'u32[]', space=smem, size = 0x4, offset = 0x4, fixed_abs, tag = 'smem constant byte address 0x4 - core index']
  #allocation1 [shape = 'u32[144,128]{1,0:T(1,128)}', space=vmem, size = 0x12000, scoped, tag = 'internal scratch']
  %s0 = inlined_call_operand.vmem [shape: s32[144,1], index: 0, kind: input, shape index: {}]
  %s1 = inlined_call_operand.hbm [shape: f32[100,128], index: 1, kind: input, shape index: {}]
  %s2 = inlined_call_operand.hbm [shape: f32[1,128], index: 2, kind: input, shape index: {}]
  %s3 = inlined_call_operand.hbm [shape: f32[72,128,128], index: 3, kind: input, shape index: {}]
  %s4 = inlined_call_operand.hbm [shape: f32[1,128], index: 4, kind: input, shape index: {}]
  %s5 = inlined_call_operand.hbm [shape: f32[2,128], index: 5, kind: output, shape index: {}]
  %s6 = sld [smem:[#allocation0]]
  $region46: #{intent_dl_forward.1} parent=0
    _
  %s8 = ssub.s32 1, %s6
  %s9 = scalar_select 0, %s8, %s6
  $region1: #{intent_dl_forward.1} parent=0
    #allocation2 [shape = 'u8[53248]{0}', space=vmem, size = 0xd000, scoped, tag = 'input window, operand 1, single buffered']
    #allocation3 [shape = 's32[1]{0}', space=sflag, size = 0x4, scoped, tag = 'scoped memory for intent_dl_forward.1']
    #allocation4 [shape = 's32[1]{0}', space=sflag, size = 0x4, scoped, tag = 'scoped memory for intent_dl_forward.1']
    #allocation5 [shape = 'u8[512]{0}', space=vmem, size = 0x400, scoped, tag = 'input window, operand 2, single buffered']
    #allocation6 [shape = 's32[1]{0}', space=sflag, size = 0x4, scoped, tag = 'scoped memory for intent_dl_forward.1']
    #allocation7 [shape = 'u8[4718592]{0}', space=vmem, size = 0x480000, scoped, tag = 'input window, operand 3, single buffered']
    #allocation8 [shape = 'u8[512]{0}', space=vmem, size = 0x400, scoped, tag = 'input window, operand 4, single buffered']
    #allocation9 [shape = 's32[1]{0}', space=sflag, size = 0x4, scoped, tag = 'scoped memory for intent_dl_forward.1']
    #allocation10 [shape = 'u8[1024]{0}', space=vmem, size = 0x400, scoped, tag = 'output window, operand 0, single buffered']
    %10 = vsyncpa [#allocation3], 0
    %11 = vsyncpa [#allocation6], 0
    %12 = vsyncpa [#allocation9], 0
    %13 = vsyncpa [#allocation4], 0
    // Predicated region
    $region2: #{intent_dl_forward.1} parent=1 // pred_check
      _
    $region3: #{intent_dl_forward.1} parent=1 // pred_check_branch
      %15 = sbr.rel (0) target = $region5
    $region4: #{intent_dl_forward.1} parent=1 // pred_region
      _
    $region5: #{intent_dl_forward.1} parent=1 // pred_fallthru
      _
    // Predicated region
    $region6: #{intent_dl_forward.1} parent=1 // pred_check
      _
    $region7: #{intent_dl_forward.1} parent=1 // pred_check_branch
      %17 = sbr.rel (0) target = $region9
    $region8: #{intent_dl_forward.1} parent=1 // pred_region
      %s19 = ssub.s32 1664, 1664
      %20 = vsyncadd [#allocation3], %s19
      %s21 = sshll.u32 [#allocation2], 4
      %s22 = int_to_ptr.vmem [resolvable:$true] %s21
      %27 = dma.hbm_to_vmem [thread:$0]  %s1, 1664, %s22, [#allocation3], 128, 128, 8
    $region9: #{intent_dl_forward.1} parent=1 // pred_fallthru
      _
    // Predicated region
    $region10: #{intent_dl_forward.1} parent=1 // pred_check
      _
    $region11: #{intent_dl_forward.1} parent=1 // pred_check_branch
      %29 = sbr.rel (0) target = $region13
    $region12: #{intent_dl_forward.1} parent=1 // pred_region
      %s31 = ssub.s32 16, 16
      %32 = vsyncadd [#allocation6], %s31
      %s34 = sshll.u32 [#allocation5], 4
      %s35 = int_to_ptr.vmem [resolvable:$true] %s34
      %37 = dma.hbm_to_vmem [thread:$0]  %s2, 16, %s35, [#allocation6]
    $region13: #{intent_dl_forward.1} parent=1 // pred_fallthru
      _
    // Predicated region
    $region14: #{intent_dl_forward.1} parent=1 // pred_check
      _
    $region15: #{intent_dl_forward.1} parent=1 // pred_check_branch
      %39 = sbr.rel (0) target = $region17
    $region16: #{intent_dl_forward.1} parent=1 // pred_region
      %s41 = ssub.s32 147456, 147456
      %42 = vsyncadd [#allocation6], %s41
      %s43 = sshll.u32 [#allocation7], 4
      %s44 = int_to_ptr.vmem [resolvable:$true] %s43
      %49 = dma.hbm_to_vmem [thread:$0]  %s3, 147456, %s44, [#allocation6], 128, 128, 8
    $region17: #{intent_dl_forward.1} parent=1 // pred_fallthru
      _
    // Predicated region
    $region18: #{intent_dl_forward.1} parent=1 // pred_check
      _
    $region19: #{intent_dl_forward.1} parent=1 // pred_check_branch
      %51 = sbr.rel (0) target = $region21
    $region20: #{intent_dl_forward.1} parent=1 // pred_region
      %s53 = ssub.s32 16, 16
      %54 = vsyncadd [#allocation9], %s53
      %s56 = sshll.u32 [#allocation8], 4
      %s57 = int_to_ptr.vmem [resolvable:$true] %s56
      %59 = dma.hbm_to_vmem [thread:$0]  %s4, 16, %s57, [#allocation9]
    $region21: #{intent_dl_forward.1} parent=1 // pred_fallthru
      _
    // Predicated region
    $region22: #{intent_dl_forward.1} parent=1 // pred_check
      _
    $region23: #{intent_dl_forward.1} parent=1 // pred_check_branch
      %61 = sbr.rel (0) target = $region25
    $region24: #{intent_dl_forward.1} parent=1 // pred_region
      %62 = dma.done [#allocation3], 1664
    $region25: #{intent_dl_forward.1} parent=1 // pred_fallthru
      _
    // Predicated region
    $region26: #{intent_dl_forward.1} parent=1 // pred_check
      _
    $region27: #{intent_dl_forward.1} parent=1 // pred_check_branch
      %64 = sbr.rel (0) target = $region29
    $region28: #{intent_dl_forward.1} parent=1 // pred_region
      %65 = dma.done [#allocation6], 16
    $region29: #{intent_dl_forward.1} parent=1 // pred_fallthru
      _
    // Predicated region
    $region30: #{intent_dl_forward.1} parent=1 // pred_check
      _
    $region31: #{intent_dl_forward.1} parent=1 // pred_check_branch
      %67 = sbr.rel (0) target = $region33
    $region32: #{intent_dl_forward.1} parent=1 // pred_region
      %68 = dma.done [#allocation6], 147456
    $region33: #{intent_dl_forward.1} parent=1 // pred_fallthru
      _
    // Predicated region
    $region34: #{intent_dl_forward.1} parent=1 // pred_check
      _
    $region35: #{intent_dl_forward.1} parent=1 // pred_check_branch
      %70 = sbr.rel (0) target = $region37
    $region36: #{intent_dl_forward.1} parent=1 // pred_region
      %71 = dma.done [#allocation9], 16
    $region37: #{intent_dl_forward.1} parent=1 // pred_fallthru
      _
    %v72 = vld [vmem:[%s0] sm:$0xff]
    %v73 = vld [vmem:[%s0 + $0x8] sm:$0xff]
    %v74 = vld [vmem:[%s0 + $0x10] sm:$0xff]
    %v75 = vld [vmem:[%s0 + $0x18] sm:$0xff]
    %v76 = vld [vmem:[%s0 + $0x20] sm:$0xff]
    %v77 = vld [vmem:[%s0 + $0x28] sm:$0xff]
    %v78 = vld [vmem:[%s0 + $0x30] sm:$0xff]
    %v79 = vld [vmem:[%s0 + $0x38] sm:$0xff]
    %v80 = vld [vmem:[%s0 + $0x40] sm:$0xff]
    %v81 = vld [vmem:[%s0 + $0x48] sm:$0xff]
    %v82 = vld [vmem:[%s0 + $0x50] sm:$0xff]
    %v83 = vld [vmem:[%s0 + $0x58] sm:$0xff]
    %v84 = vld [vmem:[%s0 + $0x60] sm:$0xff]
    %v85 = vld [vmem:[%s0 + $0x68] sm:$0xff]
    %v86 = vld [vmem:[%s0 + $0x70] sm:$0xff]
    %v87 = vld [vmem:[%s0 + $0x78] sm:$0xff]
    %v88 = vld [vmem:[%s0 + $0x80] sm:$0xff]
    %v89 = vld [vmem:[%s0 + $0x88] sm:$0xff]
    %v90 = vlaneseq
    %v91 = vand.u32 %v90, 127
    %92 = vset.pattern.permute.xlu0 0
    %93 = vperm.xlu0 %92, %v72
    %v94 = vpop.permute.xlu0 %93
    %95 = vset.pattern.permute.xlu0 0
    %96 = vperm.xlu0 %95, %v73
    %v97 = vpop.permute.xlu0 %96
    %98 = vset.pattern.permute.xlu0 0
    %99 = vperm.xlu0 %98, %v74
    %v100 = vpop.permute.xlu0 %99
    %101 = vset.pattern.permute.xlu0 0
    %102 = vperm.xlu0 %101, %v75
    %v103 = vpop.permute.xlu0 %102
    %104 = vset.pattern.permute.xlu0 0
    %105 = vperm.xlu0 %104, %v76
    %v106 = vpop.permute.xlu0 %105
    %107 = vset.pattern.permute.xlu0 0
    %108 = vperm.xlu0 %107, %v77
    %v109 = vpop.permute.xlu0 %108
    %110 = vset.pattern.permute.xlu0 0
    %111 = vperm.xlu0 %110, %v78
    %v112 = vpop.permute.xlu0 %111
    %113 = vset.pattern.permute.xlu0 0
    %114 = vperm.xlu0 %113, %v79
    %v115 = vpop.permute.xlu0 %114
    %116 = vset.pattern.permute.xlu0 0
    %117 = vperm.xlu0 %116, %v80
    %v118 = vpop.permute.xlu0 %117
    %119 = vset.pattern.permute.xlu0 0
    %120 = vperm.xlu0 %119, %v81
    %v121 = vpop.permute.xlu0 %120
    %122 = vset.pattern.permute.xlu0 0
    %123 = vperm.xlu0 %122, %v82
    %v124 = vpop.permute.xlu0 %123
    %125 = vset.pattern.permute.xlu0 0
    %126 = vperm.xlu0 %125, %v83
    %v127 = vpop.permute.xlu0 %126
    %128 = vset.pattern.permute.xlu0 0
    %129 = vperm.xlu0 %128, %v84
    %v130 = vpop.permute.xlu0 %129
    %131 = vset.pattern.permute.xlu0 0
    %132 = vperm.xlu0 %131, %v85
    %v133 = vpop.permute.xlu0 %132
    %134 = vset.pattern.permute.xlu0 0
    %135 = vperm.xlu0 %134, %v86
    %v136 = vpop.permute.xlu0 %135
    %137 = vset.pattern.permute.xlu0 0
    %138 = vperm.xlu0 %137, %v87
    %v139 = vpop.permute.xlu0 %138
    %140 = vset.pattern.permute.xlu0 0
    %141 = vperm.xlu0 %140, %v88
    %v142 = vpop.permute.xlu0 %141
    %143 = vset.pattern.permute.xlu0 0
    %144 = vperm.xlu0 %143, %v89
    %v145 = vpop.permute.xlu0 %144
    %vm146 = vcmp.eq.s32.totalorder %v94, %v91
    %vm147 = vcmp.eq.s32.totalorder %v97, %v91
    %vm148 = vcmp.eq.s32.totalorder %v100, %v91
    %vm149 = vcmp.eq.s32.totalorder %v103, %v91
    %vm150 = vcmp.eq.s32.totalorder %v106, %v91
    %vm151 = vcmp.eq.s32.totalorder %v109, %v91
    %vm152 = vcmp.eq.s32.totalorder %v112, %v91
    %vm153 = vcmp.eq.s32.totalorder %v115, %v91
    %vm154 = vcmp.eq.s32.totalorder %v118, %v91
    %vm155 = vcmp.eq.s32.totalorder %v121, %v91
    %vm156 = vcmp.eq.s32.totalorder %v124, %v91
    %vm157 = vcmp.eq.s32.totalorder %v127, %v91
    %vm158 = vcmp.eq.s32.totalorder %v130, %v91
    %vm159 = vcmp.eq.s32.totalorder %v133, %v91
    %vm160 = vcmp.eq.s32.totalorder %v136, %v91
    %vm161 = vcmp.eq.s32.totalorder %v139, %v91
    %vm162 = vcmp.eq.s32.totalorder %v142, %v91
    %vm163 = vcmp.eq.s32.totalorder %v145, %v91
    %v164 = vsel %vm146, 1, 0
    %v165 = vsel %vm147, 1, 0
    %v166 = vsel %vm148, 1, 0
    %v167 = vsel %vm149, 1, 0
    %v168 = vsel %vm150, 1, 0
    %v169 = vsel %vm151, 1, 0
    %v170 = vsel %vm152, 1, 0
    %v171 = vsel %vm153, 1, 0
    %v172 = vsel %vm154, 1, 0
    %v173 = vsel %vm155, 1, 0
    %v174 = vsel %vm156, 1, 0
    %v175 = vsel %vm157, 1, 0
    %v176 = vsel %vm158, 1, 0
    %v177 = vsel %vm159, 1, 0
    %v178 = vsel %vm160, 1, 0
    %v179 = vsel %vm161, 1, 0
    %v180 = vsel %vm162, 1, 0
    %v181 = vsel %vm163, 1, 0
    %v182 = vcvt.s32.f32 %v164
    %v183 = vcvt.s32.f32 %v165
    %v184 = vcvt.s32.f32 %v166
    %v185 = vcvt.s32.f32 %v167
    %v186 = vcvt.s32.f32 %v168
    %v187 = vcvt.s32.f32 %v169
    %v188 = vcvt.s32.f32 %v170
    %v189 = vcvt.s32.f32 %v171
    %v190 = vcvt.s32.f32 %v172
    %v191 = vcvt.s32.f32 %v173
    %v192 = vcvt.s32.f32 %v174
    %v193 = vcvt.s32.f32 %v175
    %v194 = vcvt.s32.f32 %v176
    %v195 = vcvt.s32.f32 %v177
    %v196 = vcvt.s32.f32 %v178
    %v197 = vcvt.s32.f32 %v179
    %v198 = vcvt.s32.f32 %v180
    %v199 = vcvt.s32.f32 %v181
    %v200 = vld [vmem:[#allocation2] sm:$0xff]
    %v201 = vld [vmem:[#allocation2 + $0x8] sm:$0xff]
    %v202 = vld [vmem:[#allocation2 + $0x10] sm:$0xff]
    %v203 = vld [vmem:[#allocation2 + $0x18] sm:$0xff]
    %v204 = vld [vmem:[#allocation2 + $0x20] sm:$0xff]
    %v205 = vld [vmem:[#allocation2 + $0x28] sm:$0xff]
    %v206 = vld [vmem:[#allocation2 + $0x30] sm:$0xff]
    %v207 = vld [vmem:[#allocation2 + $0x38] sm:$0xff]
    %v208 = vld [vmem:[#allocation2 + $0x40] sm:$0xff]
    %v209 = vld [vmem:[#allocation2 + $0x48] sm:$0xff]
    %v210 = vld [vmem:[#allocation2 + $0x50] sm:$0xff]
    %v211 = vld [vmem:[#allocation2 + $0x58] sm:$0xff]
    %v212 = vld [vmem:[#allocation2 + $0x60] sm:$0xf]
    %v213 = vld [vmem:[#allocation5] sm:$0x1]
    %v215 = vlaneseq
    %v216 = vshrl.u32 %v215, 7
    %v217 = vsub.s32 0, %v216
    %v218 = vrot.slane %v213, %v217
    %vm220 = vcmask 818176
    %v222 = vsel %vm220, %v182, 0
    %v225 = vsel %vm220, %v183, 0
    %v228 = vsel %vm220, %v184, 0
    %v231 = vsel %vm220, %v185, 0
    %v234 = vsel %vm220, %v186, 0
    %v237 = vsel %vm220, %v187, 0
    %v240 = vsel %vm220, %v188, 0
    %v243 = vsel %vm220, %v189, 0
    %v246 = vsel %vm220, %v190, 0
    %v249 = vsel %vm220, %v191, 0
    %v252 = vsel %vm220, %v192, 0
    %v255 = vsel %vm220, %v193, 0
    %v258 = vsel %vm220, %v194, 0
    %v261 = vsel %vm220, %v195, 0
    %v264 = vsel %vm220, %v196, 0
    %v267 = vsel %vm220, %v197, 0
    %v270 = vsel %vm220, %v198, 0
    %v273 = vsel %vm220, %v199, 0
    %vm275 = vcmask 1043456
    %v277 = vsel %vm275, %v212, 0
    %279 = vmatprep.subr.mxu0 0.0
    %280 = vmatpush1.msra.mxu0 %v200
    %281 = vmatprep.subr.mxu0 0.0
    %282 = vmatpush1.msra.mxu0 %v201
    %283 = vmatprep.subr.mxu0 0.0
    %284 = vmatpush1.msra.mxu0 %v202
    %285 = vmatprep.subr.mxu0 0.0
    %286 = vmatpush1.msra.mxu0 %v203
    %287 = vmatprep.subr.mxu0 0.0
    %288 = vmatpush1.msra.mxu0 %v204
    %289 = vmatprep.subr.mxu0 0.0
    %290 = vmatpush1.msra.mxu0 %v205
    %291 = vmatprep.subr.mxu0 0.0
    %292 = vmatpush1.msra.mxu0 %v206
    %293 = vmatprep.subr.mxu0 0.0
    %294 = vmatpush1.msra.mxu0 %v207
    %295 = vmatprep.subr.mxu0 0.0
    %296 = vmatpush1.msra.mxu0 %v208
    %297 = vmatprep.subr.mxu0 0.0
    %298 = vmatpush1.msra.mxu0 %v209
    %299 = vmatprep.subr.mxu0 0.0
    %300 = vmatpush1.msra.mxu0 %v210
    %301 = vmatprep.subr.mxu0 0.0
    %302 = vmatpush1.msra.mxu0 %v211
    %303 = vmatprep.subr.mxu0 0.0
    %304 = vmatpush1.msra.mxu0 %v277
    %305 = vmatprep.subr.mxu0 0.0
    %306 = vmatpush1.msra.mxu0 0.0
    %307 = vmatprep.subr.mxu0 0.0
    %308 = vmatpush1.msra.mxu0 0.0
    %309 = vmatprep.subr.mxu0 0.0
    %310 = vmatpush1.msra.mxu0 0.0
    %311 = vmatprep.subr.mxu0 0.0
    %312 = vmatpush1.msra.mxu0 0.0
    %313 = vmatprep.subr.mxu0 0.0
    %314 = vmatpush1.msra.mxu0 0.0
    %315 = vmatprep.subr.mxu0 0.0
    %316 = vmatpush1.msra.mxu0 0.0
    %317 = vmatprep.subr.mxu0 0.0
    %318 = vmatpush1.msra.mxu0 0.0
    %319 = vmatprep.subr.mxu0 0.0
    %320 = vmatpush1.msra.mxu0 0.0
    %321 = vmatprep.subr.mxu0 0.0
    %322 = vmatpush1.msra.mxu0 0.0
    %323 = vmatprep.subr.mxu0 0.0
    %324 = vmatpush1.msra.mxu0 0.0
    %325 = vmatprep.subr.mxu0 0.0
    %326 = vmatpush1.msra.mxu0 0.0
    %327 = vmatprep.subr.mxu0 0.0
    %328 = vmatpush1.msra.mxu0 0.0
    %329 = vmatprep.subr.mxu0 0.0
    %330 = vmatpush1.msra.mxu0 0.0
    %331 = vmatprep.subr.mxu0 0.0
    %332 = vmatpush1.msra.mxu0 0.0
    %333 = vmatprep.subr.mxu0 0.0
    %334 = vmatpush1.msra.mxu0 0.0
    %335 = vmatprep.subr.mxu0 0.0
    %336 = vmatpush1.msra.mxu0 0.0
    %337 = vmatprep.subr.mxu0 0.0
    %338 = vmatpush1.msra.mxu0 0.0
    %339 = vmatprep.subr.mxu0 0.0
    %340 = vmatpush1.msra.mxu0 0.0
    %341 = vmatprep.subr.mxu0 0.0
    %342 = vmatpush1.msra.mxu0 0.0
    %343 = vmatprep.mubr.f32.mxu0 0.0
    %344 = vmatmul.mubr.f32.gmra.mrb[0].mxu0 %v222
    %v345 = vpop.f32.mrb[0].mxu0
    %v346 = vadd.f32 %v218, %v345
    %v347 = vpop.f32.mrb[0].mxu0
    %348 = vmatprep.mubr.f32.mxu0 0.0
    %349 = vmatmul.mubr.f32.gmra.mrb[0].mxu0 %v225
    %v350 = vpop.f32.mrb[0].mxu0
    %v351 = vadd.f32 %v218, %v350
    %v352 = vpop.f32.mrb[0].mxu0
    %353 = vmatprep.mubr.f32.mxu0 0.0
    %354 = vmatmul.mubr.f32.gmra.mrb[0].mxu0 %v228
    %v355 = vpop.f32.mrb[0].mxu0
    %v356 = vadd.f32 %v218, %v355
    %v357 = vpop.f32.mrb[0].mxu0
    %358 = vmatprep.mubr.f32.mxu0 0.0
    %359 = vmatmul.mubr.f32.gmra.mrb[0].mxu0 %v231
    %v360 = vpop.f32.mrb[0].mxu0
    %v361 = vadd.f32 %v218, %v360
    %v362 = vpop.f32.mrb[0].mxu0
    %363 = vmatprep.mubr.f32.mxu0 0.0
    %364 = vmatmul.mubr.f32.gmra.mrb[0].mxu0 %v234
    %v365 = vpop.f32.mrb[0].mxu0
    %v366 = vadd.f32 %v218, %v365
    %v367 = vpop.f32.mrb[0].mxu0
    %368 = vmatprep.mubr.f32.mxu0 0.0
    %369 = vmatmul.mubr.f32.gmra.mrb[0].mxu0 %v237
    %v370 = vpop.f32.mrb[0].mxu0
    %v371 = vadd.f32 %v218, %v370
    %v372 = vpop.f32.mrb[0].mxu0
    %373 = vmatprep.mubr.f32.mxu0 0.0
    %374 = vmatmul.mubr.f32.gmra.mrb[0].mxu0 %v240
    %v375 = vpop.f32.mrb[0].mxu0
    %v376 = vadd.f32 %v218, %v375
    %v377 = vpop.f32.mrb[0].mxu0
    %378 = vmatprep.mubr.f32.mxu0 0.0
    %379 = vmatmul.mubr.f32.gmra.mrb[0].mxu0 %v243
    %v380 = vpop.f32.mrb[0].mxu0
    %v381 = vadd.f32 %v218, %v380
    %v382 = vpop.f32.mrb[0].mxu0
    %383 = vmatprep.mubr.f32.mxu0 0.0
    %384 = vmatmul.mubr.f32.gmra.mrb[0].mxu0 %v246
    %v385 = vpop.f32.mrb[0].mxu0
    %v386 = vadd.f32 %v218, %v385
    %v387 = vpop.f32.mrb[0].mxu0
    %388 = vmatprep.mubr.f32.mxu0 0.0
    %389 = vmatmul.mubr.f32.gmra.mrb[0].mxu0 %v249
    %v390 = vpop.f32.mrb[0].mxu0
    %v391 = vadd.f32 %v218, %v390
    %v392 = vpop.f32.mrb[0].mxu0
    %393 = vmatprep.mubr.f32.mxu0 0.0
    %394 = vmatmul.mubr.f32.gmra.mrb[0].mxu0 %v252
    %v395 = vpop.f32.mrb[0].mxu0
    %v396 = vadd.f32 %v218, %v395
    %v397 = vpop.f32.mrb[0].mxu0
    %398 = vmatprep.mubr.f32.mxu0 0.0
    %399 = vmatmul.mubr.f32.gmra.mrb[0].mxu0 %v255
    %v400 = vpop.f32.mrb[0].mxu0
    %v401 = vadd.f32 %v218, %v400
    %v402 = vpop.f32.mrb[0].mxu0
    %403 = vmatprep.mubr.f32.mxu0 0.0
    %404 = vmatmul.mubr.f32.gmra.mrb[0].mxu0 %v258
    %v405 = vpop.f32.mrb[0].mxu0
    %v406 = vadd.f32 %v218, %v405
    %v407 = vpop.f32.mrb[0].mxu0
    %408 = vmatprep.mubr.f32.mxu0 0.0
    %409 = vmatmul.mubr.f32.gmra.mrb[0].mxu0 %v261
    %v410 = vpop.f32.mrb[0].mxu0
    %v411 = vadd.f32 %v218, %v410
    %v412 = vpop.f32.mrb[0].mxu0
    %413 = vmatprep.mubr.f32.mxu0 0.0
    %414 = vmatmul.mubr.f32.gmra.mrb[0].mxu0 %v264
    %v415 = vpop.f32.mrb[0].mxu0
    %v416 = vadd.f32 %v218, %v415
    %v417 = vpop.f32.mrb[0].mxu0
    %418 = vmatprep.mubr.f32.mxu0 0.0
    %419 = vmatmul.mubr.f32.gmra.mrb[0].mxu0 %v267
    %v420 = vpop.f32.mrb[0].mxu0
    %v421 = vadd.f32 %v218, %v420
    %v422 = vpop.f32.mrb[0].mxu0
    %423 = vmatprep.mubr.f32.mxu0 0.0
    %424 = vmatmul.mubr.f32.gmra.mrb[0].mxu0 %v270
    %v425 = vpop.f32.mrb[0].mxu0
    %v426 = vadd.f32 %v218, %v425
    %v427 = vpop.f32.mrb[0].mxu0
    %428 = vmatprep.mubr.f32.mxu0 0.0
    %429 = vmatmul.mubr.f32.gmra.mrb[0].mxu0 %v273
    %v430 = vpop.f32.mrb[0].mxu0
    %v431 = vadd.f32 %v218, %v430
    %v432 = vpop.f32.mrb[0].mxu0
    %433 = vdwg.mxu0
    %v434 = vmax.f32 %v346, 0.0
    %v435 = vmax.f32 %v351, 0.0
    %v436 = vmax.f32 %v356, 0.0
    %v437 = vmax.f32 %v361, 0.0
    %v438 = vmax.f32 %v366, 0.0
    %v439 = vmax.f32 %v371, 0.0
    %v440 = vmax.f32 %v376, 0.0
    %v441 = vmax.f32 %v381, 0.0
    %v442 = vmax.f32 %v386, 0.0
    %v443 = vmax.f32 %v391, 0.0
    %v444 = vmax.f32 %v396, 0.0
    %v445 = vmax.f32 %v401, 0.0
    %v446 = vmax.f32 %v406, 0.0
    %v447 = vmax.f32 %v411, 0.0
    %v448 = vmax.f32 %v416, 0.0
    %v449 = vmax.f32 %v421, 0.0
    %v450 = vmax.f32 %v426, 0.0
    %v451 = vmax.f32 %v431, 0.0
    %v470 = vcombine.high %v434, %v434
    %v472 = vunpack.c.l.s4 1983009808
    %v473 = vunpack.c.0.s8 %v472
    %v474 = vlaneseq
    %v475 = vshrl.u32 %v474, 7
    %v476 = vsub.s32 %v473, %v475
    %v477 = vrot.slane %v434, %v476
    %v479 = vunpack.c.l.s4 1983009808
    %v480 = vunpack.c.0.s8 %v479
    %v481 = vlaneseq
    %v482 = vshrl.u32 %v481, 7
    %v483 = vsub.s32 %v480, %v482
    %v484 = vrot.slane %v470, %v483
    %v485 = vcombine.high %v477, %v477
    %v486 = vcombine.high %v484, %v484
    %v487 = vcombine.high %v435, %v435
    %v489 = vunpack.c.l.s4 1983009808
    %v490 = vunpack.c.0.s8 %v489
    %v491 = vlaneseq
    %v492 = vshrl.u32 %v491, 7
    %v493 = vsub.s32 %v490, %v492
    %v494 = vrot.slane %v435, %v493
    %v496 = vunpack.c.l.s4 1983009808
    %v497 = vunpack.c.0.s8 %v496
    %v498 = vlaneseq
    %v499 = vshrl.u32 %v498, 7
    %v500 = vsub.s32 %v497, %v499
    %v501 = vrot.slane %v487, %v500
    %v502 = vcombine.high %v494, %v494
    %v503 = vcombine.high %v501, %v501
    %v504 = vcombine.high %v436, %v436
    %v506 = vunpack.c.l.s4 1983009808
    %v507 = vunpack.c.0.s8 %v506
    %v508 = vlaneseq
    %v509 = vshrl.u32 %v508, 7
    %v510 = vsub.s32 %v507, %v509
    %v511 = vrot.slane %v436, %v510
    %v513 = vunpack.c.l.s4 1983009808
    %v514 = vunpack.c.0.s8 %v513
    %v515 = vlaneseq
    %v516 = vshrl.u32 %v515, 7
    %v517 = vsub.s32 %v514, %v516
    %v518 = vrot.slane %v504, %v517
    %v519 = vcombine.high %v511, %v511
    %v520 = vcombine.high %v518, %v518
    %v521 = vcombine.high %v437, %v437
    %v523 = vunpack.c.l.s4 1983009808
    %v524 = vunpack.c.0.s8 %v523
    %v525 = vlaneseq
    %v526 = vshrl.u32 %v525, 7
    %v527 = vsub.s32 %v524, %v526
    %v528 = vrot.slane %v437, %v527
    %v530 = vunpack.c.l.s4 1983009808
    %v531 = vunpack.c.0.s8 %v530
    %v532 = vlaneseq
    %v533 = vshrl.u32 %v532, 7
    %v534 = vsub.s32 %v531, %v533
    %v535 = vrot.slane %v521, %v534
    %v536 = vcombine.high %v528, %v528
    %v537 = vcombine.high %v535, %v535
    %v538 = vcombine.high %v438, %v438
    %v540 = vunpack.c.l.s4 1983009808
    %v541 = vunpack.c.0.s8 %v540
    %v542 = vlaneseq
    %v543 = vshrl.u32 %v542, 7
    %v544 = vsub.s32 %v541, %v543
    %v545 = vrot.slane %v438, %v544
    %v547 = vunpack.c.l.s4 1983009808
    %v548 = vunpack.c.0.s8 %v547
    %v549 = vlaneseq
    %v550 = vshrl.u32 %v549, 7
    %v551 = vsub.s32 %v548, %v550
    %v552 = vrot.slane %v538, %v551
    %v553 = vcombine.high %v545, %v545
    %v554 = vcombine.high %v552, %v552
    %v555 = vcombine.high %v439, %v439
    %v557 = vunpack.c.l.s4 1983009808
    %v558 = vunpack.c.0.s8 %v557
    %v559 = vlaneseq
    %v560 = vshrl.u32 %v559, 7
    %v561 = vsub.s32 %v558, %v560
    %v562 = vrot.slane %v439, %v561
    %v564 = vunpack.c.l.s4 1983009808
    %v565 = vunpack.c.0.s8 %v564
    %v566 = vlaneseq
    %v567 = vshrl.u32 %v566, 7
    %v568 = vsub.s32 %v565, %v567
    %v569 = vrot.slane %v555, %v568
    %v570 = vcombine.high %v562, %v562
    %v571 = vcombine.high %v569, %v569
    %v572 = vcombine.high %v440, %v440
    %v574 = vunpack.c.l.s4 1983009808
    %v575 = vunpack.c.0.s8 %v574
    %v576 = vlaneseq
    %v577 = vshrl.u32 %v576, 7
    %v578 = vsub.s32 %v575, %v577
    %v579 = vrot.slane %v440, %v578
    %v581 = vunpack.c.l.s4 1983009808
    %v582 = vunpack.c.0.s8 %v581
    %v583 = vlaneseq
    %v584 = vshrl.u32 %v583, 7
    %v585 = vsub.s32 %v582, %v584
    %v586 = vrot.slane %v572, %v585
    %v587 = vcombine.high %v579, %v579
    %v588 = vcombine.high %v586, %v586
    %v589 = vcombine.high %v441, %v441
    %v591 = vunpack.c.l.s4 1983009808
    %v592 = vunpack.c.0.s8 %v591
    %v593 = vlaneseq
    %v594 = vshrl.u32 %v593, 7
    %v595 = vsub.s32 %v592, %v594
    %v596 = vrot.slane %v441, %v595
    %v598 = vunpack.c.l.s4 1983009808
    %v599 = vunpack.c.0.s8 %v598
    %v600 = vlaneseq
    %v601 = vshrl.u32 %v600, 7
    %v602 = vsub.s32 %v599, %v601
    %v603 = vrot.slane %v589, %v602
    %v604 = vcombine.high %v596, %v596
    %v605 = vcombine.high %v603, %v603
    %v606 = vcombine.high %v442, %v442
    %v608 = vunpack.c.l.s4 1983009808
    %v609 = vunpack.c.0.s8 %v608
    %v610 = vlaneseq
    %v611 = vshrl.u32 %v610, 7
    %v612 = vsub.s32 %v609, %v611
    %v613 = vrot.slane %v442, %v612
    %v615 = vunpack.c.l.s4 1983009808
    %v616 = vunpack.c.0.s8 %v615
    %v617 = vlaneseq
    %v618 = vshrl.u32 %v617, 7
    %v619 = vsub.s32 %v616, %v618
    %v620 = vrot.slane %v606, %v619
    %v621 = vcombine.high %v613, %v613
    %v622 = vcombine.high %v620, %v620
    %v623 = vcombine.high %v443, %v443
    %v625 = vunpack.c.l.s4 1983009808
    %v626 = vunpack.c.0.s8 %v625
    %v627 = vlaneseq
    %v628 = vshrl.u32 %v627, 7
    %v629 = vsub.s32 %v626, %v628
    %v630 = vrot.slane %v443, %v629
    %v632 = vunpack.c.l.s4 1983009808
    %v633 = vunpack.c.0.s8 %v632
    %v634 = vlaneseq
    %v635 = vshrl.u32 %v634, 7
    %v636 = vsub.s32 %v633, %v635
    %v637 = vrot.slane %v623, %v636
    %v638 = vcombine.high %v630, %v630
    %v639 = vcombine.high %v637, %v637
    %v640 = vcombine.high %v444, %v444
    %v642 = vunpack.c.l.s4 1983009808
    %v643 = vunpack.c.0.s8 %v642
    %v644 = vlaneseq
    %v645 = vshrl.u32 %v644, 7
    %v646 = vsub.s32 %v643, %v645
    %v647 = vrot.slane %v444, %v646
    %v649 = vunpack.c.l.s4 1983009808
    %v650 = vunpack.c.0.s8 %v649
    %v651 = vlaneseq
    %v652 = vshrl.u32 %v651, 7
    %v653 = vsub.s32 %v650, %v652
    %v654 = vrot.slane %v640, %v653
    %v655 = vcombine.high %v647, %v647
    %v656 = vcombine.high %v654, %v654
    %v657 = vcombine.high %v445, %v445
    %v659 = vunpack.c.l.s4 1983009808
    %v660 = vunpack.c.0.s8 %v659
    %v661 = vlaneseq
    %v662 = vshrl.u32 %v661, 7
    %v663 = vsub.s32 %v660, %v662
    %v664 = vrot.slane %v445, %v663
    %v666 = vunpack.c.l.s4 1983009808
    %v667 = vunpack.c.0.s8 %v666
    %v668 = vlaneseq
    %v669 = vshrl.u32 %v668, 7
    %v670 = vsub.s32 %v667, %v669
    %v671 = vrot.slane %v657, %v670
    %v672 = vcombine.high %v664, %v664
    %v673 = vcombine.high %v671, %v671
    %v674 = vcombine.high %v446, %v446
    %v676 = vunpack.c.l.s4 1983009808
    %v677 = vunpack.c.0.s8 %v676
    %v678 = vlaneseq
    %v679 = vshrl.u32 %v678, 7
    %v680 = vsub.s32 %v677, %v679
    %v681 = vrot.slane %v446, %v680
    %v683 = vunpack.c.l.s4 1983009808
    %v684 = vunpack.c.0.s8 %v683
    %v685 = vlaneseq
    %v686 = vshrl.u32 %v685, 7
    %v687 = vsub.s32 %v684, %v686
    %v688 = vrot.slane %v674, %v687
    %v689 = vcombine.high %v681, %v681
    %v690 = vcombine.high %v688, %v688
    %v691 = vcombine.high %v447, %v447
    %v693 = vunpack.c.l.s4 1983009808
    %v694 = vunpack.c.0.s8 %v693
    %v695 = vlaneseq
    %v696 = vshrl.u32 %v695, 7
    %v697 = vsub.s32 %v694, %v696
    %v698 = vrot.slane %v447, %v697
    %v700 = vunpack.c.l.s4 1983009808
    %v701 = vunpack.c.0.s8 %v700
    %v702 = vlaneseq
    %v703 = vshrl.u32 %v702, 7
    %v704 = vsub.s32 %v701, %v703
    %v705 = vrot.slane %v691, %v704
    %v706 = vcombine.high %v698, %v698
    %v707 = vcombine.high %v705, %v705
    %v708 = vcombine.high %v448, %v448
    %v710 = vunpack.c.l.s4 1983009808
    %v711 = vunpack.c.0.s8 %v710
    %v712 = vlaneseq
    %v713 = vshrl.u32 %v712, 7
    %v714 = vsub.s32 %v711, %v713
    %v715 = vrot.slane %v448, %v714
    %v717 = vunpack.c.l.s4 1983009808
    %v718 = vunpack.c.0.s8 %v717
    %v719 = vlaneseq
    %v720 = vshrl.u32 %v719, 7
    %v721 = vsub.s32 %v718, %v720
    %v722 = vrot.slane %v708, %v721
    %v723 = vcombine.high %v715, %v715
    %v724 = vcombine.high %v722, %v722
    %v725 = vcombine.high %v449, %v449
    %v727 = vunpack.c.l.s4 1983009808
    %v728 = vunpack.c.0.s8 %v727
    %v729 = vlaneseq
    %v730 = vshrl.u32 %v729, 7
    %v731 = vsub.s32 %v728, %v730
    %v732 = vrot.slane %v449, %v731
    %v734 = vunpack.c.l.s4 1983009808
    %v735 = vunpack.c.0.s8 %v734
    %v736 = vlaneseq
    %v737 = vshrl.u32 %v736, 7
    %v738 = vsub.s32 %v735, %v737
    %v739 = vrot.slane %v725, %v738
    %v740 = vcombine.high %v732, %v732
    %v741 = vcombine.high %v739, %v739
    %v742 = vcombine.high %v450, %v450
    %v744 = vunpack.c.l.s4 1983009808
    %v745 = vunpack.c.0.s8 %v744
    %v746 = vlaneseq
    %v747 = vshrl.u32 %v746, 7
    %v748 = vsub.s32 %v745, %v747
    %v749 = vrot.slane %v450, %v748
    %v751 = vunpack.c.l.s4 1983009808
    %v752 = vunpack.c.0.s8 %v751
    %v753 = vlaneseq
    %v754 = vshrl.u32 %v753, 7
    %v755 = vsub.s32 %v752, %v754
    %v756 = vrot.slane %v742, %v755
    %v757 = vcombine.high %v749, %v749
    %v758 = vcombine.high %v756, %v756
    %v759 = vcombine.high %v451, %v451
    %v761 = vunpack.c.l.s4 1983009808
    %v762 = vunpack.c.0.s8 %v761
    %v763 = vlaneseq
    %v764 = vshrl.u32 %v763, 7
    %v765 = vsub.s32 %v762, %v764
    %v766 = vrot.slane %v451, %v765
    %v768 = vunpack.c.l.s4 1983009808
    %v769 = vunpack.c.0.s8 %v768
    %v770 = vlaneseq
    %v771 = vshrl.u32 %v770, 7
    %v772 = vsub.s32 %v769, %v771
    %v773 = vrot.slane %v759, %v772
    %v774 = vcombine.high %v766, %v766
    %v775 = vcombine.high %v773, %v773
    %v848 = vld [vmem:[#allocation7] sm:$0xff]
    %v849 = vld [vmem:[#allocation7 + $0x8] sm:$0xff]
    %v850 = vld [vmem:[#allocation7 + $0x10] sm:$0xff]
    %v851 = vld [vmem:[#allocation7 + $0x18] sm:$0xff]
    %v852 = vld [vmem:[#allocation7 + $0x20] sm:$0xff]
    %v853 = vld [vmem:[#allocation7 + $0x28] sm:$0xff]
    %v854 = vld [vmem:[#allocation7 + $0x30] sm:$0xff]
    %v855 = vld [vmem:[#allocation7 + $0x38] sm:$0xff]
    %v856 = vld [vmem:[#allocation7 + $0x40] sm:$0xff]
    %v857 = vld [vmem:[#allocation7 + $0x48] sm:$0xff]
    %v858 = vld [vmem:[#allocation7 + $0x50] sm:$0xff]
    %v859 = vld [vmem:[#allocation7 + $0x58] sm:$0xff]
    %v860 = vld [vmem:[#allocation7 + $0x60] sm:$0xff]
    %v861 = vld [vmem:[#allocation7 + $0x68] sm:$0xff]
    %v862 = vld [vmem:[#allocation7 + $0x70] sm:$0xff]
    %v863 = vld [vmem:[#allocation7 + $0x78] sm:$0xff]
    %v864 = vld [vmem:[#allocation7 + $0x80] sm:$0xff]
    %v865 = vld [vmem:[#allocation7 + $0x88] sm:$0xff]
    %v866 = vld [vmem:[#allocation7 + $0x90] sm:$0xff]
    %v867 = vld [vmem:[#allocation7 + $0x98] sm:$0xff]
    %v868 = vld [vmem:[#allocation7 + $0xa0] sm:$0xff]
    %v869 = vld [vmem:[#allocation7 + $0xa8] sm:$0xff]
    %v870 = vld [vmem:[#allocation7 + $0xb0] sm:$0xff]
    %v871 = vld [vmem:[#allocation7 + $0xb8] sm:$0xff]
    %v872 = vld [vmem:[#allocation7 + $0xc0] sm:$0xff]
    %v873 = vld [vmem:[#allocation7 + $0xc8] sm:$0xff]
    %v874 = vld [vmem:[#allocation7 + $0xd0] sm:$0xff]
    %v875 = vld [vmem:[#allocation7 + $0xd8] sm:$0xff]
    %v876 = vld [vmem:[#allocation7 + $0xe0] sm:$0xff]
    %v877 = vld [vmem:[#allocation7 + $0xe8] sm:$0xff]
    %v878 = vld [vmem:[#allocation7 + $0xf0] sm:$0xff]
    %v879 = vld [vmem:[#allocation7 + $0xf8] sm:$0xff]
    %v880 = vld [vmem:[#allocation7 + $0x100] sm:$0xff]
    %v881 = vld [vmem:[#allocation7 + $0x108] sm:$0xff]
    %v882 = vld [vmem:[#allocation7 + $0x110] sm:$0xff]
    %v883 = vld [vmem:[#allocation7 + $0x118] sm:$0xff]
    %v884 = vld [vmem:[#allocation7 + $0x120] sm:$0xff]
    %v885 = vld [vmem:[#allocation7 + $0x128] sm:$0xff]
    %v886 = vld [vmem:[#allocation7 + $0x130] sm:$0xff]
    %v887 = vld [vmem:[#allocation7 + $0x138] sm:$0xff]
    %v888 = vld [vmem:[#allocation7 + $0x140] sm:$0xff]
    %v889 = vld [vmem:[#allocation7 + $0x148] sm:$0xff]
    %v890 = vld [vmem:[#allocation7 + $0x150] sm:$0xff]
    %v891 = vld [vmem:[#allocation7 + $0x158] sm:$0xff]
    %v892 = vld [vmem:[#allocation7 + $0x160] sm:$0xff]
    %v893 = vld [vmem:[#allocation7 + $0x168] sm:$0xff]
    %v894 = vld [vmem:[#allocation7 + $0x170] sm:$0xff]
    %v895 = vld [vmem:[#allocation7 + $0x178] sm:$0xff]
    %v896 = vld [vmem:[#allocation7 + $0x180] sm:$0xff]
    %v897 = vld [vmem:[#allocation7 + $0x188] sm:$0xff]
    %v898 = vld [vmem:[#allocation7 + $0x190] sm:$0xff]
    %v899 = vld [vmem:[#allocation7 + $0x198] sm:$0xff]
    %v900 = vld [vmem:[#allocation7 + $0x1a0] sm:$0xff]
    %v901 = vld [vmem:[#allocation7 + $0x1a8] sm:$0xff]
    %v902 = vld [vmem:[#allocation7 + $0x1b0] sm:$0xff]
    %v903 = vld [vmem:[#allocation7 + $0x1b8] sm:$0xff]
    %v904 = vld [vmem:[#allocation7 + $0x1c0] sm:$0xff]
    %v905 = vld [vmem:[#allocation7 + $0x1c8] sm:$0xff]
    %v906 = vld [vmem:[#allocation7 + $0x1d0] sm:$0xff]
    %v907 = vld [vmem:[#allocation7 + $0x1d8] sm:$0xff]
    %v908 = vld [vmem:[#allocation7 + $0x1e0] sm:$0xff]
    %v909 = vld [vmem:[#allocation7 + $0x1e8] sm:$0xff]
    %v910 = vld [vmem:[#allocation7 + $0x1f0] sm:$0xff]
    %v911 = vld [vmem:[#allocation7 + $0x1f8] sm:$0xff]
    %v912 = vld [vmem:[#allocation7 + $0x200] sm:$0xff]
    %v913 = vld [vmem:[#allocation7 + $0x208] sm:$0xff]
    %v914 = vld [vmem:[#allocation7 + $0x210] sm:$0xff]
    %v915 = vld [vmem:[#allocation7 + $0x218] sm:$0xff]
    %v916 = vld [vmem:[#allocation7 + $0x220] sm:$0xff]
    %v917 = vld [vmem:[#allocation7 + $0x228] sm:$0xff]
    %v918 = vld [vmem:[#allocation7 + $0x230] sm:$0xff]
    %v919 = vld [vmem:[#allocation7 + $0x238] sm:$0xff]
    %v920 = vld [vmem:[#allocation7 + $0x240] sm:$0xff]
    %v921 = vld [vmem:[#allocation7 + $0x248] sm:$0xff]
    %v922 = vld [vmem:[#allocation7 + $0x250] sm:$0xff]
    %v923 = vld [vmem:[#allocation7 + $0x258] sm:$0xff]
    %v924 = vld [vmem:[#allocation7 + $0x260] sm:$0xff]
    %v925 = vld [vmem:[#allocation7 + $0x268] sm:$0xff]
    %v926 = vld [vmem:[#allocation7 + $0x270] sm:$0xff]
    %v927 = vld [vmem:[#allocation7 + $0x278] sm:$0xff]
    %v928 = vld [vmem:[#allocation7 + $0x280] sm:$0xff]
    %v929 = vld [vmem:[#allocation7 + $0x288] sm:$0xff]
    %v930 = vld [vmem:[#allocation7 + $0x290] sm:$0xff]
    %v931 = vld [vmem:[#allocation7 + $0x298] sm:$0xff]
    %v932 = vld [vmem:[#allocation7 + $0x2a0] sm:$0xff]
    %v933 = vld [vmem:[#allocation7 + $0x2a8] sm:$0xff]
    %v934 = vld [vmem:[#allocation7 + $0x2b0] sm:$0xff]
    %v935 = vld [vmem:[#allocation7 + $0x2b8] sm:$0xff]
    %v936 = vld [vmem:[#allocation7 + $0x2c0] sm:$0xff]
    %v937 = vld [vmem:[#allocation7 + $0x2c8] sm:$0xff]
    %v938 = vld [vmem:[#allocation7 + $0x2d0] sm:$0xff]
    %v939 = vld [vmem:[#allocation7 + $0x2d8] sm:$0xff]
    %v940 = vld [vmem:[#allocation7 + $0x2e0] sm:$0xff]
    %v941 = vld [vmem:[#allocation7 + $0x2e8] sm:$0xff]
    %v942 = vld [vmem:[#allocation7 + $0x2f0] sm:$0xff]
    %v943 = vld [vmem:[#allocation7 + $0x2f8] sm:$0xff]
    %v944 = vld [vmem:[#allocation7 + $0x300] sm:$0xff]
    %v945 = vld [vmem:[#allocation7 + $0x308] sm:$0xff]
    %v946 = vld [vmem:[#allocation7 + $0x310] sm:$0xff]
    %v947 = vld [vmem:[#allocation7 + $0x318] sm:$0xff]
    %v948 = vld [vmem:[#allocation7 + $0x320] sm:$0xff]
    %v949 = vld [vmem:[#allocation7 + $0x328] sm:$0xff]
    %v950 = vld [vmem:[#allocation7 + $0x330] sm:$0xff]
    %v951 = vld [vmem:[#allocation7 + $0x338] sm:$0xff]
    %v952 = vld [vmem:[#allocation7 + $0x340] sm:$0xff]
    %v953 = vld [vmem:[#allocation7 + $0x348] sm:$0xff]
    %v954 = vld [vmem:[#allocation7 + $0x350] sm:$0xff]
    %v955 = vld [vmem:[#allocation7 + $0x358] sm:$0xff]
    %v956 = vld [vmem:[#allocation7 + $0x360] sm:$0xff]
    %v957 = vld [vmem:[#allocation7 + $0x368] sm:$0xff]
    %v958 = vld [vmem:[#allocation7 + $0x370] sm:$0xff]
    %v959 = vld [vmem:[#allocation7 + $0x378] sm:$0xff]
    %v960 = vld [vmem:[#allocation7 + $0x380] sm:$0xff]
    %v961 = vld [vmem:[#allocation7 + $0x388] sm:$0xff]
    %v962 = vld [vmem:[#allocation7 + $0x390] sm:$0xff]
    %v963 = vld [vmem:[#allocation7 + $0x398] sm:$0xff]
    %v964 = vld [vmem:[#allocation7 + $0x3a0] sm:$0xff]
    %v965 = vld [vmem:[#allocation7 + $0x3a8] sm:$0xff]
    %v966 = vld [vmem:[#allocation7 + $0x3b0] sm:$0xff]
    %v967 = vld [vmem:[#allocation7 + $0x3b8] sm:$0xff]
    %v968 = vld [vmem:[#allocation7 + $0x3c0] sm:$0xff]
    %v969 = vld [vmem:[#allocation7 + $0x3c8] sm:$0xff]
    %v970 = vld [vmem:[#allocation7 + $0x3d0] sm:$0xff]
    %v971 = vld [vmem:[#allocation7 + $0x3d8] sm:$0xff]
    %v972 = vld [vmem:[#allocation7 + $0x3e0] sm:$0xff]
    %v973 = vld [vmem:[#allocation7 + $0x3e8] sm:$0xff]
    %v974 = vld [vmem:[#allocation7 + $0x3f0] sm:$0xff]
    %v975 = vld [vmem:[#allocation7 + $0x3f8] sm:$0xff]
    %v976 = vld [vmem:[#allocation7 + $0x400] sm:$0xff]
    %v977 = vld [vmem:[#allocation7 + $0x408] sm:$0xff]
    %v978 = vld [vmem:[#allocation7 + $0x410] sm:$0xff]
    %v979 = vld [vmem:[#allocation7 + $0x418] sm:$0xff]
    %v980 = vld [vmem:[#allocation7 + $0x420] sm:$0xff]
    %v981 = vld [vmem:[#allocation7 + $0x428] sm:$0xff]
    %v982 = vld [vmem:[#allocation7 + $0x430] sm:$0xff]
    %v983 = vld [vmem:[#allocation7 + $0x438] sm:$0xff]
    %v984 = vld [vmem:[#allocation7 + $0x440] sm:$0xff]
    %v985 = vld [vmem:[#allocation7 + $0x448] sm:$0xff]
    %v986 = vld [vmem:[#allocation7 + $0x450] sm:$0xff]
    %v987 = vld [vmem:[#allocation7 + $0x458] sm:$0xff]
    %v988 = vld [vmem:[#allocation7 + $0x460] sm:$0xff]
    %v989 = vld [vmem:[#allocation7 + $0x468] sm:$0xff]
    %v990 = vld [vmem:[#allocation7 + $0x470] sm:$0xff]
    %v991 = vld [vmem:[#allocation7 + $0x478] sm:$0xff]
    %v992 = vld [vmem:[#allocation7 + $0x480] sm:$0xff]
    %v993 = vld [vmem:[#allocation7 + $0x488] sm:$0xff]
    %v994 = vld [vmem:[#allocation7 + $0x490] sm:$0xff]
    %v995 = vld [vmem:[#allocation7 + $0x498] sm:$0xff]
    %v996 = vld [vmem:[#allocation7 + $0x4a0] sm:$0xff]
    %v997 = vld [vmem:[#allocation7 + $0x4a8] sm:$0xff]
    %v998 = vld [vmem:[#allocation7 + $0x4b0] sm:$0xff]
    %v999 = vld [vmem:[#allocation7 + $0x4b8] sm:$0xff]
    %v1000 = vld [vmem:[#allocation7 + $0x4c0] sm:$0xff]
    %v1001 = vld [vmem:[#allocation7 + $0x4c8] sm:$0xff]
    %v1002 = vld [vmem:[#allocation7 + $0x4d0] sm:$0xff]
    %v1003 = vld [vmem:[#allocation7 + $0x4d8] sm:$0xff]
    %v1004 = vld [vmem:[#allocation7 + $0x4e0] sm:$0xff]
    %v1005 = vld [vmem:[#allocation7 + $0x4e8] sm:$0xff]
    %v1006 = vld [vmem:[#allocation7 + $0x4f0] sm:$0xff]
    %v1007 = vld [vmem:[#allocation7 + $0x4f8] sm:$0xff]
    %v1008 = vld [vmem:[#allocation7 + $0x500] sm:$0xff]
    %v1009 = vld [vmem:[#allocation7 + $0x508] sm:$0xff]
    %v1010 = vld [vmem:[#allocation7 + $0x510] sm:$0xff]
    %v1011 = vld [vmem:[#allocation7 + $0x518] sm:$0xff]
    %v1012 = vld [vmem:[#allocation7 + $0x520] sm:$0xff]
    %v1013 = vld [vmem:[#allocation7 + $0x528] sm:$0xff]
    %v1014 = vld [vmem:[#allocation7 + $0x530] sm:$0xff]
    %v1015 = vld [vmem:[#allocation7 + $0x538] sm:$0xff]
    %v1016 = vld [vmem:[#allocation7 + $0x540] sm:$0xff]
    %v1017 = vld [vmem:[#allocation7 + $0x548] sm:$0xff]
    %v1018 = vld [vmem:[#allocation7 + $0x550] sm:$0xff]
    %v1019 = vld [vmem:[#allocation7 + $0x558] sm:$0xff]
    %v1020 = vld [vmem:[#allocation7 + $0x560] sm:$0xff]
    %v1021 = vld [vmem:[#allocation7 + $0x568] sm:$0xff]
    %v1022 = vld [vmem:[#allocation7 + $0x570] sm:$0xff]
    %v1023 = vld [vmem:[#allocation7 + $0x578] sm:$0xff]
    %v1024 = vld [vmem:[#allocation7 + $0x580] sm:$0xff]
    %v1025 = vld [vmem:[#allocation7 + $0x588] sm:$0xff]
    %v1026 = vld [vmem:[#allocation7 + $0x590] sm:$0xff]
    %v1027 = vld [vmem:[#allocation7 + $0x598] sm:$0xff]
    %v1028 = vld [vmem:[#allocation7 + $0x5a0] sm:$0xff]
    %v1029 = vld [vmem:[#allocation7 + $0x5a8] sm:$0xff]
    %v1030 = vld [vmem:[#allocation7 + $0x5b0] sm:$0xff]
    %v1031 = vld [vmem:[#allocation7 + $0x5b8] sm:$0xff]
    %v1032 = vld [vmem:[#allocation7 + $0x5c0] sm:$0xff]
    %v1033 = vld [vmem:[#allocation7 + $0x5c8] sm:$0xff]
    %v1034 = vld [vmem:[#allocation7 + $0x5d0] sm:$0xff]
    %v1035 = vld [vmem:[#allocation7 + $0x5d8] sm:$0xff]
    %v1036 = vld [vmem:[#allocation7 + $0x5e0] sm:$0xff]
    %v1037 = vld [vmem:[#allocation7 + $0x5e8] sm:$0xff]
    %v1038 = vld [vmem:[#allocation7 + $0x5f0] sm:$0xff]
    %v1039 = vld [vmem:[#allocation7 + $0x5f8] sm:$0xff]
    %v1040 = vld [vmem:[#allocation7 + $0x600] sm:$0xff]
    %v1041 = vld [vmem:[#allocation7 + $0x608] sm:$0xff]
    %v1042 = vld [vmem:[#allocation7 + $0x610] sm:$0xff]
    %v1043 = vld [vmem:[#allocation7 + $0x618] sm:$0xff]
    %v1044 = vld [vmem:[#allocation7 + $0x620] sm:$0xff]
    %v1045 = vld [vmem:[#allocation7 + $0x628] sm:$0xff]
    %v1046 = vld [vmem:[#allocation7 + $0x630] sm:$0xff]
    %v1047 = vld [vmem:[#allocation7 + $0x638] sm:$0xff]
    %v1048 = vld [vmem:[#allocation7 + $0x640] sm:$0xff]
    %v1049 = vld [vmem:[#allocation7 + $0x648] sm:$0xff]
    %v1050 = vld [vmem:[#allocation7 + $0x650] sm:$0xff]
    %v1051 = vld [vmem:[#allocation7 + $0x658] sm:$0xff]
    %v1052 = vld [vmem:[#allocation7 + $0x660] sm:$0xff]
    %v1053 = vld [vmem:[#allocation7 + $0x668] sm:$0xff]
    %v1054 = vld [vmem:[#allocation7 + $0x670] sm:$0xff]
    %v1055 = vld [vmem:[#allocation7 + $0x678] sm:$0xff]
    %v1056 = vld [vmem:[#allocation7 + $0x680] sm:$0xff]
    %v1057 = vld [vmem:[#allocation7 + $0x688] sm:$0xff]
    %v1058 = vld [vmem:[#allocation7 + $0x690] sm:$0xff]
    %v1059 = vld [vmem:[#allocation7 + $0x698] sm:$0xff]
    %v1060 = vld [vmem:[#allocation7 + $0x6a0] sm:$0xff]
    %v1061 = vld [vmem:[#allocation7 + $0x6a8] sm:$0xff]
    %v1062 = vld [vmem:[#allocation7 + $0x6b0] sm:$0xff]
    %v1063 = vld [vmem:[#allocation7 + $0x6b8] sm:$0xff]
    %v1064 = vld [vmem:[#allocation7 + $0x6c0] sm:$0xff]
    %v1065 = vld [vmem:[#allocation7 + $0x6c8] sm:$0xff]
    %v1066 = vld [vmem:[#allocation7 + $0x6d0] sm:$0xff]
    %v1067 = vld [vmem:[#allocation7 + $0x6d8] sm:$0xff]
    %v1068 = vld [vmem:[#allocation7 + $0x6e0] sm:$0xff]
    %v1069 = vld [vmem:[#allocation7 + $0x6e8] sm:$0xff]
    %v1070 = vld [vmem:[#allocation7 + $0x6f0] sm:$0xff]
    %v1071 = vld [vmem:[#allocation7 + $0x6f8] sm:$0xff]
    %v1072 = vld [vmem:[#allocation7 + $0x700] sm:$0xff]
    %v1073 = vld [vmem:[#allocation7 + $0x708] sm:$0xff]
    %v1074 = vld [vmem:[#allocation7 + $0x710] sm:$0xff]
    %v1075 = vld [vmem:[#allocation7 + $0x718] sm:$0xff]
    %v1076 = vld [vmem:[#allocation7 + $0x720] sm:$0xff]
    %v1077 = vld [vmem:[#allocation7 + $0x728] sm:$0xff]
    %v1078 = vld [vmem:[#allocation7 + $0x730] sm:$0xff]
    %v1079 = vld [vmem:[#allocation7 + $0x738] sm:$0xff]
    %v1080 = vld [vmem:[#allocation7 + $0x740] sm:$0xff]
    %v1081 = vld [vmem:[#allocation7 + $0x748] sm:$0xff]
    %v1082 = vld [vmem:[#allocation7 + $0x750] sm:$0xff]
    %v1083 = vld [vmem:[#allocation7 + $0x758] sm:$0xff]
    %v1084 = vld [vmem:[#allocation7 + $0x760] sm:$0xff]
    %v1085 = vld [vmem:[#allocation7 + $0x768] sm:$0xff]
    %v1086 = vld [vmem:[#allocation7 + $0x770] sm:$0xff]
    %v1087 = vld [vmem:[#allocation7 + $0x778] sm:$0xff]
    %v1088 = vld [vmem:[#allocation7 + $0x780] sm:$0xff]
    %v1089 = vld [vmem:[#allocation7 + $0x788] sm:$0xff]
    %v1090 = vld [vmem:[#allocation7 + $0x790] sm:$0xff]
    %v1091 = vld [vmem:[#allocation7 + $0x798] sm:$0xff]
    %v1092 = vld [vmem:[#allocation7 + $0x7a0] sm:$0xff]
    %v1093 = vld [vmem:[#allocation7 + $0x7a8] sm:$0xff]
    %v1094 = vld [vmem:[#allocation7 + $0x7b0] sm:$0xff]
    %v1095 = vld [vmem:[#allocation7 + $0x7b8] sm:$0xff]
    %v1096 = vld [vmem:[#allocation7 + $0x7c0] sm:$0xff]
    %v1097 = vld [vmem:[#allocation7 + $0x7c8] sm:$0xff]
    %v1098 = vld [vmem:[#allocation7 + $0x7d0] sm:$0xff]
    %v1099 = vld [vmem:[#allocation7 + $0x7d8] sm:$0xff]
    %v1100 = vld [vmem:[#allocation7 + $0x7e0] sm:$0xff]
    %v1101 = vld [vmem:[#allocation7 + $0x7e8] sm:$0xff]
    %v1102 = vld [vmem:[#allocation7 + $0x7f0] sm:$0xff]
    %v1103 = vld [vmem:[#allocation7 + $0x7f8] sm:$0xff]
    %v1104 = vld [vmem:[#allocation7 + $0x800] sm:$0xff]
    %v1105 = vld [vmem:[#allocation7 + $0x808] sm:$0xff]
    %v1106 = vld [vmem:[#allocation7 + $0x810] sm:$0xff]
    %v1107 = vld [vmem:[#allocation7 + $0x818] sm:$0xff]
    %v1108 = vld [vmem:[#allocation7 + $0x820] sm:$0xff]
    %v1109 = vld [vmem:[#allocation7 + $0x828] sm:$0xff]
    %v1110 = vld [vmem:[#allocation7 + $0x830] sm:$0xff]
    %v1111 = vld [vmem:[#allocation7 + $0x838] sm:$0xff]
    %v1112 = vld [vmem:[#allocation7 + $0x840] sm:$0xff]
    %v1113 = vld [vmem:[#allocation7 + $0x848] sm:$0xff]
    %v1114 = vld [vmem:[#allocation7 + $0x850] sm:$0xff]
    %v1115 = vld [vmem:[#allocation7 + $0x858] sm:$0xff]
    %v1116 = vld [vmem:[#allocation7 + $0x860] sm:$0xff]
    %v1117 = vld [vmem:[#allocation7 + $0x868] sm:$0xff]
    %v1118 = vld [vmem:[#allocation7 + $0x870] sm:$0xff]
    %v1119 = vld [vmem:[#allocation7 + $0x878] sm:$0xff]
    %v1120 = vld [vmem:[#allocation7 + $0x880] sm:$0xff]
    %v1121 = vld [vmem:[#allocation7 + $0x888] sm:$0xff]
    %v1122 = vld [vmem:[#allocation7 + $0x890] sm:$0xff]
    %v1123 = vld [vmem:[#allocation7 + $0x898] sm:$0xff]
    %v1124 = vld [vmem:[#allocation7 + $0x8a0] sm:$0xff]
    %v1125 = vld [vmem:[#allocation7 + $0x8a8] sm:$0xff]
    %v1126 = vld [vmem:[#allocation7 + $0x8b0] sm:$0xff]
    %v1127 = vld [vmem:[#allocation7 + $0x8b8] sm:$0xff]
    %v1128 = vld [vmem:[#allocation7 + $0x8c0] sm:$0xff]
    %v1129 = vld [vmem:[#allocation7 + $0x8c8] sm:$0xff]
    %v1130 = vld [vmem:[#allocation7 + $0x8d0] sm:$0xff]
    %v1131 = vld [vmem:[#allocation7 + $0x8d8] sm:$0xff]
    %v1132 = vld [vmem:[#allocation7 + $0x8e0] sm:$0xff]
    %v1133 = vld [vmem:[#allocation7 + $0x8e8] sm:$0xff]
    %v1134 = vld [vmem:[#allocation7 + $0x8f0] sm:$0xff]
    %v1135 = vld [vmem:[#allocation7 + $0x8f8] sm:$0xff]
    %v1136 = vld [vmem:[#allocation7 + $0x900] sm:$0xff]
    %v1137 = vld [vmem:[#allocation7 + $0x908] sm:$0xff]
    %v1138 = vld [vmem:[#allocation7 + $0x910] sm:$0xff]
    %v1139 = vld [vmem:[#allocation7 + $0x918] sm:$0xff]
    %v1140 = vld [vmem:[#allocation7 + $0x920] sm:$0xff]
    %v1141 = vld [vmem:[#allocation7 + $0x928] sm:$0xff]
    %v1142 = vld [vmem:[#allocation7 + $0x930] sm:$0xff]
    %v1143 = vld [vmem:[#allocation7 + $0x938] sm:$0xff]
    %v1144 = vld [vmem:[#allocation7 + $0x940] sm:$0xff]
    %v1145 = vld [vmem:[#allocation7 + $0x948] sm:$0xff]
    %v1146 = vld [vmem:[#allocation7 + $0x950] sm:$0xff]
    %v1147 = vld [vmem:[#allocation7 + $0x958] sm:$0xff]
    %v1148 = vld [vmem:[#allocation7 + $0x960] sm:$0xff]
    %v1149 = vld [vmem:[#allocation7 + $0x968] sm:$0xff]
    %v1150 = vld [vmem:[#allocation7 + $0x970] sm:$0xff]
    %v1151 = vld [vmem:[#allocation7 + $0x978] sm:$0xff]
    %v1152 = vld [vmem:[#allocation7 + $0x980] sm:$0xff]
    %v1153 = vld [vmem:[#allocation7 + $0x988] sm:$0xff]
    %v1154 = vld [vmem:[#allocation7 + $0x990] sm:$0xff]
    %v1155 = vld [vmem:[#allocation7 + $0x998] sm:$0xff]
    %v1156 = vld [vmem:[#allocation7 + $0x9a0] sm:$0xff]
    %v1157 = vld [vmem:[#allocation7 + $0x9a8] sm:$0xff]
    %v1158 = vld [vmem:[#allocation7 + $0x9b0] sm:$0xff]
    %v1159 = vld [vmem:[#allocation7 + $0x9b8] sm:$0xff]
    %v1160 = vld [vmem:[#allocation7 + $0x9c0] sm:$0xff]
    %v1161 = vld [vmem:[#allocation7 + $0x9c8] sm:$0xff]
    %v1162 = vld [vmem:[#allocation7 + $0x9d0] sm:$0xff]
    %v1163 = vld [vmem:[#allocation7 + $0x9d8] sm:$0xff]
    %v1164 = vld [vmem:[#allocation7 + $0x9e0] sm:$0xff]
    %v1165 = vld [vmem:[#allocation7 + $0x9e8] sm:$0xff]
    %v1166 = vld [vmem:[#allocation7 + $0x9f0] sm:$0xff]
    %v1167 = vld [vmem:[#allocation7 + $0x9f8] sm:$0xff]
    %v1168 = vld [vmem:[#allocation7 + $0xa00] sm:$0xff]
    %v1169 = vld [vmem:[#allocation7 + $0xa08] sm:$0xff]
    %v1170 = vld [vmem:[#allocation7 + $0xa10] sm:$0xff]
    %v1171 = vld [vmem:[#allocation7 + $0xa18] sm:$0xff]
    %v1172 = vld [vmem:[#allocation7 + $0xa20] sm:$0xff]
    %v1173 = vld [vmem:[#allocation7 + $0xa28] sm:$0xff]
    %v1174 = vld [vmem:[#allocation7 + $0xa30] sm:$0xff]
    %v1175 = vld [vmem:[#allocation7 + $0xa38] sm:$0xff]
    %v1176 = vld [vmem:[#allocation7 + $0xa40] sm:$0xff]
    %v1177 = vld [vmem:[#allocation7 + $0xa48] sm:$0xff]
    %v1178 = vld [vmem:[#allocation7 + $0xa50] sm:$0xff]
    %v1179 = vld [vmem:[#allocation7 + $0xa58] sm:$0xff]
    %v1180 = vld [vmem:[#allocation7 + $0xa60] sm:$0xff]
    %v1181 = vld [vmem:[#allocation7 + $0xa68] sm:$0xff]
    %v1182 = vld [vmem:[#allocation7 + $0xa70] sm:$0xff]
    %v1183 = vld [vmem:[#allocation7 + $0xa78] sm:$0xff]
    %v1184 = vld [vmem:[#allocation7 + $0xa80] sm:$0xff]
    %v1185 = vld [vmem:[#allocation7 + $0xa88] sm:$0xff]
    %v1186 = vld [vmem:[#allocation7 + $0xa90] sm:$0xff]
    %v1187 = vld [vmem:[#allocation7 + $0xa98] sm:$0xff]
    %v1188 = vld [vmem:[#allocation7 + $0xaa0] sm:$0xff]
    %v1189 = vld [vmem:[#allocation7 + $0xaa8] sm:$0xff]
    %v1190 = vld [vmem:[#allocation7 + $0xab0] sm:$0xff]
    %v1191 = vld [vmem:[#allocation7 + $0xab8] sm:$0xff]
    %v1192 = vld [vmem:[#allocation7 + $0xac0] sm:$0xff]
    %v1193 = vld [vmem:[#allocation7 + $0xac8] sm:$0xff]
    %v1194 = vld [vmem:[#allocation7 + $0xad0] sm:$0xff]
    %v1195 = vld [vmem:[#allocation7 + $0xad8] sm:$0xff]
    %v1196 = vld [vmem:[#allocation7 + $0xae0] sm:$0xff]
    %v1197 = vld [vmem:[#allocation7 + $0xae8] sm:$0xff]
    %v1198 = vld [vmem:[#allocation7 + $0xaf0] sm:$0xff]
    %v1199 = vld [vmem:[#allocation7 + $0xaf8] sm:$0xff]
    %v1200 = vld [vmem:[#allocation7 + $0xb00] sm:$0xff]
    %v1201 = vld [vmem:[#allocation7 + $0xb08] sm:$0xff]
    %v1202 = vld [vmem:[#allocation7 + $0xb10] sm:$0xff]
    %v1203 = vld [vmem:[#allocation7 + $0xb18] sm:$0xff]
    %v1204 = vld [vmem:[#allocation7 + $0xb20] sm:$0xff]
    %v1205 = vld [vmem:[#allocation7 + $0xb28] sm:$0xff]
    %v1206 = vld [vmem:[#allocation7 + $0xb30] sm:$0xff]
    %v1207 = vld [vmem:[#allocation7 + $0xb38] sm:$0xff]
    %v1208 = vld [vmem:[#allocation7 + $0xb40] sm:$0xff]
    %v1209 = vld [vmem:[#allocation7 + $0xb48] sm:$0xff]
    %v1210 = vld [vmem:[#allocation7 + $0xb50] sm:$0xff]
    %v1211 = vld [vmem:[#allocation7 + $0xb58] sm:$0xff]
    %v1212 = vld [vmem:[#allocation7 + $0xb60] sm:$0xff]
    %v1213 = vld [vmem:[#allocation7 + $0xb68] sm:$0xff]
    %v1214 = vld [vmem:[#allocation7 + $0xb70] sm:$0xff]
    %v1215 = vld [vmem:[#allocation7 + $0xb78] sm:$0xff]
    %v1216 = vld [vmem:[#allocation7 + $0xb80] sm:$0xff]
    %v1217 = vld [vmem:[#allocation7 + $0xb88] sm:$0xff]
    %v1218 = vld [vmem:[#allocation7 + $0xb90] sm:$0xff]
    %v1219 = vld [vmem:[#allocation7 + $0xb98] sm:$0xff]
    %v1220 = vld [vmem:[#allocation7 + $0xba0] sm:$0xff]
    %v1221 = vld [vmem:[#allocation7 + $0xba8] sm:$0xff]
    %v1222 = vld [vmem:[#allocation7 + $0xbb0] sm:$0xff]
    %v1223 = vld [vmem:[#allocation7 + $0xbb8] sm:$0xff]
    %v1224 = vld [vmem:[#allocation7 + $0xbc0] sm:$0xff]
    %v1225 = vld [vmem:[#allocation7 + $0xbc8] sm:$0xff]
    %v1226 = vld [vmem:[#allocation7 + $0xbd0] sm:$0xff]
    %v1227 = vld [vmem:[#allocation7 + $0xbd8] sm:$0xff]
    %v1228 = vld [vmem:[#allocation7 + $0xbe0] sm:$0xff]
    %v1229 = vld [vmem:[#allocation7 + $0xbe8] sm:$0xff]
    %v1230 = vld [vmem:[#allocation7 + $0xbf0] sm:$0xff]
    %v1231 = vld [vmem:[#allocation7 + $0xbf8] sm:$0xff]
    %v1232 = vld [vmem:[#allocation7 + $0xc00] sm:$0xff]
    %v1233 = vld [vmem:[#allocation7 + $0xc08] sm:$0xff]
    %v1234 = vld [vmem:[#allocation7 + $0xc10] sm:$0xff]
    %v1235 = vld [vmem:[#allocation7 + $0xc18] sm:$0xff]
    %v1236 = vld [vmem:[#allocation7 + $0xc20] sm:$0xff]
    %v1237 = vld [vmem:[#allocation7 + $0xc28] sm:$0xff]
    %v1238 = vld [vmem:[#allocation7 + $0xc30] sm:$0xff]
    %v1239 = vld [vmem:[#allocation7 + $0xc38] sm:$0xff]
    %v1240 = vld [vmem:[#allocation7 + $0xc40] sm:$0xff]
    %v1241 = vld [vmem:[#allocation7 + $0xc48] sm:$0xff]
    %v1242 = vld [vmem:[#allocation7 + $0xc50] sm:$0xff]
    %v1243 = vld [vmem:[#allocation7 + $0xc58] sm:$0xff]
    %v1244 = vld [vmem:[#allocation7 + $0xc60] sm:$0xff]
    %v1245 = vld [vmem:[#allocation7 + $0xc68] sm:$0xff]
    %v1246 = vld [vmem:[#allocation7 + $0xc70] sm:$0xff]
    %v1247 = vld [vmem:[#allocation7 + $0xc78] sm:$0xff]
    %v1248 = vld [vmem:[#allocation7 + $0xc80] sm:$0xff]
    %v1249 = vld [vmem:[#allocation7 + $0xc88] sm:$0xff]
    %v1250 = vld [vmem:[#allocation7 + $0xc90] sm:$0xff]
    %v1251 = vld [vmem:[#allocation7 + $0xc98] sm:$0xff]
    %v1252 = vld [vmem:[#allocation7 + $0xca0] sm:$0xff]
    %v1253 = vld [vmem:[#allocation7 + $0xca8] sm:$0xff]
    %v1254 = vld [vmem:[#allocation7 + $0xcb0] sm:$0xff]
    %v1255 = vld [vmem:[#allocation7 + $0xcb8] sm:$0xff]
    %v1256 = vld [vmem:[#allocation7 + $0xcc0] sm:$0xff]
    %v1257 = vld [vmem:[#allocation7 + $0xcc8] sm:$0xff]
    %v1258 = vld [vmem:[#allocation7 + $0xcd0] sm:$0xff]
    %v1259 = vld [vmem:[#allocation7 + $0xcd8] sm:$0xff]
    %v1260 = vld [vmem:[#allocation7 + $0xce0] sm:$0xff]
    %v1261 = vld [vmem:[#allocation7 + $0xce8] sm:$0xff]
    %v1262 = vld [vmem:[#allocation7 + $0xcf0] sm:$0xff]
    %v1263 = vld [vmem:[#allocation7 + $0xcf8] sm:$0xff]
    %v1264 = vld [vmem:[#allocation7 + $0xd00] sm:$0xff]
    %v1265 = vld [vmem:[#allocation7 + $0xd08] sm:$0xff]
    %v1266 = vld [vmem:[#allocation7 + $0xd10] sm:$0xff]
    %v1267 = vld [vmem:[#allocation7 + $0xd18] sm:$0xff]
    %v1268 = vld [vmem:[#allocation7 + $0xd20] sm:$0xff]
    %v1269 = vld [vmem:[#allocation7 + $0xd28] sm:$0xff]
    %v1270 = vld [vmem:[#allocation7 + $0xd30] sm:$0xff]
    %v1271 = vld [vmem:[#allocation7 + $0xd38] sm:$0xff]
    %v1272 = vld [vmem:[#allocation7 + $0xd40] sm:$0xff]
    %v1273 = vld [vmem:[#allocation7 + $0xd48] sm:$0xff]
    %v1274 = vld [vmem:[#allocation7 + $0xd50] sm:$0xff]
    %v1275 = vld [vmem:[#allocation7 + $0xd58] sm:$0xff]
    %v1276 = vld [vmem:[#allocation7 + $0xd60] sm:$0xff]
    %v1277 = vld [vmem:[#allocation7 + $0xd68] sm:$0xff]
    %v1278 = vld [vmem:[#allocation7 + $0xd70] sm:$0xff]
    %v1279 = vld [vmem:[#allocation7 + $0xd78] sm:$0xff]
    %v1280 = vld [vmem:[#allocation7 + $0xd80] sm:$0xff]
    %v1281 = vld [vmem:[#allocation7 + $0xd88] sm:$0xff]
    %v1282 = vld [vmem:[#allocation7 + $0xd90] sm:$0xff]
    %v1283 = vld [vmem:[#allocation7 + $0xd98] sm:$0xff]
    %v1284 = vld [vmem:[#allocation7 + $0xda0] sm:$0xff]
    %v1285 = vld [vmem:[#allocation7 + $0xda8] sm:$0xff]
    %v1286 = vld [vmem:[#allocation7 + $0xdb0] sm:$0xff]
    %v1287 = vld [vmem:[#allocation7 + $0xdb8] sm:$0xff]
    %v1288 = vld [vmem:[#allocation7 + $0xdc0] sm:$0xff]
    %v1289 = vld [vmem:[#allocation7 + $0xdc8] sm:$0xff]
    %v1290 = vld [vmem:[#allocation7 + $0xdd0] sm:$0xff]
    %v1291 = vld [vmem:[#allocation7 + $0xdd8] sm:$0xff]
    %v1292 = vld [vmem:[#allocation7 + $0xde0] sm:$0xff]
    %v1293 = vld [vmem:[#allocation7 + $0xde8] sm:$0xff]
    %v1294 = vld [vmem:[#allocation7 + $0xdf0] sm:$0xff]
    %v1295 = vld [vmem:[#allocation7 + $0xdf8] sm:$0xff]
    %v1296 = vld [vmem:[#allocation7 + $0xe00] sm:$0xff]
    %v1297 = vld [vmem:[#allocation7 + $0xe08] sm:$0xff]
    %v1298 = vld [vmem:[#allocation7 + $0xe10] sm:$0xff]
    %v1299 = vld [vmem:[#allocation7 + $0xe18] sm:$0xff]
    %v1300 = vld [vmem:[#allocation7 + $0xe20] sm:$0xff]
    %v1301 = vld [vmem:[#allocation7 + $0xe28] sm:$0xff]
    %v1302 = vld [vmem:[#allocation7 + $0xe30] sm:$0xff]
    %v1303 = vld [vmem:[#allocation7 + $0xe38] sm:$0xff]
    %v1304 = vld [vmem:[#allocation7 + $0xe40] sm:$0xff]
    %v1305 = vld [vmem:[#allocation7 + $0xe48] sm:$0xff]
    %v1306 = vld [vmem:[#allocation7 + $0xe50] sm:$0xff]
    %v1307 = vld [vmem:[#allocation7 + $0xe58] sm:$0xff]
    %v1308 = vld [vmem:[#allocation7 + $0xe60] sm:$0xff]
    %v1309 = vld [vmem:[#allocation7 + $0xe68] sm:$0xff]
    %v1310 = vld [vmem:[#allocation7 + $0xe70] sm:$0xff]
    %v1311 = vld [vmem:[#allocation7 + $0xe78] sm:$0xff]
    %v1312 = vld [vmem:[#allocation7 + $0xe80] sm:$0xff]
    %v1313 = vld [vmem:[#allocation7 + $0xe88] sm:$0xff]
    %v1314 = vld [vmem:[#allocation7 + $0xe90] sm:$0xff]
    %v1315 = vld [vmem:[#allocation7 + $0xe98] sm:$0xff]
    %v1316 = vld [vmem:[#allocation7 + $0xea0] sm:$0xff]
    %v1317 = vld [vmem:[#allocation7 + $0xea8] sm:$0xff]
    %v1318 = vld [vmem:[#allocation7 + $0xeb0] sm:$0xff]
    %v1319 = vld [vmem:[#allocation7 + $0xeb8] sm:$0xff]
    %v1320 = vld [vmem:[#allocation7 + $0xec0] sm:$0xff]
    %v1321 = vld [vmem:[#allocation7 + $0xec8] sm:$0xff]
    %v1322 = vld [vmem:[#allocation7 + $0xed0] sm:$0xff]
    %v1323 = vld [vmem:[#allocation7 + $0xed8] sm:$0xff]
    %v1324 = vld [vmem:[#allocation7 + $0xee0] sm:$0xff]
    %v1325 = vld [vmem:[#allocation7 + $0xee8] sm:$0xff]
    %v1326 = vld [vmem:[#allocation7 + $0xef0] sm:$0xff]
    %v1327 = vld [vmem:[#allocation7 + $0xef8] sm:$0xff]
    %v1328 = vld [vmem:[#allocation7 + $0xf00] sm:$0xff]
    %v1329 = vld [vmem:[#allocation7 + $0xf08] sm:$0xff]
    %v1330 = vld [vmem:[#allocation7 + $0xf10] sm:$0xff]
    %v1331 = vld [vmem:[#allocation7 + $0xf18] sm:$0xff]
    %v1332 = vld [vmem:[#allocation7 + $0xf20] sm:$0xff]
    %v1333 = vld [vmem:[#allocation7 + $0xf28] sm:$0xff]
    %v1334 = vld [vmem:[#allocation7 + $0xf30] sm:$0xff]
    %v1335 = vld [vmem:[#allocation7 + $0xf38] sm:$0xff]
    %v1336 = vld [vmem:[#allocation7 + $0xf40] sm:$0xff]
    %v1337 = vld [vmem:[#allocation7 + $0xf48] sm:$0xff]
    %v1338 = vld [vmem:[#allocation7 + $0xf50] sm:$0xff]
    %v1339 = vld [vmem:[#allocation7 + $0xf58] sm:$0xff]
    %v1340 = vld [vmem:[#allocation7 + $0xf60] sm:$0xff]
    %v1341 = vld [vmem:[#allocation7 + $0xf68] sm:$0xff]
    %v1342 = vld [vmem:[#allocation7 + $0xf70] sm:$0xff]
    %v1343 = vld [vmem:[#allocation7 + $0xf78] sm:$0xff]
    %v1344 = vld [vmem:[#allocation7 + $0xf80] sm:$0xff]
    %v1345 = vld [vmem:[#allocation7 + $0xf88] sm:$0xff]
    %v1346 = vld [vmem:[#allocation7 + $0xf90] sm:$0xff]
    %v1347 = vld [vmem:[#allocation7 + $0xf98] sm:$0xff]
    %v1348 = vld [vmem:[#allocation7 + $0xfa0] sm:$0xff]
    %v1349 = vld [vmem:[#allocation7 + $0xfa8] sm:$0xff]
    %v1350 = vld [vmem:[#allocation7 + $0xfb0] sm:$0xff]
    %v1351 = vld [vmem:[#allocation7 + $0xfb8] sm:$0xff]
    %v1352 = vld [vmem:[#allocation7 + $0xfc0] sm:$0xff]
    %v1353 = vld [vmem:[#allocation7 + $0xfc8] sm:$0xff]
    %v1354 = vld [vmem:[#allocation7 + $0xfd0] sm:$0xff]
    %v1355 = vld [vmem:[#allocation7 + $0xfd8] sm:$0xff]
    %v1356 = vld [vmem:[#allocation7 + $0xfe0] sm:$0xff]
    %v1357 = vld [vmem:[#allocation7 + $0xfe8] sm:$0xff]
    %v1358 = vld [vmem:[#allocation7 + $0xff0] sm:$0xff]
    %v1359 = vld [vmem:[#allocation7 + $0xff8] sm:$0xff]
    %v1360 = vld [vmem:[#allocation7 + $0x1000] sm:$0xff]
    %v1361 = vld [vmem:[#allocation7 + $0x1008] sm:$0xff]
    %v1362 = vld [vmem:[#allocation7 + $0x1010] sm:$0xff]
    %v1363 = vld [vmem:[#allocation7 + $0x1018] sm:$0xff]
    %v1364 = vld [vmem:[#allocation7 + $0x1020] sm:$0xff]
    %v1365 = vld [vmem:[#allocation7 + $0x1028] sm:$0xff]
    %v1366 = vld [vmem:[#allocation7 + $0x1030] sm:$0xff]
    %v1367 = vld [vmem:[#allocation7 + $0x1038] sm:$0xff]
    %v1368 = vld [vmem:[#allocation7 + $0x1040] sm:$0xff]
    %v1369 = vld [vmem:[#allocation7 + $0x1048] sm:$0xff]
    %v1370 = vld [vmem:[#allocation7 + $0x1050] sm:$0xff]
    %v1371 = vld [vmem:[#allocation7 + $0x1058] sm:$0xff]
    %v1372 = vld [vmem:[#allocation7 + $0x1060] sm:$0xff]
    %v1373 = vld [vmem:[#allocation7 + $0x1068] sm:$0xff]
    %v1374 = vld [vmem:[#allocation7 + $0x1070] sm:$0xff]
    %v1375 = vld [vmem:[#allocation7 + $0x1078] sm:$0xff]
    %v1376 = vld [vmem:[#allocation7 + $0x1080] sm:$0xff]
    %v1377 = vld [vmem:[#allocation7 + $0x1088] sm:$0xff]
    %v1378 = vld [vmem:[#allocation7 + $0x1090] sm:$0xff]
    %v1379 = vld [vmem:[#allocation7 + $0x1098] sm:$0xff]
    %v1380 = vld [vmem:[#allocation7 + $0x10a0] sm:$0xff]
    %v1381 = vld [vmem:[#allocation7 + $0x10a8] sm:$0xff]
    %v1382 = vld [vmem:[#allocation7 + $0x10b0] sm:$0xff]
    %v1383 = vld [vmem:[#allocation7 + $0x10b8] sm:$0xff]
    %v1384 = vld [vmem:[#allocation7 + $0x10c0] sm:$0xff]
    %v1385 = vld [vmem:[#allocation7 + $0x10c8] sm:$0xff]
    %v1386 = vld [vmem:[#allocation7 + $0x10d0] sm:$0xff]
    %v1387 = vld [vmem:[#allocation7 + $0x10d8] sm:$0xff]
    %v1388 = vld [vmem:[#allocation7 + $0x10e0] sm:$0xff]
    %v1389 = vld [vmem:[#allocation7 + $0x10e8] sm:$0xff]
    %v1390 = vld [vmem:[#allocation7 + $0x10f0] sm:$0xff]
    %v1391 = vld [vmem:[#allocation7 + $0x10f8] sm:$0xff]
    %v1392 = vld [vmem:[#allocation7 + $0x1100] sm:$0xff]
    %v1393 = vld [vmem:[#allocation7 + $0x1108] sm:$0xff]
    %v1394 = vld [vmem:[#allocation7 + $0x1110] sm:$0xff]
    %v1395 = vld [vmem:[#allocation7 + $0x1118] sm:$0xff]
    %v1396 = vld [vmem:[#allocation7 + $0x1120] sm:$0xff]
    %v1397 = vld [vmem:[#allocation7 + $0x1128] sm:$0xff]
    %v1398 = vld [vmem:[#allocation7 + $0x1130] sm:$0xff]
    %v1399 = vld [vmem:[#allocation7 + $0x1138] sm:$0xff]
    %v1400 = vld [vmem:[#allocation7 + $0x1140] sm:$0xff]
    %v1401 = vld [vmem:[#allocation7 + $0x1148] sm:$0xff]
    %v1402 = vld [vmem:[#allocation7 + $0x1150] sm:$0xff]
    %v1403 = vld [vmem:[#allocation7 + $0x1158] sm:$0xff]
    %v1404 = vld [vmem:[#allocation7 + $0x1160] sm:$0xff]
    %v1405 = vld [vmem:[#allocation7 + $0x1168] sm:$0xff]
    %v1406 = vld [vmem:[#allocation7 + $0x1170] sm:$0xff]
    %v1407 = vld [vmem:[#allocation7 + $0x1178] sm:$0xff]
    %v1408 = vld [vmem:[#allocation7 + $0x1180] sm:$0xff]
    %v1409 = vld [vmem:[#allocation7 + $0x1188] sm:$0xff]
    %v1410 = vld [vmem:[#allocation7 + $0x1190] sm:$0xff]
    %v1411 = vld [vmem:[#allocation7 + $0x1198] sm:$0xff]
    %v1412 = vld [vmem:[#allocation7 + $0x11a0] sm:$0xff]
    %v1413 = vld [vmem:[#allocation7 + $0x11a8] sm:$0xff]
    %v1414 = vld [vmem:[#allocation7 + $0x11b0] sm:$0xff]
    %v1415 = vld [vmem:[#allocation7 + $0x11b8] sm:$0xff]
    %v1416 = vld [vmem:[#allocation7 + $0x11c0] sm:$0xff]
    %v1417 = vld [vmem:[#allocation7 + $0x11c8] sm:$0xff]
    %v1418 = vld [vmem:[#allocation7 + $0x11d0] sm:$0xff]
    %v1419 = vld [vmem:[#allocation7 + $0x11d8] sm:$0xff]
    %v1420 = vld [vmem:[#allocation7 + $0x11e0] sm:$0xff]
    %v1421 = vld [vmem:[#allocation7 + $0x11e8] sm:$0xff]
    %v1422 = vld [vmem:[#allocation7 + $0x11f0] sm:$0xff]
    %v1423 = vld [vmem:[#allocation7 + $0x11f8] sm:$0xff]
    %v1424 = vld [vmem:[#allocation7 + $0x1200] sm:$0xff]
    %v1425 = vld [vmem:[#allocation7 + $0x1208] sm:$0xff]
    %v1426 = vld [vmem:[#allocation7 + $0x1210] sm:$0xff]
    %v1427 = vld [vmem:[#allocation7 + $0x1218] sm:$0xff]
    %v1428 = vld [vmem:[#allocation7 + $0x1220] sm:$0xff]
    %v1429 = vld [vmem:[#allocation7 + $0x1228] sm:$0xff]
    %v1430 = vld [vmem:[#allocation7 + $0x1230] sm:$0xff]
    %v1431 = vld [vmem:[#allocation7 + $0x1238] sm:$0xff]
    %v1432 = vld [vmem:[#allocation7 + $0x1240] sm:$0xff]
    %v1433 = vld [vmem:[#allocation7 + $0x1248] sm:$0xff]
    %v1434 = vld [vmem:[#allocation7 + $0x1250] sm:$0xff]
    %v1435 = vld [vmem:[#allocation7 + $0x1258] sm:$0xff]
    %v1436 = vld [vmem:[#allocation7 + $0x1260] sm:$0xff]
    %v1437 = vld [vmem:[#allocation7 + $0x1268] sm:$0xff]
    %v1438 = vld [vmem:[#allocation7 + $0x1270] sm:$0xff]
    %v1439 = vld [vmem:[#allocation7 + $0x1278] sm:$0xff]
    %v1440 = vld [vmem:[#allocation7 + $0x1280] sm:$0xff]
    %v1441 = vld [vmem:[#allocation7 + $0x1288] sm:$0xff]
    %v1442 = vld [vmem:[#allocation7 + $0x1290] sm:$0xff]
    %v1443 = vld [vmem:[#allocation7 + $0x1298] sm:$0xff]
    %v1444 = vld [vmem:[#allocation7 + $0x12a0] sm:$0xff]
    %v1445 = vld [vmem:[#allocation7 + $0x12a8] sm:$0xff]
    %v1446 = vld [vmem:[#allocation7 + $0x12b0] sm:$0xff]
    %v1447 = vld [vmem:[#allocation7 + $0x12b8] sm:$0xff]
    %v1448 = vld [vmem:[#allocation7 + $0x12c0] sm:$0xff]
    %v1449 = vld [vmem:[#allocation7 + $0x12c8] sm:$0xff]
    %v1450 = vld [vmem:[#allocation7 + $0x12d0] sm:$0xff]
    %v1451 = vld [vmem:[#allocation7 + $0x12d8] sm:$0xff]
    %v1452 = vld [vmem:[#allocation7 + $0x12e0] sm:$0xff]
    %v1453 = vld [vmem:[#allocation7 + $0x12e8] sm:$0xff]
    %v1454 = vld [vmem:[#allocation7 + $0x12f0] sm:$0xff]
    %v1455 = vld [vmem:[#allocation7 + $0x12f8] sm:$0xff]
    %v1456 = vld [vmem:[#allocation7 + $0x1300] sm:$0xff]
    %v1457 = vld [vmem:[#allocation7 + $0x1308] sm:$0xff]
    %v1458 = vld [vmem:[#allocation7 + $0x1310] sm:$0xff]
    %v1459 = vld [vmem:[#allocation7 + $0x1318] sm:$0xff]
    %v1460 = vld [vmem:[#allocation7 + $0x1320] sm:$0xff]
    %v1461 = vld [vmem:[#allocation7 + $0x1328] sm:$0xff]
    %v1462 = vld [vmem:[#allocation7 + $0x1330] sm:$0xff]
    %v1463 = vld [vmem:[#allocation7 + $0x1338] sm:$0xff]
    %v1464 = vld [vmem:[#allocation7 + $0x1340] sm:$0xff]
    %v1465 = vld [vmem:[#allocation7 + $0x1348] sm:$0xff]
    %v1466 = vld [vmem:[#allocation7 + $0x1350] sm:$0xff]
    %v1467 = vld [vmem:[#allocation7 + $0x1358] sm:$0xff]
    %v1468 = vld [vmem:[#allocation7 + $0x1360] sm:$0xff]
    %v1469 = vld [vmem:[#allocation7 + $0x1368] sm:$0xff]
    %v1470 = vld [vmem:[#allocation7 + $0x1370] sm:$0xff]
    %v1471 = vld [vmem:[#allocation7 + $0x1378] sm:$0xff]
    %v1472 = vld [vmem:[#allocation7 + $0x1380] sm:$0xff]
    %v1473 = vld [vmem:[#allocation7 + $0x1388] sm:$0xff]
    %v1474 = vld [vmem:[#allocation7 + $0x1390] sm:$0xff]
    %v1475 = vld [vmem:[#allocation7 + $0x1398] sm:$0xff]
    %v1476 = vld [vmem:[#allocation7 + $0x13a0] sm:$0xff]
    %v1477 = vld [vmem:[#allocation7 + $0x13a8] sm:$0xff]
    %v1478 = vld [vmem:[#allocation7 + $0x13b0] sm:$0xff]
    %v1479 = vld [vmem:[#allocation7 + $0x13b8] sm:$0xff]
    %v1480 = vld [vmem:[#allocation7 + $0x13c0] sm:$0xff]
    %v1481 = vld [vmem:[#allocation7 + $0x13c8] sm:$0xff]
    %v1482 = vld [vmem:[#allocation7 + $0x13d0] sm:$0xff]
    %v1483 = vld [vmem:[#allocation7 + $0x13d8] sm:$0xff]
    %v1484 = vld [vmem:[#allocation7 + $0x13e0] sm:$0xff]
    %v1485 = vld [vmem:[#allocation7 + $0x13e8] sm:$0xff]
    %v1486 = vld [vmem:[#allocation7 + $0x13f0] sm:$0xff]
    %v1487 = vld [vmem:[#allocation7 + $0x13f8] sm:$0xff]
    %v1488 = vld [vmem:[#allocation7 + $0x1400] sm:$0xff]
    %v1489 = vld [vmem:[#allocation7 + $0x1408] sm:$0xff]
    %v1490 = vld [vmem:[#allocation7 + $0x1410] sm:$0xff]
    %v1491 = vld [vmem:[#allocation7 + $0x1418] sm:$0xff]
    %v1492 = vld [vmem:[#allocation7 + $0x1420] sm:$0xff]
    %v1493 = vld [vmem:[#allocation7 + $0x1428] sm:$0xff]
    %v1494 = vld [vmem:[#allocation7 + $0x1430] sm:$0xff]
    %v1495 = vld [vmem:[#allocation7 + $0x1438] sm:$0xff]
    %v1496 = vld [vmem:[#allocation7 + $0x1440] sm:$0xff]
    %v1497 = vld [vmem:[#allocation7 + $0x1448] sm:$0xff]
    %v1498 = vld [vmem:[#allocation7 + $0x1450] sm:$0xff]
    %v1499 = vld [vmem:[#allocation7 + $0x1458] sm:$0xff]
    %v1500 = vld [vmem:[#allocation7 + $0x1460] sm:$0xff]
    %v1501 = vld [vmem:[#allocation7 + $0x1468] sm:$0xff]
    %v1502 = vld [vmem:[#allocation7 + $0x1470] sm:$0xff]
    %v1503 = vld [vmem:[#allocation7 + $0x1478] sm:$0xff]
    %v1504 = vld [vmem:[#allocation7 + $0x1480] sm:$0xff]
    %v1505 = vld [vmem:[#allocation7 + $0x1488] sm:$0xff]
    %v1506 = vld [vmem:[#allocation7 + $0x1490] sm:$0xff]
    %v1507 = vld [vmem:[#allocation7 + $0x1498] sm:$0xff]
    %v1508 = vld [vmem:[#allocation7 + $0x14a0] sm:$0xff]
    %v1509 = vld [vmem:[#allocation7 + $0x14a8] sm:$0xff]
    %v1510 = vld [vmem:[#allocation7 + $0x14b0] sm:$0xff]
    %v1511 = vld [vmem:[#allocation7 + $0x14b8] sm:$0xff]
    %v1512 = vld [vmem:[#allocation7 + $0x14c0] sm:$0xff]
    %v1513 = vld [vmem:[#allocation7 + $0x14c8] sm:$0xff]
    %v1514 = vld [vmem:[#allocation7 + $0x14d0] sm:$0xff]
    %v1515 = vld [vmem:[#allocation7 + $0x14d8] sm:$0xff]
    %v1516 = vld [vmem:[#allocation7 + $0x14e0] sm:$0xff]
    %v1517 = vld [vmem:[#allocation7 + $0x14e8] sm:$0xff]
    %v1518 = vld [vmem:[#allocation7 + $0x14f0] sm:$0xff]
    %v1519 = vld [vmem:[#allocation7 + $0x14f8] sm:$0xff]
    %v1520 = vld [vmem:[#allocation7 + $0x1500] sm:$0xff]
    %v1521 = vld [vmem:[#allocation7 + $0x1508] sm:$0xff]
    %v1522 = vld [vmem:[#allocation7 + $0x1510] sm:$0xff]
    %v1523 = vld [vmem:[#allocation7 + $0x1518] sm:$0xff]
    %v1524 = vld [vmem:[#allocation7 + $0x1520] sm:$0xff]
    %v1525 = vld [vmem:[#allocation7 + $0x1528] sm:$0xff]
    %v1526 = vld [vmem:[#allocation7 + $0x1530] sm:$0xff]
    %v1527 = vld [vmem:[#allocation7 + $0x1538] sm:$0xff]
    %v1528 = vld [vmem:[#allocation7 + $0x1540] sm:$0xff]
    %v1529 = vld [vmem:[#allocation7 + $0x1548] sm:$0xff]
    %v1530 = vld [vmem:[#allocation7 + $0x1550] sm:$0xff]
    %v1531 = vld [vmem:[#allocation7 + $0x1558] sm:$0xff]
    %v1532 = vld [vmem:[#allocation7 + $0x1560] sm:$0xff]
    %v1533 = vld [vmem:[#allocation7 + $0x1568] sm:$0xff]
    %v1534 = vld [vmem:[#allocation7 + $0x1570] sm:$0xff]
    %v1535 = vld [vmem:[#allocation7 + $0x1578] sm:$0xff]
    %v1536 = vld [vmem:[#allocation7 + $0x1580] sm:$0xff]
    %v1537 = vld [vmem:[#allocation7 + $0x1588] sm:$0xff]
    %v1538 = vld [vmem:[#allocation7 + $0x1590] sm:$0xff]
    %v1539 = vld [vmem:[#allocation7 + $0x1598] sm:$0xff]
    %v1540 = vld [vmem:[#allocation7 + $0x15a0] sm:$0xff]
    %v1541 = vld [vmem:[#allocation7 + $0x15a8] sm:$0xff]
    %v1542 = vld [vmem:[#allocation7 + $0x15b0] sm:$0xff]
    %v1543 = vld [vmem:[#allocation7 + $0x15b8] sm:$0xff]
    %v1544 = vld [vmem:[#allocation7 + $0x15c0] sm:$0xff]
    %v1545 = vld [vmem:[#allocation7 + $0x15c8] sm:$0xff]
    %v1546 = vld [vmem:[#allocation7 + $0x15d0] sm:$0xff]
    %v1547 = vld [vmem:[#allocation7 + $0x15d8] sm:$0xff]
    %v1548 = vld [vmem:[#allocation7 + $0x15e0] sm:$0xff]
    %v1549 = vld [vmem:[#allocation7 + $0x15e8] sm:$0xff]
    %v1550 = vld [vmem:[#allocation7 + $0x15f0] sm:$0xff]
    %v1551 = vld [vmem:[#allocation7 + $0x15f8] sm:$0xff]
    %v1552 = vld [vmem:[#allocation7 + $0x1600] sm:$0xff]
    %v1553 = vld [vmem:[#allocation7 + $0x1608] sm:$0xff]
    %v1554 = vld [vmem:[#allocation7 + $0x1610] sm:$0xff]
    %v1555 = vld [vmem:[#allocation7 + $0x1618] sm:$0xff]
    %v1556 = vld [vmem:[#allocation7 + $0x1620] sm:$0xff]
    %v1557 = vld [vmem:[#allocation7 + $0x1628] sm:$0xff]
    %v1558 = vld [vmem:[#allocation7 + $0x1630] sm:$0xff]
    %v1559 = vld [vmem:[#allocation7 + $0x1638] sm:$0xff]
    %v1560 = vld [vmem:[#allocation7 + $0x1640] sm:$0xff]
    %v1561 = vld [vmem:[#allocation7 + $0x1648] sm:$0xff]
    %v1562 = vld [vmem:[#allocation7 + $0x1650] sm:$0xff]
    %v1563 = vld [vmem:[#allocation7 + $0x1658] sm:$0xff]
    %v1564 = vld [vmem:[#allocation7 + $0x1660] sm:$0xff]
    %v1565 = vld [vmem:[#allocation7 + $0x1668] sm:$0xff]
    %v1566 = vld [vmem:[#allocation7 + $0x1670] sm:$0xff]
    %v1567 = vld [vmem:[#allocation7 + $0x1678] sm:$0xff]
    %v1568 = vld [vmem:[#allocation7 + $0x1680] sm:$0xff]
    %v1569 = vld [vmem:[#allocation7 + $0x1688] sm:$0xff]
    %v1570 = vld [vmem:[#allocation7 + $0x1690] sm:$0xff]
    %v1571 = vld [vmem:[#allocation7 + $0x1698] sm:$0xff]
    %v1572 = vld [vmem:[#allocation7 + $0x16a0] sm:$0xff]
    %v1573 = vld [vmem:[#allocation7 + $0x16a8] sm:$0xff]
    %v1574 = vld [vmem:[#allocation7 + $0x16b0] sm:$0xff]
    %v1575 = vld [vmem:[#allocation7 + $0x16b8] sm:$0xff]
    %v1576 = vld [vmem:[#allocation7 + $0x16c0] sm:$0xff]
    %v1577 = vld [vmem:[#allocation7 + $0x16c8] sm:$0xff]
    %v1578 = vld [vmem:[#allocation7 + $0x16d0] sm:$0xff]
    %v1579 = vld [vmem:[#allocation7 + $0x16d8] sm:$0xff]
    %v1580 = vld [vmem:[#allocation7 + $0x16e0] sm:$0xff]
    %v1581 = vld [vmem:[#allocation7 + $0x16e8] sm:$0xff]
    %v1582 = vld [vmem:[#allocation7 + $0x16f0] sm:$0xff]
    %v1583 = vld [vmem:[#allocation7 + $0x16f8] sm:$0xff]
    %v1584 = vld [vmem:[#allocation7 + $0x1700] sm:$0xff]
    %v1585 = vld [vmem:[#allocation7 + $0x1708] sm:$0xff]
    %v1586 = vld [vmem:[#allocation7 + $0x1710] sm:$0xff]
    %v1587 = vld [vmem:[#allocation7 + $0x1718] sm:$0xff]
    %v1588 = vld [vmem:[#allocation7 + $0x1720] sm:$0xff]
    %v1589 = vld [vmem:[#allocation7 + $0x1728] sm:$0xff]
    %v1590 = vld [vmem:[#allocation7 + $0x1730] sm:$0xff]
    %v1591 = vld [vmem:[#allocation7 + $0x1738] sm:$0xff]
    %v1592 = vld [vmem:[#allocation7 + $0x1740] sm:$0xff]
    %v1593 = vld [vmem:[#allocation7 + $0x1748] sm:$0xff]
    %v1594 = vld [vmem:[#allocation7 + $0x1750] sm:$0xff]
    %v1595 = vld [vmem:[#allocation7 + $0x1758] sm:$0xff]
    %v1596 = vld [vmem:[#allocation7 + $0x1760] sm:$0xff]
    %v1597 = vld [vmem:[#allocation7 + $0x1768] sm:$0xff]
    %v1598 = vld [vmem:[#allocation7 + $0x1770] sm:$0xff]
    %v1599 = vld [vmem:[#allocation7 + $0x1778] sm:$0xff]
    %v1600 = vld [vmem:[#allocation7 + $0x1780] sm:$0xff]
    %v1601 = vld [vmem:[#allocation7 + $0x1788] sm:$0xff]
    %v1602 = vld [vmem:[#allocation7 + $0x1790] sm:$0xff]
    %v1603 = vld [vmem:[#allocation7 + $0x1798] sm:$0xff]
    %v1604 = vld [vmem:[#allocation7 + $0x17a0] sm:$0xff]
    %v1605 = vld [vmem:[#allocation7 + $0x17a8] sm:$0xff]
    %v1606 = vld [vmem:[#allocation7 + $0x17b0] sm:$0xff]
    %v1607 = vld [vmem:[#allocation7 + $0x17b8] sm:$0xff]
    %v1608 = vld [vmem:[#allocation7 + $0x17c0] sm:$0xff]
    %v1609 = vld [vmem:[#allocation7 + $0x17c8] sm:$0xff]
    %v1610 = vld [vmem:[#allocation7 + $0x17d0] sm:$0xff]
    %v1611 = vld [vmem:[#allocation7 + $0x17d8] sm:$0xff]
    %v1612 = vld [vmem:[#allocation7 + $0x17e0] sm:$0xff]
    %v1613 = vld [vmem:[#allocation7 + $0x17e8] sm:$0xff]
    %v1614 = vld [vmem:[#allocation7 + $0x17f0] sm:$0xff]
    %v1615 = vld [vmem:[#allocation7 + $0x17f8] sm:$0xff]
    %v1616 = vld [vmem:[#allocation7 + $0x1800] sm:$0xff]
    %v1617 = vld [vmem:[#allocation7 + $0x1808] sm:$0xff]
    %v1618 = vld [vmem:[#allocation7 + $0x1810] sm:$0xff]
    %v1619 = vld [vmem:[#allocation7 + $0x1818] sm:$0xff]
    %v1620 = vld [vmem:[#allocation7 + $0x1820] sm:$0xff]
    %v1621 = vld [vmem:[#allocation7 + $0x1828] sm:$0xff]
    %v1622 = vld [vmem:[#allocation7 + $0x1830] sm:$0xff]
    %v1623 = vld [vmem:[#allocation7 + $0x1838] sm:$0xff]
    %v1624 = vld [vmem:[#allocation7 + $0x1840] sm:$0xff]
    %v1625 = vld [vmem:[#allocation7 + $0x1848] sm:$0xff]
    %v1626 = vld [vmem:[#allocation7 + $0x1850] sm:$0xff]
    %v1627 = vld [vmem:[#allocation7 + $0x1858] sm:$0xff]
    %v1628 = vld [vmem:[#allocation7 + $0x1860] sm:$0xff]
    %v1629 = vld [vmem:[#allocation7 + $0x1868] sm:$0xff]
    %v1630 = vld [vmem:[#allocation7 + $0x1870] sm:$0xff]
    %v1631 = vld [vmem:[#allocation7 + $0x1878] sm:$0xff]
    %v1632 = vld [vmem:[#allocation7 + $0x1880] sm:$0xff]
    %v1633 = vld [vmem:[#allocation7 + $0x1888] sm:$0xff]
    %v1634 = vld [vmem:[#allocation7 + $0x1890] sm:$0xff]
    %v1635 = vld [vmem:[#allocation7 + $0x1898] sm:$0xff]
    %v1636 = vld [vmem:[#allocation7 + $0x18a0] sm:$0xff]
    %v1637 = vld [vmem:[#allocation7 + $0x18a8] sm:$0xff]
    %v1638 = vld [vmem:[#allocation7 + $0x18b0] sm:$0xff]
    %v1639 = vld [vmem:[#allocation7 + $0x18b8] sm:$0xff]
    %v1640 = vld [vmem:[#allocation7 + $0x18c0] sm:$0xff]
    %v1641 = vld [vmem:[#allocation7 + $0x18c8] sm:$0xff]
    %v1642 = vld [vmem:[#allocation7 + $0x18d0] sm:$0xff]
    %v1643 = vld [vmem:[#allocation7 + $0x18d8] sm:$0xff]
    %v1644 = vld [vmem:[#allocation7 + $0x18e0] sm:$0xff]
    %v1645 = vld [vmem:[#allocation7 + $0x18e8] sm:$0xff]
    %v1646 = vld [vmem:[#allocation7 + $0x18f0] sm:$0xff]
    %v1647 = vld [vmem:[#allocation7 + $0x18f8] sm:$0xff]
    %v1648 = vld [vmem:[#allocation7 + $0x1900] sm:$0xff]
    %v1649 = vld [vmem:[#allocation7 + $0x1908] sm:$0xff]
    %v1650 = vld [vmem:[#allocation7 + $0x1910] sm:$0xff]
    %v1651 = vld [vmem:[#allocation7 + $0x1918] sm:$0xff]
    %v1652 = vld [vmem:[#allocation7 + $0x1920] sm:$0xff]
    %v1653 = vld [vmem:[#allocation7 + $0x1928] sm:$0xff]
    %v1654 = vld [vmem:[#allocation7 + $0x1930] sm:$0xff]
    %v1655 = vld [vmem:[#allocation7 + $0x1938] sm:$0xff]
    %v1656 = vld [vmem:[#allocation7 + $0x1940] sm:$0xff]
    %v1657 = vld [vmem:[#allocation7 + $0x1948] sm:$0xff]
    %v1658 = vld [vmem:[#allocation7 + $0x1950] sm:$0xff]
    %v1659 = vld [vmem:[#allocation7 + $0x1958] sm:$0xff]
    %v1660 = vld [vmem:[#allocation7 + $0x1960] sm:$0xff]
    %v1661 = vld [vmem:[#allocation7 + $0x1968] sm:$0xff]
    %v1662 = vld [vmem:[#allocation7 + $0x1970] sm:$0xff]
    %v1663 = vld [vmem:[#allocation7 + $0x1978] sm:$0xff]
    %v1664 = vld [vmem:[#allocation7 + $0x1980] sm:$0xff]
    %v1665 = vld [vmem:[#allocation7 + $0x1988] sm:$0xff]
    %v1666 = vld [vmem:[#allocation7 + $0x1990] sm:$0xff]
    %v1667 = vld [vmem:[#allocation7 + $0x1998] sm:$0xff]
    %v1668 = vld [vmem:[#allocation7 + $0x19a0] sm:$0xff]
    %v1669 = vld [vmem:[#allocation7 + $0x19a8] sm:$0xff]
    %v1670 = vld [vmem:[#allocation7 + $0x19b0] sm:$0xff]
    %v1671 = vld [vmem:[#allocation7 + $0x19b8] sm:$0xff]
    %v1672 = vld [vmem:[#allocation7 + $0x19c0] sm:$0xff]
    %v1673 = vld [vmem:[#allocation7 + $0x19c8] sm:$0xff]
    %v1674 = vld [vmem:[#allocation7 + $0x19d0] sm:$0xff]
    %v1675 = vld [vmem:[#allocation7 + $0x19d8] sm:$0xff]
    %v1676 = vld [vmem:[#allocation7 + $0x19e0] sm:$0xff]
    %v1677 = vld [vmem:[#allocation7 + $0x19e8] sm:$0xff]
    %v1678 = vld [vmem:[#allocation7 + $0x19f0] sm:$0xff]
    %v1679 = vld [vmem:[#allocation7 + $0x19f8] sm:$0xff]
    %v1680 = vld [vmem:[#allocation7 + $0x1a00] sm:$0xff]
    %v1681 = vld [vmem:[#allocation7 + $0x1a08] sm:$0xff]
    %v1682 = vld [vmem:[#allocation7 + $0x1a10] sm:$0xff]
    %v1683 = vld [vmem:[#allocation7 + $0x1a18] sm:$0xff]
    %v1684 = vld [vmem:[#allocation7 + $0x1a20] sm:$0xff]
    %v1685 = vld [vmem:[#allocation7 + $0x1a28] sm:$0xff]
    %v1686 = vld [vmem:[#allocation7 + $0x1a30] sm:$0xff]
    %v1687 = vld [vmem:[#allocation7 + $0x1a38] sm:$0xff]
    %v1688 = vld [vmem:[#allocation7 + $0x1a40] sm:$0xff]
    %v1689 = vld [vmem:[#allocation7 + $0x1a48] sm:$0xff]
    %v1690 = vld [vmem:[#allocation7 + $0x1a50] sm:$0xff]
    %v1691 = vld [vmem:[#allocation7 + $0x1a58] sm:$0xff]
    %v1692 = vld [vmem:[#allocation7 + $0x1a60] sm:$0xff]
    %v1693 = vld [vmem:[#allocation7 + $0x1a68] sm:$0xff]
    %v1694 = vld [vmem:[#allocation7 + $0x1a70] sm:$0xff]
    %v1695 = vld [vmem:[#allocation7 + $0x1a78] sm:$0xff]
    %v1696 = vld [vmem:[#allocation7 + $0x1a80] sm:$0xff]
    %v1697 = vld [vmem:[#allocation7 + $0x1a88] sm:$0xff]
    %v1698 = vld [vmem:[#allocation7 + $0x1a90] sm:$0xff]
    %v1699 = vld [vmem:[#allocation7 + $0x1a98] sm:$0xff]
    %v1700 = vld [vmem:[#allocation7 + $0x1aa0] sm:$0xff]
    %v1701 = vld [vmem:[#allocation7 + $0x1aa8] sm:$0xff]
    %v1702 = vld [vmem:[#allocation7 + $0x1ab0] sm:$0xff]
    %v1703 = vld [vmem:[#allocation7 + $0x1ab8] sm:$0xff]
    %v1704 = vld [vmem:[#allocation7 + $0x1ac0] sm:$0xff]
    %v1705 = vld [vmem:[#allocation7 + $0x1ac8] sm:$0xff]
    %v1706 = vld [vmem:[#allocation7 + $0x1ad0] sm:$0xff]
    %v1707 = vld [vmem:[#allocation7 + $0x1ad8] sm:$0xff]
    %v1708 = vld [vmem:[#allocation7 + $0x1ae0] sm:$0xff]
    %v1709 = vld [vmem:[#allocation7 + $0x1ae8] sm:$0xff]
    %v1710 = vld [vmem:[#allocation7 + $0x1af0] sm:$0xff]
    %v1711 = vld [vmem:[#allocation7 + $0x1af8] sm:$0xff]
    %v1712 = vld [vmem:[#allocation7 + $0x1b00] sm:$0xff]
    %v1713 = vld [vmem:[#allocation7 + $0x1b08] sm:$0xff]
    %v1714 = vld [vmem:[#allocation7 + $0x1b10] sm:$0xff]
    %v1715 = vld [vmem:[#allocation7 + $0x1b18] sm:$0xff]
    %v1716 = vld [vmem:[#allocation7 + $0x1b20] sm:$0xff]
    %v1717 = vld [vmem:[#allocation7 + $0x1b28] sm:$0xff]
    %v1718 = vld [vmem:[#allocation7 + $0x1b30] sm:$0xff]
    %v1719 = vld [vmem:[#allocation7 + $0x1b38] sm:$0xff]
    %v1720 = vld [vmem:[#allocation7 + $0x1b40] sm:$0xff]
    %v1721 = vld [vmem:[#allocation7 + $0x1b48] sm:$0xff]
    %v1722 = vld [vmem:[#allocation7 + $0x1b50] sm:$0xff]
    %v1723 = vld [vmem:[#allocation7 + $0x1b58] sm:$0xff]
    %v1724 = vld [vmem:[#allocation7 + $0x1b60] sm:$0xff]
    %v1725 = vld [vmem:[#allocation7 + $0x1b68] sm:$0xff]
    %v1726 = vld [vmem:[#allocation7 + $0x1b70] sm:$0xff]
    %v1727 = vld [vmem:[#allocation7 + $0x1b78] sm:$0xff]
    %v1728 = vld [vmem:[#allocation7 + $0x1b80] sm:$0xff]
    %v1729 = vld [vmem:[#allocation7 + $0x1b88] sm:$0xff]
    %v1730 = vld [vmem:[#allocation7 + $0x1b90] sm:$0xff]
    %v1731 = vld [vmem:[#allocation7 + $0x1b98] sm:$0xff]
    %v1732 = vld [vmem:[#allocation7 + $0x1ba0] sm:$0xff]
    %v1733 = vld [vmem:[#allocation7 + $0x1ba8] sm:$0xff]
    %v1734 = vld [vmem:[#allocation7 + $0x1bb0] sm:$0xff]
    %v1735 = vld [vmem:[#allocation7 + $0x1bb8] sm:$0xff]
    %v1736 = vld [vmem:[#allocation7 + $0x1bc0] sm:$0xff]
    %v1737 = vld [vmem:[#allocation7 + $0x1bc8] sm:$0xff]
    %v1738 = vld [vmem:[#allocation7 + $0x1bd0] sm:$0xff]
    %v1739 = vld [vmem:[#allocation7 + $0x1bd8] sm:$0xff]
    %v1740 = vld [vmem:[#allocation7 + $0x1be0] sm:$0xff]
    %v1741 = vld [vmem:[#allocation7 + $0x1be8] sm:$0xff]
    %v1742 = vld [vmem:[#allocation7 + $0x1bf0] sm:$0xff]
    %v1743 = vld [vmem:[#allocation7 + $0x1bf8] sm:$0xff]
    %v1744 = vld [vmem:[#allocation7 + $0x1c00] sm:$0xff]
    %v1745 = vld [vmem:[#allocation7 + $0x1c08] sm:$0xff]
    %v1746 = vld [vmem:[#allocation7 + $0x1c10] sm:$0xff]
    %v1747 = vld [vmem:[#allocation7 + $0x1c18] sm:$0xff]
    %v1748 = vld [vmem:[#allocation7 + $0x1c20] sm:$0xff]
    %v1749 = vld [vmem:[#allocation7 + $0x1c28] sm:$0xff]
    %v1750 = vld [vmem:[#allocation7 + $0x1c30] sm:$0xff]
    %v1751 = vld [vmem:[#allocation7 + $0x1c38] sm:$0xff]
    %v1752 = vld [vmem:[#allocation7 + $0x1c40] sm:$0xff]
    %v1753 = vld [vmem:[#allocation7 + $0x1c48] sm:$0xff]
    %v1754 = vld [vmem:[#allocation7 + $0x1c50] sm:$0xff]
    %v1755 = vld [vmem:[#allocation7 + $0x1c58] sm:$0xff]
    %v1756 = vld [vmem:[#allocation7 + $0x1c60] sm:$0xff]
    %v1757 = vld [vmem:[#allocation7 + $0x1c68] sm:$0xff]
    %v1758 = vld [vmem:[#allocation7 + $0x1c70] sm:$0xff]
    %v1759 = vld [vmem:[#allocation7 + $0x1c78] sm:$0xff]
    %v1760 = vld [vmem:[#allocation7 + $0x1c80] sm:$0xff]
    %v1761 = vld [vmem:[#allocation7 + $0x1c88] sm:$0xff]
    %v1762 = vld [vmem:[#allocation7 + $0x1c90] sm:$0xff]
    %v1763 = vld [vmem:[#allocation7 + $0x1c98] sm:$0xff]
    %v1764 = vld [vmem:[#allocation7 + $0x1ca0] sm:$0xff]
    %v1765 = vld [vmem:[#allocation7 + $0x1ca8] sm:$0xff]
    %v1766 = vld [vmem:[#allocation7 + $0x1cb0] sm:$0xff]
    %v1767 = vld [vmem:[#allocation7 + $0x1cb8] sm:$0xff]
    %v1768 = vld [vmem:[#allocation7 + $0x1cc0] sm:$0xff]
    %v1769 = vld [vmem:[#allocation7 + $0x1cc8] sm:$0xff]
    %v1770 = vld [vmem:[#allocation7 + $0x1cd0] sm:$0xff]
    %v1771 = vld [vmem:[#allocation7 + $0x1cd8] sm:$0xff]
    %v1772 = vld [vmem:[#allocation7 + $0x1ce0] sm:$0xff]
    %v1773 = vld [vmem:[#allocation7 + $0x1ce8] sm:$0xff]
    %v1774 = vld [vmem:[#allocation7 + $0x1cf0] sm:$0xff]
    %v1775 = vld [vmem:[#allocation7 + $0x1cf8] sm:$0xff]
    %v1776 = vld [vmem:[#allocation7 + $0x1d00] sm:$0xff]
    %v1777 = vld [vmem:[#allocation7 + $0x1d08] sm:$0xff]
    %v1778 = vld [vmem:[#allocation7 + $0x1d10] sm:$0xff]
    %v1779 = vld [vmem:[#allocation7 + $0x1d18] sm:$0xff]
    %v1780 = vld [vmem:[#allocation7 + $0x1d20] sm:$0xff]
    %v1781 = vld [vmem:[#allocation7 + $0x1d28] sm:$0xff]
    %v1782 = vld [vmem:[#allocation7 + $0x1d30] sm:$0xff]
    %v1783 = vld [vmem:[#allocation7 + $0x1d38] sm:$0xff]
    %v1784 = vld [vmem:[#allocation7 + $0x1d40] sm:$0xff]
    %v1785 = vld [vmem:[#allocation7 + $0x1d48] sm:$0xff]
    %v1786 = vld [vmem:[#allocation7 + $0x1d50] sm:$0xff]
    %v1787 = vld [vmem:[#allocation7 + $0x1d58] sm:$0xff]
    %v1788 = vld [vmem:[#allocation7 + $0x1d60] sm:$0xff]
    %v1789 = vld [vmem:[#allocation7 + $0x1d68] sm:$0xff]
    %v1790 = vld [vmem:[#allocation7 + $0x1d70] sm:$0xff]
    %v1791 = vld [vmem:[#allocation7 + $0x1d78] sm:$0xff]
    %v1792 = vld [vmem:[#allocation7 + $0x1d80] sm:$0xff]
    %v1793 = vld [vmem:[#allocation7 + $0x1d88] sm:$0xff]
    %v1794 = vld [vmem:[#allocation7 + $0x1d90] sm:$0xff]
    %v1795 = vld [vmem:[#allocation7 + $0x1d98] sm:$0xff]
    %v1796 = vld [vmem:[#allocation7 + $0x1da0] sm:$0xff]
    %v1797 = vld [vmem:[#allocation7 + $0x1da8] sm:$0xff]
    %v1798 = vld [vmem:[#allocation7 + $0x1db0] sm:$0xff]
    %v1799 = vld [vmem:[#allocation7 + $0x1db8] sm:$0xff]
    %v1800 = vld [vmem:[#allocation7 + $0x1dc0] sm:$0xff]
    %v1801 = vld [vmem:[#allocation7 + $0x1dc8] sm:$0xff]
    %v1802 = vld [vmem:[#allocation7 + $0x1dd0] sm:$0xff]
    %v1803 = vld [vmem:[#allocation7 + $0x1dd8] sm:$0xff]
    %v1804 = vld [vmem:[#allocation7 + $0x1de0] sm:$0xff]
    %v1805 = vld [vmem:[#allocation7 + $0x1de8] sm:$0xff]
    %v1806 = vld [vmem:[#allocation7 + $0x1df0] sm:$0xff]
    %v1807 = vld [vmem:[#allocation7 + $0x1df8] sm:$0xff]
    %v1808 = vld [vmem:[#allocation7 + $0x1e00] sm:$0xff]
    %v1809 = vld [vmem:[#allocation7 + $0x1e08] sm:$0xff]
    %v1810 = vld [vmem:[#allocation7 + $0x1e10] sm:$0xff]
    %v1811 = vld [vmem:[#allocation7 + $0x1e18] sm:$0xff]
    %v1812 = vld [vmem:[#allocation7 + $0x1e20] sm:$0xff]
    %v1813 = vld [vmem:[#allocation7 + $0x1e28] sm:$0xff]
    %v1814 = vld [vmem:[#allocation7 + $0x1e30] sm:$0xff]
    %v1815 = vld [vmem:[#allocation7 + $0x1e38] sm:$0xff]
    %v1816 = vld [vmem:[#allocation7 + $0x1e40] sm:$0xff]
    %v1817 = vld [vmem:[#allocation7 + $0x1e48] sm:$0xff]
    %v1818 = vld [vmem:[#allocation7 + $0x1e50] sm:$0xff]
    %v1819 = vld [vmem:[#allocation7 + $0x1e58] sm:$0xff]
    %v1820 = vld [vmem:[#allocation7 + $0x1e60] sm:$0xff]
    %v1821 = vld [vmem:[#allocation7 + $0x1e68] sm:$0xff]
    %v1822 = vld [vmem:[#allocation7 + $0x1e70] sm:$0xff]
    %v1823 = vld [vmem:[#allocation7 + $0x1e78] sm:$0xff]
    %v1824 = vld [vmem:[#allocation7 + $0x1e80] sm:$0xff]
    %v1825 = vld [vmem:[#allocation7 + $0x1e88] sm:$0xff]
    %v1826 = vld [vmem:[#allocation7 + $0x1e90] sm:$0xff]
    %v1827 = vld [vmem:[#allocation7 + $0x1e98] sm:$0xff]
    %v1828 = vld [vmem:[#allocation7 + $0x1ea0] sm:$0xff]
    %v1829 = vld [vmem:[#allocation7 + $0x1ea8] sm:$0xff]
    %v1830 = vld [vmem:[#allocation7 + $0x1eb0] sm:$0xff]
    %v1831 = vld [vmem:[#allocation7 + $0x1eb8] sm:$0xff]
    %v1832 = vld [vmem:[#allocation7 + $0x1ec0] sm:$0xff]
    %v1833 = vld [vmem:[#allocation7 + $0x1ec8] sm:$0xff]
    %v1834 = vld [vmem:[#allocation7 + $0x1ed0] sm:$0xff]
    %v1835 = vld [vmem:[#allocation7 + $0x1ed8] sm:$0xff]
    %v1836 = vld [vmem:[#allocation7 + $0x1ee0] sm:$0xff]
    %v1837 = vld [vmem:[#allocation7 + $0x1ee8] sm:$0xff]
    %v1838 = vld [vmem:[#allocation7 + $0x1ef0] sm:$0xff]
    %v1839 = vld [vmem:[#allocation7 + $0x1ef8] sm:$0xff]
    %v1840 = vld [vmem:[#allocation7 + $0x1f00] sm:$0xff]
    %v1841 = vld [vmem:[#allocation7 + $0x1f08] sm:$0xff]
    %v1842 = vld [vmem:[#allocation7 + $0x1f10] sm:$0xff]
    %v1843 = vld [vmem:[#allocation7 + $0x1f18] sm:$0xff]
    %v1844 = vld [vmem:[#allocation7 + $0x1f20] sm:$0xff]
    %v1845 = vld [vmem:[#allocation7 + $0x1f28] sm:$0xff]
    %v1846 = vld [vmem:[#allocation7 + $0x1f30] sm:$0xff]
    %v1847 = vld [vmem:[#allocation7 + $0x1f38] sm:$0xff]
    %v1848 = vld [vmem:[#allocation7 + $0x1f40] sm:$0xff]
    %v1849 = vld [vmem:[#allocation7 + $0x1f48] sm:$0xff]
    %v1850 = vld [vmem:[#allocation7 + $0x1f50] sm:$0xff]
    %v1851 = vld [vmem:[#allocation7 + $0x1f58] sm:$0xff]
    %v1852 = vld [vmem:[#allocation7 + $0x1f60] sm:$0xff]
    %v1853 = vld [vmem:[#allocation7 + $0x1f68] sm:$0xff]
    %v1854 = vld [vmem:[#allocation7 + $0x1f70] sm:$0xff]
    %v1855 = vld [vmem:[#allocation7 + $0x1f78] sm:$0xff]
    %v1856 = vld [vmem:[#allocation7 + $0x1f80] sm:$0xff]
    %v1857 = vld [vmem:[#allocation7 + $0x1f88] sm:$0xff]
    %v1858 = vld [vmem:[#allocation7 + $0x1f90] sm:$0xff]
    %v1859 = vld [vmem:[#allocation7 + $0x1f98] sm:$0xff]
    %v1860 = vld [vmem:[#allocation7 + $0x1fa0] sm:$0xff]
    %v1861 = vld [vmem:[#allocation7 + $0x1fa8] sm:$0xff]
    %v1862 = vld [vmem:[#allocation7 + $0x1fb0] sm:$0xff]
    %v1863 = vld [vmem:[#allocation7 + $0x1fb8] sm:$0xff]
    %v1864 = vld [vmem:[#allocation7 + $0x1fc0] sm:$0xff]
    %v1865 = vld [vmem:[#allocation7 + $0x1fc8] sm:$0xff]
    %v1866 = vld [vmem:[#allocation7 + $0x1fd0] sm:$0xff]
    %v1867 = vld [vmem:[#allocation7 + $0x1fd8] sm:$0xff]
    %v1868 = vld [vmem:[#allocation7 + $0x1fe0] sm:$0xff]
    %v1869 = vld [vmem:[#allocation7 + $0x1fe8] sm:$0xff]
    %v1870 = vld [vmem:[#allocation7 + $0x1ff0] sm:$0xff]
    %v1871 = vld [vmem:[#allocation7 + $0x1ff8] sm:$0xff]
    %v1872 = vld [vmem:[#allocation7 + $0x2000] sm:$0xff]
    %v1873 = vld [vmem:[#allocation7 + $0x2008] sm:$0xff]
    %v1874 = vld [vmem:[#allocation7 + $0x2010] sm:$0xff]
    %v1875 = vld [vmem:[#allocation7 + $0x2018] sm:$0xff]
    %v1876 = vld [vmem:[#allocation7 + $0x2020] sm:$0xff]
    %v1877 = vld [vmem:[#allocation7 + $0x2028] sm:$0xff]
    %v1878 = vld [vmem:[#allocation7 + $0x2030] sm:$0xff]
    %v1879 = vld [vmem:[#allocation7 + $0x2038] sm:$0xff]
    %v1880 = vld [vmem:[#allocation7 + $0x2040] sm:$0xff]
    %v1881 = vld [vmem:[#allocation7 + $0x2048] sm:$0xff]
    %v1882 = vld [vmem:[#allocation7 + $0x2050] sm:$0xff]
    %v1883 = vld [vmem:[#allocation7 + $0x2058] sm:$0xff]
    %v1884 = vld [vmem:[#allocation7 + $0x2060] sm:$0xff]
    %v1885 = vld [vmem:[#allocation7 + $0x2068] sm:$0xff]
    %v1886 = vld [vmem:[#allocation7 + $0x2070] sm:$0xff]
    %v1887 = vld [vmem:[#allocation7 + $0x2078] sm:$0xff]
    %v1888 = vld [vmem:[#allocation7 + $0x2080] sm:$0xff]
    %v1889 = vld [vmem:[#allocation7 + $0x2088] sm:$0xff]
    %v1890 = vld [vmem:[#allocation7 + $0x2090] sm:$0xff]
    %v1891 = vld [vmem:[#allocation7 + $0x2098] sm:$0xff]
    %v1892 = vld [vmem:[#allocation7 + $0x20a0] sm:$0xff]
    %v1893 = vld [vmem:[#allocation7 + $0x20a8] sm:$0xff]
    %v1894 = vld [vmem:[#allocation7 + $0x20b0] sm:$0xff]
    %v1895 = vld [vmem:[#allocation7 + $0x20b8] sm:$0xff]
    %v1896 = vld [vmem:[#allocation7 + $0x20c0] sm:$0xff]
    %v1897 = vld [vmem:[#allocation7 + $0x20c8] sm:$0xff]
    %v1898 = vld [vmem:[#allocation7 + $0x20d0] sm:$0xff]
    %v1899 = vld [vmem:[#allocation7 + $0x20d8] sm:$0xff]
    %v1900 = vld [vmem:[#allocation7 + $0x20e0] sm:$0xff]
    %v1901 = vld [vmem:[#allocation7 + $0x20e8] sm:$0xff]
    %v1902 = vld [vmem:[#allocation7 + $0x20f0] sm:$0xff]
    %v1903 = vld [vmem:[#allocation7 + $0x20f8] sm:$0xff]
    %v1904 = vld [vmem:[#allocation7 + $0x2100] sm:$0xff]
    %v1905 = vld [vmem:[#allocation7 + $0x2108] sm:$0xff]
    %v1906 = vld [vmem:[#allocation7 + $0x2110] sm:$0xff]
    %v1907 = vld [vmem:[#allocation7 + $0x2118] sm:$0xff]
    %v1908 = vld [vmem:[#allocation7 + $0x2120] sm:$0xff]
    %v1909 = vld [vmem:[#allocation7 + $0x2128] sm:$0xff]
    %v1910 = vld [vmem:[#allocation7 + $0x2130] sm:$0xff]
    %v1911 = vld [vmem:[#allocation7 + $0x2138] sm:$0xff]
    %v1912 = vld [vmem:[#allocation7 + $0x2140] sm:$0xff]
    %v1913 = vld [vmem:[#allocation7 + $0x2148] sm:$0xff]
    %v1914 = vld [vmem:[#allocation7 + $0x2150] sm:$0xff]
    %v1915 = vld [vmem:[#allocation7 + $0x2158] sm:$0xff]
    %v1916 = vld [vmem:[#allocation7 + $0x2160] sm:$0xff]
    %v1917 = vld [vmem:[#allocation7 + $0x2168] sm:$0xff]
    %v1918 = vld [vmem:[#allocation7 + $0x2170] sm:$0xff]
    %v1919 = vld [vmem:[#allocation7 + $0x2178] sm:$0xff]
    %v1920 = vld [vmem:[#allocation7 + $0x2180] sm:$0xff]
    %v1921 = vld [vmem:[#allocation7 + $0x2188] sm:$0xff]
    %v1922 = vld [vmem:[#allocation7 + $0x2190] sm:$0xff]
    %v1923 = vld [vmem:[#allocation7 + $0x2198] sm:$0xff]
    %v1924 = vld [vmem:[#allocation7 + $0x21a0] sm:$0xff]
    %v1925 = vld [vmem:[#allocation7 + $0x21a8] sm:$0xff]
    %v1926 = vld [vmem:[#allocation7 + $0x21b0] sm:$0xff]
    %v1927 = vld [vmem:[#allocation7 + $0x21b8] sm:$0xff]
    %v1928 = vld [vmem:[#allocation7 + $0x21c0] sm:$0xff]
    %v1929 = vld [vmem:[#allocation7 + $0x21c8] sm:$0xff]
    %v1930 = vld [vmem:[#allocation7 + $0x21d0] sm:$0xff]
    %v1931 = vld [vmem:[#allocation7 + $0x21d8] sm:$0xff]
    %v1932 = vld [vmem:[#allocation7 + $0x21e0] sm:$0xff]
    %v1933 = vld [vmem:[#allocation7 + $0x21e8] sm:$0xff]
    %v1934 = vld [vmem:[#allocation7 + $0x21f0] sm:$0xff]
    %v1935 = vld [vmem:[#allocation7 + $0x21f8] sm:$0xff]
    %v1936 = vld [vmem:[#allocation7 + $0x2200] sm:$0xff]
    %v1937 = vld [vmem:[#allocation7 + $0x2208] sm:$0xff]
    %v1938 = vld [vmem:[#allocation7 + $0x2210] sm:$0xff]
    %v1939 = vld [vmem:[#allocation7 + $0x2218] sm:$0xff]
    %v1940 = vld [vmem:[#allocation7 + $0x2220] sm:$0xff]
    %v1941 = vld [vmem:[#allocation7 + $0x2228] sm:$0xff]
    %v1942 = vld [vmem:[#allocation7 + $0x2230] sm:$0xff]
    %v1943 = vld [vmem:[#allocation7 + $0x2238] sm:$0xff]
    %v1944 = vld [vmem:[#allocation7 + $0x2240] sm:$0xff]
    %v1945 = vld [vmem:[#allocation7 + $0x2248] sm:$0xff]
    %v1946 = vld [vmem:[#allocation7 + $0x2250] sm:$0xff]
    %v1947 = vld [vmem:[#allocation7 + $0x2258] sm:$0xff]
    %v1948 = vld [vmem:[#allocation7 + $0x2260] sm:$0xff]
    %v1949 = vld [vmem:[#allocation7 + $0x2268] sm:$0xff]
    %v1950 = vld [vmem:[#allocation7 + $0x2270] sm:$0xff]
    %v1951 = vld [vmem:[#allocation7 + $0x2278] sm:$0xff]
    %v1952 = vld [vmem:[#allocation7 + $0x2280] sm:$0xff]
    %v1953 = vld [vmem:[#allocation7 + $0x2288] sm:$0xff]
    %v1954 = vld [vmem:[#allocation7 + $0x2290] sm:$0xff]
    %v1955 = vld [vmem:[#allocation7 + $0x2298] sm:$0xff]
    %v1956 = vld [vmem:[#allocation7 + $0x22a0] sm:$0xff]
    %v1957 = vld [vmem:[#allocation7 + $0x22a8] sm:$0xff]
    %v1958 = vld [vmem:[#allocation7 + $0x22b0] sm:$0xff]
    %v1959 = vld [vmem:[#allocation7 + $0x22b8] sm:$0xff]
    %v1960 = vld [vmem:[#allocation7 + $0x22c0] sm:$0xff]
    %v1961 = vld [vmem:[#allocation7 + $0x22c8] sm:$0xff]
    %v1962 = vld [vmem:[#allocation7 + $0x22d0] sm:$0xff]
    %v1963 = vld [vmem:[#allocation7 + $0x22d8] sm:$0xff]
    %v1964 = vld [vmem:[#allocation7 + $0x22e0] sm:$0xff]
    %v1965 = vld [vmem:[#allocation7 + $0x22e8] sm:$0xff]
    %v1966 = vld [vmem:[#allocation7 + $0x22f0] sm:$0xff]
    %v1967 = vld [vmem:[#allocation7 + $0x22f8] sm:$0xff]
    %v1968 = vld [vmem:[#allocation7 + $0x2300] sm:$0xff]
    %v1969 = vld [vmem:[#allocation7 + $0x2308] sm:$0xff]
    %v1970 = vld [vmem:[#allocation7 + $0x2310] sm:$0xff]
    %v1971 = vld [vmem:[#allocation7 + $0x2318] sm:$0xff]
    %v1972 = vld [vmem:[#allocation7 + $0x2320] sm:$0xff]
    %v1973 = vld [vmem:[#allocation7 + $0x2328] sm:$0xff]
    %v1974 = vld [vmem:[#allocation7 + $0x2330] sm:$0xff]
    %v1975 = vld [vmem:[#allocation7 + $0x2338] sm:$0xff]
    %v1976 = vld [vmem:[#allocation7 + $0x2340] sm:$0xff]
    %v1977 = vld [vmem:[#allocation7 + $0x2348] sm:$0xff]
    %v1978 = vld [vmem:[#allocation7 + $0x2350] sm:$0xff]
    %v1979 = vld [vmem:[#allocation7 + $0x2358] sm:$0xff]
    %v1980 = vld [vmem:[#allocation7 + $0x2360] sm:$0xff]
    %v1981 = vld [vmem:[#allocation7 + $0x2368] sm:$0xff]
    %v1982 = vld [vmem:[#allocation7 + $0x2370] sm:$0xff]
    %v1983 = vld [vmem:[#allocation7 + $0x2378] sm:$0xff]
    %v1984 = vld [vmem:[#allocation7 + $0x2380] sm:$0xff]
    %v1985 = vld [vmem:[#allocation7 + $0x2388] sm:$0xff]
    %v1986 = vld [vmem:[#allocation7 + $0x2390] sm:$0xff]
    %v1987 = vld [vmem:[#allocation7 + $0x2398] sm:$0xff]
    %v1988 = vld [vmem:[#allocation7 + $0x23a0] sm:$0xff]
    %v1989 = vld [vmem:[#allocation7 + $0x23a8] sm:$0xff]
    %v1990 = vld [vmem:[#allocation7 + $0x23b0] sm:$0xff]
    %v1991 = vld [vmem:[#allocation7 + $0x23b8] sm:$0xff]
    %v1992 = vld [vmem:[#allocation7 + $0x23c0] sm:$0xff]
    %v1993 = vld [vmem:[#allocation7 + $0x23c8] sm:$0xff]
    %v1994 = vld [vmem:[#allocation7 + $0x23d0] sm:$0xff]
    %v1995 = vld [vmem:[#allocation7 + $0x23d8] sm:$0xff]
    %v1996 = vld [vmem:[#allocation7 + $0x23e0] sm:$0xff]
    %v1997 = vld [vmem:[#allocation7 + $0x23e8] sm:$0xff]
    %v1998 = vld [vmem:[#allocation7 + $0x23f0] sm:$0xff]
    %v1999 = vld [vmem:[#allocation7 + $0x23f8] sm:$0xff]
    %2000 = vmatprep.subr.mxu0 0.0
    %2001 = vmatpush1.msra.mxu0 %v848
    %2002 = vmatprep.subr.mxu0 0.0
    %2003 = vmatpush1.msra.mxu0 %v849
    %2004 = vmatprep.subr.mxu0 0.0
    %2005 = vmatpush1.msra.mxu0 %v850
    %2006 = vmatprep.subr.mxu0 0.0
    %2007 = vmatpush1.msra.mxu0 %v851
    %2008 = vmatprep.subr.mxu0 0.0
    %2009 = vmatpush1.msra.mxu0 %v852
    %2010 = vmatprep.subr.mxu0 0.0
    %2011 = vmatpush1.msra.mxu0 %v853
    %2012 = vmatprep.subr.mxu0 0.0
    %2013 = vmatpush1.msra.mxu0 %v854
    %2014 = vmatprep.subr.mxu0 0.0
    %2015 = vmatpush1.msra.mxu0 %v855
    %2016 = vmatprep.subr.mxu0 0.0
    %2017 = vmatpush1.msra.mxu0 %v856
    %2018 = vmatprep.subr.mxu0 0.0
    %2019 = vmatpush1.msra.mxu0 %v857
    %2020 = vmatprep.subr.mxu0 0.0
    %2021 = vmatpush1.msra.mxu0 %v858
    %2022 = vmatprep.subr.mxu0 0.0
    %2023 = vmatpush1.msra.mxu0 %v859
    %2024 = vmatprep.subr.mxu0 0.0
    %2025 = vmatpush1.msra.mxu0 %v860
    %2026 = vmatprep.subr.mxu0 0.0
    %2027 = vmatpush1.msra.mxu0 %v861
    %2028 = vmatprep.subr.mxu0 0.0
    %2029 = vmatpush1.msra.mxu0 %v862
    %2030 = vmatprep.subr.mxu0 0.0
    %2031 = vmatpush1.msra.mxu0 %v863
    %2032 = vmatprep.subr.mxu0 0.0
    %2033 = vmatpush1.msra.mxu0 0.0
    %2034 = vmatprep.subr.mxu0 0.0
    %2035 = vmatpush1.msra.mxu0 0.0
    %2036 = vmatprep.subr.mxu0 0.0
    %2037 = vmatpush1.msra.mxu0 0.0
    %2038 = vmatprep.subr.mxu0 0.0
    %2039 = vmatpush1.msra.mxu0 0.0
    %2040 = vmatprep.subr.mxu0 0.0
    %2041 = vmatpush1.msra.mxu0 0.0
    %2042 = vmatprep.subr.mxu0 0.0
    %2043 = vmatpush1.msra.mxu0 0.0
    %2044 = vmatprep.subr.mxu0 0.0
    %2045 = vmatpush1.msra.mxu0 0.0
    %2046 = vmatprep.subr.mxu0 0.0
    %2047 = vmatpush1.msra.mxu0 0.0
    %2048 = vmatprep.subr.mxu0 0.0
    %2049 = vmatpush1.msra.mxu0 0.0
    %2050 = vmatprep.subr.mxu0 0.0
    %2051 = vmatpush1.msra.mxu0 0.0
    %2052 = vmatprep.subr.mxu0 0.0
    %2053 = vmatpush1.msra.mxu0 0.0
    %2054 = vmatprep.subr.mxu0 0.0
    %2055 = vmatpush1.msra.mxu0 0.0
    %2056 = vmatprep.subr.mxu0 0.0
    %2057 = vmatpush1.msra.mxu0 0.0
    %2058 = vmatprep.subr.mxu0 0.0
    %2059 = vmatpush1.msra.mxu0 0.0
    %2060 = vmatprep.subr.mxu0 0.0
    %2061 = vmatpush1.msra.mxu0 0.0
    %2062 = vmatprep.subr.mxu0 0.0
    %2063 = vmatpush1.msra.mxu0 0.0
    %2064 = vmatprep.mubr.f32.mxu0 0.0
    %2065 = vmatmul.mubr.f32.gmra.mrb[0].mxu0 %v477
    %v2066 = vpop.f32.mrb[0].mxu0
    %v2067 = vadd.f32 0.0, %v2066
    %v2068 = vpop.f32.mrb[0].mxu0
    %2069 = vdwg.mxu0
    %2070 = vmatprep.subr.mxu0 0.0
    %2071 = vmatpush1.msra.mxu0 %v864
    %2072 = vmatprep.subr.mxu0 0.0
    %2073 = vmatpush1.msra.mxu0 %v865
    %2074 = vmatprep.subr.mxu0 0.0
    %2075 = vmatpush1.msra.mxu0 %v866
    %2076 = vmatprep.subr.mxu0 0.0
    %2077 = vmatpush1.msra.mxu0 %v867
    %2078 = vmatprep.subr.mxu0 0.0
    %2079 = vmatpush1.msra.mxu0 %v868
    %2080 = vmatprep.subr.mxu0 0.0
    %2081 = vmatpush1.msra.mxu0 %v869
    %2082 = vmatprep.subr.mxu0 0.0
    %2083 = vmatpush1.msra.mxu0 %v870
    %2084 = vmatprep.subr.mxu0 0.0
    %2085 = vmatpush1.msra.mxu0 %v871
    %2086 = vmatprep.subr.mxu0 0.0
    %2087 = vmatpush1.msra.mxu0 %v872
    %2088 = vmatprep.subr.mxu0 0.0
    %2089 = vmatpush1.msra.mxu0 %v873
    %2090 = vmatprep.subr.mxu0 0.0
    %2091 = vmatpush1.msra.mxu0 %v874
    %2092 = vmatprep.subr.mxu0 0.0
    %2093 = vmatpush1.msra.mxu0 %v875
    %2094 = vmatprep.subr.mxu0 0.0
    %2095 = vmatpush1.msra.mxu0 %v876
    %2096 = vmatprep.subr.mxu0 0.0
    %2097 = vmatpush1.msra.mxu0 %v877
    %2098 = vmatprep.subr.mxu0 0.0
    %2099 = vmatpush1.msra.mxu0 %v878
    %2100 = vmatprep.subr.mxu0 0.0
    %2101 = vmatpush1.msra.mxu0 %v879
    %2102 = vmatprep.subr.mxu0 0.0
    %2103 = vmatpush1.msra.mxu0 0.0
    %2104 = vmatprep.subr.mxu0 0.0
    %2105 = vmatpush1.msra.mxu0 0.0
    %2106 = vmatprep.subr.mxu0 0.0
    %2107 = vmatpush1.msra.mxu0 0.0
    %2108 = vmatprep.subr.mxu0 0.0
    %2109 = vmatpush1.msra.mxu0 0.0
    %2110 = vmatprep.subr.mxu0 0.0
    %2111 = vmatpush1.msra.mxu0 0.0
    %2112 = vmatprep.subr.mxu0 0.0
    %2113 = vmatpush1.msra.mxu0 0.0
    %2114 = vmatprep.subr.mxu0 0.0
    %2115 = vmatpush1.msra.mxu0 0.0
    %2116 = vmatprep.subr.mxu0 0.0
    %2117 = vmatpush1.msra.mxu0 0.0
    %2118 = vmatprep.subr.mxu0 0.0
    %2119 = vmatpush1.msra.mxu0 0.0
    %2120 = vmatprep.subr.mxu0 0.0
    %2121 = vmatpush1.msra.mxu0 0.0
    %2122 = vmatprep.subr.mxu0 0.0
    %2123 = vmatpush1.msra.mxu0 0.0
    %2124 = vmatprep.subr.mxu0 0.0
    %2125 = vmatpush1.msra.mxu0 0.0
    %2126 = vmatprep.subr.mxu0 0.0
    %2127 = vmatpush1.msra.mxu0 0.0
    %2128 = vmatprep.subr.mxu0 0.0
    %2129 = vmatpush1.msra.mxu0 0.0
    %2130 = vmatprep.subr.mxu0 0.0
    %2131 = vmatpush1.msra.mxu0 0.0
    %2132 = vmatprep.subr.mxu0 0.0
    %2133 = vmatpush1.msra.mxu0 0.0
    %2134 = vmatprep.mubr.f32.mxu0 0.0
    %2135 = vmatmul.mubr.f32.gmra.mrb[0].mxu0 %v485
    %v2136 = vpop.f32.mrb[0].mxu0
    %v2137 = vadd.f32 0.0, %v2136
    %v2138 = vpop.f32.mrb[0].mxu0
    %2139 = vdwg.mxu0
    %2140 = vmatprep.subr.mxu0 0.0
    %2141 = vmatpush1.msra.mxu0 %v880
    %2142 = vmatprep.subr.mxu0 0.0
    %2143 = vmatpush1.msra.mxu0 %v881
    %2144 = vmatprep.subr.mxu0 0.0
    %2145 = vmatpush1.msra.mxu0 %v882
    %2146 = vmatprep.subr.mxu0 0.0
    %2147 = vmatpush1.msra.mxu0 %v883
    %2148 = vmatprep.subr.mxu0 0.0
    %2149 = vmatpush1.msra.mxu0 %v884
    %2150 = vmatprep.subr.mxu0 0.0
    %2151 = vmatpush1.msra.mxu0 %v885
    %2152 = vmatprep.subr.mxu0 0.0
    %2153 = vmatpush1.msra.mxu0 %v886
    %2154 = vmatprep.subr.mxu0 0.0
    %2155 = vmatpush1.msra.mxu0 %v887
    %2156 = vmatprep.subr.mxu0 0.0
    %2157 = vmatpush1.msra.mxu0 %v888
    %2158 = vmatprep.subr.mxu0 0.0
    %2159 = vmatpush1.msra.mxu0 %v889
    %2160 = vmatprep.subr.mxu0 0.0
    %2161 = vmatpush1.msra.mxu0 %v890
    %2162 = vmatprep.subr.mxu0 0.0
    %2163 = vmatpush1.msra.mxu0 %v891
    %2164 = vmatprep.subr.mxu0 0.0
    %2165 = vmatpush1.msra.mxu0 %v892
    %2166 = vmatprep.subr.mxu0 0.0
    %2167 = vmatpush1.msra.mxu0 %v893
    %2168 = vmatprep.subr.mxu0 0.0
    %2169 = vmatpush1.msra.mxu0 %v894
    %2170 = vmatprep.subr.mxu0 0.0
    %2171 = vmatpush1.msra.mxu0 %v895
    %2172 = vmatprep.subr.mxu0 0.0
    %2173 = vmatpush1.msra.mxu0 0.0
    %2174 = vmatprep.subr.mxu0 0.0
    %2175 = vmatpush1.msra.mxu0 0.0
    %2176 = vmatprep.subr.mxu0 0.0
    %2177 = vmatpush1.msra.mxu0 0.0
    %2178 = vmatprep.subr.mxu0 0.0
    %2179 = vmatpush1.msra.mxu0 0.0
    %2180 = vmatprep.subr.mxu0 0.0
    %2181 = vmatpush1.msra.mxu0 0.0
    %2182 = vmatprep.subr.mxu0 0.0
    %2183 = vmatpush1.msra.mxu0 0.0
    %2184 = vmatprep.subr.mxu0 0.0
    %2185 = vmatpush1.msra.mxu0 0.0
    %2186 = vmatprep.subr.mxu0 0.0
    %2187 = vmatpush1.msra.mxu0 0.0
    %2188 = vmatprep.subr.mxu0 0.0
    %2189 = vmatpush1.msra.mxu0 0.0
    %2190 = vmatprep.subr.mxu0 0.0
    %2191 = vmatpush1.msra.mxu0 0.0
    %2192 = vmatprep.subr.mxu0 0.0
    %2193 = vmatpush1.msra.mxu0 0.0
    %2194 = vmatprep.subr.mxu0 0.0
    %2195 = vmatpush1.msra.mxu0 0.0
    %2196 = vmatprep.subr.mxu0 0.0
    %2197 = vmatpush1.msra.mxu0 0.0
    %2198 = vmatprep.subr.mxu0 0.0
    %2199 = vmatpush1.msra.mxu0 0.0
    %2200 = vmatprep.subr.mxu0 0.0
    %2201 = vmatpush1.msra.mxu0 0.0
    %2202 = vmatprep.subr.mxu0 0.0
    %2203 = vmatpush1.msra.mxu0 0.0
    %2204 = vmatprep.mubr.f32.mxu0 0.0
    %2205 = vmatmul.mubr.f32.gmra.mrb[0].mxu0 %v484
    %v2206 = vpop.f32.mrb[0].mxu0
    %v2207 = vadd.f32 0.0, %v2206
    %v2208 = vpop.f32.mrb[0].mxu0
    %2209 = vdwg.mxu0
    %2210 = vmatprep.subr.mxu0 0.0
    %2211 = vmatpush1.msra.mxu0 %v896
    %2212 = vmatprep.subr.mxu0 0.0
    %2213 = vmatpush1.msra.mxu0 %v897
    %2214 = vmatprep.subr.mxu0 0.0
    %2215 = vmatpush1.msra.mxu0 %v898
    %2216 = vmatprep.subr.mxu0 0.0
    %2217 = vmatpush1.msra.mxu0 %v899
    %2218 = vmatprep.subr.mxu0 0.0
    %2219 = vmatpush1.msra.mxu0 %v900
    %2220 = vmatprep.subr.mxu0 0.0
    %2221 = vmatpush1.msra.mxu0 %v901
    %2222 = vmatprep.subr.mxu0 0.0
    %2223 = vmatpush1.msra.mxu0 %v902
    %2224 = vmatprep.subr.mxu0 0.0
    %2225 = vmatpush1.msra.mxu0 %v903
    %2226 = vmatprep.subr.mxu0 0.0
    %2227 = vmatpush1.msra.mxu0 %v904
    %2228 = vmatprep.subr.mxu0 0.0
    %2229 = vmatpush1.msra.mxu0 %v905
    %2230 = vmatprep.subr.mxu0 0.0
    %2231 = vmatpush1.msra.mxu0 %v906
    %2232 = vmatprep.subr.mxu0 0.0
    %2233 = vmatpush1.msra.mxu0 %v907
    %2234 = vmatprep.subr.mxu0 0.0
    %2235 = vmatpush1.msra.mxu0 %v908
    %2236 = vmatprep.subr.mxu0 0.0
    %2237 = vmatpush1.msra.mxu0 %v909
    %2238 = vmatprep.subr.mxu0 0.0
    %2239 = vmatpush1.msra.mxu0 %v910
    %2240 = vmatprep.subr.mxu0 0.0
    %2241 = vmatpush1.msra.mxu0 %v911
    %2242 = vmatprep.subr.mxu0 0.0
    %2243 = vmatpush1.msra.mxu0 0.0
    %2244 = vmatprep.subr.mxu0 0.0
    %2245 = vmatpush1.msra.mxu0 0.0
    %2246 = vmatprep.subr.mxu0 0.0
    %2247 = vmatpush1.msra.mxu0 0.0
    %2248 = vmatprep.subr.mxu0 0.0
    %2249 = vmatpush1.msra.mxu0 0.0
    %2250 = vmatprep.subr.mxu0 0.0
    %2251 = vmatpush1.msra.mxu0 0.0
    %2252 = vmatprep.subr.mxu0 0.0
    %2253 = vmatpush1.msra.mxu0 0.0
    %2254 = vmatprep.subr.mxu0 0.0
    %2255 = vmatpush1.msra.mxu0 0.0
    %2256 = vmatprep.subr.mxu0 0.0
    %2257 = vmatpush1.msra.mxu0 0.0
    %2258 = vmatprep.subr.mxu0 0.0
    %2259 = vmatpush1.msra.mxu0 0.0
    %2260 = vmatprep.subr.mxu0 0.0
    %2261 = vmatpush1.msra.mxu0 0.0
    %2262 = vmatprep.subr.mxu0 0.0
    %2263 = vmatpush1.msra.mxu0 0.0
    %2264 = vmatprep.subr.mxu0 0.0
    %2265 = vmatpush1.msra.mxu0 0.0
    %2266 = vmatprep.subr.mxu0 0.0
    %2267 = vmatpush1.msra.mxu0 0.0
    %2268 = vmatprep.subr.mxu0 0.0
    %2269 = vmatpush1.msra.mxu0 0.0
    %2270 = vmatprep.subr.mxu0 0.0
    %2271 = vmatpush1.msra.mxu0 0.0
    %2272 = vmatprep.subr.mxu0 0.0
    %2273 = vmatpush1.msra.mxu0 0.0
    %2274 = vmatprep.mubr.f32.mxu0 0.0
    %2275 = vmatmul.mubr.f32.gmra.mrb[0].mxu0 %v486
    %v2276 = vpop.f32.mrb[0].mxu0
    %v2277 = vadd.f32 0.0, %v2276
    %v2278 = vpop.f32.mrb[0].mxu0
    %2279 = vdwg.mxu0
    %2280 = vmatprep.subr.mxu0 0.0
    %2281 = vmatpush1.msra.mxu0 %v912
    %2282 = vmatprep.subr.mxu0 0.0
    %2283 = vmatpush1.msra.mxu0 %v913
    %2284 = vmatprep.subr.mxu0 0.0
    %2285 = vmatpush1.msra.mxu0 %v914
    %2286 = vmatprep.subr.mxu0 0.0
    %2287 = vmatpush1.msra.mxu0 %v915
    %2288 = vmatprep.subr.mxu0 0.0
    %2289 = vmatpush1.msra.mxu0 %v916
    %2290 = vmatprep.subr.mxu0 0.0
    %2291 = vmatpush1.msra.mxu0 %v917
    %2292 = vmatprep.subr.mxu0 0.0
    %2293 = vmatpush1.msra.mxu0 %v918
    %2294 = vmatprep.subr.mxu0 0.0
    %2295 = vmatpush1.msra.mxu0 %v919
    %2296 = vmatprep.subr.mxu0 0.0
    %2297 = vmatpush1.msra.mxu0 %v920
    %2298 = vmatprep.subr.mxu0 0.0
    %2299 = vmatpush1.msra.mxu0 %v921
    %2300 = vmatprep.subr.mxu0 0.0
    %2301 = vmatpush1.msra.mxu0 %v922
    %2302 = vmatprep.subr.mxu0 0.0
    %2303 = vmatpush1.msra.mxu0 %v923
    %2304 = vmatprep.subr.mxu0 0.0
    %2305 = vmatpush1.msra.mxu0 %v924
    %2306 = vmatprep.subr.mxu0 0.0
    %2307 = vmatpush1.msra.mxu0 %v925
    %2308 = vmatprep.subr.mxu0 0.0
    %2309 = vmatpush1.msra.mxu0 %v926
    %2310 = vmatprep.subr.mxu0 0.0
    %2311 = vmatpush1.msra.mxu0 %v927
    %2312 = vmatprep.subr.mxu0 0.0
    %2313 = vmatpush1.msra.mxu0 0.0
    %2314 = vmatprep.subr.mxu0 0.0
    %2315 = vmatpush1.msra.mxu0 0.0
    %2316 = vmatprep.subr.mxu0 0.0
    %2317 = vmatpush1.msra.mxu0 0.0
    %2318 = vmatprep.subr.mxu0 0.0
    %2319 = vmatpush1.msra.mxu0 0.0
    %2320 = vmatprep.subr.mxu0 0.0
    %2321 = vmatpush1.msra.mxu0 0.0
    %2322 = vmatprep.subr.mxu0 0.0
    %2323 = vmatpush1.msra.mxu0 0.0
    %2324 = vmatprep.subr.mxu0 0.0
    %2325 = vmatpush1.msra.mxu0 0.0
    %2326 = vmatprep.subr.mxu0 0.0
    %2327 = vmatpush1.msra.mxu0 0.0
    %2328 = vmatprep.subr.mxu0 0.0
    %2329 = vmatpush1.msra.mxu0 0.0
    %2330 = vmatprep.subr.mxu0 0.0
    %2331 = vmatpush1.msra.mxu0 0.0
    %2332 = vmatprep.subr.mxu0 0.0
    %2333 = vmatpush1.msra.mxu0 0.0
    %2334 = vmatprep.subr.mxu0 0.0
    %2335 = vmatpush1.msra.mxu0 0.0
    %2336 = vmatprep.subr.mxu0 0.0
    %2337 = vmatpush1.msra.mxu0 0.0
    %2338 = vmatprep.subr.mxu0 0.0
    %2339 = vmatpush1.msra.mxu0 0.0
    %2340 = vmatprep.subr.mxu0 0.0
    %2341 = vmatpush1.msra.mxu0 0.0
    %2342 = vmatprep.subr.mxu0 0.0
    %2343 = vmatpush1.msra.mxu0 0.0
    %2344 = vmatprep.mubr.f32.mxu0 0.0
    %2345 = vmatmul.mubr.f32.gmra.mrb[0].mxu0 %v494
    %v2346 = vpop.f32.mrb[0].mxu0
    %v2347 = vadd.f32 0.0, %v2346
    %v2348 = vpop.f32.mrb[0].mxu0
    %2349 = vdwg.mxu0
    %2350 = vmatprep.subr.mxu0 0.0
    %2351 = vmatpush1.msra.mxu0 %v928
    %2352 = vmatprep.subr.mxu0 0.0
    %2353 = vmatpush1.msra.mxu0 %v929
    %2354 = vmatprep.subr.mxu0 0.0
    %2355 = vmatpush1.msra.mxu0 %v930
    %2356 = vmatprep.subr.mxu0 0.0
    %2357 = vmatpush1.msra.mxu0 %v931
    %2358 = vmatprep.subr.mxu0 0.0
    %2359 = vmatpush1.msra.mxu0 %v932
    %2360 = vmatprep.subr.mxu0 0.0
    %2361 = vmatpush1.msra.mxu0 %v933
    %2362 = vmatprep.subr.mxu0 0.0
    %2363 = vmatpush1.msra.mxu0 %v934
    %2364 = vmatprep.subr.mxu0 0.0
    %2365 = vmatpush1.msra.mxu0 %v935
    %2366 = vmatprep.subr.mxu0 0.0
    %2367 = vmatpush1.msra.mxu0 %v936
    %2368 = vmatprep.subr.mxu0 0.0
    %2369 = vmatpush1.msra.mxu0 %v937
    %2370 = vmatprep.subr.mxu0 0.0
    %2371 = vmatpush1.msra.mxu0 %v938
    %2372 = vmatprep.subr.mxu0 0.0
    %2373 = vmatpush1.msra.mxu0 %v939
    %2374 = vmatprep.subr.mxu0 0.0
    %2375 = vmatpush1.msra.mxu0 %v940
    %2376 = vmatprep.subr.mxu0 0.0
    %2377 = vmatpush1.msra.mxu0 %v941
    %2378 = vmatprep.subr.mxu0 0.0
    %2379 = vmatpush1.msra.mxu0 %v942
    %2380 = vmatprep.subr.mxu0 0.0
    %2381 = vmatpush1.msra.mxu0 %v943
    %2382 = vmatprep.subr.mxu0 0.0
    %2383 = vmatpush1.msra.mxu0 0.0
    %2384 = vmatprep.subr.mxu0 0.0
    %2385 = vmatpush1.msra.mxu0 0.0
    %2386 = vmatprep.subr.mxu0 0.0
    %2387 = vmatpush1.msra.mxu0 0.0
    %2388 = vmatprep.subr.mxu0 0.0
    %2389 = vmatpush1.msra.mxu0 0.0
    %2390 = vmatprep.subr.mxu0 0.0
    %2391 = vmatpush1.msra.mxu0 0.0
    %2392 = vmatprep.subr.mxu0 0.0
    %2393 = vmatpush1.msra.mxu0 0.0
    %2394 = vmatprep.subr.mxu0 0.0
    %2395 = vmatpush1.msra.mxu0 0.0
    %2396 = vmatprep.subr.mxu0 0.0
    %2397 = vmatpush1.msra.mxu0 0.0
    %2398 = vmatprep.subr.mxu0 0.0
    %2399 = vmatpush1.msra.mxu0 0.0
    %2400 = vmatprep.subr.mxu0 0.0
    %2401 = vmatpush1.msra.mxu0 0.0
    %2402 = vmatprep.subr.mxu0 0.0
    %2403 = vmatpush1.msra.mxu0 0.0
    %2404 = vmatprep.subr.mxu0 0.0
    %2405 = vmatpush1.msra.mxu0 0.0
    %2406 = vmatprep.subr.mxu0 0.0
    %2407 = vmatpush1.msra.mxu0 0.0
    %2408 = vmatprep.subr.mxu0 0.0
    %2409 = vmatpush1.msra.mxu0 0.0
    %2410 = vmatprep.subr.mxu0 0.0
    %2411 = vmatpush1.msra.mxu0 0.0
    %2412 = vmatprep.subr.mxu0 0.0
    %2413 = vmatpush1.msra.mxu0 0.0
    %2414 = vmatprep.mubr.f32.mxu0 0.0
    %2415 = vmatmul.mubr.f32.gmra.mrb[0].mxu0 %v502
    %v2416 = vpop.f32.mrb[0].mxu0
    %v2417 = vadd.f32 0.0, %v2416
    %v2418 = vpop.f32.mrb[0].mxu0
    %2419 = vdwg.mxu0
    %2420 = vmatprep.subr.mxu0 0.0
    %2421 = vmatpush1.msra.mxu0 %v944
    %2422 = vmatprep.subr.mxu0 0.0
    %2423 = vmatpush1.msra.mxu0 %v945
    %2424 = vmatprep.subr.mxu0 0.0
    %2425 = vmatpush1.msra.mxu0 %v946
    %2426 = vmatprep.subr.mxu0 0.0
    %2427 = vmatpush1.msra.mxu0 %v947
    %2428 = vmatprep.subr.mxu0 0.0
    %2429 = vmatpush1.msra.mxu0 %v948
    %2430 = vmatprep.subr.mxu0 0.0
    %2431 = vmatpush1.msra.mxu0 %v949
    %2432 = vmatprep.subr.mxu0 0.0
    %2433 = vmatpush1.msra.mxu0 %v950
    %2434 = vmatprep.subr.mxu0 0.0
    %2435 = vmatpush1.msra.mxu0 %v951
    %2436 = vmatprep.subr.mxu0 0.0
    %2437 = vmatpush1.msra.mxu0 %v952
    %2438 = vmatprep.subr.mxu0 0.0
    %2439 = vmatpush1.msra.mxu0 %v953
    %2440 = vmatprep.subr.mxu0 0.0
    %2441 = vmatpush1.msra.mxu0 %v954
    %2442 = vmatprep.subr.mxu0 0.0
    %2443 = vmatpush1.msra.mxu0 %v955
    %2444 = vmatprep.subr.mxu0 0.0
    %2445 = vmatpush1.msra.mxu0 %v956
    %2446 = vmatprep.subr.mxu0 0.0
    %2447 = vmatpush1.msra.mxu0 %v957
    %2448 = vmatprep.subr.mxu0 0.0
    %2449 = vmatpush1.msra.mxu0 %v958
    %2450 = vmatprep.subr.mxu0 0.0
    %2451 = vmatpush1.msra.mxu0 %v959
    %2452 = vmatprep.subr.mxu0 0.0
    %2453 = vmatpush1.msra.mxu0 0.0
    %2454 = vmatprep.subr.mxu0 0.0
    %2455 = vmatpush1.msra.mxu0 0.0
    %2456 = vmatprep.subr.mxu0 0.0
    %2457 = vmatpush1.msra.mxu0 0.0
    %2458 = vmatprep.subr.mxu0 0.0
    %2459 = vmatpush1.msra.mxu0 0.0
    %2460 = vmatprep.subr.mxu0 0.0
    %2461 = vmatpush1.msra.mxu0 0.0
    %2462 = vmatprep.subr.mxu0 0.0
    %2463 = vmatpush1.msra.mxu0 0.0
    %2464 = vmatprep.subr.mxu0 0.0
    %2465 = vmatpush1.msra.mxu0 0.0
    %2466 = vmatprep.subr.mxu0 0.0
    %2467 = vmatpush1.msra.mxu0 0.0
    %2468 = vmatprep.subr.mxu0 0.0
    %2469 = vmatpush1.msra.mxu0 0.0
    %2470 = vmatprep.subr.mxu0 0.0
    %2471 = vmatpush1.msra.mxu0 0.0
    %2472 = vmatprep.subr.mxu0 0.0
    %2473 = vmatpush1.msra.mxu0 0.0
    %2474 = vmatprep.subr.mxu0 0.0
    %2475 = vmatpush1.msra.mxu0 0.0
    %2476 = vmatprep.subr.mxu0 0.0
    %2477 = vmatpush1.msra.mxu0 0.0
    %2478 = vmatprep.subr.mxu0 0.0
    %2479 = vmatpush1.msra.mxu0 0.0
    %2480 = vmatprep.subr.mxu0 0.0
    %2481 = vmatpush1.msra.mxu0 0.0
    %2482 = vmatprep.subr.mxu0 0.0
    %2483 = vmatpush1.msra.mxu0 0.0
    %2484 = vmatprep.mubr.f32.mxu0 0.0
    %2485 = vmatmul.mubr.f32.gmra.mrb[0].mxu0 %v501
    %v2486 = vpop.f32.mrb[0].mxu0
    %v2487 = vadd.f32 0.0, %v2486
    %v2488 = vpop.f32.mrb[0].mxu0
    %2489 = vdwg.mxu0
    %2490 = vmatprep.subr.mxu0 0.0
    %2491 = vmatpush1.msra.mxu0 %v960
    %2492 = vmatprep.subr.mxu0 0.0
    %2493 = vmatpush1.msra.mxu0 %v961
    %2494 = vmatprep.subr.mxu0 0.0
    %2495 = vmatpush1.msra.mxu0 %v962
    %2496 = vmatprep.subr.mxu0 0.0
    %2497 = vmatpush1.msra.mxu0 %v963
    %2498 = vmatprep.subr.mxu0 0.0
    %2499 = vmatpush1.msra.mxu0 %v964
    %2500 = vmatprep.subr.mxu0 0.0
    %2501 = vmatpush1.msra.mxu0 %v965
    %2502 = vmatprep.subr.mxu0 0.0
    %2503 = vmatpush1.msra.mxu0 %v966
    %2504 = vmatprep.subr.mxu0 0.0
    %2505 = vmatpush1.msra.mxu0 %v967
    %2506 = vmatprep.subr.mxu0 0.0
    %2507 = vmatpush1.msra.mxu0 %v968
    %2508 = vmatprep.subr.mxu0 0.0
    %2509 = vmatpush1.msra.mxu0 %v969
    %2510 = vmatprep.subr.mxu0 0.0
    %2511 = vmatpush1.msra.mxu0 %v970
    %2512 = vmatprep.subr.mxu0 0.0
    %2513 = vmatpush1.msra.mxu0 %v971
    %2514 = vmatprep.subr.mxu0 0.0
    %2515 = vmatpush1.msra.mxu0 %v972
    %2516 = vmatprep.subr.mxu0 0.0
    %2517 = vmatpush1.msra.mxu0 %v973
    %2518 = vmatprep.subr.mxu0 0.0
    %2519 = vmatpush1.msra.mxu0 %v974
    %2520 = vmatprep.subr.mxu0 0.0
    %2521 = vmatpush1.msra.mxu0 %v975
    %2522 = vmatprep.subr.mxu0 0.0
    %2523 = vmatpush1.msra.mxu0 0.0
    %2524 = vmatprep.subr.mxu0 0.0
    %2525 = vmatpush1.msra.mxu0 0.0
    %2526 = vmatprep.subr.mxu0 0.0
    %2527 = vmatpush1.msra.mxu0 0.0
    %2528 = vmatprep.subr.mxu0 0.0
    %2529 = vmatpush1.msra.mxu0 0.0
    %2530 = vmatprep.subr.mxu0 0.0
    %2531 = vmatpush1.msra.mxu0 0.0
    %2532 = vmatprep.subr.mxu0 0.0
    %2533 = vmatpush1.msra.mxu0 0.0
    %2534 = vmatprep.subr.mxu0 0.0
    %2535 = vmatpush1.msra.mxu0 0.0
    %2536 = vmatprep.subr.mxu0 0.0
    %2537 = vmatpush1.msra.mxu0 0.0
    %2538 = vmatprep.subr.mxu0 0.0
    %2539 = vmatpush1.msra.mxu0 0.0
    %2540 = vmatprep.subr.mxu0 0.0
    %2541 = vmatpush1.msra.mxu0 0.0
    %2542 = vmatprep.subr.mxu0 0.0
    %2543 = vmatpush1.msra.mxu0 0.0
    %2544 = vmatprep.subr.mxu0 0.0
    %2545 = vmatpush1.msra.mxu0 0.0
    %2546 = vmatprep.subr.mxu0 0.0
    %2547 = vmatpush1.msra.mxu0 0.0
    %2548 = vmatprep.subr.mxu0 0.0
    %2549 = vmatpush1.msra.mxu0 0.0
    %2550 = vmatprep.subr.mxu0 0.0
    %2551 = vmatpush1.msra.mxu0 0.0
    %2552 = vmatprep.subr.mxu0 0.0
    %2553 = vmatpush1.msra.mxu0 0.0
    %2554 = vmatprep.mubr.f32.mxu0 0.0
    %2555 = vmatmul.mubr.f32.gmra.mrb[0].mxu0 %v503
    %v2556 = vpop.f32.mrb[0].mxu0
    %v2557 = vadd.f32 0.0, %v2556
    %v2558 = vpop.f32.mrb[0].mxu0
    %2559 = vdwg.mxu0
    %2560 = vmatprep.subr.mxu0 0.0
    %2561 = vmatpush1.msra.mxu0 %v976
    %2562 = vmatprep.subr.mxu0 0.0
    %2563 = vmatpush1.msra.mxu0 %v977
    %2564 = vmatprep.subr.mxu0 0.0
    %2565 = vmatpush1.msra.mxu0 %v978
    %2566 = vmatprep.subr.mxu0 0.0
    %2567 = vmatpush1.msra.mxu0 %v979
    %2568 = vmatprep.subr.mxu0 0.0
    %2569 = vmatpush1.msra.mxu0 %v980
    %2570 = vmatprep.subr.mxu0 0.0
    %2571 = vmatpush1.msra.mxu0 %v981
    %2572 = vmatprep.subr.mxu0 0.0
    %2573 = vmatpush1.msra.mxu0 %v982
    %2574 = vmatprep.subr.mxu0 0.0
    %2575 = vmatpush1.msra.mxu0 %v983
    %2576 = vmatprep.subr.mxu0 0.0
    %2577 = vmatpush1.msra.mxu0 %v984
    %2578 = vmatprep.subr.mxu0 0.0
    %2579 = vmatpush1.msra.mxu0 %v985
    %2580 = vmatprep.subr.mxu0 0.0
    %2581 = vmatpush1.msra.mxu0 %v986
    %2582 = vmatprep.subr.mxu0 0.0
    %2583 = vmatpush1.msra.mxu0 %v987
    %2584 = vmatprep.subr.mxu0 0.0
    %2585 = vmatpush1.msra.mxu0 %v988
    %2586 = vmatprep.subr.mxu0 0.0
    %2587 = vmatpush1.msra.mxu0 %v989
    %2588 = vmatprep.subr.mxu0 0.0
    %2589 = vmatpush1.msra.mxu0 %v990
    %2590 = vmatprep.subr.mxu0 0.0
    %2591 = vmatpush1.msra.mxu0 %v991
    %2592 = vmatprep.subr.mxu0 0.0
    %2593 = vmatpush1.msra.mxu0 0.0
    %2594 = vmatprep.subr.mxu0 0.0
    %2595 = vmatpush1.msra.mxu0 0.0
    %2596 = vmatprep.subr.mxu0 0.0
    %2597 = vmatpush1.msra.mxu0 0.0
    %2598 = vmatprep.subr.mxu0 0.0
    %2599 = vmatpush1.msra.mxu0 0.0
    %2600 = vmatprep.subr.mxu0 0.0
    %2601 = vmatpush1.msra.mxu0 0.0
    %2602 = vmatprep.subr.mxu0 0.0
    %2603 = vmatpush1.msra.mxu0 0.0
    %2604 = vmatprep.subr.mxu0 0.0
    %2605 = vmatpush1.msra.mxu0 0.0
    %2606 = vmatprep.subr.mxu0 0.0
    %2607 = vmatpush1.msra.mxu0 0.0
    %2608 = vmatprep.subr.mxu0 0.0
    %2609 = vmatpush1.msra.mxu0 0.0
    %2610 = vmatprep.subr.mxu0 0.0
    %2611 = vmatpush1.msra.mxu0 0.0
    %2612 = vmatprep.subr.mxu0 0.0
    %2613 = vmatpush1.msra.mxu0 0.0
    %2614 = vmatprep.subr.mxu0 0.0
    %2615 = vmatpush1.msra.mxu0 0.0
    %2616 = vmatprep.subr.mxu0 0.0
    %2617 = vmatpush1.msra.mxu0 0.0
    %2618 = vmatprep.subr.mxu0 0.0
    %2619 = vmatpush1.msra.mxu0 0.0
    %2620 = vmatprep.subr.mxu0 0.0
    %2621 = vmatpush1.msra.mxu0 0.0
    %2622 = vmatprep.subr.mxu0 0.0
    %2623 = vmatpush1.msra.mxu0 0.0
    %2624 = vmatprep.mubr.f32.mxu0 0.0
    %2625 = vmatmul.mubr.f32.gmra.mrb[0].mxu0 %v511
    %v2626 = vpop.f32.mrb[0].mxu0
    %v2627 = vadd.f32 0.0, %v2626
    %v2628 = vpop.f32.mrb[0].mxu0
    %2629 = vdwg.mxu0
    %2630 = vmatprep.subr.mxu0 0.0
    %2631 = vmatpush1.msra.mxu0 %v992
    %2632 = vmatprep.subr.mxu0 0.0
    %2633 = vmatpush1.msra.mxu0 %v993
    %2634 = vmatprep.subr.mxu0 0.0
    %2635 = vmatpush1.msra.mxu0 %v994
    %2636 = vmatprep.subr.mxu0 0.0
    %2637 = vmatpush1.msra.mxu0 %v995
    %2638 = vmatprep.subr.mxu0 0.0
    %2639 = vmatpush1.msra.mxu0 %v996
    %2640 = vmatprep.subr.mxu0 0.0
    %2641 = vmatpush1.msra.mxu0 %v997
    %2642 = vmatprep.subr.mxu0 0.0
    %2643 = vmatpush1.msra.mxu0 %v998
    %2644 = vmatprep.subr.mxu0 0.0
    %2645 = vmatpush1.msra.mxu0 %v999
    %2646 = vmatprep.subr.mxu0 0.0
    %2647 = vmatpush1.msra.mxu0 %v1000
    %2648 = vmatprep.subr.mxu0 0.0
    %2649 = vmatpush1.msra.mxu0 %v1001
    %2650 = vmatprep.subr.mxu0 0.0
    %2651 = vmatpush1.msra.mxu0 %v1002
    %2652 = vmatprep.subr.mxu0 0.0
    %2653 = vmatpush1.msra.mxu0 %v1003
    %2654 = vmatprep.subr.mxu0 0.0
    %2655 = vmatpush1.msra.mxu0 %v1004
    %2656 = vmatprep.subr.mxu0 0.0
    %2657 = vmatpush1.msra.mxu0 %v1005
    %2658 = vmatprep.subr.mxu0 0.0
    %2659 = vmatpush1.msra.mxu0 %v1006
    %2660 = vmatprep.subr.mxu0 0.0
    %2661 = vmatpush1.msra.mxu0 %v1007
    %2662 = vmatprep.subr.mxu0 0.0
    %2663 = vmatpush1.msra.mxu0 0.0
    %2664 = vmatprep.subr.mxu0 0.0
    %2665 = vmatpush1.msra.mxu0 0.0
    %2666 = vmatprep.subr.mxu0 0.0
    %2667 = vmatpush1.msra.mxu0 0.0
    %2668 = vmatprep.subr.mxu0 0.0
    %2669 = vmatpush1.msra.mxu0 0.0
    %2670 = vmatprep.subr.mxu0 0.0
    %2671 = vmatpush1.msra.mxu0 0.0
    %2672 = vmatprep.subr.mxu0 0.0
    %2673 = vmatpush1.msra.mxu0 0.0
    %2674 = vmatprep.subr.mxu0 0.0
    %2675 = vmatpush1.msra.mxu0 0.0
    %2676 = vmatprep.subr.mxu0 0.0
    %2677 = vmatpush1.msra.mxu0 0.0
    %2678 = vmatprep.subr.mxu0 0.0
    %2679 = vmatpush1.msra.mxu0 0.0
    %2680 = vmatprep.subr.mxu0 0.0
    %2681 = vmatpush1.msra.mxu0 0.0
    %2682 = vmatprep.subr.mxu0 0.0
    %2683 = vmatpush1.msra.mxu0 0.0
    %2684 = vmatprep.subr.mxu0 0.0
    %2685 = vmatpush1.msra.mxu0 0.0
    %2686 = vmatprep.subr.mxu0 0.0
    %2687 = vmatpush1.msra.mxu0 0.0
    %2688 = vmatprep.subr.mxu0 0.0
    %2689 = vmatpush1.msra.mxu0 0.0
    %2690 = vmatprep.subr.mxu0 0.0
    %2691 = vmatpush1.msra.mxu0 0.0
    %2692 = vmatprep.subr.mxu0 0.0
    %2693 = vmatpush1.msra.mxu0 0.0
    %2694 = vmatprep.mubr.f32.mxu0 0.0
    %2695 = vmatmul.mubr.f32.gmra.mrb[0].mxu0 %v519
    %v2696 = vpop.f32.mrb[0].mxu0
    %v2697 = vadd.f32 0.0, %v2696
    %v2698 = vpop.f32.mrb[0].mxu0
    %2699 = vdwg.mxu0
    %2700 = vmatprep.subr.mxu0 0.0
    %2701 = vmatpush1.msra.mxu0 %v1008
    %2702 = vmatprep.subr.mxu0 0.0
    %2703 = vmatpush1.msra.mxu0 %v1009
    %2704 = vmatprep.subr.mxu0 0.0
    %2705 = vmatpush1.msra.mxu0 %v1010
    %2706 = vmatprep.subr.mxu0 0.0
    %2707 = vmatpush1.msra.mxu0 %v1011
    %2708 = vmatprep.subr.mxu0 0.0
    %2709 = vmatpush1.msra.mxu0 %v1012
    %2710 = vmatprep.subr.mxu0 0.0
    %2711 = vmatpush1.msra.mxu0 %v1013
    %2712 = vmatprep.subr.mxu0 0.0
    %2713 = vmatpush1.msra.mxu0 %v1014
    %2714 = vmatprep.subr.mxu0 0.0
    %2715 = vmatpush1.msra.mxu0 %v1015
    %2716 = vmatprep.subr.mxu0 0.0
    %2717 = vmatpush1.msra.mxu0 %v1016
    %2718 = vmatprep.subr.mxu0 0.0
    %2719 = vmatpush1.msra.mxu0 %v1017
    %2720 = vmatprep.subr.mxu0 0.0
    %2721 = vmatpush1.msra.mxu0 %v1018
    %2722 = vmatprep.subr.mxu0 0.0
    %2723 = vmatpush1.msra.mxu0 %v1019
    %2724 = vmatprep.subr.mxu0 0.0
    %2725 = vmatpush1.msra.mxu0 %v1020
    %2726 = vmatprep.subr.mxu0 0.0
    %2727 = vmatpush1.msra.mxu0 %v1021
    %2728 = vmatprep.subr.mxu0 0.0
    %2729 = vmatpush1.msra.mxu0 %v1022
    %2730 = vmatprep.subr.mxu0 0.0
    %2731 = vmatpush1.msra.mxu0 %v1023
    %2732 = vmatprep.subr.mxu0 0.0
    %2733 = vmatpush1.msra.mxu0 0.0
    %2734 = vmatprep.subr.mxu0 0.0
    %2735 = vmatpush1.msra.mxu0 0.0
    %2736 = vmatprep.subr.mxu0 0.0
    %2737 = vmatpush1.msra.mxu0 0.0
    %2738 = vmatprep.subr.mxu0 0.0
    %2739 = vmatpush1.msra.mxu0 0.0
    %2740 = vmatprep.subr.mxu0 0.0
    %2741 = vmatpush1.msra.mxu0 0.0
    %2742 = vmatprep.subr.mxu0 0.0
    %2743 = vmatpush1.msra.mxu0 0.0
    %2744 = vmatprep.subr.mxu0 0.0
    %2745 = vmatpush1.msra.mxu0 0.0
    %2746 = vmatprep.subr.mxu0 0.0
    %2747 = vmatpush1.msra.mxu0 0.0
    %2748 = vmatprep.subr.mxu0 0.0
    %2749 = vmatpush1.msra.mxu0 0.0
    %2750 = vmatprep.subr.mxu0 0.0
    %2751 = vmatpush1.msra.mxu0 0.0
    %2752 = vmatprep.subr.mxu0 0.0
    %2753 = vmatpush1.msra.mxu0 0.0
    %2754 = vmatprep.subr.mxu0 0.0
    %2755 = vmatpush1.msra.mxu0 0.0
    %2756 = vmatprep.subr.mxu0 0.0
    %2757 = vmatpush1.msra.mxu0 0.0
    %2758 = vmatprep.subr.mxu0 0.0
    %2759 = vmatpush1.msra.mxu0 0.0
    %2760 = vmatprep.subr.mxu0 0.0
    %2761 = vmatpush1.msra.mxu0 0.0
    %2762 = vmatprep.subr.mxu0 0.0
    %2763 = vmatpush1.msra.mxu0 0.0
    %2764 = vmatprep.mubr.f32.mxu0 0.0
    %2765 = vmatmul.mubr.f32.gmra.mrb[0].mxu0 %v518
    %v2766 = vpop.f32.mrb[0].mxu0
    %v2767 = vadd.f32 0.0, %v2766
    %v2768 = vpop.f32.mrb[0].mxu0
    %2769 = vdwg.mxu0
    %2770 = vmatprep.subr.mxu0 0.0
    %2771 = vmatpush1.msra.mxu0 %v1024
    %2772 = vmatprep.subr.mxu0 0.0
    %2773 = vmatpush1.msra.mxu0 %v1025
    %2774 = vmatprep.subr.mxu0 0.0
    %2775 = vmatpush1.msra.mxu0 %v1026
    %2776 = vmatprep.subr.mxu0 0.0
    %2777 = vmatpush1.msra.mxu0 %v1027
    %2778 = vmatprep.subr.mxu0 0.0
    %2779 = vmatpush1.msra.mxu0 %v1028
    %2780 = vmatprep.subr.mxu0 0.0
    %2781 = vmatpush1.msra.mxu0 %v1029
    %2782 = vmatprep.subr.mxu0 0.0
    %2783 = vmatpush1.msra.mxu0 %v1030
    %2784 = vmatprep.subr.mxu0 0.0
    %2785 = vmatpush1.msra.mxu0 %v1031
    %2786 = vmatprep.subr.mxu0 0.0
    %2787 = vmatpush1.msra.mxu0 %v1032
    %2788 = vmatprep.subr.mxu0 0.0
    %2789 = vmatpush1.msra.mxu0 %v1033
    %2790 = vmatprep.subr.mxu0 0.0
    %2791 = vmatpush1.msra.mxu0 %v1034
    %2792 = vmatprep.subr.mxu0 0.0
    %2793 = vmatpush1.msra.mxu0 %v1035
    %2794 = vmatprep.subr.mxu0 0.0
    %2795 = vmatpush1.msra.mxu0 %v1036
    %2796 = vmatprep.subr.mxu0 0.0
    %2797 = vmatpush1.msra.mxu0 %v1037
    %2798 = vmatprep.subr.mxu0 0.0
    %2799 = vmatpush1.msra.mxu0 %v1038
    %2800 = vmatprep.subr.mxu0 0.0
    %2801 = vmatpush1.msra.mxu0 %v1039
    %2802 = vmatprep.subr.mxu0 0.0
    %2803 = vmatpush1.msra.mxu0 0.0
    %2804 = vmatprep.subr.mxu0 0.0
    %2805 = vmatpush1.msra.mxu0 0.0
    %2806 = vmatprep.subr.mxu0 0.0
    %2807 = vmatpush1.msra.mxu0 0.0
    %2808 = vmatprep.subr.mxu0 0.0
    %2809 = vmatpush1.msra.mxu0 0.0
    %2810 = vmatprep.subr.mxu0 0.0
    %2811 = vmatpush1.msra.mxu0 0.0
    %2812 = vmatprep.subr.mxu0 0.0
    %2813 = vmatpush1.msra.mxu0 0.0
    %2814 = vmatprep.subr.mxu0 0.0
    %2815 = vmatpush1.msra.mxu0 0.0
    %2816 = vmatprep.subr.mxu0 0.0
    %2817 = vmatpush1.msra.mxu0 0.0
    %2818 = vmatprep.subr.mxu0 0.0
    %2819 = vmatpush1.msra.mxu0 0.0
    %2820 = vmatprep.subr.mxu0 0.0
    %2821 = vmatpush1.msra.mxu0 0.0
    %2822 = vmatprep.subr.mxu0 0.0
    %2823 = vmatpush1.msra.mxu0 0.0
    %2824 = vmatprep.subr.mxu0 0.0
    %2825 = vmatpush1.msra.mxu0 0.0
    %2826 = vmatprep.subr.mxu0 0.0
    %2827 = vmatpush1.msra.mxu0 0.0
    %2828 = vmatprep.subr.mxu0 0.0
    %2829 = vmatpush1.msra.mxu0 0.0
    %2830 = vmatprep.subr.mxu0 0.0
    %2831 = vmatpush1.msra.mxu0 0.0
    %2832 = vmatprep.subr.mxu0 0.0
    %2833 = vmatpush1.msra.mxu0 0.0
    %2834 = vmatprep.mubr.f32.mxu0 0.0
    %2835 = vmatmul.mubr.f32.gmra.mrb[0].mxu0 %v520
    %v2836 = vpop.f32.mrb[0].mxu0
    %v2837 = vadd.f32 0.0, %v2836
    %v2838 = vpop.f32.mrb[0].mxu0
    %2839 = vdwg.mxu0
    %2840 = vmatprep.subr.mxu0 0.0
    %2841 = vmatpush1.msra.mxu0 %v1040
    %2842 = vmatprep.subr.mxu0 0.0
    %2843 = vmatpush1.msra.mxu0 %v1041
    %2844 = vmatprep.subr.mxu0 0.0
    %2845 = vmatpush1.msra.mxu0 %v1042
    %2846 = vmatprep.subr.mxu0 0.0
    %2847 = vmatpush1.msra.mxu0 %v1043
    %2848 = vmatprep.subr.mxu0 0.0
    %2849 = vmatpush1.msra.mxu0 %v1044
    %2850 = vmatprep.subr.mxu0 0.0
    %2851 = vmatpush1.msra.mxu0 %v1045
    %2852 = vmatprep.subr.mxu0 0.0
    %2853 = vmatpush1.msra.mxu0 %v1046
    %2854 = vmatprep.subr.mxu0 0.0
    %2855 = vmatpush1.msra.mxu0 %v1047
    %2856 = vmatprep.subr.mxu0 0.0
    %2857 = vmatpush1.msra.mxu0 %v1048
    %2858 = vmatprep.subr.mxu0 0.0
    %2859 = vmatpush1.msra.mxu0 %v1049
    %2860 = vmatprep.subr.mxu0 0.0
    %2861 = vmatpush1.msra.mxu0 %v1050
    %2862 = vmatprep.subr.mxu0 0.0
    %2863 = vmatpush1.msra.mxu0 %v1051
    %2864 = vmatprep.subr.mxu0 0.0
    %2865 = vmatpush1.msra.mxu0 %v1052
    %2866 = vmatprep.subr.mxu0 0.0
    %2867 = vmatpush1.msra.mxu0 %v1053
    %2868 = vmatprep.subr.mxu0 0.0
    %2869 = vmatpush1.msra.mxu0 %v1054
    %2870 = vmatprep.subr.mxu0 0.0
    %2871 = vmatpush1.msra.mxu0 %v1055
    %2872 = vmatprep.subr.mxu0 0.0
    %2873 = vmatpush1.msra.mxu0 0.0
    %2874 = vmatprep.subr.mxu0 0.0
    %2875 = vmatpush1.msra.mxu0 0.0
    %2876 = vmatprep.subr.mxu0 0.0
    %2877 = vmatpush1.msra.mxu0 0.0
    %2878 = vmatprep.subr.mxu0 0.0
    %2879 = vmatpush1.msra.mxu0 0.0
    %2880 = vmatprep.subr.mxu0 0.0
    %2881 = vmatpush1.msra.mxu0 0.0
    %2882 = vmatprep.subr.mxu0 0.0
    %2883 = vmatpush1.msra.mxu0 0.0
    %2884 = vmatprep.subr.mxu0 0.0
    %2885 = vmatpush1.msra.mxu0 0.0
    %2886 = vmatprep.subr.mxu0 0.0
    %2887 = vmatpush1.msra.mxu0 0.0
    %2888 = vmatprep.subr.mxu0 0.0
    %2889 = vmatpush1.msra.mxu0 0.0
    %2890 = vmatprep.subr.mxu0 0.0
    %2891 = vmatpush1.msra.mxu0 0.0
    %2892 = vmatprep.subr.mxu0 0.0
    %2893 = vmatpush1.msra.mxu0 0.0
    %2894 = vmatprep.subr.mxu0 0.0
    %2895 = vmatpush1.msra.mxu0 0.0
    %2896 = vmatprep.subr.mxu0 0.0
    %2897 = vmatpush1.msra.mxu0 0.0
    %2898 = vmatprep.subr.mxu0 0.0
    %2899 = vmatpush1.msra.mxu0 0.0
    %2900 = vmatprep.subr.mxu0 0.0
    %2901 = vmatpush1.msra.mxu0 0.0
    %2902 = vmatprep.subr.mxu0 0.0
    %2903 = vmatpush1.msra.mxu0 0.0
    %2904 = vmatprep.mubr.f32.mxu0 0.0
    %2905 = vmatmul.mubr.f32.gmra.mrb[0].mxu0 %v528
    %v2906 = vpop.f32.mrb[0].mxu0
    %v2907 = vadd.f32 0.0, %v2906
    %v2908 = vpop.f32.mrb[0].mxu0
    %2909 = vdwg.mxu0
    %2910 = vmatprep.subr.mxu0 0.0
    %2911 = vmatpush1.msra.mxu0 %v1056
    %2912 = vmatprep.subr.mxu0 0.0
    %2913 = vmatpush1.msra.mxu0 %v1057
    %2914 = vmatprep.subr.mxu0 0.0
    %2915 = vmatpush1.msra.mxu0 %v1058
    %2916 = vmatprep.subr.mxu0 0.0
    %2917 = vmatpush1.msra.mxu0 %v1059
    %2918 = vmatprep.subr.mxu0 0.0
    %2919 = vmatpush1.msra.mxu0 %v1060
    %2920 = vmatprep.subr.mxu0 0.0
    %2921 = vmatpush1.msra.mxu0 %v1061
    %2922 = vmatprep.subr.mxu0 0.0
    %2923 = vmatpush1.msra.mxu0 %v1062
    %2924 = vmatprep.subr.mxu0 0.0
    %2925 = vmatpush1.msra.mxu0 %v1063
    %2926 = vmatprep.subr.mxu0 0.0
    %2927 = vmatpush1.msra.mxu0 %v1064
    %2928 = vmatprep.subr.mxu0 0.0
    %2929 = vmatpush1.msra.mxu0 %v1065
    %2930 = vmatprep.subr.mxu0 0.0
    %2931 = vmatpush1.msra.mxu0 %v1066
    %2932 = vmatprep.subr.mxu0 0.0
    %2933 = vmatpush1.msra.mxu0 %v1067
    %2934 = vmatprep.subr.mxu0 0.0
    %2935 = vmatpush1.msra.mxu0 %v1068
    %2936 = vmatprep.subr.mxu0 0.0
    %2937 = vmatpush1.msra.mxu0 %v1069
    %2938 = vmatprep.subr.mxu0 0.0
    %2939 = vmatpush1.msra.mxu0 %v1070
    %2940 = vmatprep.subr.mxu0 0.0
    %2941 = vmatpush1.msra.mxu0 %v1071
    %2942 = vmatprep.subr.mxu0 0.0
    %2943 = vmatpush1.msra.mxu0 0.0
    %2944 = vmatprep.subr.mxu0 0.0
    %2945 = vmatpush1.msra.mxu0 0.0
    %2946 = vmatprep.subr.mxu0 0.0
    %2947 = vmatpush1.msra.mxu0 0.0
    %2948 = vmatprep.subr.mxu0 0.0
    %2949 = vmatpush1.msra.mxu0 0.0
    %2950 = vmatprep.subr.mxu0 0.0
    %2951 = vmatpush1.msra.mxu0 0.0
    %2952 = vmatprep.subr.mxu0 0.0
    %2953 = vmatpush1.msra.mxu0 0.0
    %2954 = vmatprep.subr.mxu0 0.0
    %2955 = vmatpush1.msra.mxu0 0.0
    %2956 = vmatprep.subr.mxu0 0.0
    %2957 = vmatpush1.msra.mxu0 0.0
    %2958 = vmatprep.subr.mxu0 0.0
    %2959 = vmatpush1.msra.mxu0 0.0
    %2960 = vmatprep.subr.mxu0 0.0
    %2961 = vmatpush1.msra.mxu0 0.0
    %2962 = vmatprep.subr.mxu0 0.0
    %2963 = vmatpush1.msra.mxu0 0.0
    %2964 = vmatprep.subr.mxu0 0.0
    %2965 = vmatpush1.msra.mxu0 0.0
    %2966 = vmatprep.subr.mxu0 0.0
    %2967 = vmatpush1.msra.mxu0 0.0
    %2968 = vmatprep.subr.mxu0 0.0
    %2969 = vmatpush1.msra.mxu0 0.0
    %2970 = vmatprep.subr.mxu0 0.0
    %2971 = vmatpush1.msra.mxu0 0.0
    %2972 = vmatprep.subr.mxu0 0.0
    %2973 = vmatpush1.msra.mxu0 0.0
    %2974 = vmatprep.mubr.f32.mxu0 0.0
    %2975 = vmatmul.mubr.f32.gmra.mrb[0].mxu0 %v536
    %v2976 = vpop.f32.mrb[0].mxu0
    %v2977 = vadd.f32 0.0, %v2976
    %v2978 = vpop.f32.mrb[0].mxu0
    %2979 = vdwg.mxu0
    %2980 = vmatprep.subr.mxu0 0.0
    %2981 = vmatpush1.msra.mxu0 %v1072
    %2982 = vmatprep.subr.mxu0 0.0
    %2983 = vmatpush1.msra.mxu0 %v1073
    %2984 = vmatprep.subr.mxu0 0.0
    %2985 = vmatpush1.msra.mxu0 %v1074
    %2986 = vmatprep.subr.mxu0 0.0
    %2987 = vmatpush1.msra.mxu0 %v1075
    %2988 = vmatprep.subr.mxu0 0.0
    %2989 = vmatpush1.msra.mxu0 %v1076
    %2990 = vmatprep.subr.mxu0 0.0
    %2991 = vmatpush1.msra.mxu0 %v1077
    %2992 = vmatprep.subr.mxu0 0.0
    %2993 = vmatpush1.msra.mxu0 %v1078
    %2994 = vmatprep.subr.mxu0 0.0
    %2995 = vmatpush1.msra.mxu0 %v1079
    %2996 = vmatprep.subr.mxu0 0.0
    %2997 = vmatpush1.msra.mxu0 %v1080
    %2998 = vmatprep.subr.mxu0 0.0
    %2999 = vmatpush1.msra.mxu0 %v1081
    %3000 = vmatprep.subr.mxu0 0.0
    %3001 = vmatpush1.msra.mxu0 %v1082
    %3002 = vmatprep.subr.mxu0 0.0
    %3003 = vmatpush1.msra.mxu0 %v1083
    %3004 = vmatprep.subr.mxu0 0.0
    %3005 = vmatpush1.msra.mxu0 %v1084
    %3006 = vmatprep.subr.mxu0 0.0
    %3007 = vmatpush1.msra.mxu0 %v1085
    %3008 = vmatprep.subr.mxu0 0.0
    %3009 = vmatpush1.msra.mxu0 %v1086
    %3010 = vmatprep.subr.mxu0 0.0
    %3011 = vmatpush1.msra.mxu0 %v1087
    %3012 = vmatprep.subr.mxu0 0.0
    %3013 = vmatpush1.msra.mxu0 0.0
    %3014 = vmatprep.subr.mxu0 0.0
    %3015 = vmatpush1.msra.mxu0 0.0
    %3016 = vmatprep.subr.mxu0 0.0
    %3017 = vmatpush1.msra.mxu0 0.0
    %3018 = vmatprep.subr.mxu0 0.0
    %3019 = vmatpush1.msra.mxu0 0.0
    %3020 = vmatprep.subr.mxu0 0.0
    %3021 = vmatpush1.msra.mxu0 0.0
    %3022 = vmatprep.subr.mxu0 0.0
    %3023 = vmatpush1.msra.mxu0 0.0
    %3024 = vmatprep.subr.mxu0 0.0
    %3025 = vmatpush1.msra.mxu0 0.0
    %3026 = vmatprep.subr.mxu0 0.0
    %3027 = vmatpush1.msra.mxu0 0.0
    %3028 = vmatprep.subr.mxu0 0.0
    %3029 = vmatpush1.msra.mxu0 0.0
    %3030 = vmatprep.subr.mxu0 0.0
    %3031 = vmatpush1.msra.mxu0 0.0
    %3032 = vmatprep.subr.mxu0 0.0
    %3033 = vmatpush1.msra.mxu0 0.0
    %3034 = vmatprep.subr.mxu0 0.0
    %3035 = vmatpush1.msra.mxu0 0.0
    %3036 = vmatprep.subr.mxu0 0.0
    %3037 = vmatpush1.msra.mxu0 0.0
    %3038 = vmatprep.subr.mxu0 0.0
    %3039 = vmatpush1.msra.mxu0 0.0
    %3040 = vmatprep.subr.mxu0 0.0
    %3041 = vmatpush1.msra.mxu0 0.0
    %3042 = vmatprep.subr.mxu0 0.0
    %3043 = vmatpush1.msra.mxu0 0.0
    %3044 = vmatprep.mubr.f32.mxu0 0.0
    %3045 = vmatmul.mubr.f32.gmra.mrb[0].mxu0 %v535
    %v3046 = vpop.f32.mrb[0].mxu0
    %v3047 = vadd.f32 0.0, %v3046
    %v3048 = vpop.f32.mrb[0].mxu0
    %3049 = vdwg.mxu0
    %3050 = vmatprep.subr.mxu0 0.0
    %3051 = vmatpush1.msra.mxu0 %v1088
    %3052 = vmatprep.subr.mxu0 0.0
    %3053 = vmatpush1.msra.mxu0 %v1089
    %3054 = vmatprep.subr.mxu0 0.0
    %3055 = vmatpush1.msra.mxu0 %v1090
    %3056 = vmatprep.subr.mxu0 0.0
    %3057 = vmatpush1.msra.mxu0 %v1091
    %3058 = vmatprep.subr.mxu0 0.0
    %3059 = vmatpush1.msra.mxu0 %v1092
    %3060 = vmatprep.subr.mxu0 0.0
    %3061 = vmatpush1.msra.mxu0 %v1093
    %3062 = vmatprep.subr.mxu0 0.0
    %3063 = vmatpush1.msra.mxu0 %v1094
    %3064 = vmatprep.subr.mxu0 0.0
    %3065 = vmatpush1.msra.mxu0 %v1095
    %3066 = vmatprep.subr.mxu0 0.0
    %3067 = vmatpush1.msra.mxu0 %v1096
    %3068 = vmatprep.subr.mxu0 0.0
    %3069 = vmatpush1.msra.mxu0 %v1097
    %3070 = vmatprep.subr.mxu0 0.0
    %3071 = vmatpush1.msra.mxu0 %v1098
    %3072 = vmatprep.subr.mxu0 0.0
    %3073 = vmatpush1.msra.mxu0 %v1099
    %3074 = vmatprep.subr.mxu0 0.0
    %3075 = vmatpush1.msra.mxu0 %v1100
    %3076 = vmatprep.subr.mxu0 0.0
    %3077 = vmatpush1.msra.mxu0 %v1101
    %3078 = vmatprep.subr.mxu0 0.0
    %3079 = vmatpush1.msra.mxu0 %v1102
    %3080 = vmatprep.subr.mxu0 0.0
    %3081 = vmatpush1.msra.mxu0 %v1103
    %3082 = vmatprep.subr.mxu0 0.0
    %3083 = vmatpush1.msra.mxu0 0.0
    %3084 = vmatprep.subr.mxu0 0.0
    %3085 = vmatpush1.msra.mxu0 0.0
    %3086 = vmatprep.subr.mxu0 0.0
    %3087 = vmatpush1.msra.mxu0 0.0
    %3088 = vmatprep.subr.mxu0 0.0
    %3089 = vmatpush1.msra.mxu0 0.0
    %3090 = vmatprep.subr.mxu0 0.0
    %3091 = vmatpush1.msra.mxu0 0.0
    %3092 = vmatprep.subr.mxu0 0.0
    %3093 = vmatpush1.msra.mxu0 0.0
    %3094 = vmatprep.subr.mxu0 0.0
    %3095 = vmatpush1.msra.mxu0 0.0
    %3096 = vmatprep.subr.mxu0 0.0
    %3097 = vmatpush1.msra.mxu0 0.0
    %3098 = vmatprep.subr.mxu0 0.0
    %3099 = vmatpush1.msra.mxu0 0.0
    %3100 = vmatprep.subr.mxu0 0.0
    %3101 = vmatpush1.msra.mxu0 0.0
    %3102 = vmatprep.subr.mxu0 0.0
    %3103 = vmatpush1.msra.mxu0 0.0
    %3104 = vmatprep.subr.mxu0 0.0
    %3105 = vmatpush1.msra.mxu0 0.0
    %3106 = vmatprep.subr.mxu0 0.0
    %3107 = vmatpush1.msra.mxu0 0.0
    %3108 = vmatprep.subr.mxu0 0.0
    %3109 = vmatpush1.msra.mxu0 0.0
    %3110 = vmatprep.subr.mxu0 0.0
    %3111 = vmatpush1.msra.mxu0 0.0
    %3112 = vmatprep.subr.mxu0 0.0
    %3113 = vmatpush1.msra.mxu0 0.0
    %3114 = vmatprep.mubr.f32.mxu0 0.0
    %3115 = vmatmul.mubr.f32.gmra.mrb[0].mxu0 %v537
    %v3116 = vpop.f32.mrb[0].mxu0
    %v3117 = vadd.f32 0.0, %v3116
    %v3118 = vpop.f32.mrb[0].mxu0
    %3119 = vdwg.mxu0
    %3120 = vmatprep.subr.mxu0 0.0
    %3121 = vmatpush1.msra.mxu0 %v1104
    %3122 = vmatprep.subr.mxu0 0.0
    %3123 = vmatpush1.msra.mxu0 %v1105
    %3124 = vmatprep.subr.mxu0 0.0
    %3125 = vmatpush1.msra.mxu0 %v1106
    %3126 = vmatprep.subr.mxu0 0.0
    %3127 = vmatpush1.msra.mxu0 %v1107
    %3128 = vmatprep.subr.mxu0 0.0
    %3129 = vmatpush1.msra.mxu0 %v1108
    %3130 = vmatprep.subr.mxu0 0.0
    %3131 = vmatpush1.msra.mxu0 %v1109
    %3132 = vmatprep.subr.mxu0 0.0
    %3133 = vmatpush1.msra.mxu0 %v1110
    %3134 = vmatprep.subr.mxu0 0.0
    %3135 = vmatpush1.msra.mxu0 %v1111
    %3136 = vmatprep.subr.mxu0 0.0
    %3137 = vmatpush1.msra.mxu0 %v1112
    %3138 = vmatprep.subr.mxu0 0.0
    %3139 = vmatpush1.msra.mxu0 %v1113
    %3140 = vmatprep.subr.mxu0 0.0
    %3141 = vmatpush1.msra.mxu0 %v1114
    %3142 = vmatprep.subr.mxu0 0.0
    %3143 = vmatpush1.msra.mxu0 %v1115
    %3144 = vmatprep.subr.mxu0 0.0
    %3145 = vmatpush1.msra.mxu0 %v1116
    %3146 = vmatprep.subr.mxu0 0.0
    %3147 = vmatpush1.msra.mxu0 %v1117
    %3148 = vmatprep.subr.mxu0 0.0
    %3149 = vmatpush1.msra.mxu0 %v1118
    %3150 = vmatprep.subr.mxu0 0.0
    %3151 = vmatpush1.msra.mxu0 %v1119
    %3152 = vmatprep.subr.mxu0 0.0
    %3153 = vmatpush1.msra.mxu0 0.0
    %3154 = vmatprep.subr.mxu0 0.0
    %3155 = vmatpush1.msra.mxu0 0.0
    %3156 = vmatprep.subr.mxu0 0.0
    %3157 = vmatpush1.msra.mxu0 0.0
    %3158 = vmatprep.subr.mxu0 0.0
    %3159 = vmatpush1.msra.mxu0 0.0
    %3160 = vmatprep.subr.mxu0 0.0
    %3161 = vmatpush1.msra.mxu0 0.0
    %3162 = vmatprep.subr.mxu0 0.0
    %3163 = vmatpush1.msra.mxu0 0.0
    %3164 = vmatprep.subr.mxu0 0.0
    %3165 = vmatpush1.msra.mxu0 0.0
    %3166 = vmatprep.subr.mxu0 0.0
    %3167 = vmatpush1.msra.mxu0 0.0
    %3168 = vmatprep.subr.mxu0 0.0
    %3169 = vmatpush1.msra.mxu0 0.0
    %3170 = vmatprep.subr.mxu0 0.0
    %3171 = vmatpush1.msra.mxu0 0.0
    %3172 = vmatprep.subr.mxu0 0.0
    %3173 = vmatpush1.msra.mxu0 0.0
    %3174 = vmatprep.subr.mxu0 0.0
    %3175 = vmatpush1.msra.mxu0 0.0
    %3176 = vmatprep.subr.mxu0 0.0
    %3177 = vmatpush1.msra.mxu0 0.0
    %3178 = vmatprep.subr.mxu0 0.0
    %3179 = vmatpush1.msra.mxu0 0.0
    %3180 = vmatprep.subr.mxu0 0.0
    %3181 = vmatpush1.msra.mxu0 0.0
    %3182 = vmatprep.subr.mxu0 0.0
    %3183 = vmatpush1.msra.mxu0 0.0
    %3184 = vmatprep.mubr.f32.mxu0 0.0
    %3185 = vmatmul.mubr.f32.gmra.mrb[0].mxu0 %v545
    %v3186 = vpop.f32.mrb[0].mxu0
    %v3187 = vadd.f32 0.0, %v3186
    %v3188 = vpop.f32.mrb[0].mxu0
    %3189 = vdwg.mxu0
    %3190 = vmatprep.subr.mxu0 0.0
    %3191 = vmatpush1.msra.mxu0 %v1120
    %3192 = vmatprep.subr.mxu0 0.0
    %3193 = vmatpush1.msra.mxu0 %v1121
    %3194 = vmatprep.subr.mxu0 0.0
    %3195 = vmatpush1.msra.mxu0 %v1122
    %3196 = vmatprep.subr.mxu0 0.0
    %3197 = vmatpush1.msra.mxu0 %v1123
    %3198 = vmatprep.subr.mxu0 0.0
    %3199 = vmatpush1.msra.mxu0 %v1124
    %3200 = vmatprep.subr.mxu0 0.0
    %3201 = vmatpush1.msra.mxu0 %v1125
    %3202 = vmatprep.subr.mxu0 0.0
    %3203 = vmatpush1.msra.mxu0 %v1126
    %3204 = vmatprep.subr.mxu0 0.0
    %3205 = vmatpush1.msra.mxu0 %v1127
    %3206 = vmatprep.subr.mxu0 0.0
    %3207 = vmatpush1.msra.mxu0 %v1128
    %3208 = vmatprep.subr.mxu0 0.0
    %3209 = vmatpush1.msra.mxu0 %v1129
    %3210 = vmatprep.subr.mxu0 0.0
    %3211 = vmatpush1.msra.mxu0 %v1130
    %3212 = vmatprep.subr.mxu0 0.0
    %3213 = vmatpush1.msra.mxu0 %v1131
    %3214 = vmatprep.subr.mxu0 0.0
    %3215 = vmatpush1.msra.mxu0 %v1132
    %3216 = vmatprep.subr.mxu0 0.0
    %3217 = vmatpush1.msra.mxu0 %v1133
    %3218 = vmatprep.subr.mxu0 0.0
    %3219 = vmatpush1.msra.mxu0 %v1134
    %3220 = vmatprep.subr.mxu0 0.0
    %3221 = vmatpush1.msra.mxu0 %v1135
    %3222 = vmatprep.subr.mxu0 0.0
    %3223 = vmatpush1.msra.mxu0 0.0
    %3224 = vmatprep.subr.mxu0 0.0
    %3225 = vmatpush1.msra.mxu0 0.0
    %3226 = vmatprep.subr.mxu0 0.0
    %3227 = vmatpush1.msra.mxu0 0.0
    %3228 = vmatprep.subr.mxu0 0.0
    %3229 = vmatpush1.msra.mxu0 0.0
    %3230 = vmatprep.subr.mxu0 0.0
    %3231 = vmatpush1.msra.mxu0 0.0
    %3232 = vmatprep.subr.mxu0 0.0
    %3233 = vmatpush1.msra.mxu0 0.0
    %3234 = vmatprep.subr.mxu0 0.0
    %3235 = vmatpush1.msra.mxu0 0.0
    %3236 = vmatprep.subr.mxu0 0.0
    %3237 = vmatpush1.msra.mxu0 0.0
    %3238 = vmatprep.subr.mxu0 0.0
    %3239 = vmatpush1.msra.mxu0 0.0
    %3240 = vmatprep.subr.mxu0 0.0
    %3241 = vmatpush1.msra.mxu0 0.0
    %3242 = vmatprep.subr.mxu0 0.0
    %3243 = vmatpush1.msra.mxu0 0.0
    %3244 = vmatprep.subr.mxu0 0.0
    %3245 = vmatpush1.msra.mxu0 0.0
    %3246 = vmatprep.subr.mxu0 0.0
    %3247 = vmatpush1.msra.mxu0 0.0
    %3248 = vmatprep.subr.mxu0 0.0
    %3249 = vmatpush1.msra.mxu0 0.0
    %3250 = vmatprep.subr.mxu0 0.0
    %3251 = vmatpush1.msra.mxu0 0.0
    %3252 = vmatprep.subr.mxu0 0.0
    %3253 = vmatpush1.msra.mxu0 0.0
    %3254 = vmatprep.mubr.f32.mxu0 0.0
    %3255 = vmatmul.mubr.f32.gmra.mrb[0].mxu0 %v553
    %v3256 = vpop.f32.mrb[0].mxu0
    %v3257 = vadd.f32 0.0, %v3256
    %v3258 = vpop.f32.mrb[0].mxu0
    %3259 = vdwg.mxu0
    %3260 = vmatprep.subr.mxu0 0.0
    %3261 = vmatpush1.msra.mxu0 %v1136
    %3262 = vmatprep.subr.mxu0 0.0
    %3263 = vmatpush1.msra.mxu0 %v1137
    %3264 = vmatprep.subr.mxu0 0.0
    %3265 = vmatpush1.msra.mxu0 %v1138
    %3266 = vmatprep.subr.mxu0 0.0
    %3267 = vmatpush1.msra.mxu0 %v1139
    %3268 = vmatprep.subr.mxu0 0.0
    %3269 = vmatpush1.msra.mxu0 %v1140
    %3270 = vmatprep.subr.mxu0 0.0
    %3271 = vmatpush1.msra.mxu0 %v1141
    %3272 = vmatprep.subr.mxu0 0.0
    %3273 = vmatpush1.msra.mxu0 %v1142
    %3274 = vmatprep.subr.mxu0 0.0
    %3275 = vmatpush1.msra.mxu0 %v1143
    %3276 = vmatprep.subr.mxu0 0.0
    %3277 = vmatpush1.msra.mxu0 %v1144
    %3278 = vmatprep.subr.mxu0 0.0
    %3279 = vmatpush1.msra.mxu0 %v1145
    %3280 = vmatprep.subr.mxu0 0.0
    %3281 = vmatpush1.msra.mxu0 %v1146
    %3282 = vmatprep.subr.mxu0 0.0
    %3283 = vmatpush1.msra.mxu0 %v1147
    %3284 = vmatprep.subr.mxu0 0.0
    %3285 = vmatpush1.msra.mxu0 %v1148
    %3286 = vmatprep.subr.mxu0 0.0
    %3287 = vmatpush1.msra.mxu0 %v1149
    %3288 = vmatprep.subr.mxu0 0.0
    %3289 = vmatpush1.msra.mxu0 %v1150
    %3290 = vmatprep.subr.mxu0 0.0
    %3291 = vmatpush1.msra.mxu0 %v1151
    %3292 = vmatprep.subr.mxu0 0.0
    %3293 = vmatpush1.msra.mxu0 0.0
    %3294 = vmatprep.subr.mxu0 0.0
    %3295 = vmatpush1.msra.mxu0 0.0
    %3296 = vmatprep.subr.mxu0 0.0
    %3297 = vmatpush1.msra.mxu0 0.0
    %3298 = vmatprep.subr.mxu0 0.0
    %3299 = vmatpush1.msra.mxu0 0.0
    %3300 = vmatprep.subr.mxu0 0.0
    %3301 = vmatpush1.msra.mxu0 0.0
    %3302 = vmatprep.subr.mxu0 0.0
    %3303 = vmatpush1.msra.mxu0 0.0
    %3304 = vmatprep.subr.mxu0 0.0
    %3305 = vmatpush1.msra.mxu0 0.0
    %3306 = vmatprep.subr.mxu0 0.0
    %3307 = vmatpush1.msra.mxu0 0.0
    %3308 = vmatprep.subr.mxu0 0.0
    %3309 = vmatpush1.msra.mxu0 0.0
    %3310 = vmatprep.subr.mxu0 0.0
    %3311 = vmatpush1.msra.mxu0 0.0
    %3312 = vmatprep.subr.mxu0 0.0
    %3313 = vmatpush1.msra.mxu0 0.0
    %3314 = vmatprep.subr.mxu0 0.0
    %3315 = vmatpush1.msra.mxu0 0.0
    %3316 = vmatprep.subr.mxu0 0.0
    %3317 = vmatpush1.msra.mxu0 0.0
    %3318 = vmatprep.subr.mxu0 0.0
    %3319 = vmatpush1.msra.mxu0 0.0
    %3320 = vmatprep.subr.mxu0 0.0
    %3321 = vmatpush1.msra.mxu0 0.0
    %3322 = vmatprep.subr.mxu0 0.0
    %3323 = vmatpush1.msra.mxu0 0.0
    %3324 = vmatprep.mubr.f32.mxu0 0.0
    %3325 = vmatmul.mubr.f32.gmra.mrb[0].mxu0 %v552
    %v3326 = vpop.f32.mrb[0].mxu0
    %v3327 = vadd.f32 0.0, %v3326
    %v3328 = vpop.f32.mrb[0].mxu0
    %3329 = vdwg.mxu0
    %3330 = vmatprep.subr.mxu0 0.0
    %3331 = vmatpush1.msra.mxu0 %v1152
    %3332 = vmatprep.subr.mxu0 0.0
    %3333 = vmatpush1.msra.mxu0 %v1153
    %3334 = vmatprep.subr.mxu0 0.0
    %3335 = vmatpush1.msra.mxu0 %v1154
    %3336 = vmatprep.subr.mxu0 0.0
    %3337 = vmatpush1.msra.mxu0 %v1155
    %3338 = vmatprep.subr.mxu0 0.0
    %3339 = vmatpush1.msra.mxu0 %v1156
    %3340 = vmatprep.subr.mxu0 0.0
    %3341 = vmatpush1.msra.mxu0 %v1157
    %3342 = vmatprep.subr.mxu0 0.0
    %3343 = vmatpush1.msra.mxu0 %v1158
    %3344 = vmatprep.subr.mxu0 0.0
    %3345 = vmatpush1.msra.mxu0 %v1159
    %3346 = vmatprep.subr.mxu0 0.0
    %3347 = vmatpush1.msra.mxu0 %v1160
    %3348 = vmatprep.subr.mxu0 0.0
    %3349 = vmatpush1.msra.mxu0 %v1161
    %3350 = vmatprep.subr.mxu0 0.0
    %3351 = vmatpush1.msra.mxu0 %v1162
    %3352 = vmatprep.subr.mxu0 0.0
    %3353 = vmatpush1.msra.mxu0 %v1163
    %3354 = vmatprep.subr.mxu0 0.0
    %3355 = vmatpush1.msra.mxu0 %v1164
    %3356 = vmatprep.subr.mxu0 0.0
    %3357 = vmatpush1.msra.mxu0 %v1165
    %3358 = vmatprep.subr.mxu0 0.0
    %3359 = vmatpush1.msra.mxu0 %v1166
    %3360 = vmatprep.subr.mxu0 0.0
    %3361 = vmatpush1.msra.mxu0 %v1167
    %3362 = vmatprep.subr.mxu0 0.0
    %3363 = vmatpush1.msra.mxu0 0.0
    %3364 = vmatprep.subr.mxu0 0.0
    %3365 = vmatpush1.msra.mxu0 0.0
    %3366 = vmatprep.subr.mxu0 0.0
    %3367 = vmatpush1.msra.mxu0 0.0
    %3368 = vmatprep.subr.mxu0 0.0
    %3369 = vmatpush1.msra.mxu0 0.0
    %3370 = vmatprep.subr.mxu0 0.0
    %3371 = vmatpush1.msra.mxu0 0.0
    %3372 = vmatprep.subr.mxu0 0.0
    %3373 = vmatpush1.msra.mxu0 0.0
    %3374 = vmatprep.subr.mxu0 0.0
    %3375 = vmatpush1.msra.mxu0 0.0
    %3376 = vmatprep.subr.mxu0 0.0
    %3377 = vmatpush1.msra.mxu0 0.0
    %3378 = vmatprep.subr.mxu0 0.0
    %3379 = vmatpush1.msra.mxu0 0.0
    %3380 = vmatprep.subr.mxu0 0.0
    %3381 = vmatpush1.msra.mxu0 0.0
    %3382 = vmatprep.subr.mxu0 0.0
    %3383 = vmatpush1.msra.mxu0 0.0
    %3384 = vmatprep.subr.mxu0 0.0
    %3385 = vmatpush1.msra.mxu0 0.0
    %3386 = vmatprep.subr.mxu0 0.0
    %3387 = vmatpush1.msra.mxu0 0.0
    %3388 = vmatprep.subr.mxu0 0.0
    %3389 = vmatpush1.msra.mxu0 0.0
    %3390 = vmatprep.subr.mxu0 0.0
    %3391 = vmatpush1.msra.mxu0 0.0
    %3392 = vmatprep.subr.mxu0 0.0
    %3393 = vmatpush1.msra.mxu0 0.0
    %3394 = vmatprep.mubr.f32.mxu0 0.0
    %3395 = vmatmul.mubr.f32.gmra.mrb[0].mxu0 %v554
    %v3396 = vpop.f32.mrb[0].mxu0
    %v3397 = vadd.f32 0.0, %v3396
    %v3398 = vpop.f32.mrb[0].mxu0
    %3399 = vdwg.mxu0
    %3400 = vmatprep.subr.mxu0 0.0
    %3401 = vmatpush1.msra.mxu0 %v1168
    %3402 = vmatprep.subr.mxu0 0.0
    %3403 = vmatpush1.msra.mxu0 %v1169
    %3404 = vmatprep.subr.mxu0 0.0
    %3405 = vmatpush1.msra.mxu0 %v1170
    %3406 = vmatprep.subr.mxu0 0.0
    %3407 = vmatpush1.msra.mxu0 %v1171
    %3408 = vmatprep.subr.mxu0 0.0
    %3409 = vmatpush1.msra.mxu0 %v1172
    %3410 = vmatprep.subr.mxu0 0.0
    %3411 = vmatpush1.msra.mxu0 %v1173
    %3412 = vmatprep.subr.mxu0 0.0
    %3413 = vmatpush1.msra.mxu0 %v1174
    %3414 = vmatprep.subr.mxu0 0.0
    %3415 = vmatpush1.msra.mxu0 %v1175
    %3416 = vmatprep.subr.mxu0 0.0
    %3417 = vmatpush1.msra.mxu0 %v1176
    %3418 = vmatprep.subr.mxu0 0.0
    %3419 = vmatpush1.msra.mxu0 %v1177
    %3420 = vmatprep.subr.mxu0 0.0
    %3421 = vmatpush1.msra.mxu0 %v1178
    %3422 = vmatprep.subr.mxu0 0.0
    %3423 = vmatpush1.msra.mxu0 %v1179
    %3424 = vmatprep.subr.mxu0 0.0
    %3425 = vmatpush1.msra.mxu0 %v1180
    %3426 = vmatprep.subr.mxu0 0.0
    %3427 = vmatpush1.msra.mxu0 %v1181
    %3428 = vmatprep.subr.mxu0 0.0
    %3429 = vmatpush1.msra.mxu0 %v1182
    %3430 = vmatprep.subr.mxu0 0.0
    %3431 = vmatpush1.msra.mxu0 %v1183
    %3432 = vmatprep.subr.mxu0 0.0
    %3433 = vmatpush1.msra.mxu0 0.0
    %3434 = vmatprep.subr.mxu0 0.0
    %3435 = vmatpush1.msra.mxu0 0.0
    %3436 = vmatprep.subr.mxu0 0.0
    %3437 = vmatpush1.msra.mxu0 0.0
    %3438 = vmatprep.subr.mxu0 0.0
    %3439 = vmatpush1.msra.mxu0 0.0
    %3440 = vmatprep.subr.mxu0 0.0
    %3441 = vmatpush1.msra.mxu0 0.0
    %3442 = vmatprep.subr.mxu0 0.0
    %3443 = vmatpush1.msra.mxu0 0.0
    %3444 = vmatprep.subr.mxu0 0.0
    %3445 = vmatpush1.msra.mxu0 0.0
    %3446 = vmatprep.subr.mxu0 0.0
    %3447 = vmatpush1.msra.mxu0 0.0
    %3448 = vmatprep.subr.mxu0 0.0
    %3449 = vmatpush1.msra.mxu0 0.0
    %3450 = vmatprep.subr.mxu0 0.0
    %3451 = vmatpush1.msra.mxu0 0.0
    %3452 = vmatprep.subr.mxu0 0.0
    %3453 = vmatpush1.msra.mxu0 0.0
    %3454 = vmatprep.subr.mxu0 0.0
    %3455 = vmatpush1.msra.mxu0 0.0
    %3456 = vmatprep.subr.mxu0 0.0
    %3457 = vmatpush1.msra.mxu0 0.0
    %3458 = vmatprep.subr.mxu0 0.0
    %3459 = vmatpush1.msra.mxu0 0.0
    %3460 = vmatprep.subr.mxu0 0.0
    %3461 = vmatpush1.msra.mxu0 0.0
    %3462 = vmatprep.subr.mxu0 0.0
    %3463 = vmatpush1.msra.mxu0 0.0
    %3464 = vmatprep.mubr.f32.mxu0 0.0
    %3465 = vmatmul.mubr.f32.gmra.mrb[0].mxu0 %v562
    %v3466 = vpop.f32.mrb[0].mxu0
    %v3467 = vadd.f32 0.0, %v3466
    %v3468 = vpop.f32.mrb[0].mxu0
    %3469 = vdwg.mxu0
    %3470 = vmatprep.subr.mxu0 0.0
    %3471 = vmatpush1.msra.mxu0 %v1184
    %3472 = vmatprep.subr.mxu0 0.0
    %3473 = vmatpush1.msra.mxu0 %v1185
    %3474 = vmatprep.subr.mxu0 0.0
    %3475 = vmatpush1.msra.mxu0 %v1186
    %3476 = vmatprep.subr.mxu0 0.0
    %3477 = vmatpush1.msra.mxu0 %v1187
    %3478 = vmatprep.subr.mxu0 0.0
    %3479 = vmatpush1.msra.mxu0 %v1188
    %3480 = vmatprep.subr.mxu0 0.0
    %3481 = vmatpush1.msra.mxu0 %v1189
    %3482 = vmatprep.subr.mxu0 0.0
    %3483 = vmatpush1.msra.mxu0 %v1190
    %3484 = vmatprep.subr.mxu0 0.0
    %3485 = vmatpush1.msra.mxu0 %v1191
    %3486 = vmatprep.subr.mxu0 0.0
    %3487 = vmatpush1.msra.mxu0 %v1192
    %3488 = vmatprep.subr.mxu0 0.0
    %3489 = vmatpush1.msra.mxu0 %v1193
    %3490 = vmatprep.subr.mxu0 0.0
    %3491 = vmatpush1.msra.mxu0 %v1194
    %3492 = vmatprep.subr.mxu0 0.0
    %3493 = vmatpush1.msra.mxu0 %v1195
    %3494 = vmatprep.subr.mxu0 0.0
    %3495 = vmatpush1.msra.mxu0 %v1196
    %3496 = vmatprep.subr.mxu0 0.0
    %3497 = vmatpush1.msra.mxu0 %v1197
    %3498 = vmatprep.subr.mxu0 0.0
    %3499 = vmatpush1.msra.mxu0 %v1198
    %3500 = vmatprep.subr.mxu0 0.0
    %3501 = vmatpush1.msra.mxu0 %v1199
    %3502 = vmatprep.subr.mxu0 0.0
    %3503 = vmatpush1.msra.mxu0 0.0
    %3504 = vmatprep.subr.mxu0 0.0
    %3505 = vmatpush1.msra.mxu0 0.0
    %3506 = vmatprep.subr.mxu0 0.0
    %3507 = vmatpush1.msra.mxu0 0.0
    %3508 = vmatprep.subr.mxu0 0.0
    %3509 = vmatpush1.msra.mxu0 0.0
    %3510 = vmatprep.subr.mxu0 0.0
    %3511 = vmatpush1.msra.mxu0 0.0
    %3512 = vmatprep.subr.mxu0 0.0
    %3513 = vmatpush1.msra.mxu0 0.0
    %3514 = vmatprep.subr.mxu0 0.0
    %3515 = vmatpush1.msra.mxu0 0.0
    %3516 = vmatprep.subr.mxu0 0.0
    %3517 = vmatpush1.msra.mxu0 0.0
    %3518 = vmatprep.subr.mxu0 0.0
    %3519 = vmatpush1.msra.mxu0 0.0
    %3520 = vmatprep.subr.mxu0 0.0
    %3521 = vmatpush1.msra.mxu0 0.0
    %3522 = vmatprep.subr.mxu0 0.0
    %3523 = vmatpush1.msra.mxu0 0.0
    %3524 = vmatprep.subr.mxu0 0.0
    %3525 = vmatpush1.msra.mxu0 0.0
    %3526 = vmatprep.subr.mxu0 0.0
    %3527 = vmatpush1.msra.mxu0 0.0
    %3528 = vmatprep.subr.mxu0 0.0
    %3529 = vmatpush1.msra.mxu0 0.0
    %3530 = vmatprep.subr.mxu0 0.0
    %3531 = vmatpush1.msra.mxu0 0.0
    %3532 = vmatprep.subr.mxu0 0.0
    %3533 = vmatpush1.msra.mxu0 0.0
    %3534 = vmatprep.mubr.f32.mxu0 0.0
    %3535 = vmatmul.mubr.f32.gmra.mrb[0].mxu0 %v570
    %v3536 = vpop.f32.mrb[0].mxu0
    %v3537 = vadd.f32 0.0, %v3536
    %v3538 = vpop.f32.mrb[0].mxu0
    %3539 = vdwg.mxu0
    %3540 = vmatprep.subr.mxu0 0.0
    %3541 = vmatpush1.msra.mxu0 %v1200
    %3542 = vmatprep.subr.mxu0 0.0
    %3543 = vmatpush1.msra.mxu0 %v1201
    %3544 = vmatprep.subr.mxu0 0.0
    %3545 = vmatpush1.msra.mxu0 %v1202
    %3546 = vmatprep.subr.mxu0 0.0
    %3547 = vmatpush1.msra.mxu0 %v1203
    %3548 = vmatprep.subr.mxu0 0.0
    %3549 = vmatpush1.msra.mxu0 %v1204
    %3550 = vmatprep.subr.mxu0 0.0
    %3551 = vmatpush1.msra.mxu0 %v1205
    %3552 = vmatprep.subr.mxu0 0.0
    %3553 = vmatpush1.msra.mxu0 %v1206
    %3554 = vmatprep.subr.mxu0 0.0
    %3555 = vmatpush1.msra.mxu0 %v1207
    %3556 = vmatprep.subr.mxu0 0.0
    %3557 = vmatpush1.msra.mxu0 %v1208
    %3558 = vmatprep.subr.mxu0 0.0
    %3559 = vmatpush1.msra.mxu0 %v1209
    %3560 = vmatprep.subr.mxu0 0.0
    %3561 = vmatpush1.msra.mxu0 %v1210
    %3562 = vmatprep.subr.mxu0 0.0
    %3563 = vmatpush1.msra.mxu0 %v1211
    %3564 = vmatprep.subr.mxu0 0.0
    %3565 = vmatpush1.msra.mxu0 %v1212
    %3566 = vmatprep.subr.mxu0 0.0
    %3567 = vmatpush1.msra.mxu0 %v1213
    %3568 = vmatprep.subr.mxu0 0.0
    %3569 = vmatpush1.msra.mxu0 %v1214
    %3570 = vmatprep.subr.mxu0 0.0
    %3571 = vmatpush1.msra.mxu0 %v1215
    %3572 = vmatprep.subr.mxu0 0.0
    %3573 = vmatpush1.msra.mxu0 0.0
    %3574 = vmatprep.subr.mxu0 0.0
    %3575 = vmatpush1.msra.mxu0 0.0
    %3576 = vmatprep.subr.mxu0 0.0
    %3577 = vmatpush1.msra.mxu0 0.0
    %3578 = vmatprep.subr.mxu0 0.0
    %3579 = vmatpush1.msra.mxu0 0.0
    %3580 = vmatprep.subr.mxu0 0.0
    %3581 = vmatpush1.msra.mxu0 0.0
    %3582 = vmatprep.subr.mxu0 0.0
    %3583 = vmatpush1.msra.mxu0 0.0
    %3584 = vmatprep.subr.mxu0 0.0
    %3585 = vmatpush1.msra.mxu0 0.0
    %3586 = vmatprep.subr.mxu0 0.0
    %3587 = vmatpush1.msra.mxu0 0.0
    %3588 = vmatprep.subr.mxu0 0.0
    %3589 = vmatpush1.msra.mxu0 0.0
    %3590 = vmatprep.subr.mxu0 0.0
    %3591 = vmatpush1.msra.mxu0 0.0
    %3592 = vmatprep.subr.mxu0 0.0
    %3593 = vmatpush1.msra.mxu0 0.0
    %3594 = vmatprep.subr.mxu0 0.0
    %3595 = vmatpush1.msra.mxu0 0.0
    %3596 = vmatprep.subr.mxu0 0.0
    %3597 = vmatpush1.msra.mxu0 0.0
    %3598 = vmatprep.subr.mxu0 0.0
    %3599 = vmatpush1.msra.mxu0 0.0
    %3600 = vmatprep.subr.mxu0 0.0
    %3601 = vmatpush1.msra.mxu0 0.0
    %3602 = vmatprep.subr.mxu0 0.0
    %3603 = vmatpush1.msra.mxu0 0.0
    %3604 = vmatprep.mubr.f32.mxu0 0.0
    %3605 = vmatmul.mubr.f32.gmra.mrb[0].mxu0 %v569
    %v3606 = vpop.f32.mrb[0].mxu0
    %v3607 = vadd.f32 0.0, %v3606
    %v3608 = vpop.f32.mrb[0].mxu0
    %3609 = vdwg.mxu0
    %3610 = vmatprep.subr.mxu0 0.0
    %3611 = vmatpush1.msra.mxu0 %v1216
    %3612 = vmatprep.subr.mxu0 0.0
    %3613 = vmatpush1.msra.mxu0 %v1217
    %3614 = vmatprep.subr.mxu0 0.0
    %3615 = vmatpush1.msra.mxu0 %v1218
    %3616 = vmatprep.subr.mxu0 0.0
    %3617 = vmatpush1.msra.mxu0 %v1219
    %3618 = vmatprep.subr.mxu0 0.0
    %3619 = vmatpush1.msra.mxu0 %v1220
    %3620 = vmatprep.subr.mxu0 0.0
    %3621 = vmatpush1.msra.mxu0 %v1221
    %3622 = vmatprep.subr.mxu0 0.0
    %3623 = vmatpush1.msra.mxu0 %v1222
    %3624 = vmatprep.subr.mxu0 0.0
    %3625 = vmatpush1.msra.mxu0 %v1223
    %3626 = vmatprep.subr.mxu0 0.0
    %3627 = vmatpush1.msra.mxu0 %v1224
    %3628 = vmatprep.subr.mxu0 0.0
    %3629 = vmatpush1.msra.mxu0 %v1225
    %3630 = vmatprep.subr.mxu0 0.0
    %3631 = vmatpush1.msra.mxu0 %v1226
    %3632 = vmatprep.subr.mxu0 0.0
    %3633 = vmatpush1.msra.mxu0 %v1227
    %3634 = vmatprep.subr.mxu0 0.0
    %3635 = vmatpush1.msra.mxu0 %v1228
    %3636 = vmatprep.subr.mxu0 0.0
    %3637 = vmatpush1.msra.mxu0 %v1229
    %3638 = vmatprep.subr.mxu0 0.0
    %3639 = vmatpush1.msra.mxu0 %v1230
    %3640 = vmatprep.subr.mxu0 0.0
    %3641 = vmatpush1.msra.mxu0 %v1231
    %3642 = vmatprep.subr.mxu0 0.0
    %3643 = vmatpush1.msra.mxu0 0.0
    %3644 = vmatprep.subr.mxu0 0.0
    %3645 = vmatpush1.msra.mxu0 0.0
    %3646 = vmatprep.subr.mxu0 0.0
    %3647 = vmatpush1.msra.mxu0 0.0
    %3648 = vmatprep.subr.mxu0 0.0
    %3649 = vmatpush1.msra.mxu0 0.0
    %3650 = vmatprep.subr.mxu0 0.0
    %3651 = vmatpush1.msra.mxu0 0.0
    %3652 = vmatprep.subr.mxu0 0.0
    %3653 = vmatpush1.msra.mxu0 0.0
    %3654 = vmatprep.subr.mxu0 0.0
    %3655 = vmatpush1.msra.mxu0 0.0
    %3656 = vmatprep.subr.mxu0 0.0
    %3657 = vmatpush1.msra.mxu0 0.0
    %3658 = vmatprep.subr.mxu0 0.0
    %3659 = vmatpush1.msra.mxu0 0.0
    %3660 = vmatprep.subr.mxu0 0.0
    %3661 = vmatpush1.msra.mxu0 0.0
    %3662 = vmatprep.subr.mxu0 0.0
    %3663 = vmatpush1.msra.mxu0 0.0
    %3664 = vmatprep.subr.mxu0 0.0
    %3665 = vmatpush1.msra.mxu0 0.0
    %3666 = vmatprep.subr.mxu0 0.0
    %3667 = vmatpush1.msra.mxu0 0.0
    %3668 = vmatprep.subr.mxu0 0.0
    %3669 = vmatpush1.msra.mxu0 0.0
    %3670 = vmatprep.subr.mxu0 0.0
    %3671 = vmatpush1.msra.mxu0 0.0
    %3672 = vmatprep.subr.mxu0 0.0
    %3673 = vmatpush1.msra.mxu0 0.0
    %3674 = vmatprep.mubr.f32.mxu0 0.0
    %3675 = vmatmul.mubr.f32.gmra.mrb[0].mxu0 %v571
    %v3676 = vpop.f32.mrb[0].mxu0
    %v3677 = vadd.f32 0.0, %v3676
    %v3678 = vpop.f32.mrb[0].mxu0
    %3679 = vdwg.mxu0
    %3680 = vmatprep.subr.mxu0 0.0
    %3681 = vmatpush1.msra.mxu0 %v1232
    %3682 = vmatprep.subr.mxu0 0.0
    %3683 = vmatpush1.msra.mxu0 %v1233
    %3684 = vmatprep.subr.mxu0 0.0
    %3685 = vmatpush1.msra.mxu0 %v1234
    %3686 = vmatprep.subr.mxu0 0.0
    %3687 = vmatpush1.msra.mxu0 %v1235
    %3688 = vmatprep.subr.mxu0 0.0
    %3689 = vmatpush1.msra.mxu0 %v1236
    %3690 = vmatprep.subr.mxu0 0.0
    %3691 = vmatpush1.msra.mxu0 %v1237
    %3692 = vmatprep.subr.mxu0 0.0
    %3693 = vmatpush1.msra.mxu0 %v1238
    %3694 = vmatprep.subr.mxu0 0.0
    %3695 = vmatpush1.msra.mxu0 %v1239
    %3696 = vmatprep.subr.mxu0 0.0
    %3697 = vmatpush1.msra.mxu0 %v1240
    %3698 = vmatprep.subr.mxu0 0.0
    %3699 = vmatpush1.msra.mxu0 %v1241
    %3700 = vmatprep.subr.mxu0 0.0
    %3701 = vmatpush1.msra.mxu0 %v1242
    %3702 = vmatprep.subr.mxu0 0.0
    %3703 = vmatpush1.msra.mxu0 %v1243
    %3704 = vmatprep.subr.mxu0 0.0
    %3705 = vmatpush1.msra.mxu0 %v1244
    %3706 = vmatprep.subr.mxu0 0.0
    %3707 = vmatpush1.msra.mxu0 %v1245
    %3708 = vmatprep.subr.mxu0 0.0
    %3709 = vmatpush1.msra.mxu0 %v1246
    %3710 = vmatprep.subr.mxu0 0.0
    %3711 = vmatpush1.msra.mxu0 %v1247
    %3712 = vmatprep.subr.mxu0 0.0
    %3713 = vmatpush1.msra.mxu0 0.0
    %3714 = vmatprep.subr.mxu0 0.0
    %3715 = vmatpush1.msra.mxu0 0.0
    %3716 = vmatprep.subr.mxu0 0.0
    %3717 = vmatpush1.msra.mxu0 0.0
    %3718 = vmatprep.subr.mxu0 0.0
    %3719 = vmatpush1.msra.mxu0 0.0
    %3720 = vmatprep.subr.mxu0 0.0
    %3721 = vmatpush1.msra.mxu0 0.0
    %3722 = vmatprep.subr.mxu0 0.0
    %3723 = vmatpush1.msra.mxu0 0.0
    %3724 = vmatprep.subr.mxu0 0.0
    %3725 = vmatpush1.msra.mxu0 0.0
    %3726 = vmatprep.subr.mxu0 0.0
    %3727 = vmatpush1.msra.mxu0 0.0
    %3728 = vmatprep.subr.mxu0 0.0
    %3729 = vmatpush1.msra.mxu0 0.0
    %3730 = vmatprep.subr.mxu0 0.0
    %3731 = vmatpush1.msra.mxu0 0.0
    %3732 = vmatprep.subr.mxu0 0.0
    %3733 = vmatpush1.msra.mxu0 0.0
    %3734 = vmatprep.subr.mxu0 0.0
    %3735 = vmatpush1.msra.mxu0 0.0
    %3736 = vmatprep.subr.mxu0 0.0
    %3737 = vmatpush1.msra.mxu0 0.0
    %3738 = vmatprep.subr.mxu0 0.0
    %3739 = vmatpush1.msra.mxu0 0.0
    %3740 = vmatprep.subr.mxu0 0.0
    %3741 = vmatpush1.msra.mxu0 0.0
    %3742 = vmatprep.subr.mxu0 0.0
    %3743 = vmatpush1.msra.mxu0 0.0
    %3744 = vmatprep.mubr.f32.mxu0 0.0
    %3745 = vmatmul.mubr.f32.gmra.mrb[0].mxu0 %v579
    %v3746 = vpop.f32.mrb[0].mxu0
    %v3747 = vadd.f32 0.0, %v3746
    %v3748 = vpop.f32.mrb[0].mxu0
    %3749 = vdwg.mxu0
    %3750 = vmatprep.subr.mxu0 0.0
    %3751 = vmatpush1.msra.mxu0 %v1248
    %3752 = vmatprep.subr.mxu0 0.0
    %3753 = vmatpush1.msra.mxu0 %v1249
    %3754 = vmatprep.subr.mxu0 0.0
    %3755 = vmatpush1.msra.mxu0 %v1250
    %3756 = vmatprep.subr.mxu0 0.0
    %3757 = vmatpush1.msra.mxu0 %v1251
    %3758 = vmatprep.subr.mxu0 0.0
    %3759 = vmatpush1.msra.mxu0 %v1252
    %3760 = vmatprep.subr.mxu0 0.0
    %3761 = vmatpush1.msra.mxu0 %v1253
    %3762 = vmatprep.subr.mxu0 0.0
    %3763 = vmatpush1.msra.mxu0 %v1254
    %3764 = vmatprep.subr.mxu0 0.0
    %3765 = vmatpush1.msra.mxu0 %v1255
    %3766 = vmatprep.subr.mxu0 0.0
    %3767 = vmatpush1.msra.mxu0 %v1256
    %3768 = vmatprep.subr.mxu0 0.0
    %3769 = vmatpush1.msra.mxu0 %v1257
    %3770 = vmatprep.subr.mxu0 0.0
    %3771 = vmatpush1.msra.mxu0 %v1258
    %3772 = vmatprep.subr.mxu0 0.0
    %3773 = vmatpush1.msra.mxu0 %v1259
    %3774 = vmatprep.subr.mxu0 0.0
    %3775 = vmatpush1.msra.mxu0 %v1260
    %3776 = vmatprep.subr.mxu0 0.0
    %3777 = vmatpush1.msra.mxu0 %v1261
    %3778 = vmatprep.subr.mxu0 0.0
    %3779 = vmatpush1.msra.mxu0 %v1262
    %3780 = vmatprep.subr.mxu0 0.0
    %3781 = vmatpush1.msra.mxu0 %v1263
    %3782 = vmatprep.subr.mxu0 0.0
    %3783 = vmatpush1.msra.mxu0 0.0
    %3784 = vmatprep.subr.mxu0 0.0
    %3785 = vmatpush1.msra.mxu0 0.0
    %3786 = vmatprep.subr.mxu0 0.0
    %3787 = vmatpush1.msra.mxu0 0.0
    %3788 = vmatprep.subr.mxu0 0.0
    %3789 = vmatpush1.msra.mxu0 0.0
    %3790 = vmatprep.subr.mxu0 0.0
    %3791 = vmatpush1.msra.mxu0 0.0
    %3792 = vmatprep.subr.mxu0 0.0
    %3793 = vmatpush1.msra.mxu0 0.0
    %3794 = vmatprep.subr.mxu0 0.0
    %3795 = vmatpush1.msra.mxu0 0.0
    %3796 = vmatprep.subr.mxu0 0.0
    %3797 = vmatpush1.msra.mxu0 0.0
    %3798 = vmatprep.subr.mxu0 0.0
    %3799 = vmatpush1.msra.mxu0 0.0
    %3800 = vmatprep.subr.mxu0 0.0
    %3801 = vmatpush1.msra.mxu0 0.0
    %3802 = vmatprep.subr.mxu0 0.0
    %3803 = vmatpush1.msra.mxu0 0.0
    %3804 = vmatprep.subr.mxu0 0.0
    %3805 = vmatpush1.msra.mxu0 0.0
    %3806 = vmatprep.subr.mxu0 0.0
    %3807 = vmatpush1.msra.mxu0 0.0
    %3808 = vmatprep.subr.mxu0 0.0
    %3809 = vmatpush1.msra.mxu0 0.0
    %3810 = vmatprep.subr.mxu0 0.0
    %3811 = vmatpush1.msra.mxu0 0.0
    %3812 = vmatprep.subr.mxu0 0.0
    %3813 = vmatpush1.msra.mxu0 0.0
    %3814 = vmatprep.mubr.f32.mxu0 0.0
    %3815 = vmatmul.mubr.f32.gmra.mrb[0].mxu0 %v587
    %v3816 = vpop.f32.mrb[0].mxu0
    %v3817 = vadd.f32 0.0, %v3816
    %v3818 = vpop.f32.mrb[0].mxu0
    %3819 = vdwg.mxu0
    %3820 = vmatprep.subr.mxu0 0.0
    %3821 = vmatpush1.msra.mxu0 %v1264
    %3822 = vmatprep.subr.mxu0 0.0
    %3823 = vmatpush1.msra.mxu0 %v1265
    %3824 = vmatprep.subr.mxu0 0.0
    %3825 = vmatpush1.msra.mxu0 %v1266
    %3826 = vmatprep.subr.mxu0 0.0
    %3827 = vmatpush1.msra.mxu0 %v1267
    %3828 = vmatprep.subr.mxu0 0.0
    %3829 = vmatpush1.msra.mxu0 %v1268
    %3830 = vmatprep.subr.mxu0 0.0
    %3831 = vmatpush1.msra.mxu0 %v1269
    %3832 = vmatprep.subr.mxu0 0.0
    %3833 = vmatpush1.msra.mxu0 %v1270
    %3834 = vmatprep.subr.mxu0 0.0
    %3835 = vmatpush1.msra.mxu0 %v1271
    %3836 = vmatprep.subr.mxu0 0.0
    %3837 = vmatpush1.msra.mxu0 %v1272
    %3838 = vmatprep.subr.mxu0 0.0
    %3839 = vmatpush1.msra.mxu0 %v1273
    %3840 = vmatprep.subr.mxu0 0.0
    %3841 = vmatpush1.msra.mxu0 %v1274
    %3842 = vmatprep.subr.mxu0 0.0
    %3843 = vmatpush1.msra.mxu0 %v1275
    %3844 = vmatprep.subr.mxu0 0.0
    %3845 = vmatpush1.msra.mxu0 %v1276
    %3846 = vmatprep.subr.mxu0 0.0
    %3847 = vmatpush1.msra.mxu0 %v1277
    %3848 = vmatprep.subr.mxu0 0.0
    %3849 = vmatpush1.msra.mxu0 %v1278
    %3850 = vmatprep.subr.mxu0 0.0
    %3851 = vmatpush1.msra.mxu0 %v1279
    %3852 = vmatprep.subr.mxu0 0.0
    %3853 = vmatpush1.msra.mxu0 0.0
    %3854 = vmatprep.subr.mxu0 0.0
    %3855 = vmatpush1.msra.mxu0 0.0
    %3856 = vmatprep.subr.mxu0 0.0
    %3857 = vmatpush1.msra.mxu0 0.0
    %3858 = vmatprep.subr.mxu0 0.0
    %3859 = vmatpush1.msra.mxu0 0.0
    %3860 = vmatprep.subr.mxu0 0.0
    %3861 = vmatpush1.msra.mxu0 0.0
    %3862 = vmatprep.subr.mxu0 0.0
    %3863 = vmatpush1.msra.mxu0 0.0
    %3864 = vmatprep.subr.mxu0 0.0
    %3865 = vmatpush1.msra.mxu0 0.0
    %3866 = vmatprep.subr.mxu0 0.0
    %3867 = vmatpush1.msra.mxu0 0.0
    %3868 = vmatprep.subr.mxu0 0.0
    %3869 = vmatpush1.msra.mxu0 0.0
    %3870 = vmatprep.subr.mxu0 0.0
    %3871 = vmatpush1.msra.mxu0 0.0
    %3872 = vmatprep.subr.mxu0 0.0
    %3873 = vmatpush1.msra.mxu0 0.0
    %3874 = vmatprep.subr.mxu0 0.0
    %3875 = vmatpush1.msra.mxu0 0.0
    %3876 = vmatprep.subr.mxu0 0.0
    %3877 = vmatpush1.msra.mxu0 0.0
    %3878 = vmatprep.subr.mxu0 0.0
    %3879 = vmatpush1.msra.mxu0 0.0
    %3880 = vmatprep.subr.mxu0 0.0
    %3881 = vmatpush1.msra.mxu0 0.0
    %3882 = vmatprep.subr.mxu0 0.0
    %3883 = vmatpush1.msra.mxu0 0.0
    %3884 = vmatprep.mubr.f32.mxu0 0.0
    %3885 = vmatmul.mubr.f32.gmra.mrb[0].mxu0 %v586
    %v3886 = vpop.f32.mrb[0].mxu0
    %v3887 = vadd.f32 0.0, %v3886
    %v3888 = vpop.f32.mrb[0].mxu0
    %3889 = vdwg.mxu0
    %3890 = vmatprep.subr.mxu0 0.0
    %3891 = vmatpush1.msra.mxu0 %v1280
    %3892 = vmatprep.subr.mxu0 0.0
    %3893 = vmatpush1.msra.mxu0 %v1281
    %3894 = vmatprep.subr.mxu0 0.0
    %3895 = vmatpush1.msra.mxu0 %v1282
    %3896 = vmatprep.subr.mxu0 0.0
    %3897 = vmatpush1.msra.mxu0 %v1283
    %3898 = vmatprep.subr.mxu0 0.0
    %3899 = vmatpush1.msra.mxu0 %v1284
    %3900 = vmatprep.subr.mxu0 0.0
    %3901 = vmatpush1.msra.mxu0 %v1285
    %3902 = vmatprep.subr.mxu0 0.0
    %3903 = vmatpush1.msra.mxu0 %v1286
    %3904 = vmatprep.subr.mxu0 0.0
    %3905 = vmatpush1.msra.mxu0 %v1287
    %3906 = vmatprep.subr.mxu0 0.0
    %3907 = vmatpush1.msra.mxu0 %v1288
    %3908 = vmatprep.subr.mxu0 0.0
    %3909 = vmatpush1.msra.mxu0 %v1289
    %3910 = vmatprep.subr.mxu0 0.0
    %3911 = vmatpush1.msra.mxu0 %v1290
    %3912 = vmatprep.subr.mxu0 0.0
    %3913 = vmatpush1.msra.mxu0 %v1291
    %3914 = vmatprep.subr.mxu0 0.0
    %3915 = vmatpush1.msra.mxu0 %v1292
    %3916 = vmatprep.subr.mxu0 0.0
    %3917 = vmatpush1.msra.mxu0 %v1293
    %3918 = vmatprep.subr.mxu0 0.0
    %3919 = vmatpush1.msra.mxu0 %v1294
    %3920 = vmatprep.subr.mxu0 0.0
    %3921 = vmatpush1.msra.mxu0 %v1295
    %3922 = vmatprep.subr.mxu0 0.0
    %3923 = vmatpush1.msra.mxu0 0.0
    %3924 = vmatprep.subr.mxu0 0.0
    %3925 = vmatpush1.msra.mxu0 0.0
    %3926 = vmatprep.subr.mxu0 0.0
    %3927 = vmatpush1.msra.mxu0 0.0
    %3928 = vmatprep.subr.mxu0 0.0
    %3929 = vmatpush1.msra.mxu0 0.0
    %3930 = vmatprep.subr.mxu0 0.0
    %3931 = vmatpush1.msra.mxu0 0.0
    %3932 = vmatprep.subr.mxu0 0.0
    %3933 = vmatpush1.msra.mxu0 0.0
    %3934 = vmatprep.subr.mxu0 0.0
    %3935 = vmatpush1.msra.mxu0 0.0
    %3936 = vmatprep.subr.mxu0 0.0
    %3937 = vmatpush1.msra.mxu0 0.0
    %3938 = vmatprep.subr.mxu0 0.0
    %3939 = vmatpush1.msra.mxu0 0.0
    %3940 = vmatprep.subr.mxu0 0.0
    %3941 = vmatpush1.msra.mxu0 0.0
    %3942 = vmatprep.subr.mxu0 0.0
    %3943 = vmatpush1.msra.mxu0 0.0
    %3944 = vmatprep.subr.mxu0 0.0
    %3945 = vmatpush1.msra.mxu0 0.0
    %3946 = vmatprep.subr.mxu0 0.0
    %3947 = vmatpush1.msra.mxu0 0.0
    %3948 = vmatprep.subr.mxu0 0.0
    %3949 = vmatpush1.msra.mxu0 0.0
    %3950 = vmatprep.subr.mxu0 0.0
    %3951 = vmatpush1.msra.mxu0 0.0
    %3952 = vmatprep.subr.mxu0 0.0
    %3953 = vmatpush1.msra.mxu0 0.0
    %3954 = vmatprep.mubr.f32.mxu0 0.0
    %3955 = vmatmul.mubr.f32.gmra.mrb[0].mxu0 %v588
    %v3956 = vpop.f32.mrb[0].mxu0
    %v3957 = vadd.f32 0.0, %v3956
    %v3958 = vpop.f32.mrb[0].mxu0
    %3959 = vdwg.mxu0
    %3960 = vmatprep.subr.mxu0 0.0
    %3961 = vmatpush1.msra.mxu0 %v1296
    %3962 = vmatprep.subr.mxu0 0.0
    %3963 = vmatpush1.msra.mxu0 %v1297
    %3964 = vmatprep.subr.mxu0 0.0
    %3965 = vmatpush1.msra.mxu0 %v1298
    %3966 = vmatprep.subr.mxu0 0.0
    %3967 = vmatpush1.msra.mxu0 %v1299
    %3968 = vmatprep.subr.mxu0 0.0
    %3969 = vmatpush1.msra.mxu0 %v1300
    %3970 = vmatprep.subr.mxu0 0.0
    %3971 = vmatpush1.msra.mxu0 %v1301
    %3972 = vmatprep.subr.mxu0 0.0
    %3973 = vmatpush1.msra.mxu0 %v1302
    %3974 = vmatprep.subr.mxu0 0.0
    %3975 = vmatpush1.msra.mxu0 %v1303
    %3976 = vmatprep.subr.mxu0 0.0
    %3977 = vmatpush1.msra.mxu0 %v1304
    %3978 = vmatprep.subr.mxu0 0.0
    %3979 = vmatpush1.msra.mxu0 %v1305
    %3980 = vmatprep.subr.mxu0 0.0
    %3981 = vmatpush1.msra.mxu0 %v1306
    %3982 = vmatprep.subr.mxu0 0.0
    %3983 = vmatpush1.msra.mxu0 %v1307
    %3984 = vmatprep.subr.mxu0 0.0
    %3985 = vmatpush1.msra.mxu0 %v1308
    %3986 = vmatprep.subr.mxu0 0.0
    %3987 = vmatpush1.msra.mxu0 %v1309
    %3988 = vmatprep.subr.mxu0 0.0
    %3989 = vmatpush1.msra.mxu0 %v1310
    %3990 = vmatprep.subr.mxu0 0.0
    %3991 = vmatpush1.msra.mxu0 %v1311
    %3992 = vmatprep.subr.mxu0 0.0
    %3993 = vmatpush1.msra.mxu0 0.0
    %3994 = vmatprep.subr.mxu0 0.0
    %3995 = vmatpush1.msra.mxu0 0.0
    %3996 = vmatprep.subr.mxu0 0.0
    %3997 = vmatpush1.msra.mxu0 0.0
    %3998 = vmatprep.subr.mxu0 0.0
    %3999 = vmatpush1.msra.mxu0 0.0
    %4000 = vmatprep.subr.mxu0 0.0
    %4001 = vmatpush1.msra.mxu0 0.0
    %4002 = vmatprep.subr.mxu0 0.0
    %4003 = vmatpush1.msra.mxu0 0.0
    %4004 = vmatprep.subr.mxu0 0.0
    %4005 = vmatpush1.msra.mxu0 0.0
    %4006 = vmatprep.subr.mxu0 0.0
    %4007 = vmatpush1.msra.mxu0 0.0
    %4008 = vmatprep.subr.mxu0 0.0
    %4009 = vmatpush1.msra.mxu0 0.0
    %4010 = vmatprep.subr.mxu0 0.0
    %4011 = vmatpush1.msra.mxu0 0.0
    %4012 = vmatprep.subr.mxu0 0.0
    %4013 = vmatpush1.msra.mxu0 0.0
    %4014 = vmatprep.subr.mxu0 0.0
    %4015 = vmatpush1.msra.mxu0 0.0
    %4016 = vmatprep.subr.mxu0 0.0
    %4017 = vmatpush1.msra.mxu0 0.0
    %4018 = vmatprep.subr.mxu0 0.0
    %4019 = vmatpush1.msra.mxu0 0.0
    %4020 = vmatprep.subr.mxu0 0.0
    %4021 = vmatpush1.msra.mxu0 0.0
    %4022 = vmatprep.subr.mxu0 0.0
    %4023 = vmatpush1.msra.mxu0 0.0
    %4024 = vmatprep.mubr.f32.mxu0 0.0
    %4025 = vmatmul.mubr.f32.gmra.mrb[0].mxu0 %v596
    %v4026 = vpop.f32.mrb[0].mxu0
    %v4027 = vadd.f32 0.0, %v4026
    %v4028 = vpop.f32.mrb[0].mxu0
    %4029 = vdwg.mxu0
    %4030 = vmatprep.subr.mxu0 0.0
    %4031 = vmatpush1.msra.mxu0 %v1312
    %4032 = vmatprep.subr.mxu0 0.0
    %4033 = vmatpush1.msra.mxu0 %v1313
    %4034 = vmatprep.subr.mxu0 0.0
    %4035 = vmatpush1.msra.mxu0 %v1314
    %4036 = vmatprep.subr.mxu0 0.0
    %4037 = vmatpush1.msra.mxu0 %v1315
    %4038 = vmatprep.subr.mxu0 0.0
    %4039 = vmatpush1.msra.mxu0 %v1316
    %4040 = vmatprep.subr.mxu0 0.0
    %4041 = vmatpush1.msra.mxu0 %v1317
    %4042 = vmatprep.subr.mxu0 0.0
    %4043 = vmatpush1.msra.mxu0 %v1318
    %4044 = vmatprep.subr.mxu0 0.0
    %4045 = vmatpush1.msra.mxu0 %v1319
    %4046 = vmatprep.subr.mxu0 0.0
    %4047 = vmatpush1.msra.mxu0 %v1320
    %4048 = vmatprep.subr.mxu0 0.0
    %4049 = vmatpush1.msra.mxu0 %v1321
    %4050 = vmatprep.subr.mxu0 0.0
    %4051 = vmatpush1.msra.mxu0 %v1322
    %4052 = vmatprep.subr.mxu0 0.0
    %4053 = vmatpush1.msra.mxu0 %v1323
    %4054 = vmatprep.subr.mxu0 0.0
    %4055 = vmatpush1.msra.mxu0 %v1324
    %4056 = vmatprep.subr.mxu0 0.0
    %4057 = vmatpush1.msra.mxu0 %v1325
    %4058 = vmatprep.subr.mxu0 0.0
    %4059 = vmatpush1.msra.mxu0 %v1326
    %4060 = vmatprep.subr.mxu0 0.0
    %4061 = vmatpush1.msra.mxu0 %v1327
    %4062 = vmatprep.subr.mxu0 0.0
    %4063 = vmatpush1.msra.mxu0 0.0
    %4064 = vmatprep.subr.mxu0 0.0
    %4065 = vmatpush1.msra.mxu0 0.0
    %4066 = vmatprep.subr.mxu0 0.0
    %4067 = vmatpush1.msra.mxu0 0.0
    %4068 = vmatprep.subr.mxu0 0.0
    %4069 = vmatpush1.msra.mxu0 0.0
    %4070 = vmatprep.subr.mxu0 0.0
    %4071 = vmatpush1.msra.mxu0 0.0
    %4072 = vmatprep.subr.mxu0 0.0
    %4073 = vmatpush1.msra.mxu0 0.0
    %4074 = vmatprep.subr.mxu0 0.0
    %4075 = vmatpush1.msra.mxu0 0.0
    %4076 = vmatprep.subr.mxu0 0.0
    %4077 = vmatpush1.msra.mxu0 0.0
    %4078 = vmatprep.subr.mxu0 0.0
    %4079 = vmatpush1.msra.mxu0 0.0
    %4080 = vmatprep.subr.mxu0 0.0
    %4081 = vmatpush1.msra.mxu0 0.0
    %4082 = vmatprep.subr.mxu0 0.0
    %4083 = vmatpush1.msra.mxu0 0.0
    %4084 = vmatprep.subr.mxu0 0.0
    %4085 = vmatpush1.msra.mxu0 0.0
    %4086 = vmatprep.subr.mxu0 0.0
    %4087 = vmatpush1.msra.mxu0 0.0
    %4088 = vmatprep.subr.mxu0 0.0
    %4089 = vmatpush1.msra.mxu0 0.0
    %4090 = vmatprep.subr.mxu0 0.0
    %4091 = vmatpush1.msra.mxu0 0.0
    %4092 = vmatprep.subr.mxu0 0.0
    %4093 = vmatpush1.msra.mxu0 0.0
    %4094 = vmatprep.mubr.f32.mxu0 0.0
    %4095 = vmatmul.mubr.f32.gmra.mrb[0].mxu0 %v604
    %v4096 = vpop.f32.mrb[0].mxu0
    %v4097 = vadd.f32 0.0, %v4096
    %v4098 = vpop.f32.mrb[0].mxu0
    %4099 = vdwg.mxu0
    %4100 = vmatprep.subr.mxu0 0.0
    %4101 = vmatpush1.msra.mxu0 %v1328
    %4102 = vmatprep.subr.mxu0 0.0
    %4103 = vmatpush1.msra.mxu0 %v1329
    %4104 = vmatprep.subr.mxu0 0.0
    %4105 = vmatpush1.msra.mxu0 %v1330
    %4106 = vmatprep.subr.mxu0 0.0
    %4107 = vmatpush1.msra.mxu0 %v1331
    %4108 = vmatprep.subr.mxu0 0.0
    %4109 = vmatpush1.msra.mxu0 %v1332
    %4110 = vmatprep.subr.mxu0 0.0
    %4111 = vmatpush1.msra.mxu0 %v1333
    %4112 = vmatprep.subr.mxu0 0.0
    %4113 = vmatpush1.msra.mxu0 %v1334
    %4114 = vmatprep.subr.mxu0 0.0
    %4115 = vmatpush1.msra.mxu0 %v1335
    %4116 = vmatprep.subr.mxu0 0.0
    %4117 = vmatpush1.msra.mxu0 %v1336
    %4118 = vmatprep.subr.mxu0 0.0
    %4119 = vmatpush1.msra.mxu0 %v1337
    %4120 = vmatprep.subr.mxu0 0.0
    %4121 = vmatpush1.msra.mxu0 %v1338
    %4122 = vmatprep.subr.mxu0 0.0
    %4123 = vmatpush1.msra.mxu0 %v1339
    %4124 = vmatprep.subr.mxu0 0.0
    %4125 = vmatpush1.msra.mxu0 %v1340
    %4126 = vmatprep.subr.mxu0 0.0
    %4127 = vmatpush1.msra.mxu0 %v1341
    %4128 = vmatprep.subr.mxu0 0.0
    %4129 = vmatpush1.msra.mxu0 %v1342
    %4130 = vmatprep.subr.mxu0 0.0
    %4131 = vmatpush1.msra.mxu0 %v1343
    %4132 = vmatprep.subr.mxu0 0.0
    %4133 = vmatpush1.msra.mxu0 0.0
    %4134 = vmatprep.subr.mxu0 0.0
    %4135 = vmatpush1.msra.mxu0 0.0
    %4136 = vmatprep.subr.mxu0 0.0
    %4137 = vmatpush1.msra.mxu0 0.0
    %4138 = vmatprep.subr.mxu0 0.0
    %4139 = vmatpush1.msra.mxu0 0.0
    %4140 = vmatprep.subr.mxu0 0.0
    %4141 = vmatpush1.msra.mxu0 0.0
    %4142 = vmatprep.subr.mxu0 0.0
    %4143 = vmatpush1.msra.mxu0 0.0
    %4144 = vmatprep.subr.mxu0 0.0
    %4145 = vmatpush1.msra.mxu0 0.0
    %4146 = vmatprep.subr.mxu0 0.0
    %4147 = vmatpush1.msra.mxu0 0.0
    %4148 = vmatprep.subr.mxu0 0.0
    %4149 = vmatpush1.msra.mxu0 0.0
    %4150 = vmatprep.subr.mxu0 0.0
    %4151 = vmatpush1.msra.mxu0 0.0
    %4152 = vmatprep.subr.mxu0 0.0
    %4153 = vmatpush1.msra.mxu0 0.0
    %4154 = vmatprep.subr.mxu0 0.0
    %4155 = vmatpush1.msra.mxu0 0.0
    %4156 = vmatprep.subr.mxu0 0.0
    %4157 = vmatpush1.msra.mxu0 0.0
    %4158 = vmatprep.subr.mxu0 0.0
    %4159 = vmatpush1.msra.mxu0 0.0
    %4160 = vmatprep.subr.mxu0 0.0
    %4161 = vmatpush1.msra.mxu0 0.0
    %4162 = vmatprep.subr.mxu0 0.0
    %4163 = vmatpush1.msra.mxu0 0.0
    %4164 = vmatprep.mubr.f32.mxu0 0.0
    %4165 = vmatmul.mubr.f32.gmra.mrb[0].mxu0 %v603
    %v4166 = vpop.f32.mrb[0].mxu0
    %v4167 = vadd.f32 0.0, %v4166
    %v4168 = vpop.f32.mrb[0].mxu0
    %4169 = vdwg.mxu0
    %4170 = vmatprep.subr.mxu0 0.0
    %4171 = vmatpush1.msra.mxu0 %v1344
    %4172 = vmatprep.subr.mxu0 0.0
    %4173 = vmatpush1.msra.mxu0 %v1345
    %4174 = vmatprep.subr.mxu0 0.0
    %4175 = vmatpush1.msra.mxu0 %v1346
    %4176 = vmatprep.subr.mxu0 0.0
    %4177 = vmatpush1.msra.mxu0 %v1347
    %4178 = vmatprep.subr.mxu0 0.0
    %4179 = vmatpush1.msra.mxu0 %v1348
    %4180 = vmatprep.subr.mxu0 0.0
    %4181 = vmatpush1.msra.mxu0 %v1349
    %4182 = vmatprep.subr.mxu0 0.0
    %4183 = vmatpush1.msra.mxu0 %v1350
    %4184 = vmatprep.subr.mxu0 0.0
    %4185 = vmatpush1.msra.mxu0 %v1351
    %4186 = vmatprep.subr.mxu0 0.0
    %4187 = vmatpush1.msra.mxu0 %v1352
    %4188 = vmatprep.subr.mxu0 0.0
    %4189 = vmatpush1.msra.mxu0 %v1353
    %4190 = vmatprep.subr.mxu0 0.0
    %4191 = vmatpush1.msra.mxu0 %v1354
    %4192 = vmatprep.subr.mxu0 0.0
    %4193 = vmatpush1.msra.mxu0 %v1355
    %4194 = vmatprep.subr.mxu0 0.0
    %4195 = vmatpush1.msra.mxu0 %v1356
    %4196 = vmatprep.subr.mxu0 0.0
    %4197 = vmatpush1.msra.mxu0 %v1357
    %4198 = vmatprep.subr.mxu0 0.0
    %4199 = vmatpush1.msra.mxu0 %v1358
    %4200 = vmatprep.subr.mxu0 0.0
    %4201 = vmatpush1.msra.mxu0 %v1359
    %4202 = vmatprep.subr.mxu0 0.0
    %4203 = vmatpush1.msra.mxu0 0.0
    %4204 = vmatprep.subr.mxu0 0.0
    %4205 = vmatpush1.msra.mxu0 0.0
    %4206 = vmatprep.subr.mxu0 0.0
    %4207 = vmatpush1.msra.mxu0 0.0
    %4208 = vmatprep.subr.mxu0 0.0
    %4209 = vmatpush1.msra.mxu0 0.0
    %4210 = vmatprep.subr.mxu0 0.0
    %4211 = vmatpush1.msra.mxu0 0.0
    %4212 = vmatprep.subr.mxu0 0.0
    %4213 = vmatpush1.msra.mxu0 0.0
    %4214 = vmatprep.subr.mxu0 0.0
    %4215 = vmatpush1.msra.mxu0 0.0
    %4216 = vmatprep.subr.mxu0 0.0
    %4217 = vmatpush1.msra.mxu0 0.0
    %4218 = vmatprep.subr.mxu0 0.0
    %4219 = vmatpush1.msra.mxu0 0.0
    %4220 = vmatprep.subr.mxu0 0.0
    %4221 = vmatpush1.msra.mxu0 0.0
    %4222 = vmatprep.subr.mxu0 0.0
    %4223 = vmatpush1.msra.mxu0 0.0
    %4224 = vmatprep.subr.mxu0 0.0
    %4225 = vmatpush1.msra.mxu0 0.0
    %4226 = vmatprep.subr.mxu0 0.0
    %4227 = vmatpush1.msra.mxu0 0.0
    %4228 = vmatprep.subr.mxu0 0.0
    %4229 = vmatpush1.msra.mxu0 0.0
    %4230 = vmatprep.subr.mxu0 0.0
    %4231 = vmatpush1.msra.mxu0 0.0
    %4232 = vmatprep.subr.mxu0 0.0
    %4233 = vmatpush1.msra.mxu0 0.0
    %4234 = vmatprep.mubr.f32.mxu0 0.0
    %4235 = vmatmul.mubr.f32.gmra.mrb[0].mxu0 %v605
    %v4236 = vpop.f32.mrb[0].mxu0
    %v4237 = vadd.f32 0.0, %v4236
    %v4238 = vpop.f32.mrb[0].mxu0
    %4239 = vdwg.mxu0
    %4240 = vmatprep.subr.mxu0 0.0
    %4241 = vmatpush1.msra.mxu0 %v1360
    %4242 = vmatprep.subr.mxu0 0.0
    %4243 = vmatpush1.msra.mxu0 %v1361
    %4244 = vmatprep.subr.mxu0 0.0
    %4245 = vmatpush1.msra.mxu0 %v1362
    %4246 = vmatprep.subr.mxu0 0.0
    %4247 = vmatpush1.msra.mxu0 %v1363
    %4248 = vmatprep.subr.mxu0 0.0
    %4249 = vmatpush1.msra.mxu0 %v1364
    %4250 = vmatprep.subr.mxu0 0.0
    %4251 = vmatpush1.msra.mxu0 %v1365
    %4252 = vmatprep.subr.mxu0 0.0
    %4253 = vmatpush1.msra.mxu0 %v1366
    %4254 = vmatprep.subr.mxu0 0.0
    %4255 = vmatpush1.msra.mxu0 %v1367
    %4256 = vmatprep.subr.mxu0 0.0
    %4257 = vmatpush1.msra.mxu0 %v1368
    %4258 = vmatprep.subr.mxu0 0.0
    %4259 = vmatpush1.msra.mxu0 %v1369
    %4260 = vmatprep.subr.mxu0 0.0
    %4261 = vmatpush1.msra.mxu0 %v1370
    %4262 = vmatprep.subr.mxu0 0.0
    %4263 = vmatpush1.msra.mxu0 %v1371
    %4264 = vmatprep.subr.mxu0 0.0
    %4265 = vmatpush1.msra.mxu0 %v1372
    %4266 = vmatprep.subr.mxu0 0.0
    %4267 = vmatpush1.msra.mxu0 %v1373
    %4268 = vmatprep.subr.mxu0 0.0
    %4269 = vmatpush1.msra.mxu0 %v1374
    %4270 = vmatprep.subr.mxu0 0.0
    %4271 = vmatpush1.msra.mxu0 %v1375
    %4272 = vmatprep.subr.mxu0 0.0
    %4273 = vmatpush1.msra.mxu0 0.0
    %4274 = vmatprep.subr.mxu0 0.0
    %4275 = vmatpush1.msra.mxu0 0.0
    %4276 = vmatprep.subr.mxu0 0.0
    %4277 = vmatpush1.msra.mxu0 0.0
    %4278 = vmatprep.subr.mxu0 0.0
    %4279 = vmatpush1.msra.mxu0 0.0
    %4280 = vmatprep.subr.mxu0 0.0
    %4281 = vmatpush1.msra.mxu0 0.0
    %4282 = vmatprep.subr.mxu0 0.0
    %4283 = vmatpush1.msra.mxu0 0.0
    %4284 = vmatprep.subr.mxu0 0.0
    %4285 = vmatpush1.msra.mxu0 0.0
    %4286 = vmatprep.subr.mxu0 0.0
    %4287 = vmatpush1.msra.mxu0 0.0
    %4288 = vmatprep.subr.mxu0 0.0
    %4289 = vmatpush1.msra.mxu0 0.0
    %4290 = vmatprep.subr.mxu0 0.0
    %4291 = vmatpush1.msra.mxu0 0.0
    %4292 = vmatprep.subr.mxu0 0.0
    %4293 = vmatpush1.msra.mxu0 0.0
    %4294 = vmatprep.subr.mxu0 0.0
    %4295 = vmatpush1.msra.mxu0 0.0
    %4296 = vmatprep.subr.mxu0 0.0
    %4297 = vmatpush1.msra.mxu0 0.0
    %4298 = vmatprep.subr.mxu0 0.0
    %4299 = vmatpush1.msra.mxu0 0.0
    %4300 = vmatprep.subr.mxu0 0.0
    %4301 = vmatpush1.msra.mxu0 0.0
    %4302 = vmatprep.subr.mxu0 0.0
    %4303 = vmatpush1.msra.mxu0 0.0
    %4304 = vmatprep.mubr.f32.mxu0 0.0
    %4305 = vmatmul.mubr.f32.gmra.mrb[0].mxu0 %v613
    %v4306 = vpop.f32.mrb[0].mxu0
    %v4307 = vadd.f32 0.0, %v4306
    %v4308 = vpop.f32.mrb[0].mxu0
    %4309 = vdwg.mxu0
    %4310 = vmatprep.subr.mxu0 0.0
    %4311 = vmatpush1.msra.mxu0 %v1376
    %4312 = vmatprep.subr.mxu0 0.0
    %4313 = vmatpush1.msra.mxu0 %v1377
    %4314 = vmatprep.subr.mxu0 0.0
    %4315 = vmatpush1.msra.mxu0 %v1378
    %4316 = vmatprep.subr.mxu0 0.0
    %4317 = vmatpush1.msra.mxu0 %v1379
    %4318 = vmatprep.subr.mxu0 0.0
    %4319 = vmatpush1.msra.mxu0 %v1380
    %4320 = vmatprep.subr.mxu0 0.0
    %4321 = vmatpush1.msra.mxu0 %v1381
    %4322 = vmatprep.subr.mxu0 0.0
    %4323 = vmatpush1.msra.mxu0 %v1382
    %4324 = vmatprep.subr.mxu0 0.0
    %4325 = vmatpush1.msra.mxu0 %v1383
    %4326 = vmatprep.subr.mxu0 0.0
    %4327 = vmatpush1.msra.mxu0 %v1384
    %4328 = vmatprep.subr.mxu0 0.0
    %4329 = vmatpush1.msra.mxu0 %v1385
    %4330 = vmatprep.subr.mxu0 0.0
    %4331 = vmatpush1.msra.mxu0 %v1386
    %4332 = vmatprep.subr.mxu0 0.0
    %4333 = vmatpush1.msra.mxu0 %v1387
    %4334 = vmatprep.subr.mxu0 0.0
    %4335 = vmatpush1.msra.mxu0 %v1388
    %4336 = vmatprep.subr.mxu0 0.0
    %4337 = vmatpush1.msra.mxu0 %v1389
    %4338 = vmatprep.subr.mxu0 0.0
    %4339 = vmatpush1.msra.mxu0 %v1390
    %4340 = vmatprep.subr.mxu0 0.0
    %4341 = vmatpush1.msra.mxu0 %v1391
    %4342 = vmatprep.subr.mxu0 0.0
    %4343 = vmatpush1.msra.mxu0 0.0
    %4344 = vmatprep.subr.mxu0 0.0
    %4345 = vmatpush1.msra.mxu0 0.0
    %4346 = vmatprep.subr.mxu0 0.0
    %4347 = vmatpush1.msra.mxu0 0.0
    %4348 = vmatprep.subr.mxu0 0.0
    %4349 = vmatpush1.msra.mxu0 0.0
    %4350 = vmatprep.subr.mxu0 0.0
    %4351 = vmatpush1.msra.mxu0 0.0
    %4352 = vmatprep.subr.mxu0 0.0
    %4353 = vmatpush1.msra.mxu0 0.0
    %4354 = vmatprep.subr.mxu0 0.0
    %4355 = vmatpush1.msra.mxu0 0.0
    %4356 = vmatprep.subr.mxu0 0.0
    %4357 = vmatpush1.msra.mxu0 0.0
    %4358 = vmatprep.subr.mxu0 0.0
    %4359 = vmatpush1.msra.mxu0 0.0
    %4360 = vmatprep.subr.mxu0 0.0
    %4361 = vmatpush1.msra.mxu0 0.0
    %4362 = vmatprep.subr.mxu0 0.0
    %4363 = vmatpush1.msra.mxu0 0.0
    %4364 = vmatprep.subr.mxu0 0.0
    %4365 = vmatpush1.msra.mxu0 0.0
    %4366 = vmatprep.subr.mxu0 0.0
    %4367 = vmatpush1.msra.mxu0 0.0
    %4368 = vmatprep.subr.mxu0 0.0
    %4369 = vmatpush1.msra.mxu0 0.0
    %4370 = vmatprep.subr.mxu0 0.0
    %4371 = vmatpush1.msra.mxu0 0.0
    %4372 = vmatprep.subr.mxu0 0.0
    %4373 = vmatpush1.msra.mxu0 0.0
    %4374 = vmatprep.mubr.f32.mxu0 0.0
    %4375 = vmatmul.mubr.f32.gmra.mrb[0].mxu0 %v621
    %v4376 = vpop.f32.mrb[0].mxu0
    %v4377 = vadd.f32 0.0, %v4376
    %v4378 = vpop.f32.mrb[0].mxu0
    %4379 = vdwg.mxu0
    %4380 = vmatprep.subr.mxu0 0.0
    %4381 = vmatpush1.msra.mxu0 %v1392
    %4382 = vmatprep.subr.mxu0 0.0
    %4383 = vmatpush1.msra.mxu0 %v1393
    %4384 = vmatprep.subr.mxu0 0.0
    %4385 = vmatpush1.msra.mxu0 %v1394
    %4386 = vmatprep.subr.mxu0 0.0
    %4387 = vmatpush1.msra.mxu0 %v1395
    %4388 = vmatprep.subr.mxu0 0.0
    %4389 = vmatpush1.msra.mxu0 %v1396
    %4390 = vmatprep.subr.mxu0 0.0
    %4391 = vmatpush1.msra.mxu0 %v1397
    %4392 = vmatprep.subr.mxu0 0.0
    %4393 = vmatpush1.msra.mxu0 %v1398
    %4394 = vmatprep.subr.mxu0 0.0
    %4395 = vmatpush1.msra.mxu0 %v1399
    %4396 = vmatprep.subr.mxu0 0.0
    %4397 = vmatpush1.msra.mxu0 %v1400
    %4398 = vmatprep.subr.mxu0 0.0
    %4399 = vmatpush1.msra.mxu0 %v1401
    %4400 = vmatprep.subr.mxu0 0.0
    %4401 = vmatpush1.msra.mxu0 %v1402
    %4402 = vmatprep.subr.mxu0 0.0
    %4403 = vmatpush1.msra.mxu0 %v1403
    %4404 = vmatprep.subr.mxu0 0.0
    %4405 = vmatpush1.msra.mxu0 %v1404
    %4406 = vmatprep.subr.mxu0 0.0
    %4407 = vmatpush1.msra.mxu0 %v1405
    %4408 = vmatprep.subr.mxu0 0.0
    %4409 = vmatpush1.msra.mxu0 %v1406
    %4410 = vmatprep.subr.mxu0 0.0
    %4411 = vmatpush1.msra.mxu0 %v1407
    %4412 = vmatprep.subr.mxu0 0.0
    %4413 = vmatpush1.msra.mxu0 0.0
    %4414 = vmatprep.subr.mxu0 0.0
    %4415 = vmatpush1.msra.mxu0 0.0
    %4416 = vmatprep.subr.mxu0 0.0
    %4417 = vmatpush1.msra.mxu0 0.0
    %4418 = vmatprep.subr.mxu0 0.0
    %4419 = vmatpush1.msra.mxu0 0.0
    %4420 = vmatprep.subr.mxu0 0.0
    %4421 = vmatpush1.msra.mxu0 0.0
    %4422 = vmatprep.subr.mxu0 0.0
    %4423 = vmatpush1.msra.mxu0 0.0
    %4424 = vmatprep.subr.mxu0 0.0
    %4425 = vmatpush1.msra.mxu0 0.0
    %4426 = vmatprep.subr.mxu0 0.0
    %4427 = vmatpush1.msra.mxu0 0.0
    %4428 = vmatprep.subr.mxu0 0.0
    %4429 = vmatpush1.msra.mxu0 0.0
    %4430 = vmatprep.subr.mxu0 0.0
    %4431 = vmatpush1.msra.mxu0 0.0
    %4432 = vmatprep.subr.mxu0 0.0
    %4433 = vmatpush1.msra.mxu0 0.0
    %4434 = vmatprep.subr.mxu0 0.0
    %4435 = vmatpush1.msra.mxu0 0.0
    %4436 = vmatprep.subr.mxu0 0.0
    %4437 = vmatpush1.msra.mxu0 0.0
    %4438 = vmatprep.subr.mxu0 0.0
    %4439 = vmatpush1.msra.mxu0 0.0
    %4440 = vmatprep.subr.mxu0 0.0
    %4441 = vmatpush1.msra.mxu0 0.0
    %4442 = vmatprep.subr.mxu0 0.0
    %4443 = vmatpush1.msra.mxu0 0.0
    %4444 = vmatprep.mubr.f32.mxu0 0.0
    %4445 = vmatmul.mubr.f32.gmra.mrb[0].mxu0 %v620
    %v4446 = vpop.f32.mrb[0].mxu0
    %v4447 = vadd.f32 0.0, %v4446
    %v4448 = vpop.f32.mrb[0].mxu0
    %4449 = vdwg.mxu0
    %4450 = vmatprep.subr.mxu0 0.0
    %4451 = vmatpush1.msra.mxu0 %v1408
    %4452 = vmatprep.subr.mxu0 0.0
    %4453 = vmatpush1.msra.mxu0 %v1409
    %4454 = vmatprep.subr.mxu0 0.0
    %4455 = vmatpush1.msra.mxu0 %v1410
    %4456 = vmatprep.subr.mxu0 0.0
    %4457 = vmatpush1.msra.mxu0 %v1411
    %4458 = vmatprep.subr.mxu0 0.0
    %4459 = vmatpush1.msra.mxu0 %v1412
    %4460 = vmatprep.subr.mxu0 0.0
    %4461 = vmatpush1.msra.mxu0 %v1413
    %4462 = vmatprep.subr.mxu0 0.0
    %4463 = vmatpush1.msra.mxu0 %v1414
    %4464 = vmatprep.subr.mxu0 0.0
    %4465 = vmatpush1.msra.mxu0 %v1415
    %4466 = vmatprep.subr.mxu0 0.0
    %4467 = vmatpush1.msra.mxu0 %v1416
    %4468 = vmatprep.subr.mxu0 0.0
    %4469 = vmatpush1.msra.mxu0 %v1417
    %4470 = vmatprep.subr.mxu0 0.0
    %4471 = vmatpush1.msra.mxu0 %v1418
    %4472 = vmatprep.subr.mxu0 0.0
    %4473 = vmatpush1.msra.mxu0 %v1419
    %4474 = vmatprep.subr.mxu0 0.0
    %4475 = vmatpush1.msra.mxu0 %v1420
    %4476 = vmatprep.subr.mxu0 0.0
    %4477 = vmatpush1.msra.mxu0 %v1421
    %4478 = vmatprep.subr.mxu0 0.0
    %4479 = vmatpush1.msra.mxu0 %v1422
    %4480 = vmatprep.subr.mxu0 0.0
    %4481 = vmatpush1.msra.mxu0 %v1423
    %4482 = vmatprep.subr.mxu0 0.0
    %4483 = vmatpush1.msra.mxu0 0.0
    %4484 = vmatprep.subr.mxu0 0.0
    %4485 = vmatpush1.msra.mxu0 0.0
    %4486 = vmatprep.subr.mxu0 0.0
    %4487 = vmatpush1.msra.mxu0 0.0
    %4488 = vmatprep.subr.mxu0 0.0
    %4489 = vmatpush1.msra.mxu0 0.0
    %4490 = vmatprep.subr.mxu0 0.0
    %4491 = vmatpush1.msra.mxu0 0.0
    %4492 = vmatprep.subr.mxu0 0.0
    %4493 = vmatpush1.msra.mxu0 0.0
    %4494 = vmatprep.subr.mxu0 0.0
    %4495 = vmatpush1.msra.mxu0 0.0
    %4496 = vmatprep.subr.mxu0 0.0
    %4497 = vmatpush1.msra.mxu0 0.0
    %4498 = vmatprep.subr.mxu0 0.0
    %4499 = vmatpush1.msra.mxu0 0.0
    %4500 = vmatprep.subr.mxu0 0.0
    %4501 = vmatpush1.msra.mxu0 0.0
    %4502 = vmatprep.subr.mxu0 0.0
    %4503 = vmatpush1.msra.mxu0 0.0
    %4504 = vmatprep.subr.mxu0 0.0
    %4505 = vmatpush1.msra.mxu0 0.0
    %4506 = vmatprep.subr.mxu0 0.0
    %4507 = vmatpush1.msra.mxu0 0.0
    %4508 = vmatprep.subr.mxu0 0.0
    %4509 = vmatpush1.msra.mxu0 0.0
    %4510 = vmatprep.subr.mxu0 0.0
    %4511 = vmatpush1.msra.mxu0 0.0
    %4512 = vmatprep.subr.mxu0 0.0
    %4513 = vmatpush1.msra.mxu0 0.0
    %4514 = vmatprep.mubr.f32.mxu0 0.0
    %4515 = vmatmul.mubr.f32.gmra.mrb[0].mxu0 %v622
    %v4516 = vpop.f32.mrb[0].mxu0
    %v4517 = vadd.f32 0.0, %v4516
    %v4518 = vpop.f32.mrb[0].mxu0
    %4519 = vdwg.mxu0
    %4520 = vmatprep.subr.mxu0 0.0
    %4521 = vmatpush1.msra.mxu0 %v1424
    %4522 = vmatprep.subr.mxu0 0.0
    %4523 = vmatpush1.msra.mxu0 %v1425
    %4524 = vmatprep.subr.mxu0 0.0
    %4525 = vmatpush1.msra.mxu0 %v1426
    %4526 = vmatprep.subr.mxu0 0.0
    %4527 = vmatpush1.msra.mxu0 %v1427
    %4528 = vmatprep.subr.mxu0 0.0
    %4529 = vmatpush1.msra.mxu0 %v1428
    %4530 = vmatprep.subr.mxu0 0.0
    %4531 = vmatpush1.msra.mxu0 %v1429
    %4532 = vmatprep.subr.mxu0 0.0
    %4533 = vmatpush1.msra.mxu0 %v1430
    %4534 = vmatprep.subr.mxu0 0.0
    %4535 = vmatpush1.msra.mxu0 %v1431
    %4536 = vmatprep.subr.mxu0 0.0
    %4537 = vmatpush1.msra.mxu0 %v1432
    %4538 = vmatprep.subr.mxu0 0.0
    %4539 = vmatpush1.msra.mxu0 %v1433
    %4540 = vmatprep.subr.mxu0 0.0
    %4541 = vmatpush1.msra.mxu0 %v1434
    %4542 = vmatprep.subr.mxu0 0.0
    %4543 = vmatpush1.msra.mxu0 %v1435
    %4544 = vmatprep.subr.mxu0 0.0
    %4545 = vmatpush1.msra.mxu0 %v1436
    %4546 = vmatprep.subr.mxu0 0.0
    %4547 = vmatpush1.msra.mxu0 %v1437
    %4548 = vmatprep.subr.mxu0 0.0
    %4549 = vmatpush1.msra.mxu0 %v1438
    %4550 = vmatprep.subr.mxu0 0.0
    %4551 = vmatpush1.msra.mxu0 %v1439
    %4552 = vmatprep.subr.mxu0 0.0
    %4553 = vmatpush1.msra.mxu0 0.0
    %4554 = vmatprep.subr.mxu0 0.0
    %4555 = vmatpush1.msra.mxu0 0.0
    %4556 = vmatprep.subr.mxu0 0.0
    %4557 = vmatpush1.msra.mxu0 0.0
    %4558 = vmatprep.subr.mxu0 0.0
    %4559 = vmatpush1.msra.mxu0 0.0
    %4560 = vmatprep.subr.mxu0 0.0
    %4561 = vmatpush1.msra.mxu0 0.0
    %4562 = vmatprep.subr.mxu0 0.0
    %4563 = vmatpush1.msra.mxu0 0.0
    %4564 = vmatprep.subr.mxu0 0.0
    %4565 = vmatpush1.msra.mxu0 0.0
    %4566 = vmatprep.subr.mxu0 0.0
    %4567 = vmatpush1.msra.mxu0 0.0
    %4568 = vmatprep.subr.mxu0 0.0
    %4569 = vmatpush1.msra.mxu0 0.0
    %4570 = vmatprep.subr.mxu0 0.0
    %4571 = vmatpush1.msra.mxu0 0.0
    %4572 = vmatprep.subr.mxu0 0.0
    %4573 = vmatpush1.msra.mxu0 0.0
    %4574 = vmatprep.subr.mxu0 0.0
    %4575 = vmatpush1.msra.mxu0 0.0
    %4576 = vmatprep.subr.mxu0 0.0
    %4577 = vmatpush1.msra.mxu0 0.0
    %4578 = vmatprep.subr.mxu0 0.0
    %4579 = vmatpush1.msra.mxu0 0.0
    %4580 = vmatprep.subr.mxu0 0.0
    %4581 = vmatpush1.msra.mxu0 0.0
    %4582 = vmatprep.subr.mxu0 0.0
    %4583 = vmatpush1.msra.mxu0 0.0
    %4584 = vmatprep.mubr.f32.mxu0 0.0
    %4585 = vmatmul.mubr.f32.gmra.mrb[0].mxu0 %v630
    %v4586 = vpop.f32.mrb[0].mxu0
    %v4587 = vadd.f32 0.0, %v4586
    %v4588 = vpop.f32.mrb[0].mxu0
    %4589 = vdwg.mxu0
    %4590 = vmatprep.subr.mxu0 0.0
    %4591 = vmatpush1.msra.mxu0 %v1440
    %4592 = vmatprep.subr.mxu0 0.0
    %4593 = vmatpush1.msra.mxu0 %v1441
    %4594 = vmatprep.subr.mxu0 0.0
    %4595 = vmatpush1.msra.mxu0 %v1442
    %4596 = vmatprep.subr.mxu0 0.0
    %4597 = vmatpush1.msra.mxu0 %v1443
    %4598 = vmatprep.subr.mxu0 0.0
    %4599 = vmatpush1.msra.mxu0 %v1444
    %4600 = vmatprep.subr.mxu0 0.0
    %4601 = vmatpush1.msra.mxu0 %v1445
    %4602 = vmatprep.subr.mxu0 0.0
    %4603 = vmatpush1.msra.mxu0 %v1446
    %4604 = vmatprep.subr.mxu0 0.0
    %4605 = vmatpush1.msra.mxu0 %v1447
    %4606 = vmatprep.subr.mxu0 0.0
    %4607 = vmatpush1.msra.mxu0 %v1448
    %4608 = vmatprep.subr.mxu0 0.0
    %4609 = vmatpush1.msra.mxu0 %v1449
    %4610 = vmatprep.subr.mxu0 0.0
    %4611 = vmatpush1.msra.mxu0 %v1450
    %4612 = vmatprep.subr.mxu0 0.0
    %4613 = vmatpush1.msra.mxu0 %v1451
    %4614 = vmatprep.subr.mxu0 0.0
    %4615 = vmatpush1.msra.mxu0 %v1452
    %4616 = vmatprep.subr.mxu0 0.0
    %4617 = vmatpush1.msra.mxu0 %v1453
    %4618 = vmatprep.subr.mxu0 0.0
    %4619 = vmatpush1.msra.mxu0 %v1454
    %4620 = vmatprep.subr.mxu0 0.0
    %4621 = vmatpush1.msra.mxu0 %v1455
    %4622 = vmatprep.subr.mxu0 0.0
    %4623 = vmatpush1.msra.mxu0 0.0
    %4624 = vmatprep.subr.mxu0 0.0
    %4625 = vmatpush1.msra.mxu0 0.0
    %4626 = vmatprep.subr.mxu0 0.0
    %4627 = vmatpush1.msra.mxu0 0.0
    %4628 = vmatprep.subr.mxu0 0.0
    %4629 = vmatpush1.msra.mxu0 0.0
    %4630 = vmatprep.subr.mxu0 0.0
    %4631 = vmatpush1.msra.mxu0 0.0
    %4632 = vmatprep.subr.mxu0 0.0
    %4633 = vmatpush1.msra.mxu0 0.0
    %4634 = vmatprep.subr.mxu0 0.0
    %4635 = vmatpush1.msra.mxu0 0.0
    %4636 = vmatprep.subr.mxu0 0.0
    %4637 = vmatpush1.msra.mxu0 0.0
    %4638 = vmatprep.subr.mxu0 0.0
    %4639 = vmatpush1.msra.mxu0 0.0
    %4640 = vmatprep.subr.mxu0 0.0
    %4641 = vmatpush1.msra.mxu0 0.0
    %4642 = vmatprep.subr.mxu0 0.0
    %4643 = vmatpush1.msra.mxu0 0.0
    %4644 = vmatprep.subr.mxu0 0.0
    %4645 = vmatpush1.msra.mxu0 0.0
    %4646 = vmatprep.subr.mxu0 0.0
    %4647 = vmatpush1.msra.mxu0 0.0
    %4648 = vmatprep.subr.mxu0 0.0
    %4649 = vmatpush1.msra.mxu0 0.0
    %4650 = vmatprep.subr.mxu0 0.0
    %4651 = vmatpush1.msra.mxu0 0.0
    %4652 = vmatprep.subr.mxu0 0.0
    %4653 = vmatpush1.msra.mxu0 0.0
    %4654 = vmatprep.mubr.f32.mxu0 0.0
    %4655 = vmatmul.mubr.f32.gmra.mrb[0].mxu0 %v638
    %v4656 = vpop.f32.mrb[0].mxu0
    %v4657 = vadd.f32 0.0, %v4656
    %v4658 = vpop.f32.mrb[0].mxu0
    %4659 = vdwg.mxu0
    %4660 = vmatprep.subr.mxu0 0.0
    %4661 = vmatpush1.msra.mxu0 %v1456
    %4662 = vmatprep.subr.mxu0 0.0
    %4663 = vmatpush1.msra.mxu0 %v1457
    %4664 = vmatprep.subr.mxu0 0.0
    %4665 = vmatpush1.msra.mxu0 %v1458
    %4666 = vmatprep.subr.mxu0 0.0
    %4667 = vmatpush1.msra.mxu0 %v1459
    %4668 = vmatprep.subr.mxu0 0.0
    %4669 = vmatpush1.msra.mxu0 %v1460
    %4670 = vmatprep.subr.mxu0 0.0
    %4671 = vmatpush1.msra.mxu0 %v1461
    %4672 = vmatprep.subr.mxu0 0.0
    %4673 = vmatpush1.msra.mxu0 %v1462
    %4674 = vmatprep.subr.mxu0 0.0
    %4675 = vmatpush1.msra.mxu0 %v1463
    %4676 = vmatprep.subr.mxu0 0.0
    %4677 = vmatpush1.msra.mxu0 %v1464
    %4678 = vmatprep.subr.mxu0 0.0
    %4679 = vmatpush1.msra.mxu0 %v1465
    %4680 = vmatprep.subr.mxu0 0.0
    %4681 = vmatpush1.msra.mxu0 %v1466
    %4682 = vmatprep.subr.mxu0 0.0
    %4683 = vmatpush1.msra.mxu0 %v1467
    %4684 = vmatprep.subr.mxu0 0.0
    %4685 = vmatpush1.msra.mxu0 %v1468
    %4686 = vmatprep.subr.mxu0 0.0
    %4687 = vmatpush1.msra.mxu0 %v1469
    %4688 = vmatprep.subr.mxu0 0.0
    %4689 = vmatpush1.msra.mxu0 %v1470
    %4690 = vmatprep.subr.mxu0 0.0
    %4691 = vmatpush1.msra.mxu0 %v1471
    %4692 = vmatprep.subr.mxu0 0.0
    %4693 = vmatpush1.msra.mxu0 0.0
    %4694 = vmatprep.subr.mxu0 0.0
    %4695 = vmatpush1.msra.mxu0 0.0
    %4696 = vmatprep.subr.mxu0 0.0
    %4697 = vmatpush1.msra.mxu0 0.0
    %4698 = vmatprep.subr.mxu0 0.0
    %4699 = vmatpush1.msra.mxu0 0.0
    %4700 = vmatprep.subr.mxu0 0.0
    %4701 = vmatpush1.msra.mxu0 0.0
    %4702 = vmatprep.subr.mxu0 0.0
    %4703 = vmatpush1.msra.mxu0 0.0
    %4704 = vmatprep.subr.mxu0 0.0
    %4705 = vmatpush1.msra.mxu0 0.0
    %4706 = vmatprep.subr.mxu0 0.0
    %4707 = vmatpush1.msra.mxu0 0.0
    %4708 = vmatprep.subr.mxu0 0.0
    %4709 = vmatpush1.msra.mxu0 0.0
    %4710 = vmatprep.subr.mxu0 0.0
    %4711 = vmatpush1.msra.mxu0 0.0
    %4712 = vmatprep.subr.mxu0 0.0
    %4713 = vmatpush1.msra.mxu0 0.0
    %4714 = vmatprep.subr.mxu0 0.0
    %4715 = vmatpush1.msra.mxu0 0.0
    %4716 = vmatprep.subr.mxu0 0.0
    %4717 = vmatpush1.msra.mxu0 0.0
    %4718 = vmatprep.subr.mxu0 0.0
    %4719 = vmatpush1.msra.mxu0 0.0
    %4720 = vmatprep.subr.mxu0 0.0
    %4721 = vmatpush1.msra.mxu0 0.0
    %4722 = vmatprep.subr.mxu0 0.0
    %4723 = vmatpush1.msra.mxu0 0.0
    %4724 = vmatprep.mubr.f32.mxu0 0.0
    %4725 = vmatmul.mubr.f32.gmra.mrb[0].mxu0 %v637
    %v4726 = vpop.f32.mrb[0].mxu0
    %v4727 = vadd.f32 0.0, %v4726
    %v4728 = vpop.f32.mrb[0].mxu0
    %4729 = vdwg.mxu0
    %4730 = vmatprep.subr.mxu0 0.0
    %4731 = vmatpush1.msra.mxu0 %v1472
    %4732 = vmatprep.subr.mxu0 0.0
    %4733 = vmatpush1.msra.mxu0 %v1473
    %4734 = vmatprep.subr.mxu0 0.0
    %4735 = vmatpush1.msra.mxu0 %v1474
    %4736 = vmatprep.subr.mxu0 0.0
    %4737 = vmatpush1.msra.mxu0 %v1475
    %4738 = vmatprep.subr.mxu0 0.0
    %4739 = vmatpush1.msra.mxu0 %v1476
    %4740 = vmatprep.subr.mxu0 0.0
    %4741 = vmatpush1.msra.mxu0 %v1477
    %4742 = vmatprep.subr.mxu0 0.0
    %4743 = vmatpush1.msra.mxu0 %v1478
    %4744 = vmatprep.subr.mxu0 0.0
    %4745 = vmatpush1.msra.mxu0 %v1479
    %4746 = vmatprep.subr.mxu0 0.0
    %4747 = vmatpush1.msra.mxu0 %v1480
    %4748 = vmatprep.subr.mxu0 0.0
    %4749 = vmatpush1.msra.mxu0 %v1481
    %4750 = vmatprep.subr.mxu0 0.0
    %4751 = vmatpush1.msra.mxu0 %v1482
    %4752 = vmatprep.subr.mxu0 0.0
    %4753 = vmatpush1.msra.mxu0 %v1483
    %4754 = vmatprep.subr.mxu0 0.0
    %4755 = vmatpush1.msra.mxu0 %v1484
    %4756 = vmatprep.subr.mxu0 0.0
    %4757 = vmatpush1.msra.mxu0 %v1485
    %4758 = vmatprep.subr.mxu0 0.0
    %4759 = vmatpush1.msra.mxu0 %v1486
    %4760 = vmatprep.subr.mxu0 0.0
    %4761 = vmatpush1.msra.mxu0 %v1487
    %4762 = vmatprep.subr.mxu0 0.0
    %4763 = vmatpush1.msra.mxu0 0.0
    %4764 = vmatprep.subr.mxu0 0.0
    %4765 = vmatpush1.msra.mxu0 0.0
    %4766 = vmatprep.subr.mxu0 0.0
    %4767 = vmatpush1.msra.mxu0 0.0
    %4768 = vmatprep.subr.mxu0 0.0
    %4769 = vmatpush1.msra.mxu0 0.0
    %4770 = vmatprep.subr.mxu0 0.0
    %4771 = vmatpush1.msra.mxu0 0.0
    %4772 = vmatprep.subr.mxu0 0.0
    %4773 = vmatpush1.msra.mxu0 0.0
    %4774 = vmatprep.subr.mxu0 0.0
    %4775 = vmatpush1.msra.mxu0 0.0
    %4776 = vmatprep.subr.mxu0 0.0
    %4777 = vmatpush1.msra.mxu0 0.0
    %4778 = vmatprep.subr.mxu0 0.0
    %4779 = vmatpush1.msra.mxu0 0.0
    %4780 = vmatprep.subr.mxu0 0.0
    %4781 = vmatpush1.msra.mxu0 0.0
    %4782 = vmatprep.subr.mxu0 0.0
    %4783 = vmatpush1.msra.mxu0 0.0
    %4784 = vmatprep.subr.mxu0 0.0
    %4785 = vmatpush1.msra.mxu0 0.0
    %4786 = vmatprep.subr.mxu0 0.0
    %4787 = vmatpush1.msra.mxu0 0.0
    %4788 = vmatprep.subr.mxu0 0.0
    %4789 = vmatpush1.msra.mxu0 0.0
    %4790 = vmatprep.subr.mxu0 0.0
    %4791 = vmatpush1.msra.mxu0 0.0
    %4792 = vmatprep.subr.mxu0 0.0
    %4793 = vmatpush1.msra.mxu0 0.0
    %4794 = vmatprep.mubr.f32.mxu0 0.0
    %4795 = vmatmul.mubr.f32.gmra.mrb[0].mxu0 %v639
    %v4796 = vpop.f32.mrb[0].mxu0
    %v4797 = vadd.f32 0.0, %v4796
    %v4798 = vpop.f32.mrb[0].mxu0
    %4799 = vdwg.mxu0
    %4800 = vmatprep.subr.mxu0 0.0
    %4801 = vmatpush1.msra.mxu0 %v1488
    %4802 = vmatprep.subr.mxu0 0.0
    %4803 = vmatpush1.msra.mxu0 %v1489
    %4804 = vmatprep.subr.mxu0 0.0
    %4805 = vmatpush1.msra.mxu0 %v1490
    %4806 = vmatprep.subr.mxu0 0.0
    %4807 = vmatpush1.msra.mxu0 %v1491
    %4808 = vmatprep.subr.mxu0 0.0
    %4809 = vmatpush1.msra.mxu0 %v1492
    %4810 = vmatprep.subr.mxu0 0.0
    %4811 = vmatpush1.msra.mxu0 %v1493
    %4812 = vmatprep.subr.mxu0 0.0
    %4813 = vmatpush1.msra.mxu0 %v1494
    %4814 = vmatprep.subr.mxu0 0.0
    %4815 = vmatpush1.msra.mxu0 %v1495
    %4816 = vmatprep.subr.mxu0 0.0
    %4817 = vmatpush1.msra.mxu0 %v1496
    %4818 = vmatprep.subr.mxu0 0.0
    %4819 = vmatpush1.msra.mxu0 %v1497
    %4820 = vmatprep.subr.mxu0 0.0
    %4821 = vmatpush1.msra.mxu0 %v1498
    %4822 = vmatprep.subr.mxu0 0.0
    %4823 = vmatpush1.msra.mxu0 %v1499
    %4824 = vmatprep.subr.mxu0 0.0
    %4825 = vmatpush1.msra.mxu0 %v1500
    %4826 = vmatprep.subr.mxu0 0.0
    %4827 = vmatpush1.msra.mxu0 %v1501
    %4828 = vmatprep.subr.mxu0 0.0
    %4829 = vmatpush1.msra.mxu0 %v1502
    %4830 = vmatprep.subr.mxu0 0.0
    %4831 = vmatpush1.msra.mxu0 %v1503
    %4832 = vmatprep.subr.mxu0 0.0
    %4833 = vmatpush1.msra.mxu0 0.0
    %4834 = vmatprep.subr.mxu0 0.0
    %4835 = vmatpush1.msra.mxu0 0.0
    %4836 = vmatprep.subr.mxu0 0.0
    %4837 = vmatpush1.msra.mxu0 0.0
    %4838 = vmatprep.subr.mxu0 0.0
    %4839 = vmatpush1.msra.mxu0 0.0
    %4840 = vmatprep.subr.mxu0 0.0
    %4841 = vmatpush1.msra.mxu0 0.0
    %4842 = vmatprep.subr.mxu0 0.0
    %4843 = vmatpush1.msra.mxu0 0.0
    %4844 = vmatprep.subr.mxu0 0.0
    %4845 = vmatpush1.msra.mxu0 0.0
    %4846 = vmatprep.subr.mxu0 0.0
    %4847 = vmatpush1.msra.mxu0 0.0
    %4848 = vmatprep.subr.mxu0 0.0
    %4849 = vmatpush1.msra.mxu0 0.0
    %4850 = vmatprep.subr.mxu0 0.0
    %4851 = vmatpush1.msra.mxu0 0.0
    %4852 = vmatprep.subr.mxu0 0.0
    %4853 = vmatpush1.msra.mxu0 0.0
    %4854 = vmatprep.subr.mxu0 0.0
    %4855 = vmatpush1.msra.mxu0 0.0
    %4856 = vmatprep.subr.mxu0 0.0
    %4857 = vmatpush1.msra.mxu0 0.0
    %4858 = vmatprep.subr.mxu0 0.0
    %4859 = vmatpush1.msra.mxu0 0.0
    %4860 = vmatprep.subr.mxu0 0.0
    %4861 = vmatpush1.msra.mxu0 0.0
    %4862 = vmatprep.subr.mxu0 0.0
    %4863 = vmatpush1.msra.mxu0 0.0
    %4864 = vmatprep.mubr.f32.mxu0 0.0
    %4865 = vmatmul.mubr.f32.gmra.mrb[0].mxu0 %v647
    %v4866 = vpop.f32.mrb[0].mxu0
    %v4867 = vadd.f32 0.0, %v4866
    %v4868 = vpop.f32.mrb[0].mxu0
    %4869 = vdwg.mxu0
    %4870 = vmatprep.subr.mxu0 0.0
    %4871 = vmatpush1.msra.mxu0 %v1504
    %4872 = vmatprep.subr.mxu0 0.0
    %4873 = vmatpush1.msra.mxu0 %v1505
    %4874 = vmatprep.subr.mxu0 0.0
    %4875 = vmatpush1.msra.mxu0 %v1506
    %4876 = vmatprep.subr.mxu0 0.0
    %4877 = vmatpush1.msra.mxu0 %v1507
    %4878 = vmatprep.subr.mxu0 0.0
    %4879 = vmatpush1.msra.mxu0 %v1508
    %4880 = vmatprep.subr.mxu0 0.0
    %4881 = vmatpush1.msra.mxu0 %v1509
    %4882 = vmatprep.subr.mxu0 0.0
    %4883 = vmatpush1.msra.mxu0 %v1510
    %4884 = vmatprep.subr.mxu0 0.0
    %4885 = vmatpush1.msra.mxu0 %v1511
    %4886 = vmatprep.subr.mxu0 0.0
    %4887 = vmatpush1.msra.mxu0 %v1512
    %4888 = vmatprep.subr.mxu0 0.0
    %4889 = vmatpush1.msra.mxu0 %v1513
    %4890 = vmatprep.subr.mxu0 0.0
    %4891 = vmatpush1.msra.mxu0 %v1514
    %4892 = vmatprep.subr.mxu0 0.0
    %4893 = vmatpush1.msra.mxu0 %v1515
    %4894 = vmatprep.subr.mxu0 0.0
    %4895 = vmatpush1.msra.mxu0 %v1516
    %4896 = vmatprep.subr.mxu0 0.0
    %4897 = vmatpush1.msra.mxu0 %v1517
    %4898 = vmatprep.subr.mxu0 0.0
    %4899 = vmatpush1.msra.mxu0 %v1518
    %4900 = vmatprep.subr.mxu0 0.0
    %4901 = vmatpush1.msra.mxu0 %v1519
    %4902 = vmatprep.subr.mxu0 0.0
    %4903 = vmatpush1.msra.mxu0 0.0
    %4904 = vmatprep.subr.mxu0 0.0
    %4905 = vmatpush1.msra.mxu0 0.0
    %4906 = vmatprep.subr.mxu0 0.0
    %4907 = vmatpush1.msra.mxu0 0.0
    %4908 = vmatprep.subr.mxu0 0.0
    %4909 = vmatpush1.msra.mxu0 0.0
    %4910 = vmatprep.subr.mxu0 0.0
    %4911 = vmatpush1.msra.mxu0 0.0
    %4912 = vmatprep.subr.mxu0 0.0
    %4913 = vmatpush1.msra.mxu0 0.0
    %4914 = vmatprep.subr.mxu0 0.0
    %4915 = vmatpush1.msra.mxu0 0.0
    %4916 = vmatprep.subr.mxu0 0.0
    %4917 = vmatpush1.msra.mxu0 0.0
    %4918 = vmatprep.subr.mxu0 0.0
    %4919 = vmatpush1.msra.mxu0 0.0
    %4920 = vmatprep.subr.mxu0 0.0
    %4921 = vmatpush1.msra.mxu0 0.0
    %4922 = vmatprep.subr.mxu0 0.0
    %4923 = vmatpush1.msra.mxu0 0.0
    %4924 = vmatprep.subr.mxu0 0.0
    %4925 = vmatpush1.msra.mxu0 0.0
    %4926 = vmatprep.subr.mxu0 0.0
    %4927 = vmatpush1.msra.mxu0 0.0
    %4928 = vmatprep.subr.mxu0 0.0
    %4929 = vmatpush1.msra.mxu0 0.0
    %4930 = vmatprep.subr.mxu0 0.0
    %4931 = vmatpush1.msra.mxu0 0.0
    %4932 = vmatprep.subr.mxu0 0.0
    %4933 = vmatpush1.msra.mxu0 0.0
    %4934 = vmatprep.mubr.f32.mxu0 0.0
    %4935 = vmatmul.mubr.f32.gmra.mrb[0].mxu0 %v655
    %v4936 = vpop.f32.mrb[0].mxu0
    %v4937 = vadd.f32 0.0, %v4936
    %v4938 = vpop.f32.mrb[0].mxu0
    %4939 = vdwg.mxu0
    %4940 = vmatprep.subr.mxu0 0.0
    %4941 = vmatpush1.msra.mxu0 %v1520
    %4942 = vmatprep.subr.mxu0 0.0
    %4943 = vmatpush1.msra.mxu0 %v1521
    %4944 = vmatprep.subr.mxu0 0.0
    %4945 = vmatpush1.msra.mxu0 %v1522
    %4946 = vmatprep.subr.mxu0 0.0
    %4947 = vmatpush1.msra.mxu0 %v1523
    %4948 = vmatprep.subr.mxu0 0.0
    %4949 = vmatpush1.msra.mxu0 %v1524
    %4950 = vmatprep.subr.mxu0 0.0
    %4951 = vmatpush1.msra.mxu0 %v1525
    %4952 = vmatprep.subr.mxu0 0.0
    %4953 = vmatpush1.msra.mxu0 %v1526
    %4954 = vmatprep.subr.mxu0 0.0
    %4955 = vmatpush1.msra.mxu0 %v1527
    %4956 = vmatprep.subr.mxu0 0.0
    %4957 = vmatpush1.msra.mxu0 %v1528
    %4958 = vmatprep.subr.mxu0 0.0
    %4959 = vmatpush1.msra.mxu0 %v1529
    %4960 = vmatprep.subr.mxu0 0.0
    %4961 = vmatpush1.msra.mxu0 %v1530
    %4962 = vmatprep.subr.mxu0 0.0
    %4963 = vmatpush1.msra.mxu0 %v1531
    %4964 = vmatprep.subr.mxu0 0.0
    %4965 = vmatpush1.msra.mxu0 %v1532
    %4966 = vmatprep.subr.mxu0 0.0
    %4967 = vmatpush1.msra.mxu0 %v1533
    %4968 = vmatprep.subr.mxu0 0.0
    %4969 = vmatpush1.msra.mxu0 %v1534
    %4970 = vmatprep.subr.mxu0 0.0
    %4971 = vmatpush1.msra.mxu0 %v1535
    %4972 = vmatprep.subr.mxu0 0.0
    %4973 = vmatpush1.msra.mxu0 0.0
    %4974 = vmatprep.subr.mxu0 0.0
    %4975 = vmatpush1.msra.mxu0 0.0
    %4976 = vmatprep.subr.mxu0 0.0
    %4977 = vmatpush1.msra.mxu0 0.0
    %4978 = vmatprep.subr.mxu0 0.0
    %4979 = vmatpush1.msra.mxu0 0.0
    %4980 = vmatprep.subr.mxu0 0.0
    %4981 = vmatpush1.msra.mxu0 0.0
    %4982 = vmatprep.subr.mxu0 0.0
    %4983 = vmatpush1.msra.mxu0 0.0
    %4984 = vmatprep.subr.mxu0 0.0
    %4985 = vmatpush1.msra.mxu0 0.0
    %4986 = vmatprep.subr.mxu0 0.0
    %4987 = vmatpush1.msra.mxu0 0.0
    %4988 = vmatprep.subr.mxu0 0.0
    %4989 = vmatpush1.msra.mxu0 0.0
    %4990 = vmatprep.subr.mxu0 0.0
    %4991 = vmatpush1.msra.mxu0 0.0
    %4992 = vmatprep.subr.mxu0 0.0
    %4993 = vmatpush1.msra.mxu0 0.0
    %4994 = vmatprep.subr.mxu0 0.0
    %4995 = vmatpush1.msra.mxu0 0.0
    %4996 = vmatprep.subr.mxu0 0.0
    %4997 = vmatpush1.msra.mxu0 0.0
    %4998 = vmatprep.subr.mxu0 0.0
    %4999 = vmatpush1.msra.mxu0 0.0
    %5000 = vmatprep.subr.mxu0 0.0
    %5001 = vmatpush1.msra.mxu0 0.0
    %5002 = vmatprep.subr.mxu0 0.0
    %5003 = vmatpush1.msra.mxu0 0.0
    %5004 = vmatprep.mubr.f32.mxu0 0.0
    %5005 = vmatmul.mubr.f32.gmra.mrb[0].mxu0 %v654
    %v5006 = vpop.f32.mrb[0].mxu0
    %v5007 = vadd.f32 0.0, %v5006
    %v5008 = vpop.f32.mrb[0].mxu0
    %5009 = vdwg.mxu0
    %5010 = vmatprep.subr.mxu0 0.0
    %5011 = vmatpush1.msra.mxu0 %v1536
    %5012 = vmatprep.subr.mxu0 0.0
    %5013 = vmatpush1.msra.mxu0 %v1537
    %5014 = vmatprep.subr.mxu0 0.0
    %5015 = vmatpush1.msra.mxu0 %v1538
    %5016 = vmatprep.subr.mxu0 0.0
    %5017 = vmatpush1.msra.mxu0 %v1539
    %5018 = vmatprep.subr.mxu0 0.0
    %5019 = vmatpush1.msra.mxu0 %v1540
    %5020 = vmatprep.subr.mxu0 0.0
    %5021 = vmatpush1.msra.mxu0 %v1541
    %5022 = vmatprep.subr.mxu0 0.0
    %5023 = vmatpush1.msra.mxu0 %v1542
    %5024 = vmatprep.subr.mxu0 0.0
    %5025 = vmatpush1.msra.mxu0 %v1543
    %5026 = vmatprep.subr.mxu0 0.0
    %5027 = vmatpush1.msra.mxu0 %v1544
    %5028 = vmatprep.subr.mxu0 0.0
    %5029 = vmatpush1.msra.mxu0 %v1545
    %5030 = vmatprep.subr.mxu0 0.0
    %5031 = vmatpush1.msra.mxu0 %v1546
    %5032 = vmatprep.subr.mxu0 0.0
    %5033 = vmatpush1.msra.mxu0 %v1547
    %5034 = vmatprep.subr.mxu0 0.0
    %5035 = vmatpush1.msra.mxu0 %v1548
    %5036 = vmatprep.subr.mxu0 0.0
    %5037 = vmatpush1.msra.mxu0 %v1549
    %5038 = vmatprep.subr.mxu0 0.0
    %5039 = vmatpush1.msra.mxu0 %v1550
    %5040 = vmatprep.subr.mxu0 0.0
    %5041 = vmatpush1.msra.mxu0 %v1551
    %5042 = vmatprep.subr.mxu0 0.0
    %5043 = vmatpush1.msra.mxu0 0.0
    %5044 = vmatprep.subr.mxu0 0.0
    %5045 = vmatpush1.msra.mxu0 0.0
    %5046 = vmatprep.subr.mxu0 0.0
    %5047 = vmatpush1.msra.mxu0 0.0
    %5048 = vmatprep.subr.mxu0 0.0
    %5049 = vmatpush1.msra.mxu0 0.0
    %5050 = vmatprep.subr.mxu0 0.0
    %5051 = vmatpush1.msra.mxu0 0.0
    %5052 = vmatprep.subr.mxu0 0.0
    %5053 = vmatpush1.msra.mxu0 0.0
    %5054 = vmatprep.subr.mxu0 0.0
    %5055 = vmatpush1.msra.mxu0 0.0
    %5056 = vmatprep.subr.mxu0 0.0
    %5057 = vmatpush1.msra.mxu0 0.0
    %5058 = vmatprep.subr.mxu0 0.0
    %5059 = vmatpush1.msra.mxu0 0.0
    %5060 = vmatprep.subr.mxu0 0.0
    %5061 = vmatpush1.msra.mxu0 0.0
    %5062 = vmatprep.subr.mxu0 0.0
    %5063 = vmatpush1.msra.mxu0 0.0
    %5064 = vmatprep.subr.mxu0 0.0
    %5065 = vmatpush1.msra.mxu0 0.0
    %5066 = vmatprep.subr.mxu0 0.0
    %5067 = vmatpush1.msra.mxu0 0.0
    %5068 = vmatprep.subr.mxu0 0.0
    %5069 = vmatpush1.msra.mxu0 0.0
    %5070 = vmatprep.subr.mxu0 0.0
    %5071 = vmatpush1.msra.mxu0 0.0
    %5072 = vmatprep.subr.mxu0 0.0
    %5073 = vmatpush1.msra.mxu0 0.0
    %5074 = vmatprep.mubr.f32.mxu0 0.0
    %5075 = vmatmul.mubr.f32.gmra.mrb[0].mxu0 %v656
    %v5076 = vpop.f32.mrb[0].mxu0
    %v5077 = vadd.f32 0.0, %v5076
    %v5078 = vpop.f32.mrb[0].mxu0
    %5079 = vdwg.mxu0
    %5080 = vmatprep.subr.mxu0 0.0
    %5081 = vmatpush1.msra.mxu0 %v1552
    %5082 = vmatprep.subr.mxu0 0.0
    %5083 = vmatpush1.msra.mxu0 %v1553
    %5084 = vmatprep.subr.mxu0 0.0
    %5085 = vmatpush1.msra.mxu0 %v1554
    %5086 = vmatprep.subr.mxu0 0.0
    %5087 = vmatpush1.msra.mxu0 %v1555
    %5088 = vmatprep.subr.mxu0 0.0
    %5089 = vmatpush1.msra.mxu0 %v1556
    %5090 = vmatprep.subr.mxu0 0.0
    %5091 = vmatpush1.msra.mxu0 %v1557
    %5092 = vmatprep.subr.mxu0 0.0
    %5093 = vmatpush1.msra.mxu0 %v1558
    %5094 = vmatprep.subr.mxu0 0.0
    %5095 = vmatpush1.msra.mxu0 %v1559
    %5096 = vmatprep.subr.mxu0 0.0
    %5097 = vmatpush1.msra.mxu0 %v1560
    %5098 = vmatprep.subr.mxu0 0.0
    %5099 = vmatpush1.msra.mxu0 %v1561
    %5100 = vmatprep.subr.mxu0 0.0
    %5101 = vmatpush1.msra.mxu0 %v1562
    %5102 = vmatprep.subr.mxu0 0.0
    %5103 = vmatpush1.msra.mxu0 %v1563
    %5104 = vmatprep.subr.mxu0 0.0
    %5105 = vmatpush1.msra.mxu0 %v1564
    %5106 = vmatprep.subr.mxu0 0.0
    %5107 = vmatpush1.msra.mxu0 %v1565
    %5108 = vmatprep.subr.mxu0 0.0
    %5109 = vmatpush1.msra.mxu0 %v1566
    %5110 = vmatprep.subr.mxu0 0.0
    %5111 = vmatpush1.msra.mxu0 %v1567
    %5112 = vmatprep.subr.mxu0 0.0
    %5113 = vmatpush1.msra.mxu0 0.0
    %5114 = vmatprep.subr.mxu0 0.0
    %5115 = vmatpush1.msra.mxu0 0.0
    %5116 = vmatprep.subr.mxu0 0.0
    %5117 = vmatpush1.msra.mxu0 0.0
    %5118 = vmatprep.subr.mxu0 0.0
    %5119 = vmatpush1.msra.mxu0 0.0
    %5120 = vmatprep.subr.mxu0 0.0
    %5121 = vmatpush1.msra.mxu0 0.0
    %5122 = vmatprep.subr.mxu0 0.0
    %5123 = vmatpush1.msra.mxu0 0.0
    %5124 = vmatprep.subr.mxu0 0.0
    %5125 = vmatpush1.msra.mxu0 0.0
    %5126 = vmatprep.subr.mxu0 0.0
    %5127 = vmatpush1.msra.mxu0 0.0
    %5128 = vmatprep.subr.mxu0 0.0
    %5129 = vmatpush1.msra.mxu0 0.0
    %5130 = vmatprep.subr.mxu0 0.0
    %5131 = vmatpush1.msra.mxu0 0.0
    %5132 = vmatprep.subr.mxu0 0.0
    %5133 = vmatpush1.msra.mxu0 0.0
    %5134 = vmatprep.subr.mxu0 0.0
    %5135 = vmatpush1.msra.mxu0 0.0
    %5136 = vmatprep.subr.mxu0 0.0
    %5137 = vmatpush1.msra.mxu0 0.0
    %5138 = vmatprep.subr.mxu0 0.0
    %5139 = vmatpush1.msra.mxu0 0.0
    %5140 = vmatprep.subr.mxu0 0.0
    %5141 = vmatpush1.msra.mxu0 0.0
    %5142 = vmatprep.subr.mxu0 0.0
    %5143 = vmatpush1.msra.mxu0 0.0
    %5144 = vmatprep.mubr.f32.mxu0 0.0
    %5145 = vmatmul.mubr.f32.gmra.mrb[0].mxu0 %v664
    %v5146 = vpop.f32.mrb[0].mxu0
    %v5147 = vadd.f32 0.0, %v5146
    %v5148 = vpop.f32.mrb[0].mxu0
    %5149 = vdwg.mxu0
    %5150 = vmatprep.subr.mxu0 0.0
    %5151 = vmatpush1.msra.mxu0 %v1568
    %5152 = vmatprep.subr.mxu0 0.0
    %5153 = vmatpush1.msra.mxu0 %v1569
    %5154 = vmatprep.subr.mxu0 0.0
    %5155 = vmatpush1.msra.mxu0 %v1570
    %5156 = vmatprep.subr.mxu0 0.0
    %5157 = vmatpush1.msra.mxu0 %v1571
    %5158 = vmatprep.subr.mxu0 0.0
    %5159 = vmatpush1.msra.mxu0 %v1572
    %5160 = vmatprep.subr.mxu0 0.0
    %5161 = vmatpush1.msra.mxu0 %v1573
    %5162 = vmatprep.subr.mxu0 0.0
    %5163 = vmatpush1.msra.mxu0 %v1574
    %5164 = vmatprep.subr.mxu0 0.0
    %5165 = vmatpush1.msra.mxu0 %v1575
    %5166 = vmatprep.subr.mxu0 0.0
    %5167 = vmatpush1.msra.mxu0 %v1576
    %5168 = vmatprep.subr.mxu0 0.0
    %5169 = vmatpush1.msra.mxu0 %v1577
    %5170 = vmatprep.subr.mxu0 0.0
    %5171 = vmatpush1.msra.mxu0 %v1578
    %5172 = vmatprep.subr.mxu0 0.0
    %5173 = vmatpush1.msra.mxu0 %v1579
    %5174 = vmatprep.subr.mxu0 0.0
    %5175 = vmatpush1.msra.mxu0 %v1580
    %5176 = vmatprep.subr.mxu0 0.0
    %5177 = vmatpush1.msra.mxu0 %v1581
    %5178 = vmatprep.subr.mxu0 0.0
    %5179 = vmatpush1.msra.mxu0 %v1582
    %5180 = vmatprep.subr.mxu0 0.0
    %5181 = vmatpush1.msra.mxu0 %v1583
    %5182 = vmatprep.subr.mxu0 0.0
    %5183 = vmatpush1.msra.mxu0 0.0
    %5184 = vmatprep.subr.mxu0 0.0
    %5185 = vmatpush1.msra.mxu0 0.0
    %5186 = vmatprep.subr.mxu0 0.0
    %5187 = vmatpush1.msra.mxu0 0.0
    %5188 = vmatprep.subr.mxu0 0.0
    %5189 = vmatpush1.msra.mxu0 0.0
    %5190 = vmatprep.subr.mxu0 0.0
    %5191 = vmatpush1.msra.mxu0 0.0
    %5192 = vmatprep.subr.mxu0 0.0
    %5193 = vmatpush1.msra.mxu0 0.0
    %5194 = vmatprep.subr.mxu0 0.0
    %5195 = vmatpush1.msra.mxu0 0.0
    %5196 = vmatprep.subr.mxu0 0.0
    %5197 = vmatpush1.msra.mxu0 0.0
    %5198 = vmatprep.subr.mxu0 0.0
    %5199 = vmatpush1.msra.mxu0 0.0
    %5200 = vmatprep.subr.mxu0 0.0
    %5201 = vmatpush1.msra.mxu0 0.0
    %5202 = vmatprep.subr.mxu0 0.0
    %5203 = vmatpush1.msra.mxu0 0.0
    %5204 = vmatprep.subr.mxu0 0.0
    %5205 = vmatpush1.msra.mxu0 0.0
    %5206 = vmatprep.subr.mxu0 0.0
    %5207 = vmatpush1.msra.mxu0 0.0
    %5208 = vmatprep.subr.mxu0 0.0
    %5209 = vmatpush1.msra.mxu0 0.0
    %5210 = vmatprep.subr.mxu0 0.0
    %5211 = vmatpush1.msra.mxu0 0.0
    %5212 = vmatprep.subr.mxu0 0.0
    %5213 = vmatpush1.msra.mxu0 0.0
    %5214 = vmatprep.mubr.f32.mxu0 0.0
    %5215 = vmatmul.mubr.f32.gmra.mrb[0].mxu0 %v672
    %v5216 = vpop.f32.mrb[0].mxu0
    %v5217 = vadd.f32 0.0, %v5216
    %v5218 = vpop.f32.mrb[0].mxu0
    %5219 = vdwg.mxu0
    %5220 = vmatprep.subr.mxu0 0.0
    %5221 = vmatpush1.msra.mxu0 %v1584
    %5222 = vmatprep.subr.mxu0 0.0
    %5223 = vmatpush1.msra.mxu0 %v1585
    %5224 = vmatprep.subr.mxu0 0.0
    %5225 = vmatpush1.msra.mxu0 %v1586
    %5226 = vmatprep.subr.mxu0 0.0
    %5227 = vmatpush1.msra.mxu0 %v1587
    %5228 = vmatprep.subr.mxu0 0.0
    %5229 = vmatpush1.msra.mxu0 %v1588
    %5230 = vmatprep.subr.mxu0 0.0
    %5231 = vmatpush1.msra.mxu0 %v1589
    %5232 = vmatprep.subr.mxu0 0.0
    %5233 = vmatpush1.msra.mxu0 %v1590
    %5234 = vmatprep.subr.mxu0 0.0
    %5235 = vmatpush1.msra.mxu0 %v1591
    %5236 = vmatprep.subr.mxu0 0.0
    %5237 = vmatpush1.msra.mxu0 %v1592
    %5238 = vmatprep.subr.mxu0 0.0
    %5239 = vmatpush1.msra.mxu0 %v1593
    %5240 = vmatprep.subr.mxu0 0.0
    %5241 = vmatpush1.msra.mxu0 %v1594
    %5242 = vmatprep.subr.mxu0 0.0
    %5243 = vmatpush1.msra.mxu0 %v1595
    %5244 = vmatprep.subr.mxu0 0.0
    %5245 = vmatpush1.msra.mxu0 %v1596
    %5246 = vmatprep.subr.mxu0 0.0
    %5247 = vmatpush1.msra.mxu0 %v1597
    %5248 = vmatprep.subr.mxu0 0.0
    %5249 = vmatpush1.msra.mxu0 %v1598
    %5250 = vmatprep.subr.mxu0 0.0
    %5251 = vmatpush1.msra.mxu0 %v1599
    %5252 = vmatprep.subr.mxu0 0.0
    %5253 = vmatpush1.msra.mxu0 0.0
    %5254 = vmatprep.subr.mxu0 0.0
    %5255 = vmatpush1.msra.mxu0 0.0
    %5256 = vmatprep.subr.mxu0 0.0
    %5257 = vmatpush1.msra.mxu0 0.0
    %5258 = vmatprep.subr.mxu0 0.0
    %5259 = vmatpush1.msra.mxu0 0.0
    %5260 = vmatprep.subr.mxu0 0.0
    %5261 = vmatpush1.msra.mxu0 0.0
    %5262 = vmatprep.subr.mxu0 0.0
    %5263 = vmatpush1.msra.mxu0 0.0
    %5264 = vmatprep.subr.mxu0 0.0
    %5265 = vmatpush1.msra.mxu0 0.0
    %5266 = vmatprep.subr.mxu0 0.0
    %5267 = vmatpush1.msra.mxu0 0.0
    %5268 = vmatprep.subr.mxu0 0.0
    %5269 = vmatpush1.msra.mxu0 0.0
    %5270 = vmatprep.subr.mxu0 0.0
    %5271 = vmatpush1.msra.mxu0 0.0
    %5272 = vmatprep.subr.mxu0 0.0
    %5273 = vmatpush1.msra.mxu0 0.0
    %5274 = vmatprep.subr.mxu0 0.0
    %5275 = vmatpush1.msra.mxu0 0.0
    %5276 = vmatprep.subr.mxu0 0.0
    %5277 = vmatpush1.msra.mxu0 0.0
    %5278 = vmatprep.subr.mxu0 0.0
    %5279 = vmatpush1.msra.mxu0 0.0
    %5280 = vmatprep.subr.mxu0 0.0
    %5281 = vmatpush1.msra.mxu0 0.0
    %5282 = vmatprep.subr.mxu0 0.0
    %5283 = vmatpush1.msra.mxu0 0.0
    %5284 = vmatprep.mubr.f32.mxu0 0.0
    %5285 = vmatmul.mubr.f32.gmra.mrb[0].mxu0 %v671
    %v5286 = vpop.f32.mrb[0].mxu0
    %v5287 = vadd.f32 0.0, %v5286
    %v5288 = vpop.f32.mrb[0].mxu0
    %5289 = vdwg.mxu0
    %5290 = vmatprep.subr.mxu0 0.0
    %5291 = vmatpush1.msra.mxu0 %v1600
    %5292 = vmatprep.subr.mxu0 0.0
    %5293 = vmatpush1.msra.mxu0 %v1601
    %5294 = vmatprep.subr.mxu0 0.0
    %5295 = vmatpush1.msra.mxu0 %v1602
    %5296 = vmatprep.subr.mxu0 0.0
    %5297 = vmatpush1.msra.mxu0 %v1603
    %5298 = vmatprep.subr.mxu0 0.0
    %5299 = vmatpush1.msra.mxu0 %v1604
    %5300 = vmatprep.subr.mxu0 0.0
    %5301 = vmatpush1.msra.mxu0 %v1605
    %5302 = vmatprep.subr.mxu0 0.0
    %5303 = vmatpush1.msra.mxu0 %v1606
    %5304 = vmatprep.subr.mxu0 0.0
    %5305 = vmatpush1.msra.mxu0 %v1607
    %5306 = vmatprep.subr.mxu0 0.0
    %5307 = vmatpush1.msra.mxu0 %v1608
    %5308 = vmatprep.subr.mxu0 0.0
    %5309 = vmatpush1.msra.mxu0 %v1609
    %5310 = vmatprep.subr.mxu0 0.0
    %5311 = vmatpush1.msra.mxu0 %v1610
    %5312 = vmatprep.subr.mxu0 0.0
    %5313 = vmatpush1.msra.mxu0 %v1611
    %5314 = vmatprep.subr.mxu0 0.0
    %5315 = vmatpush1.msra.mxu0 %v1612
    %5316 = vmatprep.subr.mxu0 0.0
    %5317 = vmatpush1.msra.mxu0 %v1613
    %5318 = vmatprep.subr.mxu0 0.0
    %5319 = vmatpush1.msra.mxu0 %v1614
    %5320 = vmatprep.subr.mxu0 0.0
    %5321 = vmatpush1.msra.mxu0 %v1615
    %5322 = vmatprep.subr.mxu0 0.0
    %5323 = vmatpush1.msra.mxu0 0.0
    %5324 = vmatprep.subr.mxu0 0.0
    %5325 = vmatpush1.msra.mxu0 0.0
    %5326 = vmatprep.subr.mxu0 0.0
    %5327 = vmatpush1.msra.mxu0 0.0
    %5328 = vmatprep.subr.mxu0 0.0
    %5329 = vmatpush1.msra.mxu0 0.0
    %5330 = vmatprep.subr.mxu0 0.0
    %5331 = vmatpush1.msra.mxu0 0.0
    %5332 = vmatprep.subr.mxu0 0.0
    %5333 = vmatpush1.msra.mxu0 0.0
    %5334 = vmatprep.subr.mxu0 0.0
    %5335 = vmatpush1.msra.mxu0 0.0
    %5336 = vmatprep.subr.mxu0 0.0
    %5337 = vmatpush1.msra.mxu0 0.0
    %5338 = vmatprep.subr.mxu0 0.0
    %5339 = vmatpush1.msra.mxu0 0.0
    %5340 = vmatprep.subr.mxu0 0.0
    %5341 = vmatpush1.msra.mxu0 0.0
    %5342 = vmatprep.subr.mxu0 0.0
    %5343 = vmatpush1.msra.mxu0 0.0
    %5344 = vmatprep.subr.mxu0 0.0
    %5345 = vmatpush1.msra.mxu0 0.0
    %5346 = vmatprep.subr.mxu0 0.0
    %5347 = vmatpush1.msra.mxu0 0.0
    %5348 = vmatprep.subr.mxu0 0.0
    %5349 = vmatpush1.msra.mxu0 0.0
    %5350 = vmatprep.subr.mxu0 0.0
    %5351 = vmatpush1.msra.mxu0 0.0
    %5352 = vmatprep.subr.mxu0 0.0
    %5353 = vmatpush1.msra.mxu0 0.0
    %5354 = vmatprep.mubr.f32.mxu0 0.0
    %5355 = vmatmul.mubr.f32.gmra.mrb[0].mxu0 %v673
    %v5356 = vpop.f32.mrb[0].mxu0
    %v5357 = vadd.f32 0.0, %v5356
    %v5358 = vpop.f32.mrb[0].mxu0
    %5359 = vdwg.mxu0
    %5360 = vmatprep.subr.mxu0 0.0
    %5361 = vmatpush1.msra.mxu0 %v1616
    %5362 = vmatprep.subr.mxu0 0.0
    %5363 = vmatpush1.msra.mxu0 %v1617
    %5364 = vmatprep.subr.mxu0 0.0
    %5365 = vmatpush1.msra.mxu0 %v1618
    %5366 = vmatprep.subr.mxu0 0.0
    %5367 = vmatpush1.msra.mxu0 %v1619
    %5368 = vmatprep.subr.mxu0 0.0
    %5369 = vmatpush1.msra.mxu0 %v1620
    %5370 = vmatprep.subr.mxu0 0.0
    %5371 = vmatpush1.msra.mxu0 %v1621
    %5372 = vmatprep.subr.mxu0 0.0
    %5373 = vmatpush1.msra.mxu0 %v1622
    %5374 = vmatprep.subr.mxu0 0.0
    %5375 = vmatpush1.msra.mxu0 %v1623
    %5376 = vmatprep.subr.mxu0 0.0
    %5377 = vmatpush1.msra.mxu0 %v1624
    %5378 = vmatprep.subr.mxu0 0.0
    %5379 = vmatpush1.msra.mxu0 %v1625
    %5380 = vmatprep.subr.mxu0 0.0
    %5381 = vmatpush1.msra.mxu0 %v1626
    %5382 = vmatprep.subr.mxu0 0.0
    %5383 = vmatpush1.msra.mxu0 %v1627
    %5384 = vmatprep.subr.mxu0 0.0
    %5385 = vmatpush1.msra.mxu0 %v1628
    %5386 = vmatprep.subr.mxu0 0.0
    %5387 = vmatpush1.msra.mxu0 %v1629
    %5388 = vmatprep.subr.mxu0 0.0
    %5389 = vmatpush1.msra.mxu0 %v1630
    %5390 = vmatprep.subr.mxu0 0.0
    %5391 = vmatpush1.msra.mxu0 %v1631
    %5392 = vmatprep.subr.mxu0 0.0
    %5393 = vmatpush1.msra.mxu0 0.0
    %5394 = vmatprep.subr.mxu0 0.0
    %5395 = vmatpush1.msra.mxu0 0.0
    %5396 = vmatprep.subr.mxu0 0.0
    %5397 = vmatpush1.msra.mxu0 0.0
    %5398 = vmatprep.subr.mxu0 0.0
    %5399 = vmatpush1.msra.mxu0 0.0
    %5400 = vmatprep.subr.mxu0 0.0
    %5401 = vmatpush1.msra.mxu0 0.0
    %5402 = vmatprep.subr.mxu0 0.0
    %5403 = vmatpush1.msra.mxu0 0.0
    %5404 = vmatprep.subr.mxu0 0.0
    %5405 = vmatpush1.msra.mxu0 0.0
    %5406 = vmatprep.subr.mxu0 0.0
    %5407 = vmatpush1.msra.mxu0 0.0
    %5408 = vmatprep.subr.mxu0 0.0
    %5409 = vmatpush1.msra.mxu0 0.0
    %5410 = vmatprep.subr.mxu0 0.0
    %5411 = vmatpush1.msra.mxu0 0.0
    %5412 = vmatprep.subr.mxu0 0.0
    %5413 = vmatpush1.msra.mxu0 0.0
    %5414 = vmatprep.subr.mxu0 0.0
    %5415 = vmatpush1.msra.mxu0 0.0
    %5416 = vmatprep.subr.mxu0 0.0
    %5417 = vmatpush1.msra.mxu0 0.0
    %5418 = vmatprep.subr.mxu0 0.0
    %5419 = vmatpush1.msra.mxu0 0.0
    %5420 = vmatprep.subr.mxu0 0.0
    %5421 = vmatpush1.msra.mxu0 0.0
    %5422 = vmatprep.subr.mxu0 0.0
    %5423 = vmatpush1.msra.mxu0 0.0
    %5424 = vmatprep.mubr.f32.mxu0 0.0
    %5425 = vmatmul.mubr.f32.gmra.mrb[0].mxu0 %v681
    %v5426 = vpop.f32.mrb[0].mxu0
    %v5427 = vadd.f32 0.0, %v5426
    %v5428 = vpop.f32.mrb[0].mxu0
    %5429 = vdwg.mxu0
    %5430 = vmatprep.subr.mxu0 0.0
    %5431 = vmatpush1.msra.mxu0 %v1632
    %5432 = vmatprep.subr.mxu0 0.0
    %5433 = vmatpush1.msra.mxu0 %v1633
    %5434 = vmatprep.subr.mxu0 0.0
    %5435 = vmatpush1.msra.mxu0 %v1634
    %5436 = vmatprep.subr.mxu0 0.0
    %5437 = vmatpush1.msra.mxu0 %v1635
    %5438 = vmatprep.subr.mxu0 0.0
    %5439 = vmatpush1.msra.mxu0 %v1636
    %5440 = vmatprep.subr.mxu0 0.0
    %5441 = vmatpush1.msra.mxu0 %v1637
    %5442 = vmatprep.subr.mxu0 0.0
    %5443 = vmatpush1.msra.mxu0 %v1638
    %5444 = vmatprep.subr.mxu0 0.0
    %5445 = vmatpush1.msra.mxu0 %v1639
    %5446 = vmatprep.subr.mxu0 0.0
    %5447 = vmatpush1.msra.mxu0 %v1640
    %5448 = vmatprep.subr.mxu0 0.0
    %5449 = vmatpush1.msra.mxu0 %v1641
    %5450 = vmatprep.subr.mxu0 0.0
    %5451 = vmatpush1.msra.mxu0 %v1642
    %5452 = vmatprep.subr.mxu0 0.0
    %5453 = vmatpush1.msra.mxu0 %v1643
    %5454 = vmatprep.subr.mxu0 0.0
    %5455 = vmatpush1.msra.mxu0 %v1644
    %5456 = vmatprep.subr.mxu0 0.0
    %5457 = vmatpush1.msra.mxu0 %v1645
    %5458 = vmatprep.subr.mxu0 0.0
    %5459 = vmatpush1.msra.mxu0 %v1646
    %5460 = vmatprep.subr.mxu0 0.0
    %5461 = vmatpush1.msra.mxu0 %v1647
    %5462 = vmatprep.subr.mxu0 0.0
    %5463 = vmatpush1.msra.mxu0 0.0
    %5464 = vmatprep.subr.mxu0 0.0
    %5465 = vmatpush1.msra.mxu0 0.0
    %5466 = vmatprep.subr.mxu0 0.0
    %5467 = vmatpush1.msra.mxu0 0.0
    %5468 = vmatprep.subr.mxu0 0.0
    %5469 = vmatpush1.msra.mxu0 0.0
    %5470 = vmatprep.subr.mxu0 0.0
    %5471 = vmatpush1.msra.mxu0 0.0
    %5472 = vmatprep.subr.mxu0 0.0
    %5473 = vmatpush1.msra.mxu0 0.0
    %5474 = vmatprep.subr.mxu0 0.0
    %5475 = vmatpush1.msra.mxu0 0.0
    %5476 = vmatprep.subr.mxu0 0.0
    %5477 = vmatpush1.msra.mxu0 0.0
    %5478 = vmatprep.subr.mxu0 0.0
    %5479 = vmatpush1.msra.mxu0 0.0
    %5480 = vmatprep.subr.mxu0 0.0
    %5481 = vmatpush1.msra.mxu0 0.0
    %5482 = vmatprep.subr.mxu0 0.0
    %5483 = vmatpush1.msra.mxu0 0.0
    %5484 = vmatprep.subr.mxu0 0.0
    %5485 = vmatpush1.msra.mxu0 0.0
    %5486 = vmatprep.subr.mxu0 0.0
    %5487 = vmatpush1.msra.mxu0 0.0
    %5488 = vmatprep.subr.mxu0 0.0
    %5489 = vmatpush1.msra.mxu0 0.0
    %5490 = vmatprep.subr.mxu0 0.0
    %5491 = vmatpush1.msra.mxu0 0.0
    %5492 = vmatprep.subr.mxu0 0.0
    %5493 = vmatpush1.msra.mxu0 0.0
    %5494 = vmatprep.mubr.f32.mxu0 0.0
    %5495 = vmatmul.mubr.f32.gmra.mrb[0].mxu0 %v689
    %v5496 = vpop.f32.mrb[0].mxu0
    %v5497 = vadd.f32 0.0, %v5496
    %v5498 = vpop.f32.mrb[0].mxu0
    %5499 = vdwg.mxu0
    %5500 = vmatprep.subr.mxu0 0.0
    %5501 = vmatpush1.msra.mxu0 %v1648
    %5502 = vmatprep.subr.mxu0 0.0
    %5503 = vmatpush1.msra.mxu0 %v1649
    %5504 = vmatprep.subr.mxu0 0.0
    %5505 = vmatpush1.msra.mxu0 %v1650
    %5506 = vmatprep.subr.mxu0 0.0
    %5507 = vmatpush1.msra.mxu0 %v1651
    %5508 = vmatprep.subr.mxu0 0.0
    %5509 = vmatpush1.msra.mxu0 %v1652
    %5510 = vmatprep.subr.mxu0 0.0
    %5511 = vmatpush1.msra.mxu0 %v1653
    %5512 = vmatprep.subr.mxu0 0.0
    %5513 = vmatpush1.msra.mxu0 %v1654
    %5514 = vmatprep.subr.mxu0 0.0
    %5515 = vmatpush1.msra.mxu0 %v1655
    %5516 = vmatprep.subr.mxu0 0.0
    %5517 = vmatpush1.msra.mxu0 %v1656
    %5518 = vmatprep.subr.mxu0 0.0
    %5519 = vmatpush1.msra.mxu0 %v1657
    %5520 = vmatprep.subr.mxu0 0.0
    %5521 = vmatpush1.msra.mxu0 %v1658
    %5522 = vmatprep.subr.mxu0 0.0
    %5523 = vmatpush1.msra.mxu0 %v1659
    %5524 = vmatprep.subr.mxu0 0.0
    %5525 = vmatpush1.msra.mxu0 %v1660
    %5526 = vmatprep.subr.mxu0 0.0
    %5527 = vmatpush1.msra.mxu0 %v1661
    %5528 = vmatprep.subr.mxu0 0.0
    %5529 = vmatpush1.msra.mxu0 %v1662
    %5530 = vmatprep.subr.mxu0 0.0
    %5531 = vmatpush1.msra.mxu0 %v1663
    %5532 = vmatprep.subr.mxu0 0.0
    %5533 = vmatpush1.msra.mxu0 0.0
    %5534 = vmatprep.subr.mxu0 0.0
    %5535 = vmatpush1.msra.mxu0 0.0
    %5536 = vmatprep.subr.mxu0 0.0
    %5537 = vmatpush1.msra.mxu0 0.0
    %5538 = vmatprep.subr.mxu0 0.0
    %5539 = vmatpush1.msra.mxu0 0.0
    %5540 = vmatprep.subr.mxu0 0.0
    %5541 = vmatpush1.msra.mxu0 0.0
    %5542 = vmatprep.subr.mxu0 0.0
    %5543 = vmatpush1.msra.mxu0 0.0
    %5544 = vmatprep.subr.mxu0 0.0
    %5545 = vmatpush1.msra.mxu0 0.0
    %5546 = vmatprep.subr.mxu0 0.0
    %5547 = vmatpush1.msra.mxu0 0.0
    %5548 = vmatprep.subr.mxu0 0.0
    %5549 = vmatpush1.msra.mxu0 0.0
    %5550 = vmatprep.subr.mxu0 0.0
    %5551 = vmatpush1.msra.mxu0 0.0
    %5552 = vmatprep.subr.mxu0 0.0
    %5553 = vmatpush1.msra.mxu0 0.0
    %5554 = vmatprep.subr.mxu0 0.0
    %5555 = vmatpush1.msra.mxu0 0.0
    %5556 = vmatprep.subr.mxu0 0.0
    %5557 = vmatpush1.msra.mxu0 0.0
    %5558 = vmatprep.subr.mxu0 0.0
    %5559 = vmatpush1.msra.mxu0 0.0
    %5560 = vmatprep.subr.mxu0 0.0
    %5561 = vmatpush1.msra.mxu0 0.0
    %5562 = vmatprep.subr.mxu0 0.0
    %5563 = vmatpush1.msra.mxu0 0.0
    %5564 = vmatprep.mubr.f32.mxu0 0.0
    %5565 = vmatmul.mubr.f32.gmra.mrb[0].mxu0 %v688
    %v5566 = vpop.f32.mrb[0].mxu0
    %v5567 = vadd.f32 0.0, %v5566
    %v5568 = vpop.f32.mrb[0].mxu0
    %5569 = vdwg.mxu0
    %5570 = vmatprep.subr.mxu0 0.0
    %5571 = vmatpush1.msra.mxu0 %v1664
    %5572 = vmatprep.subr.mxu0 0.0
    %5573 = vmatpush1.msra.mxu0 %v1665
    %5574 = vmatprep.subr.mxu0 0.0
    %5575 = vmatpush1.msra.mxu0 %v1666
    %5576 = vmatprep.subr.mxu0 0.0
    %5577 = vmatpush1.msra.mxu0 %v1667
    %5578 = vmatprep.subr.mxu0 0.0
    %5579 = vmatpush1.msra.mxu0 %v1668
    %5580 = vmatprep.subr.mxu0 0.0
    %5581 = vmatpush1.msra.mxu0 %v1669
    %5582 = vmatprep.subr.mxu0 0.0
    %5583 = vmatpush1.msra.mxu0 %v1670
    %5584 = vmatprep.subr.mxu0 0.0
    %5585 = vmatpush1.msra.mxu0 %v1671
    %5586 = vmatprep.subr.mxu0 0.0
    %5587 = vmatpush1.msra.mxu0 %v1672
    %5588 = vmatprep.subr.mxu0 0.0
    %5589 = vmatpush1.msra.mxu0 %v1673
    %5590 = vmatprep.subr.mxu0 0.0
    %5591 = vmatpush1.msra.mxu0 %v1674
    %5592 = vmatprep.subr.mxu0 0.0
    %5593 = vmatpush1.msra.mxu0 %v1675
    %5594 = vmatprep.subr.mxu0 0.0
    %5595 = vmatpush1.msra.mxu0 %v1676
    %5596 = vmatprep.subr.mxu0 0.0
    %5597 = vmatpush1.msra.mxu0 %v1677
    %5598 = vmatprep.subr.mxu0 0.0
    %5599 = vmatpush1.msra.mxu0 %v1678
    %5600 = vmatprep.subr.mxu0 0.0
    %5601 = vmatpush1.msra.mxu0 %v1679
    %5602 = vmatprep.subr.mxu0 0.0
    %5603 = vmatpush1.msra.mxu0 0.0
    %5604 = vmatprep.subr.mxu0 0.0
    %5605 = vmatpush1.msra.mxu0 0.0
    %5606 = vmatprep.subr.mxu0 0.0
    %5607 = vmatpush1.msra.mxu0 0.0
    %5608 = vmatprep.subr.mxu0 0.0
    %5609 = vmatpush1.msra.mxu0 0.0
    %5610 = vmatprep.subr.mxu0 0.0
    %5611 = vmatpush1.msra.mxu0 0.0
    %5612 = vmatprep.subr.mxu0 0.0
    %5613 = vmatpush1.msra.mxu0 0.0
    %5614 = vmatprep.subr.mxu0 0.0
    %5615 = vmatpush1.msra.mxu0 0.0
    %5616 = vmatprep.subr.mxu0 0.0
    %5617 = vmatpush1.msra.mxu0 0.0
    %5618 = vmatprep.subr.mxu0 0.0
    %5619 = vmatpush1.msra.mxu0 0.0
    %5620 = vmatprep.subr.mxu0 0.0
    %5621 = vmatpush1.msra.mxu0 0.0
    %5622 = vmatprep.subr.mxu0 0.0
    %5623 = vmatpush1.msra.mxu0 0.0
    %5624 = vmatprep.subr.mxu0 0.0
    %5625 = vmatpush1.msra.mxu0 0.0
    %5626 = vmatprep.subr.mxu0 0.0
    %5627 = vmatpush1.msra.mxu0 0.0
    %5628 = vmatprep.subr.mxu0 0.0
    %5629 = vmatpush1.msra.mxu0 0.0
    %5630 = vmatprep.subr.mxu0 0.0
    %5631 = vmatpush1.msra.mxu0 0.0
    %5632 = vmatprep.subr.mxu0 0.0
    %5633 = vmatpush1.msra.mxu0 0.0
    %5634 = vmatprep.mubr.f32.mxu0 0.0
    %5635 = vmatmul.mubr.f32.gmra.mrb[0].mxu0 %v690
    %v5636 = vpop.f32.mrb[0].mxu0
    %v5637 = vadd.f32 0.0, %v5636
    %v5638 = vpop.f32.mrb[0].mxu0
    %5639 = vdwg.mxu0
    %5640 = vmatprep.subr.mxu0 0.0
    %5641 = vmatpush1.msra.mxu0 %v1680
    %5642 = vmatprep.subr.mxu0 0.0
    %5643 = vmatpush1.msra.mxu0 %v1681
    %5644 = vmatprep.subr.mxu0 0.0
    %5645 = vmatpush1.msra.mxu0 %v1682
    %5646 = vmatprep.subr.mxu0 0.0
    %5647 = vmatpush1.msra.mxu0 %v1683
    %5648 = vmatprep.subr.mxu0 0.0
    %5649 = vmatpush1.msra.mxu0 %v1684
    %5650 = vmatprep.subr.mxu0 0.0
    %5651 = vmatpush1.msra.mxu0 %v1685
    %5652 = vmatprep.subr.mxu0 0.0
    %5653 = vmatpush1.msra.mxu0 %v1686
    %5654 = vmatprep.subr.mxu0 0.0
    %5655 = vmatpush1.msra.mxu0 %v1687
    %5656 = vmatprep.subr.mxu0 0.0
    %5657 = vmatpush1.msra.mxu0 %v1688
    %5658 = vmatprep.subr.mxu0 0.0
    %5659 = vmatpush1.msra.mxu0 %v1689
    %5660 = vmatprep.subr.mxu0 0.0
    %5661 = vmatpush1.msra.mxu0 %v1690
    %5662 = vmatprep.subr.mxu0 0.0
    %5663 = vmatpush1.msra.mxu0 %v1691
    %5664 = vmatprep.subr.mxu0 0.0
    %5665 = vmatpush1.msra.mxu0 %v1692
    %5666 = vmatprep.subr.mxu0 0.0
    %5667 = vmatpush1.msra.mxu0 %v1693
    %5668 = vmatprep.subr.mxu0 0.0
    %5669 = vmatpush1.msra.mxu0 %v1694
    %5670 = vmatprep.subr.mxu0 0.0
    %5671 = vmatpush1.msra.mxu0 %v1695
    %5672 = vmatprep.subr.mxu0 0.0
    %5673 = vmatpush1.msra.mxu0 0.0
    %5674 = vmatprep.subr.mxu0 0.0
    %5675 = vmatpush1.msra.mxu0 0.0
    %5676 = vmatprep.subr.mxu0 0.0
    %5677 = vmatpush1.msra.mxu0 0.0
    %5678 = vmatprep.subr.mxu0 0.0
    %5679 = vmatpush1.msra.mxu0 0.0
    %5680 = vmatprep.subr.mxu0 0.0
    %5681 = vmatpush1.msra.mxu0 0.0
    %5682 = vmatprep.subr.mxu0 0.0
    %5683 = vmatpush1.msra.mxu0 0.0
    %5684 = vmatprep.subr.mxu0 0.0
    %5685 = vmatpush1.msra.mxu0 0.0
    %5686 = vmatprep.subr.mxu0 0.0
    %5687 = vmatpush1.msra.mxu0 0.0
    %5688 = vmatprep.subr.mxu0 0.0
    %5689 = vmatpush1.msra.mxu0 0.0
    %5690 = vmatprep.subr.mxu0 0.0
    %5691 = vmatpush1.msra.mxu0 0.0
    %5692 = vmatprep.subr.mxu0 0.0
    %5693 = vmatpush1.msra.mxu0 0.0
    %5694 = vmatprep.subr.mxu0 0.0
    %5695 = vmatpush1.msra.mxu0 0.0
    %5696 = vmatprep.subr.mxu0 0.0
    %5697 = vmatpush1.msra.mxu0 0.0
    %5698 = vmatprep.subr.mxu0 0.0
    %5699 = vmatpush1.msra.mxu0 0.0
    %5700 = vmatprep.subr.mxu0 0.0
    %5701 = vmatpush1.msra.mxu0 0.0
    %5702 = vmatprep.subr.mxu0 0.0
    %5703 = vmatpush1.msra.mxu0 0.0
    %5704 = vmatprep.mubr.f32.mxu0 0.0
    %5705 = vmatmul.mubr.f32.gmra.mrb[0].mxu0 %v698
    %v5706 = vpop.f32.mrb[0].mxu0
    %v5707 = vadd.f32 0.0, %v5706
    %v5708 = vpop.f32.mrb[0].mxu0
    %5709 = vdwg.mxu0
    %5710 = vmatprep.subr.mxu0 0.0
    %5711 = vmatpush1.msra.mxu0 %v1696
    %5712 = vmatprep.subr.mxu0 0.0
    %5713 = vmatpush1.msra.mxu0 %v1697
    %5714 = vmatprep.subr.mxu0 0.0
    %5715 = vmatpush1.msra.mxu0 %v1698
    %5716 = vmatprep.subr.mxu0 0.0
    %5717 = vmatpush1.msra.mxu0 %v1699
    %5718 = vmatprep.subr.mxu0 0.0
    %5719 = vmatpush1.msra.mxu0 %v1700
    %5720 = vmatprep.subr.mxu0 0.0
    %5721 = vmatpush1.msra.mxu0 %v1701
    %5722 = vmatprep.subr.mxu0 0.0
    %5723 = vmatpush1.msra.mxu0 %v1702
    %5724 = vmatprep.subr.mxu0 0.0
    %5725 = vmatpush1.msra.mxu0 %v1703
    %5726 = vmatprep.subr.mxu0 0.0
    %5727 = vmatpush1.msra.mxu0 %v1704
    %5728 = vmatprep.subr.mxu0 0.0
    %5729 = vmatpush1.msra.mxu0 %v1705
    %5730 = vmatprep.subr.mxu0 0.0
    %5731 = vmatpush1.msra.mxu0 %v1706
    %5732 = vmatprep.subr.mxu0 0.0
    %5733 = vmatpush1.msra.mxu0 %v1707
    %5734 = vmatprep.subr.mxu0 0.0
    %5735 = vmatpush1.msra.mxu0 %v1708
    %5736 = vmatprep.subr.mxu0 0.0
    %5737 = vmatpush1.msra.mxu0 %v1709
    %5738 = vmatprep.subr.mxu0 0.0
    %5739 = vmatpush1.msra.mxu0 %v1710
    %5740 = vmatprep.subr.mxu0 0.0
    %5741 = vmatpush1.msra.mxu0 %v1711
    %5742 = vmatprep.subr.mxu0 0.0
    %5743 = vmatpush1.msra.mxu0 0.0
    %5744 = vmatprep.subr.mxu0 0.0
    %5745 = vmatpush1.msra.mxu0 0.0
    %5746 = vmatprep.subr.mxu0 0.0
    %5747 = vmatpush1.msra.mxu0 0.0
    %5748 = vmatprep.subr.mxu0 0.0
    %5749 = vmatpush1.msra.mxu0 0.0
    %5750 = vmatprep.subr.mxu0 0.0
    %5751 = vmatpush1.msra.mxu0 0.0
    %5752 = vmatprep.subr.mxu0 0.0
    %5753 = vmatpush1.msra.mxu0 0.0
    %5754 = vmatprep.subr.mxu0 0.0
    %5755 = vmatpush1.msra.mxu0 0.0
    %5756 = vmatprep.subr.mxu0 0.0
    %5757 = vmatpush1.msra.mxu0 0.0
    %5758 = vmatprep.subr.mxu0 0.0
    %5759 = vmatpush1.msra.mxu0 0.0
    %5760 = vmatprep.subr.mxu0 0.0
    %5761 = vmatpush1.msra.mxu0 0.0
    %5762 = vmatprep.subr.mxu0 0.0
    %5763 = vmatpush1.msra.mxu0 0.0
    %5764 = vmatprep.subr.mxu0 0.0
    %5765 = vmatpush1.msra.mxu0 0.0
    %5766 = vmatprep.subr.mxu0 0.0
    %5767 = vmatpush1.msra.mxu0 0.0
    %5768 = vmatprep.subr.mxu0 0.0
    %5769 = vmatpush1.msra.mxu0 0.0
    %5770 = vmatprep.subr.mxu0 0.0
    %5771 = vmatpush1.msra.mxu0 0.0
    %5772 = vmatprep.subr.mxu0 0.0
    %5773 = vmatpush1.msra.mxu0 0.0
    %5774 = vmatprep.mubr.f32.mxu0 0.0
    %5775 = vmatmul.mubr.f32.gmra.mrb[0].mxu0 %v706
    %v5776 = vpop.f32.mrb[0].mxu0
    %v5777 = vadd.f32 0.0, %v5776
    %v5778 = vpop.f32.mrb[0].mxu0
    %5779 = vdwg.mxu0
    %5780 = vmatprep.subr.mxu0 0.0
    %5781 = vmatpush1.msra.mxu0 %v1712
    %5782 = vmatprep.subr.mxu0 0.0
    %5783 = vmatpush1.msra.mxu0 %v1713
    %5784 = vmatprep.subr.mxu0 0.0
    %5785 = vmatpush1.msra.mxu0 %v1714
    %5786 = vmatprep.subr.mxu0 0.0
    %5787 = vmatpush1.msra.mxu0 %v1715
    %5788 = vmatprep.subr.mxu0 0.0
    %5789 = vmatpush1.msra.mxu0 %v1716
    %5790 = vmatprep.subr.mxu0 0.0
    %5791 = vmatpush1.msra.mxu0 %v1717
    %5792 = vmatprep.subr.mxu0 0.0
    %5793 = vmatpush1.msra.mxu0 %v1718
    %5794 = vmatprep.subr.mxu0 0.0
    %5795 = vmatpush1.msra.mxu0 %v1719
    %5796 = vmatprep.subr.mxu0 0.0
    %5797 = vmatpush1.msra.mxu0 %v1720
    %5798 = vmatprep.subr.mxu0 0.0
    %5799 = vmatpush1.msra.mxu0 %v1721
    %5800 = vmatprep.subr.mxu0 0.0
    %5801 = vmatpush1.msra.mxu0 %v1722
    %5802 = vmatprep.subr.mxu0 0.0
    %5803 = vmatpush1.msra.mxu0 %v1723
    %5804 = vmatprep.subr.mxu0 0.0
    %5805 = vmatpush1.msra.mxu0 %v1724
    %5806 = vmatprep.subr.mxu0 0.0
    %5807 = vmatpush1.msra.mxu0 %v1725
    %5808 = vmatprep.subr.mxu0 0.0
    %5809 = vmatpush1.msra.mxu0 %v1726
    %5810 = vmatprep.subr.mxu0 0.0
    %5811 = vmatpush1.msra.mxu0 %v1727
    %5812 = vmatprep.subr.mxu0 0.0
    %5813 = vmatpush1.msra.mxu0 0.0
    %5814 = vmatprep.subr.mxu0 0.0
    %5815 = vmatpush1.msra.mxu0 0.0
    %5816 = vmatprep.subr.mxu0 0.0
    %5817 = vmatpush1.msra.mxu0 0.0
    %5818 = vmatprep.subr.mxu0 0.0
    %5819 = vmatpush1.msra.mxu0 0.0
    %5820 = vmatprep.subr.mxu0 0.0
    %5821 = vmatpush1.msra.mxu0 0.0
    %5822 = vmatprep.subr.mxu0 0.0
    %5823 = vmatpush1.msra.mxu0 0.0
    %5824 = vmatprep.subr.mxu0 0.0
    %5825 = vmatpush1.msra.mxu0 0.0
    %5826 = vmatprep.subr.mxu0 0.0
    %5827 = vmatpush1.msra.mxu0 0.0
    %5828 = vmatprep.subr.mxu0 0.0
    %5829 = vmatpush1.msra.mxu0 0.0
    %5830 = vmatprep.subr.mxu0 0.0
    %5831 = vmatpush1.msra.mxu0 0.0
    %5832 = vmatprep.subr.mxu0 0.0
    %5833 = vmatpush1.msra.mxu0 0.0
    %5834 = vmatprep.subr.mxu0 0.0
    %5835 = vmatpush1.msra.mxu0 0.0
    %5836 = vmatprep.subr.mxu0 0.0
    %5837 = vmatpush1.msra.mxu0 0.0
    %5838 = vmatprep.subr.mxu0 0.0
    %5839 = vmatpush1.msra.mxu0 0.0
    %5840 = vmatprep.subr.mxu0 0.0
    %5841 = vmatpush1.msra.mxu0 0.0
    %5842 = vmatprep.subr.mxu0 0.0
    %5843 = vmatpush1.msra.mxu0 0.0
    %5844 = vmatprep.mubr.f32.mxu0 0.0
    %5845 = vmatmul.mubr.f32.gmra.mrb[0].mxu0 %v705
    %v5846 = vpop.f32.mrb[0].mxu0
    %v5847 = vadd.f32 0.0, %v5846
    %v5848 = vpop.f32.mrb[0].mxu0
    %5849 = vdwg.mxu0
    %5850 = vmatprep.subr.mxu0 0.0
    %5851 = vmatpush1.msra.mxu0 %v1728
    %5852 = vmatprep.subr.mxu0 0.0
    %5853 = vmatpush1.msra.mxu0 %v1729
    %5854 = vmatprep.subr.mxu0 0.0
    %5855 = vmatpush1.msra.mxu0 %v1730
    %5856 = vmatprep.subr.mxu0 0.0
    %5857 = vmatpush1.msra.mxu0 %v1731
    %5858 = vmatprep.subr.mxu0 0.0
    %5859 = vmatpush1.msra.mxu0 %v1732
    %5860 = vmatprep.subr.mxu0 0.0
    %5861 = vmatpush1.msra.mxu0 %v1733
    %5862 = vmatprep.subr.mxu0 0.0
    %5863 = vmatpush1.msra.mxu0 %v1734
    %5864 = vmatprep.subr.mxu0 0.0
    %5865 = vmatpush1.msra.mxu0 %v1735
    %5866 = vmatprep.subr.mxu0 0.0
    %5867 = vmatpush1.msra.mxu0 %v1736
    %5868 = vmatprep.subr.mxu0 0.0
    %5869 = vmatpush1.msra.mxu0 %v1737
    %5870 = vmatprep.subr.mxu0 0.0
    %5871 = vmatpush1.msra.mxu0 %v1738
    %5872 = vmatprep.subr.mxu0 0.0
    %5873 = vmatpush1.msra.mxu0 %v1739
    %5874 = vmatprep.subr.mxu0 0.0
    %5875 = vmatpush1.msra.mxu0 %v1740
    %5876 = vmatprep.subr.mxu0 0.0
    %5877 = vmatpush1.msra.mxu0 %v1741
    %5878 = vmatprep.subr.mxu0 0.0
    %5879 = vmatpush1.msra.mxu0 %v1742
    %5880 = vmatprep.subr.mxu0 0.0
    %5881 = vmatpush1.msra.mxu0 %v1743
    %5882 = vmatprep.subr.mxu0 0.0
    %5883 = vmatpush1.msra.mxu0 0.0
    %5884 = vmatprep.subr.mxu0 0.0
    %5885 = vmatpush1.msra.mxu0 0.0
    %5886 = vmatprep.subr.mxu0 0.0
    %5887 = vmatpush1.msra.mxu0 0.0
    %5888 = vmatprep.subr.mxu0 0.0
    %5889 = vmatpush1.msra.mxu0 0.0
    %5890 = vmatprep.subr.mxu0 0.0
    %5891 = vmatpush1.msra.mxu0 0.0
    %5892 = vmatprep.subr.mxu0 0.0
    %5893 = vmatpush1.msra.mxu0 0.0
    %5894 = vmatprep.subr.mxu0 0.0
    %5895 = vmatpush1.msra.mxu0 0.0
    %5896 = vmatprep.subr.mxu0 0.0
    %5897 = vmatpush1.msra.mxu0 0.0
    %5898 = vmatprep.subr.mxu0 0.0
    %5899 = vmatpush1.msra.mxu0 0.0
    %5900 = vmatprep.subr.mxu0 0.0
    %5901 = vmatpush1.msra.mxu0 0.0
    %5902 = vmatprep.subr.mxu0 0.0
    %5903 = vmatpush1.msra.mxu0 0.0
    %5904 = vmatprep.subr.mxu0 0.0
    %5905 = vmatpush1.msra.mxu0 0.0
    %5906 = vmatprep.subr.mxu0 0.0
    %5907 = vmatpush1.msra.mxu0 0.0
    %5908 = vmatprep.subr.mxu0 0.0
    %5909 = vmatpush1.msra.mxu0 0.0
    %5910 = vmatprep.subr.mxu0 0.0
    %5911 = vmatpush1.msra.mxu0 0.0
    %5912 = vmatprep.subr.mxu0 0.0
    %5913 = vmatpush1.msra.mxu0 0.0
    %5914 = vmatprep.mubr.f32.mxu0 0.0
    %5915 = vmatmul.mubr.f32.gmra.mrb[0].mxu0 %v707
    %v5916 = vpop.f32.mrb[0].mxu0
    %v5917 = vadd.f32 0.0, %v5916
    %v5918 = vpop.f32.mrb[0].mxu0
    %5919 = vdwg.mxu0
    %5920 = vmatprep.subr.mxu0 0.0
    %5921 = vmatpush1.msra.mxu0 %v1744
    %5922 = vmatprep.subr.mxu0 0.0
    %5923 = vmatpush1.msra.mxu0 %v1745
    %5924 = vmatprep.subr.mxu0 0.0
    %5925 = vmatpush1.msra.mxu0 %v1746
    %5926 = vmatprep.subr.mxu0 0.0
    %5927 = vmatpush1.msra.mxu0 %v1747
    %5928 = vmatprep.subr.mxu0 0.0
    %5929 = vmatpush1.msra.mxu0 %v1748
    %5930 = vmatprep.subr.mxu0 0.0
    %5931 = vmatpush1.msra.mxu0 %v1749
    %5932 = vmatprep.subr.mxu0 0.0
    %5933 = vmatpush1.msra.mxu0 %v1750
    %5934 = vmatprep.subr.mxu0 0.0
    %5935 = vmatpush1.msra.mxu0 %v1751
    %5936 = vmatprep.subr.mxu0 0.0
    %5937 = vmatpush1.msra.mxu0 %v1752
    %5938 = vmatprep.subr.mxu0 0.0
    %5939 = vmatpush1.msra.mxu0 %v1753
    %5940 = vmatprep.subr.mxu0 0.0
    %5941 = vmatpush1.msra.mxu0 %v1754
    %5942 = vmatprep.subr.mxu0 0.0
    %5943 = vmatpush1.msra.mxu0 %v1755
    %5944 = vmatprep.subr.mxu0 0.0
    %5945 = vmatpush1.msra.mxu0 %v1756
    %5946 = vmatprep.subr.mxu0 0.0
    %5947 = vmatpush1.msra.mxu0 %v1757
    %5948 = vmatprep.subr.mxu0 0.0
    %5949 = vmatpush1.msra.mxu0 %v1758
    %5950 = vmatprep.subr.mxu0 0.0
    %5951 = vmatpush1.msra.mxu0 %v1759
    %5952 = vmatprep.subr.mxu0 0.0
    %5953 = vmatpush1.msra.mxu0 0.0
    %5954 = vmatprep.subr.mxu0 0.0
    %5955 = vmatpush1.msra.mxu0 0.0
    %5956 = vmatprep.subr.mxu0 0.0
    %5957 = vmatpush1.msra.mxu0 0.0
    %5958 = vmatprep.subr.mxu0 0.0
    %5959 = vmatpush1.msra.mxu0 0.0
    %5960 = vmatprep.subr.mxu0 0.0
    %5961 = vmatpush1.msra.mxu0 0.0
    %5962 = vmatprep.subr.mxu0 0.0
    %5963 = vmatpush1.msra.mxu0 0.0
    %5964 = vmatprep.subr.mxu0 0.0
    %5965 = vmatpush1.msra.mxu0 0.0
    %5966 = vmatprep.subr.mxu0 0.0
    %5967 = vmatpush1.msra.mxu0 0.0
    %5968 = vmatprep.subr.mxu0 0.0
    %5969 = vmatpush1.msra.mxu0 0.0
    %5970 = vmatprep.subr.mxu0 0.0
    %5971 = vmatpush1.msra.mxu0 0.0
    %5972 = vmatprep.subr.mxu0 0.0
    %5973 = vmatpush1.msra.mxu0 0.0
    %5974 = vmatprep.subr.mxu0 0.0
    %5975 = vmatpush1.msra.mxu0 0.0
    %5976 = vmatprep.subr.mxu0 0.0
    %5977 = vmatpush1.msra.mxu0 0.0
    %5978 = vmatprep.subr.mxu0 0.0
    %5979 = vmatpush1.msra.mxu0 0.0
    %5980 = vmatprep.subr.mxu0 0.0
    %5981 = vmatpush1.msra.mxu0 0.0
    %5982 = vmatprep.subr.mxu0 0.0
    %5983 = vmatpush1.msra.mxu0 0.0
    %5984 = vmatprep.mubr.f32.mxu0 0.0
    %5985 = vmatmul.mubr.f32.gmra.mrb[0].mxu0 %v715
    %v5986 = vpop.f32.mrb[0].mxu0
    %v5987 = vadd.f32 0.0, %v5986
    %v5988 = vpop.f32.mrb[0].mxu0
    %5989 = vdwg.mxu0
    %5990 = vmatprep.subr.mxu0 0.0
    %5991 = vmatpush1.msra.mxu0 %v1760
    %5992 = vmatprep.subr.mxu0 0.0
    %5993 = vmatpush1.msra.mxu0 %v1761
    %5994 = vmatprep.subr.mxu0 0.0
    %5995 = vmatpush1.msra.mxu0 %v1762
    %5996 = vmatprep.subr.mxu0 0.0
    %5997 = vmatpush1.msra.mxu0 %v1763
    %5998 = vmatprep.subr.mxu0 0.0
    %5999 = vmatpush1.msra.mxu0 %v1764
    %6000 = vmatprep.subr.mxu0 0.0
    %6001 = vmatpush1.msra.mxu0 %v1765
    %6002 = vmatprep.subr.mxu0 0.0
    %6003 = vmatpush1.msra.mxu0 %v1766
    %6004 = vmatprep.subr.mxu0 0.0
    %6005 = vmatpush1.msra.mxu0 %v1767
    %6006 = vmatprep.subr.mxu0 0.0
    %6007 = vmatpush1.msra.mxu0 %v1768
    %6008 = vmatprep.subr.mxu0 0.0
    %6009 = vmatpush1.msra.mxu0 %v1769
    %6010 = vmatprep.subr.mxu0 0.0
    %6011 = vmatpush1.msra.mxu0 %v1770
    %6012 = vmatprep.subr.mxu0 0.0
    %6013 = vmatpush1.msra.mxu0 %v1771
    %6014 = vmatprep.subr.mxu0 0.0
    %6015 = vmatpush1.msra.mxu0 %v1772
    %6016 = vmatprep.subr.mxu0 0.0
    %6017 = vmatpush1.msra.mxu0 %v1773
    %6018 = vmatprep.subr.mxu0 0.0
    %6019 = vmatpush1.msra.mxu0 %v1774
    %6020 = vmatprep.subr.mxu0 0.0
    %6021 = vmatpush1.msra.mxu0 %v1775
    %6022 = vmatprep.subr.mxu0 0.0
    %6023 = vmatpush1.msra.mxu0 0.0
    %6024 = vmatprep.subr.mxu0 0.0
    %6025 = vmatpush1.msra.mxu0 0.0
    %6026 = vmatprep.subr.mxu0 0.0
    %6027 = vmatpush1.msra.mxu0 0.0
    %6028 = vmatprep.subr.mxu0 0.0
    %6029 = vmatpush1.msra.mxu0 0.0
    %6030 = vmatprep.subr.mxu0 0.0
    %6031 = vmatpush1.msra.mxu0 0.0
    %6032 = vmatprep.subr.mxu0 0.0
    %6033 = vmatpush1.msra.mxu0 0.0
    %6034 = vmatprep.subr.mxu0 0.0
    %6035 = vmatpush1.msra.mxu0 0.0
    %6036 = vmatprep.subr.mxu0 0.0
    %6037 = vmatpush1.msra.mxu0 0.0
    %6038 = vmatprep.subr.mxu0 0.0
    %6039 = vmatpush1.msra.mxu0 0.0
    %6040 = vmatprep.subr.mxu0 0.0
    %6041 = vmatpush1.msra.mxu0 0.0
    %6042 = vmatprep.subr.mxu0 0.0
    %6043 = vmatpush1.msra.mxu0 0.0
    %6044 = vmatprep.subr.mxu0 0.0
    %6045 = vmatpush1.msra.mxu0 0.0
    %6046 = vmatprep.subr.mxu0 0.0
    %6047 = vmatpush1.msra.mxu0 0.0
    %6048 = vmatprep.subr.mxu0 0.0
    %6049 = vmatpush1.msra.mxu0 0.0
    %6050 = vmatprep.subr.mxu0 0.0
    %6051 = vmatpush1.msra.mxu0 0.0
    %6052 = vmatprep.subr.mxu0 0.0
    %6053 = vmatpush1.msra.mxu0 0.0
    %6054 = vmatprep.mubr.f32.mxu0 0.0
    %6055 = vmatmul.mubr.f32.gmra.mrb[0].mxu0 %v723
    %v6056 = vpop.f32.mrb[0].mxu0
    %v6057 = vadd.f32 0.0, %v6056
    %v6058 = vpop.f32.mrb[0].mxu0
    %6059 = vdwg.mxu0
    %6060 = vmatprep.subr.mxu0 0.0
    %6061 = vmatpush1.msra.mxu0 %v1776
    %6062 = vmatprep.subr.mxu0 0.0
    %6063 = vmatpush1.msra.mxu0 %v1777
    %6064 = vmatprep.subr.mxu0 0.0
    %6065 = vmatpush1.msra.mxu0 %v1778
    %6066 = vmatprep.subr.mxu0 0.0
    %6067 = vmatpush1.msra.mxu0 %v1779
    %6068 = vmatprep.subr.mxu0 0.0
    %6069 = vmatpush1.msra.mxu0 %v1780
    %6070 = vmatprep.subr.mxu0 0.0
    %6071 = vmatpush1.msra.mxu0 %v1781
    %6072 = vmatprep.subr.mxu0 0.0
    %6073 = vmatpush1.msra.mxu0 %v1782
    %6074 = vmatprep.subr.mxu0 0.0
    %6075 = vmatpush1.msra.mxu0 %v1783
    %6076 = vmatprep.subr.mxu0 0.0
    %6077 = vmatpush1.msra.mxu0 %v1784
    %6078 = vmatprep.subr.mxu0 0.0
    %6079 = vmatpush1.msra.mxu0 %v1785
    %6080 = vmatprep.subr.mxu0 0.0
    %6081 = vmatpush1.msra.mxu0 %v1786
    %6082 = vmatprep.subr.mxu0 0.0
    %6083 = vmatpush1.msra.mxu0 %v1787
    %6084 = vmatprep.subr.mxu0 0.0
    %6085 = vmatpush1.msra.mxu0 %v1788
    %6086 = vmatprep.subr.mxu0 0.0
    %6087 = vmatpush1.msra.mxu0 %v1789
    %6088 = vmatprep.subr.mxu0 0.0
    %6089 = vmatpush1.msra.mxu0 %v1790
    %6090 = vmatprep.subr.mxu0 0.0
    %6091 = vmatpush1.msra.mxu0 %v1791
    %6092 = vmatprep.subr.mxu0 0.0
    %6093 = vmatpush1.msra.mxu0 0.0
    %6094 = vmatprep.subr.mxu0 0.0
    %6095 = vmatpush1.msra.mxu0 0.0
    %6096 = vmatprep.subr.mxu0 0.0
    %6097 = vmatpush1.msra.mxu0 0.0
    %6098 = vmatprep.subr.mxu0 0.0
    %6099 = vmatpush1.msra.mxu0 0.0
    %6100 = vmatprep.subr.mxu0 0.0
    %6101 = vmatpush1.msra.mxu0 0.0
    %6102 = vmatprep.subr.mxu0 0.0
    %6103 = vmatpush1.msra.mxu0 0.0
    %6104 = vmatprep.subr.mxu0 0.0
    %6105 = vmatpush1.msra.mxu0 0.0
    %6106 = vmatprep.subr.mxu0 0.0
    %6107 = vmatpush1.msra.mxu0 0.0
    %6108 = vmatprep.subr.mxu0 0.0
    %6109 = vmatpush1.msra.mxu0 0.0
    %6110 = vmatprep.subr.mxu0 0.0
    %6111 = vmatpush1.msra.mxu0 0.0
    %6112 = vmatprep.subr.mxu0 0.0
    %6113 = vmatpush1.msra.mxu0 0.0
    %6114 = vmatprep.subr.mxu0 0.0
    %6115 = vmatpush1.msra.mxu0 0.0
    %6116 = vmatprep.subr.mxu0 0.0
    %6117 = vmatpush1.msra.mxu0 0.0
    %6118 = vmatprep.subr.mxu0 0.0
    %6119 = vmatpush1.msra.mxu0 0.0
    %6120 = vmatprep.subr.mxu0 0.0
    %6121 = vmatpush1.msra.mxu0 0.0
    %6122 = vmatprep.subr.mxu0 0.0
    %6123 = vmatpush1.msra.mxu0 0.0
    %6124 = vmatprep.mubr.f32.mxu0 0.0
    %6125 = vmatmul.mubr.f32.gmra.mrb[0].mxu0 %v722
    %v6126 = vpop.f32.mrb[0].mxu0
    %v6127 = vadd.f32 0.0, %v6126
    %v6128 = vpop.f32.mrb[0].mxu0
    %6129 = vdwg.mxu0
    %6130 = vmatprep.subr.mxu0 0.0
    %6131 = vmatpush1.msra.mxu0 %v1792
    %6132 = vmatprep.subr.mxu0 0.0
    %6133 = vmatpush1.msra.mxu0 %v1793
    %6134 = vmatprep.subr.mxu0 0.0
    %6135 = vmatpush1.msra.mxu0 %v1794
    %6136 = vmatprep.subr.mxu0 0.0
    %6137 = vmatpush1.msra.mxu0 %v1795
    %6138 = vmatprep.subr.mxu0 0.0
    %6139 = vmatpush1.msra.mxu0 %v1796
    %6140 = vmatprep.subr.mxu0 0.0
    %6141 = vmatpush1.msra.mxu0 %v1797
    %6142 = vmatprep.subr.mxu0 0.0
    %6143 = vmatpush1.msra.mxu0 %v1798
    %6144 = vmatprep.subr.mxu0 0.0
    %6145 = vmatpush1.msra.mxu0 %v1799
    %6146 = vmatprep.subr.mxu0 0.0
    %6147 = vmatpush1.msra.mxu0 %v1800
    %6148 = vmatprep.subr.mxu0 0.0
    %6149 = vmatpush1.msra.mxu0 %v1801
    %6150 = vmatprep.subr.mxu0 0.0
    %6151 = vmatpush1.msra.mxu0 %v1802
    %6152 = vmatprep.subr.mxu0 0.0
    %6153 = vmatpush1.msra.mxu0 %v1803
    %6154 = vmatprep.subr.mxu0 0.0
    %6155 = vmatpush1.msra.mxu0 %v1804
    %6156 = vmatprep.subr.mxu0 0.0
    %6157 = vmatpush1.msra.mxu0 %v1805
    %6158 = vmatprep.subr.mxu0 0.0
    %6159 = vmatpush1.msra.mxu0 %v1806
    %6160 = vmatprep.subr.mxu0 0.0
    %6161 = vmatpush1.msra.mxu0 %v1807
    %6162 = vmatprep.subr.mxu0 0.0
    %6163 = vmatpush1.msra.mxu0 0.0
    %6164 = vmatprep.subr.mxu0 0.0
    %6165 = vmatpush1.msra.mxu0 0.0
    %6166 = vmatprep.subr.mxu0 0.0
    %6167 = vmatpush1.msra.mxu0 0.0
    %6168 = vmatprep.subr.mxu0 0.0
    %6169 = vmatpush1.msra.mxu0 0.0
    %6170 = vmatprep.subr.mxu0 0.0
    %6171 = vmatpush1.msra.mxu0 0.0
    %6172 = vmatprep.subr.mxu0 0.0
    %6173 = vmatpush1.msra.mxu0 0.0
    %6174 = vmatprep.subr.mxu0 0.0
    %6175 = vmatpush1.msra.mxu0 0.0
    %6176 = vmatprep.subr.mxu0 0.0
    %6177 = vmatpush1.msra.mxu0 0.0
    %6178 = vmatprep.subr.mxu0 0.0
    %6179 = vmatpush1.msra.mxu0 0.0
    %6180 = vmatprep.subr.mxu0 0.0
    %6181 = vmatpush1.msra.mxu0 0.0
    %6182 = vmatprep.subr.mxu0 0.0
    %6183 = vmatpush1.msra.mxu0 0.0
    %6184 = vmatprep.subr.mxu0 0.0
    %6185 = vmatpush1.msra.mxu0 0.0
    %6186 = vmatprep.subr.mxu0 0.0
    %6187 = vmatpush1.msra.mxu0 0.0
    %6188 = vmatprep.subr.mxu0 0.0
    %6189 = vmatpush1.msra.mxu0 0.0
    %6190 = vmatprep.subr.mxu0 0.0
    %6191 = vmatpush1.msra.mxu0 0.0
    %6192 = vmatprep.subr.mxu0 0.0
    %6193 = vmatpush1.msra.mxu0 0.0
    %6194 = vmatprep.mubr.f32.mxu0 0.0
    %6195 = vmatmul.mubr.f32.gmra.mrb[0].mxu0 %v724
    %v6196 = vpop.f32.mrb[0].mxu0
    %v6197 = vadd.f32 0.0, %v6196
    %v6198 = vpop.f32.mrb[0].mxu0
    %6199 = vdwg.mxu0
    %6200 = vmatprep.subr.mxu0 0.0
    %6201 = vmatpush1.msra.mxu0 %v1808
    %6202 = vmatprep.subr.mxu0 0.0
    %6203 = vmatpush1.msra.mxu0 %v1809
    %6204 = vmatprep.subr.mxu0 0.0
    %6205 = vmatpush1.msra.mxu0 %v1810
    %6206 = vmatprep.subr.mxu0 0.0
    %6207 = vmatpush1.msra.mxu0 %v1811
    %6208 = vmatprep.subr.mxu0 0.0
    %6209 = vmatpush1.msra.mxu0 %v1812
    %6210 = vmatprep.subr.mxu0 0.0
    %6211 = vmatpush1.msra.mxu0 %v1813
    %6212 = vmatprep.subr.mxu0 0.0
    %6213 = vmatpush1.msra.mxu0 %v1814
    %6214 = vmatprep.subr.mxu0 0.0
    %6215 = vmatpush1.msra.mxu0 %v1815
    %6216 = vmatprep.subr.mxu0 0.0
    %6217 = vmatpush1.msra.mxu0 %v1816
    %6218 = vmatprep.subr.mxu0 0.0
    %6219 = vmatpush1.msra.mxu0 %v1817
    %6220 = vmatprep.subr.mxu0 0.0
    %6221 = vmatpush1.msra.mxu0 %v1818
    %6222 = vmatprep.subr.mxu0 0.0
    %6223 = vmatpush1.msra.mxu0 %v1819
    %6224 = vmatprep.subr.mxu0 0.0
    %6225 = vmatpush1.msra.mxu0 %v1820
    %6226 = vmatprep.subr.mxu0 0.0
    %6227 = vmatpush1.msra.mxu0 %v1821
    %6228 = vmatprep.subr.mxu0 0.0
    %6229 = vmatpush1.msra.mxu0 %v1822
    %6230 = vmatprep.subr.mxu0 0.0
    %6231 = vmatpush1.msra.mxu0 %v1823
    %6232 = vmatprep.subr.mxu0 0.0
    %6233 = vmatpush1.msra.mxu0 0.0
    %6234 = vmatprep.subr.mxu0 0.0
    %6235 = vmatpush1.msra.mxu0 0.0
    %6236 = vmatprep.subr.mxu0 0.0
    %6237 = vmatpush1.msra.mxu0 0.0
    %6238 = vmatprep.subr.mxu0 0.0
    %6239 = vmatpush1.msra.mxu0 0.0
    %6240 = vmatprep.subr.mxu0 0.0
    %6241 = vmatpush1.msra.mxu0 0.0
    %6242 = vmatprep.subr.mxu0 0.0
    %6243 = vmatpush1.msra.mxu0 0.0
    %6244 = vmatprep.subr.mxu0 0.0
    %6245 = vmatpush1.msra.mxu0 0.0
    %6246 = vmatprep.subr.mxu0 0.0
    %6247 = vmatpush1.msra.mxu0 0.0
    %6248 = vmatprep.subr.mxu0 0.0
    %6249 = vmatpush1.msra.mxu0 0.0
    %6250 = vmatprep.subr.mxu0 0.0
    %6251 = vmatpush1.msra.mxu0 0.0
    %6252 = vmatprep.subr.mxu0 0.0
    %6253 = vmatpush1.msra.mxu0 0.0
    %6254 = vmatprep.subr.mxu0 0.0
    %6255 = vmatpush1.msra.mxu0 0.0
    %6256 = vmatprep.subr.mxu0 0.0
    %6257 = vmatpush1.msra.mxu0 0.0
    %6258 = vmatprep.subr.mxu0 0.0
    %6259 = vmatpush1.msra.mxu0 0.0
    %6260 = vmatprep.subr.mxu0 0.0
    %6261 = vmatpush1.msra.mxu0 0.0
    %6262 = vmatprep.subr.mxu0 0.0
    %6263 = vmatpush1.msra.mxu0 0.0
    %6264 = vmatprep.mubr.f32.mxu0 0.0
    %6265 = vmatmul.mubr.f32.gmra.mrb[0].mxu0 %v732
    %v6266 = vpop.f32.mrb[0].mxu0
    %v6267 = vadd.f32 0.0, %v6266
    %v6268 = vpop.f32.mrb[0].mxu0
    %6269 = vdwg.mxu0
    %6270 = vmatprep.subr.mxu0 0.0
    %6271 = vmatpush1.msra.mxu0 %v1824
    %6272 = vmatprep.subr.mxu0 0.0
    %6273 = vmatpush1.msra.mxu0 %v1825
    %6274 = vmatprep.subr.mxu0 0.0
    %6275 = vmatpush1.msra.mxu0 %v1826
    %6276 = vmatprep.subr.mxu0 0.0
    %6277 = vmatpush1.msra.mxu0 %v1827
    %6278 = vmatprep.subr.mxu0 0.0
    %6279 = vmatpush1.msra.mxu0 %v1828
    %6280 = vmatprep.subr.mxu0 0.0
    %6281 = vmatpush1.msra.mxu0 %v1829
    %6282 = vmatprep.subr.mxu0 0.0
    %6283 = vmatpush1.msra.mxu0 %v1830
    %6284 = vmatprep.subr.mxu0 0.0
    %6285 = vmatpush1.msra.mxu0 %v1831
    %6286 = vmatprep.subr.mxu0 0.0
    %6287 = vmatpush1.msra.mxu0 %v1832
    %6288 = vmatprep.subr.mxu0 0.0
    %6289 = vmatpush1.msra.mxu0 %v1833
    %6290 = vmatprep.subr.mxu0 0.0
    %6291 = vmatpush1.msra.mxu0 %v1834
    %6292 = vmatprep.subr.mxu0 0.0
    %6293 = vmatpush1.msra.mxu0 %v1835
    %6294 = vmatprep.subr.mxu0 0.0
    %6295 = vmatpush1.msra.mxu0 %v1836
    %6296 = vmatprep.subr.mxu0 0.0
    %6297 = vmatpush1.msra.mxu0 %v1837
    %6298 = vmatprep.subr.mxu0 0.0
    %6299 = vmatpush1.msra.mxu0 %v1838
    %6300 = vmatprep.subr.mxu0 0.0
    %6301 = vmatpush1.msra.mxu0 %v1839
    %6302 = vmatprep.subr.mxu0 0.0
    %6303 = vmatpush1.msra.mxu0 0.0
    %6304 = vmatprep.subr.mxu0 0.0
    %6305 = vmatpush1.msra.mxu0 0.0
    %6306 = vmatprep.subr.mxu0 0.0
    %6307 = vmatpush1.msra.mxu0 0.0
    %6308 = vmatprep.subr.mxu0 0.0
    %6309 = vmatpush1.msra.mxu0 0.0
    %6310 = vmatprep.subr.mxu0 0.0
    %6311 = vmatpush1.msra.mxu0 0.0
    %6312 = vmatprep.subr.mxu0 0.0
    %6313 = vmatpush1.msra.mxu0 0.0
    %6314 = vmatprep.subr.mxu0 0.0
    %6315 = vmatpush1.msra.mxu0 0.0
    %6316 = vmatprep.subr.mxu0 0.0
    %6317 = vmatpush1.msra.mxu0 0.0
    %6318 = vmatprep.subr.mxu0 0.0
    %6319 = vmatpush1.msra.mxu0 0.0
    %6320 = vmatprep.subr.mxu0 0.0
    %6321 = vmatpush1.msra.mxu0 0.0
    %6322 = vmatprep.subr.mxu0 0.0
    %6323 = vmatpush1.msra.mxu0 0.0
    %6324 = vmatprep.subr.mxu0 0.0
    %6325 = vmatpush1.msra.mxu0 0.0
    %6326 = vmatprep.subr.mxu0 0.0
    %6327 = vmatpush1.msra.mxu0 0.0
    %6328 = vmatprep.subr.mxu0 0.0
    %6329 = vmatpush1.msra.mxu0 0.0
    %6330 = vmatprep.subr.mxu0 0.0
    %6331 = vmatpush1.msra.mxu0 0.0
    %6332 = vmatprep.subr.mxu0 0.0
    %6333 = vmatpush1.msra.mxu0 0.0
    %6334 = vmatprep.mubr.f32.mxu0 0.0
    %6335 = vmatmul.mubr.f32.gmra.mrb[0].mxu0 %v740
    %v6336 = vpop.f32.mrb[0].mxu0
    %v6337 = vadd.f32 0.0, %v6336
    %v6338 = vpop.f32.mrb[0].mxu0
    %6339 = vdwg.mxu0
    %6340 = vmatprep.subr.mxu0 0.0
    %6341 = vmatpush1.msra.mxu0 %v1840
    %6342 = vmatprep.subr.mxu0 0.0
    %6343 = vmatpush1.msra.mxu0 %v1841
    %6344 = vmatprep.subr.mxu0 0.0
    %6345 = vmatpush1.msra.mxu0 %v1842
    %6346 = vmatprep.subr.mxu0 0.0
    %6347 = vmatpush1.msra.mxu0 %v1843
    %6348 = vmatprep.subr.mxu0 0.0
    %6349 = vmatpush1.msra.mxu0 %v1844
    %6350 = vmatprep.subr.mxu0 0.0
    %6351 = vmatpush1.msra.mxu0 %v1845
    %6352 = vmatprep.subr.mxu0 0.0
    %6353 = vmatpush1.msra.mxu0 %v1846
    %6354 = vmatprep.subr.mxu0 0.0
    %6355 = vmatpush1.msra.mxu0 %v1847
    %6356 = vmatprep.subr.mxu0 0.0
    %6357 = vmatpush1.msra.mxu0 %v1848
    %6358 = vmatprep.subr.mxu0 0.0
    %6359 = vmatpush1.msra.mxu0 %v1849
    %6360 = vmatprep.subr.mxu0 0.0
    %6361 = vmatpush1.msra.mxu0 %v1850
    %6362 = vmatprep.subr.mxu0 0.0
    %6363 = vmatpush1.msra.mxu0 %v1851
    %6364 = vmatprep.subr.mxu0 0.0
    %6365 = vmatpush1.msra.mxu0 %v1852
    %6366 = vmatprep.subr.mxu0 0.0
    %6367 = vmatpush1.msra.mxu0 %v1853
    %6368 = vmatprep.subr.mxu0 0.0
    %6369 = vmatpush1.msra.mxu0 %v1854
    %6370 = vmatprep.subr.mxu0 0.0
    %6371 = vmatpush1.msra.mxu0 %v1855
    %6372 = vmatprep.subr.mxu0 0.0
    %6373 = vmatpush1.msra.mxu0 0.0
    %6374 = vmatprep.subr.mxu0 0.0
    %6375 = vmatpush1.msra.mxu0 0.0
    %6376 = vmatprep.subr.mxu0 0.0
    %6377 = vmatpush1.msra.mxu0 0.0
    %6378 = vmatprep.subr.mxu0 0.0
    %6379 = vmatpush1.msra.mxu0 0.0
    %6380 = vmatprep.subr.mxu0 0.0
    %6381 = vmatpush1.msra.mxu0 0.0
    %6382 = vmatprep.subr.mxu0 0.0
    %6383 = vmatpush1.msra.mxu0 0.0
    %6384 = vmatprep.subr.mxu0 0.0
    %6385 = vmatpush1.msra.mxu0 0.0
    %6386 = vmatprep.subr.mxu0 0.0
    %6387 = vmatpush1.msra.mxu0 0.0
    %6388 = vmatprep.subr.mxu0 0.0
    %6389 = vmatpush1.msra.mxu0 0.0
    %6390 = vmatprep.subr.mxu0 0.0
    %6391 = vmatpush1.msra.mxu0 0.0
    %6392 = vmatprep.subr.mxu0 0.0
    %6393 = vmatpush1.msra.mxu0 0.0
    %6394 = vmatprep.subr.mxu0 0.0
    %6395 = vmatpush1.msra.mxu0 0.0
    %6396 = vmatprep.subr.mxu0 0.0
    %6397 = vmatpush1.msra.mxu0 0.0
    %6398 = vmatprep.subr.mxu0 0.0
    %6399 = vmatpush1.msra.mxu0 0.0
    %6400 = vmatprep.subr.mxu0 0.0
    %6401 = vmatpush1.msra.mxu0 0.0
    %6402 = vmatprep.subr.mxu0 0.0
    %6403 = vmatpush1.msra.mxu0 0.0
    %6404 = vmatprep.mubr.f32.mxu0 0.0
    %6405 = vmatmul.mubr.f32.gmra.mrb[0].mxu0 %v739
    %v6406 = vpop.f32.mrb[0].mxu0
    %v6407 = vadd.f32 0.0, %v6406
    %v6408 = vpop.f32.mrb[0].mxu0
    %6409 = vdwg.mxu0
    %6410 = vmatprep.subr.mxu0 0.0
    %6411 = vmatpush1.msra.mxu0 %v1856
    %6412 = vmatprep.subr.mxu0 0.0
    %6413 = vmatpush1.msra.mxu0 %v1857
    %6414 = vmatprep.subr.mxu0 0.0
    %6415 = vmatpush1.msra.mxu0 %v1858
    %6416 = vmatprep.subr.mxu0 0.0
    %6417 = vmatpush1.msra.mxu0 %v1859
    %6418 = vmatprep.subr.mxu0 0.0
    %6419 = vmatpush1.msra.mxu0 %v1860
    %6420 = vmatprep.subr.mxu0 0.0
    %6421 = vmatpush1.msra.mxu0 %v1861
    %6422 = vmatprep.subr.mxu0 0.0
    %6423 = vmatpush1.msra.mxu0 %v1862
    %6424 = vmatprep.subr.mxu0 0.0
    %6425 = vmatpush1.msra.mxu0 %v1863
    %6426 = vmatprep.subr.mxu0 0.0
    %6427 = vmatpush1.msra.mxu0 %v1864
    %6428 = vmatprep.subr.mxu0 0.0
    %6429 = vmatpush1.msra.mxu0 %v1865
    %6430 = vmatprep.subr.mxu0 0.0
    %6431 = vmatpush1.msra.mxu0 %v1866
    %6432 = vmatprep.subr.mxu0 0.0
    %6433 = vmatpush1.msra.mxu0 %v1867
    %6434 = vmatprep.subr.mxu0 0.0
    %6435 = vmatpush1.msra.mxu0 %v1868
    %6436 = vmatprep.subr.mxu0 0.0
    %6437 = vmatpush1.msra.mxu0 %v1869
    %6438 = vmatprep.subr.mxu0 0.0
    %6439 = vmatpush1.msra.mxu0 %v1870
    %6440 = vmatprep.subr.mxu0 0.0
    %6441 = vmatpush1.msra.mxu0 %v1871
    %6442 = vmatprep.subr.mxu0 0.0
    %6443 = vmatpush1.msra.mxu0 0.0
    %6444 = vmatprep.subr.mxu0 0.0
    %6445 = vmatpush1.msra.mxu0 0.0
    %6446 = vmatprep.subr.mxu0 0.0
    %6447 = vmatpush1.msra.mxu0 0.0
    %6448 = vmatprep.subr.mxu0 0.0
    %6449 = vmatpush1.msra.mxu0 0.0
    %6450 = vmatprep.subr.mxu0 0.0
    %6451 = vmatpush1.msra.mxu0 0.0
    %6452 = vmatprep.subr.mxu0 0.0
    %6453 = vmatpush1.msra.mxu0 0.0
    %6454 = vmatprep.subr.mxu0 0.0
    %6455 = vmatpush1.msra.mxu0 0.0
    %6456 = vmatprep.subr.mxu0 0.0
    %6457 = vmatpush1.msra.mxu0 0.0
    %6458 = vmatprep.subr.mxu0 0.0
    %6459 = vmatpush1.msra.mxu0 0.0
    %6460 = vmatprep.subr.mxu0 0.0
    %6461 = vmatpush1.msra.mxu0 0.0
    %6462 = vmatprep.subr.mxu0 0.0
    %6463 = vmatpush1.msra.mxu0 0.0
    %6464 = vmatprep.subr.mxu0 0.0
    %6465 = vmatpush1.msra.mxu0 0.0
    %6466 = vmatprep.subr.mxu0 0.0
    %6467 = vmatpush1.msra.mxu0 0.0
    %6468 = vmatprep.subr.mxu0 0.0
    %6469 = vmatpush1.msra.mxu0 0.0
    %6470 = vmatprep.subr.mxu0 0.0
    %6471 = vmatpush1.msra.mxu0 0.0
    %6472 = vmatprep.subr.mxu0 0.0
    %6473 = vmatpush1.msra.mxu0 0.0
    %6474 = vmatprep.mubr.f32.mxu0 0.0
    %6475 = vmatmul.mubr.f32.gmra.mrb[0].mxu0 %v741
    %v6476 = vpop.f32.mrb[0].mxu0
    %v6477 = vadd.f32 0.0, %v6476
    %v6478 = vpop.f32.mrb[0].mxu0
    %6479 = vdwg.mxu0
    %6480 = vmatprep.subr.mxu0 0.0
    %6481 = vmatpush1.msra.mxu0 %v1872
    %6482 = vmatprep.subr.mxu0 0.0
    %6483 = vmatpush1.msra.mxu0 %v1873
    %6484 = vmatprep.subr.mxu0 0.0
    %6485 = vmatpush1.msra.mxu0 %v1874
    %6486 = vmatprep.subr.mxu0 0.0
    %6487 = vmatpush1.msra.mxu0 %v1875
    %6488 = vmatprep.subr.mxu0 0.0
    %6489 = vmatpush1.msra.mxu0 %v1876
    %6490 = vmatprep.subr.mxu0 0.0
    %6491 = vmatpush1.msra.mxu0 %v1877
    %6492 = vmatprep.subr.mxu0 0.0
    %6493 = vmatpush1.msra.mxu0 %v1878
    %6494 = vmatprep.subr.mxu0 0.0
    %6495 = vmatpush1.msra.mxu0 %v1879
    %6496 = vmatprep.subr.mxu0 0.0
    %6497 = vmatpush1.msra.mxu0 %v1880
    %6498 = vmatprep.subr.mxu0 0.0
    %6499 = vmatpush1.msra.mxu0 %v1881
    %6500 = vmatprep.subr.mxu0 0.0
    %6501 = vmatpush1.msra.mxu0 %v1882
    %6502 = vmatprep.subr.mxu0 0.0
    %6503 = vmatpush1.msra.mxu0 %v1883
    %6504 = vmatprep.subr.mxu0 0.0
    %6505 = vmatpush1.msra.mxu0 %v1884
    %6506 = vmatprep.subr.mxu0 0.0
    %6507 = vmatpush1.msra.mxu0 %v1885
    %6508 = vmatprep.subr.mxu0 0.0
    %6509 = vmatpush1.msra.mxu0 %v1886
    %6510 = vmatprep.subr.mxu0 0.0
    %6511 = vmatpush1.msra.mxu0 %v1887
    %6512 = vmatprep.subr.mxu0 0.0
    %6513 = vmatpush1.msra.mxu0 0.0
    %6514 = vmatprep.subr.mxu0 0.0
    %6515 = vmatpush1.msra.mxu0 0.0
    %6516 = vmatprep.subr.mxu0 0.0
    %6517 = vmatpush1.msra.mxu0 0.0
    %6518 = vmatprep.subr.mxu0 0.0
    %6519 = vmatpush1.msra.mxu0 0.0
    %6520 = vmatprep.subr.mxu0 0.0
    %6521 = vmatpush1.msra.mxu0 0.0
    %6522 = vmatprep.subr.mxu0 0.0
    %6523 = vmatpush1.msra.mxu0 0.0
    %6524 = vmatprep.subr.mxu0 0.0
    %6525 = vmatpush1.msra.mxu0 0.0
    %6526 = vmatprep.subr.mxu0 0.0
    %6527 = vmatpush1.msra.mxu0 0.0
    %6528 = vmatprep.subr.mxu0 0.0
    %6529 = vmatpush1.msra.mxu0 0.0
    %6530 = vmatprep.subr.mxu0 0.0
    %6531 = vmatpush1.msra.mxu0 0.0
    %6532 = vmatprep.subr.mxu0 0.0
    %6533 = vmatpush1.msra.mxu0 0.0
    %6534 = vmatprep.subr.mxu0 0.0
    %6535 = vmatpush1.msra.mxu0 0.0
    %6536 = vmatprep.subr.mxu0 0.0
    %6537 = vmatpush1.msra.mxu0 0.0
    %6538 = vmatprep.subr.mxu0 0.0
    %6539 = vmatpush1.msra.mxu0 0.0
    %6540 = vmatprep.subr.mxu0 0.0
    %6541 = vmatpush1.msra.mxu0 0.0
    %6542 = vmatprep.subr.mxu0 0.0
    %6543 = vmatpush1.msra.mxu0 0.0
    %6544 = vmatprep.mubr.f32.mxu0 0.0
    %6545 = vmatmul.mubr.f32.gmra.mrb[0].mxu0 %v749
    %v6546 = vpop.f32.mrb[0].mxu0
    %v6547 = vadd.f32 0.0, %v6546
    %v6548 = vpop.f32.mrb[0].mxu0
    %6549 = vdwg.mxu0
    %6550 = vmatprep.subr.mxu0 0.0
    %6551 = vmatpush1.msra.mxu0 %v1888
    %6552 = vmatprep.subr.mxu0 0.0
    %6553 = vmatpush1.msra.mxu0 %v1889
    %6554 = vmatprep.subr.mxu0 0.0
    %6555 = vmatpush1.msra.mxu0 %v1890
    %6556 = vmatprep.subr.mxu0 0.0
    %6557 = vmatpush1.msra.mxu0 %v1891
    %6558 = vmatprep.subr.mxu0 0.0
    %6559 = vmatpush1.msra.mxu0 %v1892
    %6560 = vmatprep.subr.mxu0 0.0
    %6561 = vmatpush1.msra.mxu0 %v1893
    %6562 = vmatprep.subr.mxu0 0.0
    %6563 = vmatpush1.msra.mxu0 %v1894
    %6564 = vmatprep.subr.mxu0 0.0
    %6565 = vmatpush1.msra.mxu0 %v1895
    %6566 = vmatprep.subr.mxu0 0.0
    %6567 = vmatpush1.msra.mxu0 %v1896
    %6568 = vmatprep.subr.mxu0 0.0
    %6569 = vmatpush1.msra.mxu0 %v1897
    %6570 = vmatprep.subr.mxu0 0.0
    %6571 = vmatpush1.msra.mxu0 %v1898
    %6572 = vmatprep.subr.mxu0 0.0
    %6573 = vmatpush1.msra.mxu0 %v1899
    %6574 = vmatprep.subr.mxu0 0.0
    %6575 = vmatpush1.msra.mxu0 %v1900
    %6576 = vmatprep.subr.mxu0 0.0
    %6577 = vmatpush1.msra.mxu0 %v1901
    %6578 = vmatprep.subr.mxu0 0.0
    %6579 = vmatpush1.msra.mxu0 %v1902
    %6580 = vmatprep.subr.mxu0 0.0
    %6581 = vmatpush1.msra.mxu0 %v1903
    %6582 = vmatprep.subr.mxu0 0.0
    %6583 = vmatpush1.msra.mxu0 0.0
    %6584 = vmatprep.subr.mxu0 0.0
    %6585 = vmatpush1.msra.mxu0 0.0
    %6586 = vmatprep.subr.mxu0 0.0
    %6587 = vmatpush1.msra.mxu0 0.0
    %6588 = vmatprep.subr.mxu0 0.0
    %6589 = vmatpush1.msra.mxu0 0.0
    %6590 = vmatprep.subr.mxu0 0.0
    %6591 = vmatpush1.msra.mxu0 0.0
    %6592 = vmatprep.subr.mxu0 0.0
    %6593 = vmatpush1.msra.mxu0 0.0
    %6594 = vmatprep.subr.mxu0 0.0
    %6595 = vmatpush1.msra.mxu0 0.0
    %6596 = vmatprep.subr.mxu0 0.0
    %6597 = vmatpush1.msra.mxu0 0.0
    %6598 = vmatprep.subr.mxu0 0.0
    %6599 = vmatpush1.msra.mxu0 0.0
    %6600 = vmatprep.subr.mxu0 0.0
    %6601 = vmatpush1.msra.mxu0 0.0
    %6602 = vmatprep.subr.mxu0 0.0
    %6603 = vmatpush1.msra.mxu0 0.0
    %6604 = vmatprep.subr.mxu0 0.0
    %6605 = vmatpush1.msra.mxu0 0.0
    %6606 = vmatprep.subr.mxu0 0.0
    %6607 = vmatpush1.msra.mxu0 0.0
    %6608 = vmatprep.subr.mxu0 0.0
    %6609 = vmatpush1.msra.mxu0 0.0
    %6610 = vmatprep.subr.mxu0 0.0
    %6611 = vmatpush1.msra.mxu0 0.0
    %6612 = vmatprep.subr.mxu0 0.0
    %6613 = vmatpush1.msra.mxu0 0.0
    %6614 = vmatprep.mubr.f32.mxu0 0.0
    %6615 = vmatmul.mubr.f32.gmra.mrb[0].mxu0 %v757
    %v6616 = vpop.f32.mrb[0].mxu0
    %v6617 = vadd.f32 0.0, %v6616
    %v6618 = vpop.f32.mrb[0].mxu0
    %6619 = vdwg.mxu0
    %6620 = vmatprep.subr.mxu0 0.0
    %6621 = vmatpush1.msra.mxu0 %v1904
    %6622 = vmatprep.subr.mxu0 0.0
    %6623 = vmatpush1.msra.mxu0 %v1905
    %6624 = vmatprep.subr.mxu0 0.0
    %6625 = vmatpush1.msra.mxu0 %v1906
    %6626 = vmatprep.subr.mxu0 0.0
    %6627 = vmatpush1.msra.mxu0 %v1907
    %6628 = vmatprep.subr.mxu0 0.0
    %6629 = vmatpush1.msra.mxu0 %v1908
    %6630 = vmatprep.subr.mxu0 0.0
    %6631 = vmatpush1.msra.mxu0 %v1909
    %6632 = vmatprep.subr.mxu0 0.0
    %6633 = vmatpush1.msra.mxu0 %v1910
    %6634 = vmatprep.subr.mxu0 0.0
    %6635 = vmatpush1.msra.mxu0 %v1911
    %6636 = vmatprep.subr.mxu0 0.0
    %6637 = vmatpush1.msra.mxu0 %v1912
    %6638 = vmatprep.subr.mxu0 0.0
    %6639 = vmatpush1.msra.mxu0 %v1913
    %6640 = vmatprep.subr.mxu0 0.0
    %6641 = vmatpush1.msra.mxu0 %v1914
    %6642 = vmatprep.subr.mxu0 0.0
    %6643 = vmatpush1.msra.mxu0 %v1915
    %6644 = vmatprep.subr.mxu0 0.0
    %6645 = vmatpush1.msra.mxu0 %v1916
    %6646 = vmatprep.subr.mxu0 0.0
    %6647 = vmatpush1.msra.mxu0 %v1917
    %6648 = vmatprep.subr.mxu0 0.0
    %6649 = vmatpush1.msra.mxu0 %v1918
    %6650 = vmatprep.subr.mxu0 0.0
    %6651 = vmatpush1.msra.mxu0 %v1919
    %6652 = vmatprep.subr.mxu0 0.0
    %6653 = vmatpush1.msra.mxu0 0.0
    %6654 = vmatprep.subr.mxu0 0.0
    %6655 = vmatpush1.msra.mxu0 0.0
    %6656 = vmatprep.subr.mxu0 0.0
    %6657 = vmatpush1.msra.mxu0 0.0
    %6658 = vmatprep.subr.mxu0 0.0
    %6659 = vmatpush1.msra.mxu0 0.0
    %6660 = vmatprep.subr.mxu0 0.0
    %6661 = vmatpush1.msra.mxu0 0.0
    %6662 = vmatprep.subr.mxu0 0.0
    %6663 = vmatpush1.msra.mxu0 0.0
    %6664 = vmatprep.subr.mxu0 0.0
    %6665 = vmatpush1.msra.mxu0 0.0
    %6666 = vmatprep.subr.mxu0 0.0
    %6667 = vmatpush1.msra.mxu0 0.0
    %6668 = vmatprep.subr.mxu0 0.0
    %6669 = vmatpush1.msra.mxu0 0.0
    %6670 = vmatprep.subr.mxu0 0.0
    %6671 = vmatpush1.msra.mxu0 0.0
    %6672 = vmatprep.subr.mxu0 0.0
    %6673 = vmatpush1.msra.mxu0 0.0
    %6674 = vmatprep.subr.mxu0 0.0
    %6675 = vmatpush1.msra.mxu0 0.0
    %6676 = vmatprep.subr.mxu0 0.0
    %6677 = vmatpush1.msra.mxu0 0.0
    %6678 = vmatprep.subr.mxu0 0.0
    %6679 = vmatpush1.msra.mxu0 0.0
    %6680 = vmatprep.subr.mxu0 0.0
    %6681 = vmatpush1.msra.mxu0 0.0
    %6682 = vmatprep.subr.mxu0 0.0
    %6683 = vmatpush1.msra.mxu0 0.0
    %6684 = vmatprep.mubr.f32.mxu0 0.0
    %6685 = vmatmul.mubr.f32.gmra.mrb[0].mxu0 %v756
    %v6686 = vpop.f32.mrb[0].mxu0
    %v6687 = vadd.f32 0.0, %v6686
    %v6688 = vpop.f32.mrb[0].mxu0
    %6689 = vdwg.mxu0
    %6690 = vmatprep.subr.mxu0 0.0
    %6691 = vmatpush1.msra.mxu0 %v1920
    %6692 = vmatprep.subr.mxu0 0.0
    %6693 = vmatpush1.msra.mxu0 %v1921
    %6694 = vmatprep.subr.mxu0 0.0
    %6695 = vmatpush1.msra.mxu0 %v1922
    %6696 = vmatprep.subr.mxu0 0.0
    %6697 = vmatpush1.msra.mxu0 %v1923
    %6698 = vmatprep.subr.mxu0 0.0
    %6699 = vmatpush1.msra.mxu0 %v1924
    %6700 = vmatprep.subr.mxu0 0.0
    %6701 = vmatpush1.msra.mxu0 %v1925
    %6702 = vmatprep.subr.mxu0 0.0
    %6703 = vmatpush1.msra.mxu0 %v1926
    %6704 = vmatprep.subr.mxu0 0.0
    %6705 = vmatpush1.msra.mxu0 %v1927
    %6706 = vmatprep.subr.mxu0 0.0
    %6707 = vmatpush1.msra.mxu0 %v1928
    %6708 = vmatprep.subr.mxu0 0.0
    %6709 = vmatpush1.msra.mxu0 %v1929
    %6710 = vmatprep.subr.mxu0 0.0
    %6711 = vmatpush1.msra.mxu0 %v1930
    %6712 = vmatprep.subr.mxu0 0.0
    %6713 = vmatpush1.msra.mxu0 %v1931
    %6714 = vmatprep.subr.mxu0 0.0
    %6715 = vmatpush1.msra.mxu0 %v1932
    %6716 = vmatprep.subr.mxu0 0.0
    %6717 = vmatpush1.msra.mxu0 %v1933
    %6718 = vmatprep.subr.mxu0 0.0
    %6719 = vmatpush1.msra.mxu0 %v1934
    %6720 = vmatprep.subr.mxu0 0.0
    %6721 = vmatpush1.msra.mxu0 %v1935
    %6722 = vmatprep.subr.mxu0 0.0
    %6723 = vmatpush1.msra.mxu0 0.0
    %6724 = vmatprep.subr.mxu0 0.0
    %6725 = vmatpush1.msra.mxu0 0.0
    %6726 = vmatprep.subr.mxu0 0.0
    %6727 = vmatpush1.msra.mxu0 0.0
    %6728 = vmatprep.subr.mxu0 0.0
    %6729 = vmatpush1.msra.mxu0 0.0
    %6730 = vmatprep.subr.mxu0 0.0
    %6731 = vmatpush1.msra.mxu0 0.0
    %6732 = vmatprep.subr.mxu0 0.0
    %6733 = vmatpush1.msra.mxu0 0.0
    %6734 = vmatprep.subr.mxu0 0.0
    %6735 = vmatpush1.msra.mxu0 0.0
    %6736 = vmatprep.subr.mxu0 0.0
    %6737 = vmatpush1.msra.mxu0 0.0
    %6738 = vmatprep.subr.mxu0 0.0
    %6739 = vmatpush1.msra.mxu0 0.0
    %6740 = vmatprep.subr.mxu0 0.0
    %6741 = vmatpush1.msra.mxu0 0.0
    %6742 = vmatprep.subr.mxu0 0.0
    %6743 = vmatpush1.msra.mxu0 0.0
    %6744 = vmatprep.subr.mxu0 0.0
    %6745 = vmatpush1.msra.mxu0 0.0
    %6746 = vmatprep.subr.mxu0 0.0
    %6747 = vmatpush1.msra.mxu0 0.0
    %6748 = vmatprep.subr.mxu0 0.0
    %6749 = vmatpush1.msra.mxu0 0.0
    %6750 = vmatprep.subr.mxu0 0.0
    %6751 = vmatpush1.msra.mxu0 0.0
    %6752 = vmatprep.subr.mxu0 0.0
    %6753 = vmatpush1.msra.mxu0 0.0
    %6754 = vmatprep.mubr.f32.mxu0 0.0
    %6755 = vmatmul.mubr.f32.gmra.mrb[0].mxu0 %v758
    %v6756 = vpop.f32.mrb[0].mxu0
    %v6757 = vadd.f32 0.0, %v6756
    %v6758 = vpop.f32.mrb[0].mxu0
    %6759 = vdwg.mxu0
    %6760 = vmatprep.subr.mxu0 0.0
    %6761 = vmatpush1.msra.mxu0 %v1936
    %6762 = vmatprep.subr.mxu0 0.0
    %6763 = vmatpush1.msra.mxu0 %v1937
    %6764 = vmatprep.subr.mxu0 0.0
    %6765 = vmatpush1.msra.mxu0 %v1938
    %6766 = vmatprep.subr.mxu0 0.0
    %6767 = vmatpush1.msra.mxu0 %v1939
    %6768 = vmatprep.subr.mxu0 0.0
    %6769 = vmatpush1.msra.mxu0 %v1940
    %6770 = vmatprep.subr.mxu0 0.0
    %6771 = vmatpush1.msra.mxu0 %v1941
    %6772 = vmatprep.subr.mxu0 0.0
    %6773 = vmatpush1.msra.mxu0 %v1942
    %6774 = vmatprep.subr.mxu0 0.0
    %6775 = vmatpush1.msra.mxu0 %v1943
    %6776 = vmatprep.subr.mxu0 0.0
    %6777 = vmatpush1.msra.mxu0 %v1944
    %6778 = vmatprep.subr.mxu0 0.0
    %6779 = vmatpush1.msra.mxu0 %v1945
    %6780 = vmatprep.subr.mxu0 0.0
    %6781 = vmatpush1.msra.mxu0 %v1946
    %6782 = vmatprep.subr.mxu0 0.0
    %6783 = vmatpush1.msra.mxu0 %v1947
    %6784 = vmatprep.subr.mxu0 0.0
    %6785 = vmatpush1.msra.mxu0 %v1948
    %6786 = vmatprep.subr.mxu0 0.0
    %6787 = vmatpush1.msra.mxu0 %v1949
    %6788 = vmatprep.subr.mxu0 0.0
    %6789 = vmatpush1.msra.mxu0 %v1950
    %6790 = vmatprep.subr.mxu0 0.0
    %6791 = vmatpush1.msra.mxu0 %v1951
    %6792 = vmatprep.subr.mxu0 0.0
    %6793 = vmatpush1.msra.mxu0 0.0
    %6794 = vmatprep.subr.mxu0 0.0
    %6795 = vmatpush1.msra.mxu0 0.0
    %6796 = vmatprep.subr.mxu0 0.0
    %6797 = vmatpush1.msra.mxu0 0.0
    %6798 = vmatprep.subr.mxu0 0.0
    %6799 = vmatpush1.msra.mxu0 0.0
    %6800 = vmatprep.subr.mxu0 0.0
    %6801 = vmatpush1.msra.mxu0 0.0
    %6802 = vmatprep.subr.mxu0 0.0
    %6803 = vmatpush1.msra.mxu0 0.0
    %6804 = vmatprep.subr.mxu0 0.0
    %6805 = vmatpush1.msra.mxu0 0.0
    %6806 = vmatprep.subr.mxu0 0.0
    %6807 = vmatpush1.msra.mxu0 0.0
    %6808 = vmatprep.subr.mxu0 0.0
    %6809 = vmatpush1.msra.mxu0 0.0
    %6810 = vmatprep.subr.mxu0 0.0
    %6811 = vmatpush1.msra.mxu0 0.0
    %6812 = vmatprep.subr.mxu0 0.0
    %6813 = vmatpush1.msra.mxu0 0.0
    %6814 = vmatprep.subr.mxu0 0.0
    %6815 = vmatpush1.msra.mxu0 0.0
    %6816 = vmatprep.subr.mxu0 0.0
    %6817 = vmatpush1.msra.mxu0 0.0
    %6818 = vmatprep.subr.mxu0 0.0
    %6819 = vmatpush1.msra.mxu0 0.0
    %6820 = vmatprep.subr.mxu0 0.0
    %6821 = vmatpush1.msra.mxu0 0.0
    %6822 = vmatprep.subr.mxu0 0.0
    %6823 = vmatpush1.msra.mxu0 0.0
    %6824 = vmatprep.mubr.f32.mxu0 0.0
    %6825 = vmatmul.mubr.f32.gmra.mrb[0].mxu0 %v766
    %v6826 = vpop.f32.mrb[0].mxu0
    %v6827 = vadd.f32 0.0, %v6826
    %v6828 = vpop.f32.mrb[0].mxu0
    %6829 = vdwg.mxu0
    %6830 = vmatprep.subr.mxu0 0.0
    %6831 = vmatpush1.msra.mxu0 %v1952
    %6832 = vmatprep.subr.mxu0 0.0
    %6833 = vmatpush1.msra.mxu0 %v1953
    %6834 = vmatprep.subr.mxu0 0.0
    %6835 = vmatpush1.msra.mxu0 %v1954
    %6836 = vmatprep.subr.mxu0 0.0
    %6837 = vmatpush1.msra.mxu0 %v1955
    %6838 = vmatprep.subr.mxu0 0.0
    %6839 = vmatpush1.msra.mxu0 %v1956
    %6840 = vmatprep.subr.mxu0 0.0
    %6841 = vmatpush1.msra.mxu0 %v1957
    %6842 = vmatprep.subr.mxu0 0.0
    %6843 = vmatpush1.msra.mxu0 %v1958
    %6844 = vmatprep.subr.mxu0 0.0
    %6845 = vmatpush1.msra.mxu0 %v1959
    %6846 = vmatprep.subr.mxu0 0.0
    %6847 = vmatpush1.msra.mxu0 %v1960
    %6848 = vmatprep.subr.mxu0 0.0
    %6849 = vmatpush1.msra.mxu0 %v1961
    %6850 = vmatprep.subr.mxu0 0.0
    %6851 = vmatpush1.msra.mxu0 %v1962
    %6852 = vmatprep.subr.mxu0 0.0
    %6853 = vmatpush1.msra.mxu0 %v1963
    %6854 = vmatprep.subr.mxu0 0.0
    %6855 = vmatpush1.msra.mxu0 %v1964
    %6856 = vmatprep.subr.mxu0 0.0
    %6857 = vmatpush1.msra.mxu0 %v1965
    %6858 = vmatprep.subr.mxu0 0.0
    %6859 = vmatpush1.msra.mxu0 %v1966
    %6860 = vmatprep.subr.mxu0 0.0
    %6861 = vmatpush1.msra.mxu0 %v1967
    %6862 = vmatprep.subr.mxu0 0.0
    %6863 = vmatpush1.msra.mxu0 0.0
    %6864 = vmatprep.subr.mxu0 0.0
    %6865 = vmatpush1.msra.mxu0 0.0
    %6866 = vmatprep.subr.mxu0 0.0
    %6867 = vmatpush1.msra.mxu0 0.0
    %6868 = vmatprep.subr.mxu0 0.0
    %6869 = vmatpush1.msra.mxu0 0.0
    %6870 = vmatprep.subr.mxu0 0.0
    %6871 = vmatpush1.msra.mxu0 0.0
    %6872 = vmatprep.subr.mxu0 0.0
    %6873 = vmatpush1.msra.mxu0 0.0
    %6874 = vmatprep.subr.mxu0 0.0
    %6875 = vmatpush1.msra.mxu0 0.0
    %6876 = vmatprep.subr.mxu0 0.0
    %6877 = vmatpush1.msra.mxu0 0.0
    %6878 = vmatprep.subr.mxu0 0.0
    %6879 = vmatpush1.msra.mxu0 0.0
    %6880 = vmatprep.subr.mxu0 0.0
    %6881 = vmatpush1.msra.mxu0 0.0
    %6882 = vmatprep.subr.mxu0 0.0
    %6883 = vmatpush1.msra.mxu0 0.0
    %6884 = vmatprep.subr.mxu0 0.0
    %6885 = vmatpush1.msra.mxu0 0.0
    %6886 = vmatprep.subr.mxu0 0.0
    %6887 = vmatpush1.msra.mxu0 0.0
    %6888 = vmatprep.subr.mxu0 0.0
    %6889 = vmatpush1.msra.mxu0 0.0
    %6890 = vmatprep.subr.mxu0 0.0
    %6891 = vmatpush1.msra.mxu0 0.0
    %6892 = vmatprep.subr.mxu0 0.0
    %6893 = vmatpush1.msra.mxu0 0.0
    %6894 = vmatprep.mubr.f32.mxu0 0.0
    %6895 = vmatmul.mubr.f32.gmra.mrb[0].mxu0 %v774
    %v6896 = vpop.f32.mrb[0].mxu0
    %v6897 = vadd.f32 0.0, %v6896
    %v6898 = vpop.f32.mrb[0].mxu0
    %6899 = vdwg.mxu0
    %6900 = vmatprep.subr.mxu0 0.0
    %6901 = vmatpush1.msra.mxu0 %v1968
    %6902 = vmatprep.subr.mxu0 0.0
    %6903 = vmatpush1.msra.mxu0 %v1969
    %6904 = vmatprep.subr.mxu0 0.0
    %6905 = vmatpush1.msra.mxu0 %v1970
    %6906 = vmatprep.subr.mxu0 0.0
    %6907 = vmatpush1.msra.mxu0 %v1971
    %6908 = vmatprep.subr.mxu0 0.0
    %6909 = vmatpush1.msra.mxu0 %v1972
    %6910 = vmatprep.subr.mxu0 0.0
    %6911 = vmatpush1.msra.mxu0 %v1973
    %6912 = vmatprep.subr.mxu0 0.0
    %6913 = vmatpush1.msra.mxu0 %v1974
    %6914 = vmatprep.subr.mxu0 0.0
    %6915 = vmatpush1.msra.mxu0 %v1975
    %6916 = vmatprep.subr.mxu0 0.0
    %6917 = vmatpush1.msra.mxu0 %v1976
    %6918 = vmatprep.subr.mxu0 0.0
    %6919 = vmatpush1.msra.mxu0 %v1977
    %6920 = vmatprep.subr.mxu0 0.0
    %6921 = vmatpush1.msra.mxu0 %v1978
    %6922 = vmatprep.subr.mxu0 0.0
    %6923 = vmatpush1.msra.mxu0 %v1979
    %6924 = vmatprep.subr.mxu0 0.0
    %6925 = vmatpush1.msra.mxu0 %v1980
    %6926 = vmatprep.subr.mxu0 0.0
    %6927 = vmatpush1.msra.mxu0 %v1981
    %6928 = vmatprep.subr.mxu0 0.0
    %6929 = vmatpush1.msra.mxu0 %v1982
    %6930 = vmatprep.subr.mxu0 0.0
    %6931 = vmatpush1.msra.mxu0 %v1983
    %6932 = vmatprep.subr.mxu0 0.0
    %6933 = vmatpush1.msra.mxu0 0.0
    %6934 = vmatprep.subr.mxu0 0.0
    %6935 = vmatpush1.msra.mxu0 0.0
    %6936 = vmatprep.subr.mxu0 0.0
    %6937 = vmatpush1.msra.mxu0 0.0
    %6938 = vmatprep.subr.mxu0 0.0
    %6939 = vmatpush1.msra.mxu0 0.0
    %6940 = vmatprep.subr.mxu0 0.0
    %6941 = vmatpush1.msra.mxu0 0.0
    %6942 = vmatprep.subr.mxu0 0.0
    %6943 = vmatpush1.msra.mxu0 0.0
    %6944 = vmatprep.subr.mxu0 0.0
    %6945 = vmatpush1.msra.mxu0 0.0
    %6946 = vmatprep.subr.mxu0 0.0
    %6947 = vmatpush1.msra.mxu0 0.0
    %6948 = vmatprep.subr.mxu0 0.0
    %6949 = vmatpush1.msra.mxu0 0.0
    %6950 = vmatprep.subr.mxu0 0.0
    %6951 = vmatpush1.msra.mxu0 0.0
    %6952 = vmatprep.subr.mxu0 0.0
    %6953 = vmatpush1.msra.mxu0 0.0
    %6954 = vmatprep.subr.mxu0 0.0
    %6955 = vmatpush1.msra.mxu0 0.0
    %6956 = vmatprep.subr.mxu0 0.0
    %6957 = vmatpush1.msra.mxu0 0.0
    %6958 = vmatprep.subr.mxu0 0.0
    %6959 = vmatpush1.msra.mxu0 0.0
    %6960 = vmatprep.subr.mxu0 0.0
    %6961 = vmatpush1.msra.mxu0 0.0
    %6962 = vmatprep.subr.mxu0 0.0
    %6963 = vmatpush1.msra.mxu0 0.0
    %6964 = vmatprep.mubr.f32.mxu0 0.0
    %6965 = vmatmul.mubr.f32.gmra.mrb[0].mxu0 %v773
    %v6966 = vpop.f32.mrb[0].mxu0
    %v6967 = vadd.f32 0.0, %v6966
    %v6968 = vpop.f32.mrb[0].mxu0
    %6969 = vdwg.mxu0
    %6970 = vmatprep.subr.mxu0 0.0
    %6971 = vmatpush1.msra.mxu0 %v1984
    %6972 = vmatprep.subr.mxu0 0.0
    %6973 = vmatpush1.msra.mxu0 %v1985
    %6974 = vmatprep.subr.mxu0 0.0
    %6975 = vmatpush1.msra.mxu0 %v1986
    %6976 = vmatprep.subr.mxu0 0.0
    %6977 = vmatpush1.msra.mxu0 %v1987
    %6978 = vmatprep.subr.mxu0 0.0
    %6979 = vmatpush1.msra.mxu0 %v1988
    %6980 = vmatprep.subr.mxu0 0.0
    %6981 = vmatpush1.msra.mxu0 %v1989
    %6982 = vmatprep.subr.mxu0 0.0
    %6983 = vmatpush1.msra.mxu0 %v1990
    %6984 = vmatprep.subr.mxu0 0.0
    %6985 = vmatpush1.msra.mxu0 %v1991
    %6986 = vmatprep.subr.mxu0 0.0
    %6987 = vmatpush1.msra.mxu0 %v1992
    %6988 = vmatprep.subr.mxu0 0.0
    %6989 = vmatpush1.msra.mxu0 %v1993
    %6990 = vmatprep.subr.mxu0 0.0
    %6991 = vmatpush1.msra.mxu0 %v1994
    %6992 = vmatprep.subr.mxu0 0.0
    %6993 = vmatpush1.msra.mxu0 %v1995
    %6994 = vmatprep.subr.mxu0 0.0
    %6995 = vmatpush1.msra.mxu0 %v1996
    %6996 = vmatprep.subr.mxu0 0.0
    %6997 = vmatpush1.msra.mxu0 %v1997
    %6998 = vmatprep.subr.mxu0 0.0
    %6999 = vmatpush1.msra.mxu0 %v1998
    %7000 = vmatprep.subr.mxu0 0.0
    %7001 = vmatpush1.msra.mxu0 %v1999
    %7002 = vmatprep.subr.mxu0 0.0
    %7003 = vmatpush1.msra.mxu0 0.0
    %7004 = vmatprep.subr.mxu0 0.0
    %7005 = vmatpush1.msra.mxu0 0.0
    %7006 = vmatprep.subr.mxu0 0.0
    %7007 = vmatpush1.msra.mxu0 0.0
    %7008 = vmatprep.subr.mxu0 0.0
    %7009 = vmatpush1.msra.mxu0 0.0
    %7010 = vmatprep.subr.mxu0 0.0
    %7011 = vmatpush1.msra.mxu0 0.0
    %7012 = vmatprep.subr.mxu0 0.0
    %7013 = vmatpush1.msra.mxu0 0.0
    %7014 = vmatprep.subr.mxu0 0.0
    %7015 = vmatpush1.msra.mxu0 0.0
    %7016 = vmatprep.subr.mxu0 0.0
    %7017 = vmatpush1.msra.mxu0 0.0
    %7018 = vmatprep.subr.mxu0 0.0
    %7019 = vmatpush1.msra.mxu0 0.0
    %7020 = vmatprep.subr.mxu0 0.0
    %7021 = vmatpush1.msra.mxu0 0.0
    %7022 = vmatprep.subr.mxu0 0.0
    %7023 = vmatpush1.msra.mxu0 0.0
    %7024 = vmatprep.subr.mxu0 0.0
    %7025 = vmatpush1.msra.mxu0 0.0
    %7026 = vmatprep.subr.mxu0 0.0
    %7027 = vmatpush1.msra.mxu0 0.0
    %7028 = vmatprep.subr.mxu0 0.0
    %7029 = vmatpush1.msra.mxu0 0.0
    %7030 = vmatprep.subr.mxu0 0.0
    %7031 = vmatpush1.msra.mxu0 0.0
    %7032 = vmatprep.subr.mxu0 0.0
    %7033 = vmatpush1.msra.mxu0 0.0
    %7034 = vmatprep.mubr.f32.mxu0 0.0
    %7035 = vmatmul.mubr.f32.gmra.mrb[0].mxu0 %v775
    %v7036 = vpop.f32.mrb[0].mxu0
    %v7037 = vadd.f32 0.0, %v7036
    %v7038 = vpop.f32.mrb[0].mxu0
    %7039 = vdwg.mxu0
    %vm7040 = vcmask 1041408
    %v7041 = vsel %vm7040, %v2067, 0.0
    %v7042 = vsel %vm7040, %v2137, 0.0
    %v7043 = vadd.f32 %v7041, %v7042
    %v7044 = vsel %vm7040, %v2207, 0.0
    %v7045 = vadd.f32 %v7043, %v7044
    %v7046 = vsel %vm7040, %v2277, 0.0
    %v7047 = vadd.f32 %v7045, %v7046
    %v7048 = vsel %vm7040, %v2347, 0.0
    %v7049 = vadd.f32 %v7047, %v7048
    %v7050 = vsel %vm7040, %v2417, 0.0
    %v7051 = vadd.f32 %v7049, %v7050
    %v7052 = vsel %vm7040, %v2487, 0.0
    %v7053 = vadd.f32 %v7051, %v7052
    %v7054 = vsel %vm7040, %v2557, 0.0
    %v7055 = vadd.f32 %v7053, %v7054
    %v7056 = vsel %vm7040, %v2627, 0.0
    %v7057 = vadd.f32 %v7055, %v7056
    %v7058 = vsel %vm7040, %v2697, 0.0
    %v7059 = vadd.f32 %v7057, %v7058
    %v7060 = vsel %vm7040, %v2767, 0.0
    %v7061 = vadd.f32 %v7059, %v7060
    %v7062 = vsel %vm7040, %v2837, 0.0
    %v7063 = vadd.f32 %v7061, %v7062
    %v7064 = vsel %vm7040, %v2907, 0.0
    %v7065 = vadd.f32 %v7063, %v7064
    %v7066 = vsel %vm7040, %v2977, 0.0
    %v7067 = vadd.f32 %v7065, %v7066
    %v7068 = vsel %vm7040, %v3047, 0.0
    %v7069 = vadd.f32 %v7067, %v7068
    %v7070 = vsel %vm7040, %v3117, 0.0
    %v7071 = vadd.f32 %v7069, %v7070
    %v7072 = vsel %vm7040, %v3187, 0.0
    %v7073 = vadd.f32 %v7071, %v7072
    %v7074 = vsel %vm7040, %v3257, 0.0
    %v7075 = vadd.f32 %v7073, %v7074
    %v7076 = vsel %vm7040, %v3327, 0.0
    %v7077 = vadd.f32 %v7075, %v7076
    %v7078 = vsel %vm7040, %v3397, 0.0
    %v7079 = vadd.f32 %v7077, %v7078
    %v7080 = vsel %vm7040, %v3467, 0.0
    %v7081 = vadd.f32 %v7079, %v7080
    %v7082 = vsel %vm7040, %v3537, 0.0
    %v7083 = vadd.f32 %v7081, %v7082
    %v7084 = vsel %vm7040, %v3607, 0.0
    %v7085 = vadd.f32 %v7083, %v7084
    %v7086 = vsel %vm7040, %v3677, 0.0
    %v7087 = vadd.f32 %v7085, %v7086
    %v7088 = vsel %vm7040, %v3747, 0.0
    %v7089 = vadd.f32 %v7087, %v7088
    %v7090 = vsel %vm7040, %v3817, 0.0
    %v7091 = vadd.f32 %v7089, %v7090
    %v7092 = vsel %vm7040, %v3887, 0.0
    %v7093 = vadd.f32 %v7091, %v7092
    %v7094 = vsel %vm7040, %v3957, 0.0
    %v7095 = vadd.f32 %v7093, %v7094
    %v7096 = vsel %vm7040, %v4027, 0.0
    %v7097 = vadd.f32 %v7095, %v7096
    %v7098 = vsel %vm7040, %v4097, 0.0
    %v7099 = vadd.f32 %v7097, %v7098
    %v7100 = vsel %vm7040, %v4167, 0.0
    %v7101 = vadd.f32 %v7099, %v7100
    %v7102 = vsel %vm7040, %v4237, 0.0
    %v7103 = vadd.f32 %v7101, %v7102
    %v7104 = vsel %vm7040, %v4307, 0.0
    %v7105 = vadd.f32 %v7103, %v7104
    %v7106 = vsel %vm7040, %v4377, 0.0
    %v7107 = vadd.f32 %v7105, %v7106
    %v7108 = vsel %vm7040, %v4447, 0.0
    %v7109 = vadd.f32 %v7107, %v7108
    %v7110 = vsel %vm7040, %v4517, 0.0
    %v7111 = vadd.f32 %v7109, %v7110
    %v7112 = vsel %vm7040, %v4587, 0.0
    %v7113 = vadd.f32 %v7111, %v7112
    %v7114 = vsel %vm7040, %v4657, 0.0
    %v7115 = vadd.f32 %v7113, %v7114
    %v7116 = vsel %vm7040, %v4727, 0.0
    %v7117 = vadd.f32 %v7115, %v7116
    %v7118 = vsel %vm7040, %v4797, 0.0
    %v7119 = vadd.f32 %v7117, %v7118
    %v7120 = vsel %vm7040, %v4867, 0.0
    %v7121 = vadd.f32 %v7119, %v7120
    %v7122 = vsel %vm7040, %v4937, 0.0
    %v7123 = vadd.f32 %v7121, %v7122
    %v7124 = vsel %vm7040, %v5007, 0.0
    %v7125 = vadd.f32 %v7123, %v7124
    %v7126 = vsel %vm7040, %v5077, 0.0
    %v7127 = vadd.f32 %v7125, %v7126
    %v7128 = vsel %vm7040, %v5147, 0.0
    %v7129 = vadd.f32 %v7127, %v7128
    %v7130 = vsel %vm7040, %v5217, 0.0
    %v7131 = vadd.f32 %v7129, %v7130
    %v7132 = vsel %vm7040, %v5287, 0.0
    %v7133 = vadd.f32 %v7131, %v7132
    %v7134 = vsel %vm7040, %v5357, 0.0
    %v7135 = vadd.f32 %v7133, %v7134
    %v7136 = vsel %vm7040, %v5427, 0.0
    %v7137 = vadd.f32 %v7135, %v7136
    %v7138 = vsel %vm7040, %v5497, 0.0
    %v7139 = vadd.f32 %v7137, %v7138
    %v7140 = vsel %vm7040, %v5567, 0.0
    %v7141 = vadd.f32 %v7139, %v7140
    %v7142 = vsel %vm7040, %v5637, 0.0
    %v7143 = vadd.f32 %v7141, %v7142
    %v7144 = vsel %vm7040, %v5707, 0.0
    %v7145 = vadd.f32 %v7143, %v7144
    %v7146 = vsel %vm7040, %v5777, 0.0
    %v7147 = vadd.f32 %v7145, %v7146
    %v7148 = vsel %vm7040, %v5847, 0.0
    %v7149 = vadd.f32 %v7147, %v7148
    %v7150 = vsel %vm7040, %v5917, 0.0
    %v7151 = vadd.f32 %v7149, %v7150
    %v7152 = vsel %vm7040, %v5987, 0.0
    %v7153 = vadd.f32 %v7151, %v7152
    %v7154 = vsel %vm7040, %v6057, 0.0
    %v7155 = vadd.f32 %v7153, %v7154
    %v7156 = vsel %vm7040, %v6127, 0.0
    %v7157 = vadd.f32 %v7155, %v7156
    %v7158 = vsel %vm7040, %v6197, 0.0
    %v7159 = vadd.f32 %v7157, %v7158
    %v7160 = vsel %vm7040, %v6267, 0.0
    %v7161 = vadd.f32 %v7159, %v7160
    %v7162 = vsel %vm7040, %v6337, 0.0
    %v7163 = vadd.f32 %v7161, %v7162
    %v7164 = vsel %vm7040, %v6407, 0.0
    %v7165 = vadd.f32 %v7163, %v7164
    %v7166 = vsel %vm7040, %v6477, 0.0
    %v7167 = vadd.f32 %v7165, %v7166
    %v7168 = vsel %vm7040, %v6547, 0.0
    %v7169 = vadd.f32 %v7167, %v7168
    %v7170 = vsel %vm7040, %v6617, 0.0
    %v7171 = vadd.f32 %v7169, %v7170
    %v7172 = vsel %vm7040, %v6687, 0.0
    %v7173 = vadd.f32 %v7171, %v7172
    %v7174 = vsel %vm7040, %v6757, 0.0
    %v7175 = vadd.f32 %v7173, %v7174
    %v7176 = vsel %vm7040, %v6827, 0.0
    %v7177 = vadd.f32 %v7175, %v7176
    %v7178 = vsel %vm7040, %v6897, 0.0
    %v7179 = vadd.f32 %v7177, %v7178
    %v7180 = vsel %vm7040, %v6967, 0.0
    %v7181 = vadd.f32 %v7179, %v7180
    %v7182 = vsel %vm7040, %v7037, 0.0
    %v7183 = vadd.f32 %v7181, %v7182
    %v7184 = vld [vmem:[#allocation8] sm:$0x1]
    %v7186 = vlaneseq
    %v7187 = vshrl.u32 %v7186, 7
    %v7188 = vsub.s32 0, %v7187
    %v7189 = vrot.slane %v7184, %v7188
    %v7191 = vadd.f32 %v7183, %v7189
    %7192 = vst [vmem:[#allocation10] sm:$0x3] %v7191
    // Predicated region
    $region38: #{intent_dl_forward.1} parent=1 // pred_check
      _
    $region39: #{intent_dl_forward.1} parent=1 // pred_check_branch
      %7194 = sbr.rel (0) target = $region41
    $region40: #{intent_dl_forward.1} parent=1 // pred_region
      %s7196 = ssub.s32 32, 32
      %7197 = vsyncadd [#allocation4], %s7196
      %s7199 = sshll.u32 [#allocation10], 4
      %s7200 = int_to_ptr.vmem [resolvable:$true] %s7199
      %7202 = dma.vmem_to_hbm [thread:$0]  %s7200, 32, %s5, [#allocation4]
    $region41: #{intent_dl_forward.1} parent=1 // pred_fallthru
      _
    // Predicated region
    $region42: #{intent_dl_forward.1} parent=1 // pred_check
      _
    $region43: #{intent_dl_forward.1} parent=1 // pred_check_branch
      %7204 = sbr.rel (0) target = $region45
    $region44: #{intent_dl_forward.1} parent=1 // pred_region
      %7205 = dma.done [#allocation4], 32
    $region45: #{intent_dl_forward.1} parent=1 // pred_fallthru
      _
    %7206 = vsyncpa [#allocation3], 1
    %7207 = vsyncpa [#allocation6], 1
    %7208 = vsyncpa [#allocation9], 1
    %7209 = vsyncpa [#allocation4], 1

</llo_original>
